<compile_context>
chip_gen: v7x
topology: tpu7x:2x2x1
jax: 0.10.0
libtpu: 0.0.40
codegen_flags: <defaults>
</compile_context>

<pallas_src>
import functools

import jax
import jax.numpy as jnp
from jax.experimental import pallas as pl
from jax.experimental.pallas import tpu as pltpu


_VMEM_LIMIT = 32 * 1024 * 1024   # safe headroom even on v7x's 64 MiB VMEM


def _pick_tile(R, max_tile=4096):
    """Biggest lane tile: full R if it fits (grid=1), else the largest multiple
    of 128 that divides R and is <= max_tile (small tiles are overhead-bound)."""
    if R <= max_tile:
        return R
    assert R % 128 == 0, R
    t = (max_tile // 128) * 128
    while t >= 128:
        if R % t == 0:
            return t
        t -= 128
    raise ValueError(f"no 128-multiple tile divides R={R}")


def _params(sem=("parallel",)):
    return pltpu.CompilerParams(dimension_semantics=sem,
                                vmem_limit_bytes=_VMEM_LIMIT)


# ----------------------------- Pallas kernels -------------------------------

def _linear_kernel(x_ref, wt_ref, b_ref, o_ref):
    o_ref[...] = (jnp.dot(wt_ref[...], x_ref[...],
                          preferred_element_type=jnp.float32) + b_ref[...])


def linear_cr(x_cr, w, b, *, max_tile=4096):
    """y = w.T @ x + b in channel-first layout.  x_cr: (K, R), w: (K, N), b: (N,)."""
    K, R = x_cr.shape
    N = w.shape[1]
    tn = _pick_tile(R, max_tile)
    assert R % tn == 0, (R, tn)
    return pl.pallas_call(
        _linear_kernel,
        out_shape=jax.ShapeDtypeStruct((N, R), jnp.float32),
        grid_spec=pltpu.PrefetchScalarGridSpec(
            num_scalar_prefetch=0,
            grid=(R // tn,),
            in_specs=[pl.BlockSpec((K, tn), lambda i: (0, i)),
                      pl.BlockSpec((N, K), lambda i: (0, 0)),
                      pl.BlockSpec((N, 1), lambda i: (0, 0))],
            out_specs=pl.BlockSpec((N, tn), lambda i: (0, i))),
        compiler_params=_params(),
    )(x_cr, w.T, b.reshape(N, 1))


def _pw_add_stats_kernel(x1_ref, h_ref, wt_ref, b_ref, s_ref, st_ref):
    # x2 = W^T @ h + b (1x1 Conv1d), s = x1 + x2, per-tile [sum, sumsq] stats.
    x2 = (jnp.dot(wt_ref[...], h_ref[...],
                  preferred_element_type=jnp.float32) + b_ref[...])
    s = x1_ref[...] + x2
    s_ref[...] = s
    st_ref[:, 0:1] = jnp.sum(s, axis=1, keepdims=True)
    st_ref[:, 1:2] = jnp.sum(s * s, axis=1, keepdims=True)


def pointwise_add_stats(x1, h, w, b, *, max_tile=4096):
    """Fused pointwise-conv + residual add + partial BN stats (per grid step)."""
    C, R = h.shape
    N = w.shape[1]
    tn = _pick_tile(R, max_tile)
    assert R % tn == 0, (R, tn)
    G = R // tn
    return pl.pallas_call(
        _pw_add_stats_kernel,
        out_shape=(jax.ShapeDtypeStruct((N, R), jnp.float32),
                   jax.ShapeDtypeStruct((G, N, 2), jnp.float32)),
        grid_spec=pltpu.PrefetchScalarGridSpec(
            num_scalar_prefetch=0,
            grid=(G,),
            in_specs=[pl.BlockSpec((N, tn), lambda i: (0, i)),
                      pl.BlockSpec((C, tn), lambda i: (0, i)),
                      pl.BlockSpec((N, C), lambda i: (0, 0)),
                      pl.BlockSpec((N, 1), lambda i: (0, 0))],
            out_specs=[pl.BlockSpec((N, tn), lambda i: (0, i)),
                       pl.BlockSpec((None, N, 2), lambda i: (i, 0, 0))]),
        compiler_params=_params(),
    )(x1, h, w.T, b.reshape(N, 1))


def _bn_kernel(s_ref, m_ref, inv_ref, o_ref, *, relu):
    y = (s_ref[...] - m_ref[...]) * inv_ref[...]
    if relu:
        y = jnp.maximum(y, 0.0)
    o_ref[...] = y


def bn_apply(s, mean, invstd, *, relu, max_tile=4096):
    C, R = s.shape
    tn = _pick_tile(R, max_tile)
    assert R % tn == 0, (R, tn)
    kern = functools.partial(_bn_kernel, relu=relu)
    return pl.pallas_call(
        kern,
        out_shape=jax.ShapeDtypeStruct((C, R), jnp.float32),
        grid_spec=pltpu.PrefetchScalarGridSpec(
            num_scalar_prefetch=0,
            grid=(R // tn,),
            in_specs=[pl.BlockSpec((C, tn), lambda i: (0, i)),
                      pl.BlockSpec((C, 1), lambda i: (0, 0)),
                      pl.BlockSpec((C, 1), lambda i: (0, 0))],
            out_specs=pl.BlockSpec((C, tn), lambda i: (0, i))),
        compiler_params=_params(),
    )(s, mean.reshape(C, 1), invstd.reshape(C, 1))


def _head_kernel(x_ref, w1t_ref, b1_ref, w2t_ref, b2_ref, o_ref):
    h = (jnp.dot(w1t_ref[...], x_ref[...],
                 preferred_element_type=jnp.float32) + b1_ref[...])
    h = jnp.maximum(h, 0.0)                                   # fc1 + ReLU
    o_ref[...] = (jnp.dot(w2t_ref[...], h,
                          preferred_element_type=jnp.float32) + b2_ref[...])


def head_fc1_fc2(x_cr, w1, b1, w2, b2, *, max_tile=4096):
    """Fused fc1(+ReLU)+fc2; the (128, tn) intermediate never leaves VMEM."""
    C, R = x_cr.shape
    H = w1.shape[1]
    O = w2.shape[1]
    tn = _pick_tile(R, max_tile)
    assert R % tn == 0, (R, tn)
    return pl.pallas_call(
        _head_kernel,
        out_shape=jax.ShapeDtypeStruct((O, R), jnp.float32),
        grid_spec=pltpu.PrefetchScalarGridSpec(
            num_scalar_prefetch=0,
            grid=(R // tn,),
            in_specs=[pl.BlockSpec((C, tn), lambda i: (0, i)),
                      pl.BlockSpec((H, C), lambda i: (0, 0)),
                      pl.BlockSpec((H, 1), lambda i: (0, 0)),
                      pl.BlockSpec((O, H), lambda i: (0, 0)),
                      pl.BlockSpec((O, 1), lambda i: (0, 0))],
            out_specs=pl.BlockSpec((O, tn), lambda i: (0, i))),
        compiler_params=_params(),
    )(x_cr, w1.T, b1.reshape(H, 1), w2.T, b2.reshape(O, 1))


def _spectral_kernel(ar_ref, ai_ref, wr_ref, wi_ref, or_ref, oi_ref):
    ar, ai = ar_ref[...], ai_ref[...]
    wr, wi = wr_ref[...], wi_ref[...]
    # 3-matmul (Karatsuba) complex product: re = k1 - k3, im = k1 + k2
    dot = functools.partial(jnp.einsum, 'mbi,moi->mbo',
                            preferred_element_type=jnp.float32)
    k1 = dot(ar + ai, wr)
    k2 = dot(ar, wi - wr)
    k3 = dot(ai, wr + wi)
    or_ref[...] = k1 - k3
    oi_ref[...] = k1 + k2


def spectral_cmul(ar, ai, wr, wi):
    """All corners x all modes in one grid step.
    ar/ai: (M, B, Ci); wr/wi: (M, Co, Ci) -> (M, B, Co) real & imag."""
    M, B, Ci = ar.shape
    Co = wr.shape[1]
    return pl.pallas_call(
        _spectral_kernel,
        out_shape=(jax.ShapeDtypeStruct((M, B, Co), jnp.float32),
                   jax.ShapeDtypeStruct((M, B, Co), jnp.float32)),
        grid_spec=pltpu.PrefetchScalarGridSpec(
            num_scalar_prefetch=0,
            grid=(1,),
            in_specs=[pl.BlockSpec((M, B, Ci), lambda i: (0, 0, 0)),
                      pl.BlockSpec((M, B, Ci), lambda i: (0, 0, 0)),
                      pl.BlockSpec((M, Co, Ci), lambda i: (0, 0, 0)),
                      pl.BlockSpec((M, Co, Ci), lambda i: (0, 0, 0))],
            out_specs=[pl.BlockSpec((M, B, Co), lambda i: (0, 0, 0)),
                       pl.BlockSpec((M, B, Co), lambda i: (0, 0, 0))]),
        compiler_params=_params(("arbitrary",)),
    )(ar, ai, wr, wi)


# --------------------------- Spectral conv (FNO) -----------------------------

def spectral_conv3d(x, weights, m1, m2, m3):
    """x: (C, B, X, Y, Z) f32; weights: 4x (Ci, Co, m1, m2, m3, 2) -> (Co, B, X, Y, Z)."""
    C, B, X, Y, Z = x.shape
    Co = weights[0].shape[1]
    # TODO(synk): 3-D rFFT/irFFT have no Pallas equivalent; kept in XLA.
    x_ft = jnp.fft.rfftn(x, axes=(2, 3, 4), norm='ortho')        # (C, B, X, Y, Zr)
    Zr = Z // 2 + 1
    M = m1 * m2 * m3

    corners = [(slice(0, m1), slice(0, m2)),          # order matches weights1..4
               (slice(X - m1, X), slice(0, m2)),
               (slice(0, m1), slice(Y - m2, Y)),
               (slice(X - m1, X), slice(Y - m2, Y))]

    # corners: (4, C, B, m1, m2, m3) -> (4*M, B, Ci)
    a = jnp.stack([x_ft[:, :, xs, ys, :m3] for xs, ys in corners], axis=0)
    a = jnp.transpose(a, (0, 3, 4, 5, 2, 1)).reshape(4 * M, B, C)
    # weights: (4, Ci, Co, m1, m2, m3, 2) -> (4*M, Co, Ci, 2)
    w = jnp.stack(list(weights), axis=0)
    w = jnp.transpose(w, (0, 3, 4, 5, 2, 1, 6)).reshape(4 * M, Co, C, 2)

    o_re, o_im = spectral_cmul(jnp.real(a), jnp.imag(a), w[..., 0], w[..., 1])
    o = jax.lax.complex(o_re, o_im).reshape(4, m1, m2, m3, B, Co)
    o = jnp.transpose(o, (0, 5, 4, 1, 2, 3))                      # (4, Co, B, m1, m2, m3)

    out_ft = jnp.zeros((Co, B, X, Y, Zr), dtype=x_ft.dtype)
    for c, (xs, ys) in enumerate(corners):
        out_ft = out_ft.at[:, :, xs, ys, :m3].set(o[c])

    return jnp.fft.irfftn(out_ft, s=(X, Y, Z), axes=(2, 3, 4), norm='ortho')


# ------------------------------ Full forward ---------------------------------

def simple_block2d_forward(params, x, *, m1, m2, m3, width, eps=1e-5):
    """x: (B, X, Y, Z, 4) -> (B, X, Y, Z, 1). Mirrors SimpleBlock2d.forward."""
    B, X, Y, Z, Cin = x.shape
    R = B * X * Y * Z

    # channel-first lane-dense slab (C, R); the PyTorch permute pair becomes free
    x_cr = jnp.transpose(x, (4, 0, 1, 2, 3)).reshape(Cin, R)
    h = linear_cr(x_cr, params['fc0_w'], params['fc0_b'])         # (width, R)

    def fno_block(h_cr, conv_ws, w_pt, b_pt, relu):
        h5 = h_cr.reshape(width, B, X, Y, Z)
        x1 = spectral_conv3d(h5, conv_ws, m1, m2, m3).reshape(width, R)
        # fused: x2 = w_pt.T @ h + b, s = x1 + x2, per-tile partial BN stats
        s, st = pointwise_add_stats(x1, h_cr, w_pt, b_pt)
        st = jnp.sum(st, axis=0)                                  # (width, 2)
        mean = st[:, 0] / R
        var = jnp.maximum(st[:, 1] / R - mean * mean, 0.0)        # biased (BN training)
        invstd = jax.lax.rsqrt(var + eps)
        return bn_apply(s, mean, invstd, relu=relu)

    h = fno_block(h, params['conv0'], params['w0'], params['w0_b'], relu=True)
    h = fno_block(h, params['conv1'], params['w1'], params['w1_b'], relu=True)
    h = fno_block(h, params['conv2'], params['w2'], params['w2_b'], relu=True)
    h = fno_block(h, params['conv3'], params['w3'], params['w3_b'], relu=False)

    out = head_fc1_fc2(h, params['fc1_w'], params['fc1_b'],
                       params['fc2_w'], params['fc2_b'])          # (1, R)
    return jnp.transpose(out.reshape(1, B, X, Y, Z), (1, 2, 3, 4, 0))


# --------------------------- Deterministic params ----------------------------

def init_params(key, m1, m2, m3, width):
    keys = jax.random.split(key, 40)
    k = iter(keys)
    scale = 1.0 / (width * width)

    def spectral_weights():
        return tuple(
            scale * jax.random.uniform(
                next(k), (width, width, m1, m2, m3, 2), dtype=jnp.float32)
            for _ in range(4))

    def lin(cin, cout):
        w = jax.random.normal(next(k), (cin, cout), jnp.float32) * 0.1
        b = jax.random.normal(next(k), (cout,), jnp.float32) * 0.1
        return w, b

    fc0_w, fc0_b = lin(4, width)
    conv0 = spectral_weights()
    conv1 = spectral_weights()
    conv2 = spectral_weights()
    conv3 = spectral_weights()
    w0, w0_b = lin(width, width)
    w1, w1_b = lin(width, width)
    w2, w2_b = lin(width, width)
    w3, w3_b = lin(width, width)
    fc1_w, fc1_b = lin(width, 128)
    fc2_w, fc2_b = lin(128, 1)
    return dict(fc0_w=fc0_w, fc0_b=fc0_b,
                conv0=conv0, conv1=conv1, conv2=conv2, conv3=conv3,
                w0=w0, w0_b=w0_b, w1=w1, w1_b=w1_b,
                w2=w2, w2_b=w2_b, w3=w3, w3_b=w3_b,
                fc1_w=fc1_w, fc1_b=fc1_b, fc2_w=fc2_w, fc2_b=fc2_b)


if __name__ == "__main__":
    modes1 = modes2 = modes3 = 2
    width = 8
    B, X, Y, Z = 2, 8, 8, 8

    key = jax.random.PRNGKey(0)
    pkey, xkey = jax.random.split(key)
    params = init_params(pkey, modes1, modes2, modes3, width)
    x = jax.random.normal(xkey, (B, X, Y, Z, 4), jnp.float32)

    fwd = jax.jit(functools.partial(
        simple_block2d_forward, m1=modes1, m2=modes2, m3=modes3, width=width))
    out = fwd(params, x)
    jax.block_until_ready(out)
    assert out.shape == (B, X, Y, Z, 1), out.shape
    assert out.dtype == jnp.float32
    print("KERNEL_OK")
</pallas_src>

<mosaic_0001>
module attributes {stable_mosaic.version = 11 : i64} {
  func.func @_linear_kernel(%arg0: i32, %arg1: memref<4x1024xf32, #tpu.memory_space<vmem>>, %arg2: memref<8x4xf32, #tpu.memory_space<vmem>>, %arg3: memref<8x1xf32, #tpu.memory_space<vmem>>, %arg4: memref<8x1024xf32, #tpu.memory_space<vmem>>) attributes {dimension_semantics = [#tpu.dimension_semantics<parallel>], iteration_bounds = array<i64: 1>, scalar_prefetch = 0 : i64, scratch_operands = 0 : i64, tpu.core_type = #tpu.core_type<tc>, window_params = [{transform_indices = @transform_0, window_bounds = array<i64: 4, 1024>}, {pipeline_mode = #tpu.pipeline_mode<synchronous>, transform_indices = @transform_1, window_bounds = array<i64: 8, 4>}, {pipeline_mode = #tpu.pipeline_mode<synchronous>, transform_indices = @transform_2, window_bounds = array<i64: 8, 1>}, {transform_indices = @transform_3, window_bounds = array<i64: 8, 1024>}]} {
    %c0 = arith.constant 0 : index
    %c0_0 = arith.constant 0 : index
    %0 = vector.load %arg2[%c0, %c0_0] : memref<8x4xf32, #tpu.memory_space<vmem>>, vector<8x4xf32>
    %c0_1 = arith.constant 0 : index
    %c0_2 = arith.constant 0 : index
    %1 = vector.load %arg1[%c0_1, %c0_2] : memref<4x1024xf32, #tpu.memory_space<vmem>>, vector<4x1024xf32>
    %cst = arith.constant dense<0.000000e+00> : vector<8x1024xf32>
    %2 = tpu.matmul %0, %1, %cst {dimension_numbers = #tpu.dot_dimension_numbers<[1], [0], [0], [1], [0, 0, 1, 1], [], []>} : vector<8x4xf32>, vector<4x1024xf32>, vector<8x1024xf32> -> vector<8x1024xf32>
    %c0_3 = arith.constant 0 : index
    %c0_4 = arith.constant 0 : index
    %3 = vector.load %arg3[%c0_3, %c0_4] : memref<8x1xf32, #tpu.memory_space<vmem>>, vector<8x1xf32>
    %4 = vector.broadcast %3 : vector<8x1xf32> to vector<8x1024xf32>
    %5 = arith.addf %2, %4 : vector<8x1024xf32>
    %c0_5 = arith.constant 0 : index
    %c0_6 = arith.constant 0 : index
    %6 = vector.load %arg4[%c0_5, %c0_6] : memref<8x1024xf32, #tpu.memory_space<vmem>>, vector<8x1024xf32>
    tpu.vector_store %arg4[%c0_5, %c0_6], %5 {strides = array<i32>} : memref<8x1024xf32, #tpu.memory_space<vmem>>, vector<8x1024xf32>,
    return
  }
  func.func @transform_0(%arg0: i32) -> (i32, i32) {
    %c0_i32 = arith.constant 0 : i32
    %c0_i32_0 = arith.constant 0 : i32
    return %c0_i32, %arg0 : i32, i32
  }
  func.func @transform_1(%arg0: i32) -> (i32, i32) {
    %c0_i32 = arith.constant 0 : i32
    %c0_i32_0 = arith.constant 0 : i32
    %c0_i32_1 = arith.constant 0 : i32
    return %c0_i32, %c0_i32_0 : i32, i32
  }
  func.func @transform_2(%arg0: i32) -> (i32, i32) {
    %c0_i32 = arith.constant 0 : i32
    %c0_i32_0 = arith.constant 0 : i32
    %c0_i32_1 = arith.constant 0 : i32
    return %c0_i32, %c0_i32_0 : i32, i32
  }
  func.func @transform_3(%arg0: i32) -> (i32, i32) {
    %c0_i32 = arith.constant 0 : i32
    %c0_i32_0 = arith.constant 0 : i32
    return %c0_i32, %arg0 : i32, i32
  }
}

module attributes {stable_mosaic.version = 11 : i64} {
  func.func @_spectral_kernel(%arg0: i32, %arg1: memref<32x2x8xf32, #tpu.memory_space<vmem>>, %arg2: memref<32x2x8xf32, #tpu.memory_space<vmem>>, %arg3: memref<32x8x8xf32, #tpu.memory_space<vmem>>, %arg4: memref<32x8x8xf32, #tpu.memory_space<vmem>>, %arg5: memref<32x2x8xf32, #tpu.memory_space<vmem>>, %arg6: memref<32x2x8xf32, #tpu.memory_space<vmem>>) attributes {dimension_semantics = [#tpu.dimension_semantics<arbitrary>], iteration_bounds = array<i64: 1>, scalar_prefetch = 0 : i64, scratch_operands = 0 : i64, tpu.core_type = #tpu.core_type<tc>, window_params = [{pipeline_mode = #tpu.pipeline_mode<synchronous>, transform_indices = @transform_0, window_bounds = array<i64: 32, 2, 8>}, {pipeline_mode = #tpu.pipeline_mode<synchronous>, transform_indices = @transform_1, window_bounds = array<i64: 32, 2, 8>}, {pipeline_mode = #tpu.pipeline_mode<synchronous>, transform_indices = @transform_2, window_bounds = array<i64: 32, 8, 8>}, {pipeline_mode = #tpu.pipeline_mode<synchronous>, transform_indices = @transform_3, window_bounds = array<i64: 32, 8, 8>}, {pipeline_mode = #tpu.pipeline_mode<synchronous>, transform_indices = @transform_4, window_bounds = array<i64: 32, 2, 8>}, {pipeline_mode = #tpu.pipeline_mode<synchronous>, transform_indices = @transform_5, window_bounds = array<i64: 32, 2, 8>}]} {
    %c0 = arith.constant 0 : index
    %c0_0 = arith.constant 0 : index
    %c0_1 = arith.constant 0 : index
    %0 = vector.load %arg1[%c0, %c0_0, %c0_1] : memref<32x2x8xf32, #tpu.memory_space<vmem>>, vector<32x2x8xf32>
    %c0_2 = arith.constant 0 : index
    %c0_3 = arith.constant 0 : index
    %c0_4 = arith.constant 0 : index
    %1 = vector.load %arg2[%c0_2, %c0_3, %c0_4] : memref<32x2x8xf32, #tpu.memory_space<vmem>>, vector<32x2x8xf32>
    %c0_5 = arith.constant 0 : index
    %c0_6 = arith.constant 0 : index
    %c0_7 = arith.constant 0 : index
    %2 = vector.load %arg3[%c0_5, %c0_6, %c0_7] : memref<32x8x8xf32, #tpu.memory_space<vmem>>, vector<32x8x8xf32>
    %c0_8 = arith.constant 0 : index
    %c0_9 = arith.constant 0 : index
    %c0_10 = arith.constant 0 : index
    %3 = vector.load %arg4[%c0_8, %c0_9, %c0_10] : memref<32x8x8xf32, #tpu.memory_space<vmem>>, vector<32x8x8xf32>
    %4 = arith.addf %0, %1 : vector<32x2x8xf32>
    "tpu.trace_start"() <{level = 10 : i32, message = "mbi,moi->mbo"}> : () -> ()
    %cst = arith.constant dense<0.000000e+00> : vector<32x2x8xf32>
    %5 = tpu.matmul %4, %2, %cst {dimension_numbers = #tpu.dot_dimension_numbers<[2], [2], [1], [1], [0, 0, 0, 1, 1, 1], [0], [0]>} : vector<32x2x8xf32>, vector<32x8x8xf32>, vector<32x2x8xf32> -> vector<32x2x8xf32>
    "tpu.trace_stop"() : () -> ()
    %6 = arith.subf %3, %2 : vector<32x8x8xf32>
    "tpu.trace_start"() <{level = 10 : i32, message = "mbi,moi->mbo"}> : () -> ()
    %cst_11 = arith.constant dense<0.000000e+00> : vector<32x2x8xf32>
    %7 = tpu.matmul %0, %6, %cst_11 {dimension_numbers = #tpu.dot_dimension_numbers<[2], [2], [1], [1], [0, 0, 0, 1, 1, 1], [0], [0]>} : vector<32x2x8xf32>, vector<32x8x8xf32>, vector<32x2x8xf32> -> vector<32x2x8xf32>
    "tpu.trace_stop"() : () -> ()
    %8 = arith.addf %2, %3 : vector<32x8x8xf32>
    "tpu.trace_start"() <{level = 10 : i32, message = "mbi,moi->mbo"}> : () -> ()
    %cst_12 = arith.constant dense<0.000000e+00> : vector<32x2x8xf32>
    %9 = tpu.matmul %1, %8, %cst_12 {dimension_numbers = #tpu.dot_dimension_numbers<[2], [2], [1], [1], [0, 0, 0, 1, 1, 1], [0], [0]>} : vector<32x2x8xf32>, vector<32x8x8xf32>, vector<32x2x8xf32> -> vector<32x2x8xf32>
    "tpu.trace_stop"() : () -> ()
    %10 = arith.subf %5, %9 : vector<32x2x8xf32>
    %c0_13 = arith.constant 0 : index
    %c0_14 = arith.constant 0 : index
    %c0_15 = arith.constant 0 : index
    %11 = vector.load %arg5[%c0_13, %c0_14, %c0_15] : memref<32x2x8xf32, #tpu.memory_space<vmem>>, vector<32x2x8xf32>
    tpu.vector_store %arg5[%c0_13, %c0_14, %c0_15], %10 {strides = array<i32>} : memref<32x2x8xf32, #tpu.memory_space<vmem>>, vector<32x2x8xf32>,
    %12 = arith.addf %5, %7 : vector<32x2x8xf32>
    %c0_16 = arith.constant 0 : index
    %c0_17 = arith.constant 0 : index
    %c0_18 = arith.constant 0 : index
    %13 = vector.load %arg6[%c0_16, %c0_17, %c0_18] : memref<32x2x8xf32, #tpu.memory_space<vmem>>, vector<32x2x8xf32>
    tpu.vector_store %arg6[%c0_16, %c0_17, %c0_18], %12 {strides = array<i32>} : memref<32x2x8xf32, #tpu.memory_space<vmem>>, vector<32x2x8xf32>,
    return
  }
  func.func @transform_0(%arg0: i32) -> (i32, i32, i32) {
    %c0_i32 = arith.constant 0 : i32
    %c0_i32_0 = arith.constant 0 : i32
    %c0_i32_1 = arith.constant 0 : i32
    %c0_i32_2 = arith.constant 0 : i32
    return %c0_i32, %c0_i32_0, %c0_i32_1 : i32, i32, i32
  }
  func.func @transform_1(%arg0: i32) -> (i32, i32, i32) {
    %c0_i32 = arith.constant 0 : i32
    %c0_i32_0 = arith.constant 0 : i32
    %c0_i32_1 = arith.constant 0 : i32
    %c0_i32_2 = arith.constant 0 : i32
    return %c0_i32, %c0_i32_0, %c0_i32_1 : i32, i32, i32
  }
  func.func @transform_2(%arg0: i32) -> (i32, i32, i32) {
    %c0_i32 = arith.constant 0 : i32
    %c0_i32_0 = arith.constant 0 : i32
    %c0_i32_1 = arith.constant 0 : i32
    %c0_i32_2 = arith.constant 0 : i32
    return %c0_i32, %c0_i32_0, %c0_i32_1 : i32, i32, i32
  }
  func.func @transform_3(%arg0: i32) -> (i32, i32, i32) {
    %c0_i32 = arith.constant 0 : i32
    %c0_i32_0 = arith.constant 0 : i32
    %c0_i32_1 = arith.constant 0 : i32
    %c0_i32_2 = arith.constant 0 : i32
    return %c0_i32, %c0_i32_0, %c0_i32_1 : i32, i32, i32
  }
  func.func @transform_4(%arg0: i32) -> (i32, i32, i32) {
    %c0_i32 = arith.constant 0 : i32
    %c0_i32_0 = arith.constant 0 : i32
    %c0_i32_1 = arith.constant 0 : i32
    %c0_i32_2 = arith.constant 0 : i32
    return %c0_i32, %c0_i32_0, %c0_i32_1 : i32, i32, i32
  }
  func.func @transform_5(%arg0: i32) -> (i32, i32, i32) {
    %c0_i32 = arith.constant 0 : i32
    %c0_i32_0 = arith.constant 0 : i32
    %c0_i32_1 = arith.constant 0 : i32
    %c0_i32_2 = arith.constant 0 : i32
    return %c0_i32, %c0_i32_0, %c0_i32_1 : i32, i32, i32
  }
}

module attributes {stable_mosaic.version = 11 : i64} {
  func.func @_pw_add_stats_kernel(%arg0: i32, %arg1: memref<8x1024xf32, #tpu.memory_space<vmem>>, %arg2: memref<8x1024xf32, #tpu.memory_space<vmem>>, %arg3: memref<8x8xf32, #tpu.memory_space<vmem>>, %arg4: memref<8x1xf32, #tpu.memory_space<vmem>>, %arg5: memref<8x1024xf32, #tpu.memory_space<vmem>>, %arg6: memref<1x8x2xf32, #tpu.memory_space<vmem>>) attributes {dimension_semantics = [#tpu.dimension_semantics<parallel>], iteration_bounds = array<i64: 1>, scalar_prefetch = 0 : i64, scratch_operands = 0 : i64, tpu.core_type = #tpu.core_type<tc>, window_params = [{transform_indices = @transform_0, window_bounds = array<i64: 8, 1024>}, {transform_indices = @transform_1, window_bounds = array<i64: 8, 1024>}, {pipeline_mode = #tpu.pipeline_mode<synchronous>, transform_indices = @transform_2, window_bounds = array<i64: 8, 8>}, {pipeline_mode = #tpu.pipeline_mode<synchronous>, transform_indices = @transform_3, window_bounds = array<i64: 8, 1>}, {transform_indices = @transform_4, window_bounds = array<i64: 8, 1024>}, {transform_indices = @transform_5, window_bounds = array<i64: 1, 8, 2>}]} {
    %c0 = arith.constant 0 : index
    %c0_0 = arith.constant 0 : index
    %0 = vector.load %arg3[%c0, %c0_0] : memref<8x8xf32, #tpu.memory_space<vmem>>, vector<8x8xf32>
    %c0_1 = arith.constant 0 : index
    %c0_2 = arith.constant 0 : index
    %1 = vector.load %arg2[%c0_1, %c0_2] : memref<8x1024xf32, #tpu.memory_space<vmem>>, vector<8x1024xf32>
    %cst = arith.constant dense<0.000000e+00> : vector<8x1024xf32>
    %2 = tpu.matmul %0, %1, %cst {dimension_numbers = #tpu.dot_dimension_numbers<[1], [0], [0], [1], [0, 0, 1, 1], [], []>} : vector<8x8xf32>, vector<8x1024xf32>, vector<8x1024xf32> -> vector<8x1024xf32>
    %c0_3 = arith.constant 0 : index
    %c0_4 = arith.constant 0 : index
    %3 = vector.load %arg4[%c0_3, %c0_4] : memref<8x1xf32, #tpu.memory_space<vmem>>, vector<8x1xf32>
    %4 = vector.broadcast %3 : vector<8x1xf32> to vector<8x1024xf32>
    %5 = arith.addf %2, %4 : vector<8x1024xf32>
    %c0_5 = arith.constant 0 : index
    %c0_6 = arith.constant 0 : index
    %6 = vector.load %arg1[%c0_5, %c0_6] : memref<8x1024xf32, #tpu.memory_space<vmem>>, vector<8x1024xf32>
    %7 = arith.addf %6, %5 : vector<8x1024xf32>
    %c0_7 = arith.constant 0 : index
    %c0_8 = arith.constant 0 : index
    %8 = vector.load %arg5[%c0_7, %c0_8] : memref<8x1024xf32, #tpu.memory_space<vmem>>, vector<8x1024xf32>
    tpu.vector_store %arg5[%c0_7, %c0_8], %7 {strides = array<i32>} : memref<8x1024xf32, #tpu.memory_space<vmem>>, vector<8x1024xf32>,
    %cst_9 = arith.constant dense<0.000000e+00> : vector<8xf32>
    %9 = vector.multi_reduction <add>, %7, %cst_9 [1] : vector<8x1024xf32> to vector<8xf32>
    %10 = vector.shape_cast %9 : vector<8xf32> to vector<8x1xf32>
    %c0_10 = arith.constant 0 : index
    %c0_11 = arith.constant 0 : index
    %c0_12 = arith.constant 0 : index
    %11 = vector.load %arg6[%c0_10, %c0_11, %c0_12] : memref<1x8x2xf32, #tpu.memory_space<vmem>>, vector<1x8x1xf32>
    %12 = vector.shape_cast %11 : vector<1x8x1xf32> to vector<8x1xf32>
    %13 = vector.shape_cast %10 : vector<8x1xf32> to vector<1x8x1xf32>
    tpu.vector_store %arg6[%c0_10, %c0_11, %c0_12], %13 {strides = array<i32>} : memref<1x8x2xf32, #tpu.memory_space<vmem>>, vector<1x8x1xf32>,
    %14 = arith.mulf %7, %7 : vector<8x1024xf32>
    %cst_13 = arith.constant dense<0.000000e+00> : vector<8xf32>
    %15 = vector.multi_reduction <add>, %14, %cst_13 [1] : vector<8x1024xf32> to vector<8xf32>
    %16 = vector.shape_cast %15 : vector<8xf32> to vector<8x1xf32>
    %c0_14 = arith.constant 0 : index
    %c0_15 = arith.constant 0 : index
    %c1 = arith.constant 1 : index
    %17 = vector.load %arg6[%c0_14, %c0_15, %c1] : memref<1x8x2xf32, #tpu.memory_space<vmem>>, vector<1x8x1xf32>
    %18 = vector.shape_cast %17 : vector<1x8x1xf32> to vector<8x1xf32>
    %19 = vector.shape_cast %16 : vector<8x1xf32> to vector<1x8x1xf32>
    tpu.vector_store %arg6[%c0_14, %c0_15, %c1], %19 {strides = array<i32>} : memref<1x8x2xf32, #tpu.memory_space<vmem>>, vector<1x8x1xf32>,
    return
  }
  func.func @transform_0(%arg0: i32) -> (i32, i32) {
    %c0_i32 = arith.constant 0 : i32
    %c0_i32_0 = arith.constant 0 : i32
    return %c0_i32, %arg0 : i32, i32
  }
  func.func @transform_1(%arg0: i32) -> (i32, i32) {
    %c0_i32 = arith.constant 0 : i32
    %c0_i32_0 = arith.constant 0 : i32
    return %c0_i32, %arg0 : i32, i32
  }
  func.func @transform_2(%arg0: i32) -> (i32, i32) {
    %c0_i32 = arith.constant 0 : i32
    %c0_i32_0 = arith.constant 0 : i32
    %c0_i32_1 = arith.constant 0 : i32
    return %c0_i32, %c0_i32_0 : i32, i32
  }
  func.func @transform_3(%arg0: i32) -> (i32, i32) {
    %c0_i32 = arith.constant 0 : i32
    %c0_i32_0 = arith.constant 0 : i32
    %c0_i32_1 = arith.constant 0 : i32
    return %c0_i32, %c0_i32_0 : i32, i32
  }
  func.func @transform_4(%arg0: i32) -> (i32, i32) {
    %c0_i32 = arith.constant 0 : i32
    %c0_i32_0 = arith.constant 0 : i32
    return %c0_i32, %arg0 : i32, i32
  }
  func.func @transform_5(%arg0: i32) -> (i32, i32, i32) {
    %c0_i32 = arith.constant 0 : i32
    %c0_i32_0 = arith.constant 0 : i32
    %c0_i32_1 = arith.constant 0 : i32
    return %arg0, %c0_i32, %c0_i32_0 : i32, i32, i32
  }
}

module attributes {stable_mosaic.version = 11 : i64} {
  func.func @_bn_kernel(%arg0: i32, %arg1: memref<8x1024xf32, #tpu.memory_space<vmem>>, %arg2: memref<8x1xf32, #tpu.memory_space<vmem>>, %arg3: memref<8x1xf32, #tpu.memory_space<vmem>>, %arg4: memref<8x1024xf32, #tpu.memory_space<vmem>>) attributes {dimension_semantics = [#tpu.dimension_semantics<parallel>], iteration_bounds = array<i64: 1>, scalar_prefetch = 0 : i64, scratch_operands = 0 : i64, tpu.core_type = #tpu.core_type<tc>, window_params = [{transform_indices = @transform_0, window_bounds = array<i64: 8, 1024>}, {pipeline_mode = #tpu.pipeline_mode<synchronous>, transform_indices = @transform_1, window_bounds = array<i64: 8, 1>}, {pipeline_mode = #tpu.pipeline_mode<synchronous>, transform_indices = @transform_2, window_bounds = array<i64: 8, 1>}, {transform_indices = @transform_3, window_bounds = array<i64: 8, 1024>}]} {
    %c0 = arith.constant 0 : index
    %c0_0 = arith.constant 0 : index
    %0 = vector.load %arg1[%c0, %c0_0] : memref<8x1024xf32, #tpu.memory_space<vmem>>, vector<8x1024xf32>
    %c0_1 = arith.constant 0 : index
    %c0_2 = arith.constant 0 : index
    %1 = vector.load %arg2[%c0_1, %c0_2] : memref<8x1xf32, #tpu.memory_space<vmem>>, vector<8x1xf32>
    %2 = vector.broadcast %1 : vector<8x1xf32> to vector<8x1024xf32>
    %3 = arith.subf %0, %2 : vector<8x1024xf32>
    %c0_3 = arith.constant 0 : index
    %c0_4 = arith.constant 0 : index
    %4 = vector.load %arg3[%c0_3, %c0_4] : memref<8x1xf32, #tpu.memory_space<vmem>>, vector<8x1xf32>
    %5 = vector.broadcast %4 : vector<8x1xf32> to vector<8x1024xf32>
    %6 = arith.mulf %3, %5 : vector<8x1024xf32>
    %cst = arith.constant 0.000000e+00 : f32
    %7 = vector.broadcast %cst : f32 to vector<8x1024xf32>
    %8 = arith.maximumf %6, %7 : vector<8x1024xf32>
    %c0_5 = arith.constant 0 : index
    %c0_6 = arith.constant 0 : index
    %9 = vector.load %arg4[%c0_5, %c0_6] : memref<8x1024xf32, #tpu.memory_space<vmem>>, vector<8x1024xf32>
    tpu.vector_store %arg4[%c0_5, %c0_6], %8 {strides = array<i32>} : memref<8x1024xf32, #tpu.memory_space<vmem>>, vector<8x1024xf32>,
    return
  }
  func.func @transform_0(%arg0: i32) -> (i32, i32) {
    %c0_i32 = arith.constant 0 : i32
    %c0_i32_0 = arith.constant 0 : i32
    return %c0_i32, %arg0 : i32, i32
  }
  func.func @transform_1(%arg0: i32) -> (i32, i32) {
    %c0_i32 = arith.constant 0 : i32
    %c0_i32_0 = arith.constant 0 : i32
    %c0_i32_1 = arith.constant 0 : i32
    return %c0_i32, %c0_i32_0 : i32, i32
  }
  func.func @transform_2(%arg0: i32) -> (i32, i32) {
    %c0_i32 = arith.constant 0 : i32
    %c0_i32_0 = arith.constant 0 : i32
    %c0_i32_1 = arith.constant 0 : i32
    return %c0_i32, %c0_i32_0 : i32, i32
  }
  func.func @transform_3(%arg0: i32) -> (i32, i32) {
    %c0_i32 = arith.constant 0 : i32
    %c0_i32_0 = arith.constant 0 : i32
    return %c0_i32, %arg0 : i32, i32
  }
}

module attributes {stable_mosaic.version = 11 : i64} {
  func.func @_bn_kernel(%arg0: i32, %arg1: memref<8x1024xf32, #tpu.memory_space<vmem>>, %arg2: memref<8x1xf32, #tpu.memory_space<vmem>>, %arg3: memref<8x1xf32, #tpu.memory_space<vmem>>, %arg4: memref<8x1024xf32, #tpu.memory_space<vmem>>) attributes {dimension_semantics = [#tpu.dimension_semantics<parallel>], iteration_bounds = array<i64: 1>, scalar_prefetch = 0 : i64, scratch_operands = 0 : i64, tpu.core_type = #tpu.core_type<tc>, window_params = [{transform_indices = @transform_0, window_bounds = array<i64: 8, 1024>}, {pipeline_mode = #tpu.pipeline_mode<synchronous>, transform_indices = @transform_1, window_bounds = array<i64: 8, 1>}, {pipeline_mode = #tpu.pipeline_mode<synchronous>, transform_indices = @transform_2, window_bounds = array<i64: 8, 1>}, {transform_indices = @transform_3, window_bounds = array<i64: 8, 1024>}]} {
    %c0 = arith.constant 0 : index
    %c0_0 = arith.constant 0 : index
    %0 = vector.load %arg1[%c0, %c0_0] : memref<8x1024xf32, #tpu.memory_space<vmem>>, vector<8x1024xf32>
    %c0_1 = arith.constant 0 : index
    %c0_2 = arith.constant 0 : index
    %1 = vector.load %arg2[%c0_1, %c0_2] : memref<8x1xf32, #tpu.memory_space<vmem>>, vector<8x1xf32>
    %2 = vector.broadcast %1 : vector<8x1xf32> to vector<8x1024xf32>
    %3 = arith.subf %0, %2 : vector<8x1024xf32>
    %c0_3 = arith.constant 0 : index
    %c0_4 = arith.constant 0 : index
    %4 = vector.load %arg3[%c0_3, %c0_4] : memref<8x1xf32, #tpu.memory_space<vmem>>, vector<8x1xf32>
    %5 = vector.broadcast %4 : vector<8x1xf32> to vector<8x1024xf32>
    %6 = arith.mulf %3, %5 : vector<8x1024xf32>
    %c0_5 = arith.constant 0 : index
    %c0_6 = arith.constant 0 : index
    %7 = vector.load %arg4[%c0_5, %c0_6] : memref<8x1024xf32, #tpu.memory_space<vmem>>, vector<8x1024xf32>
    tpu.vector_store %arg4[%c0_5, %c0_6], %6 {strides = array<i32>} : memref<8x1024xf32, #tpu.memory_space<vmem>>, vector<8x1024xf32>,
    return
  }
  func.func @transform_0(%arg0: i32) -> (i32, i32) {
    %c0_i32 = arith.constant 0 : i32
    %c0_i32_0 = arith.constant 0 : i32
    return %c0_i32, %arg0 : i32, i32
  }
  func.func @transform_1(%arg0: i32) -> (i32, i32) {
    %c0_i32 = arith.constant 0 : i32
    %c0_i32_0 = arith.constant 0 : i32
    %c0_i32_1 = arith.constant 0 : i32
    return %c0_i32, %c0_i32_0 : i32, i32
  }
  func.func @transform_2(%arg0: i32) -> (i32, i32) {
    %c0_i32 = arith.constant 0 : i32
    %c0_i32_0 = arith.constant 0 : i32
    %c0_i32_1 = arith.constant 0 : i32
    return %c0_i32, %c0_i32_0 : i32, i32
  }
  func.func @transform_3(%arg0: i32) -> (i32, i32) {
    %c0_i32 = arith.constant 0 : i32
    %c0_i32_0 = arith.constant 0 : i32
    return %c0_i32, %arg0 : i32, i32
  }
}

module attributes {stable_mosaic.version = 11 : i64} {
  func.func @_head_kernel(%arg0: i32, %arg1: memref<8x1024xf32, #tpu.memory_space<vmem>>, %arg2: memref<128x8xf32, #tpu.memory_space<vmem>>, %arg3: memref<128x1xf32, #tpu.memory_space<vmem>>, %arg4: memref<1x128xf32, #tpu.memory_space<vmem>>, %arg5: memref<1x1xf32, #tpu.memory_space<vmem>>, %arg6: memref<1x1024xf32, #tpu.memory_space<vmem>>) attributes {dimension_semantics = [#tpu.dimension_semantics<parallel>], iteration_bounds = array<i64: 1>, scalar_prefetch = 0 : i64, scratch_operands = 0 : i64, tpu.core_type = #tpu.core_type<tc>, window_params = [{transform_indices = @transform_0, window_bounds = array<i64: 8, 1024>}, {pipeline_mode = #tpu.pipeline_mode<synchronous>, transform_indices = @transform_1, window_bounds = array<i64: 128, 8>}, {pipeline_mode = #tpu.pipeline_mode<synchronous>, transform_indices = @transform_2, window_bounds = array<i64: 128, 1>}, {pipeline_mode = #tpu.pipeline_mode<synchronous>, transform_indices = @transform_3, window_bounds = array<i64: 1, 128>}, {pipeline_mode = #tpu.pipeline_mode<synchronous>, transform_indices = @transform_4, window_bounds = array<i64: 1, 1>}, {transform_indices = @transform_5, window_bounds = array<i64: 1, 1024>}]} {
    %c0 = arith.constant 0 : index
    %c0_0 = arith.constant 0 : index
    %0 = vector.load %arg2[%c0, %c0_0] : memref<128x8xf32, #tpu.memory_space<vmem>>, vector<128x8xf32>
    %c0_1 = arith.constant 0 : index
    %c0_2 = arith.constant 0 : index
    %1 = vector.load %arg1[%c0_1, %c0_2] : memref<8x1024xf32, #tpu.memory_space<vmem>>, vector<8x1024xf32>
    %cst = arith.constant dense<0.000000e+00> : vector<128x1024xf32>
    %2 = tpu.matmul %0, %1, %cst {dimension_numbers = #tpu.dot_dimension_numbers<[1], [0], [0], [1], [0, 0, 1, 1], [], []>} : vector<128x8xf32>, vector<8x1024xf32>, vector<128x1024xf32> -> vector<128x1024xf32>
    %c0_3 = arith.constant 0 : index
    %c0_4 = arith.constant 0 : index
    %3 = vector.load %arg3[%c0_3, %c0_4] : memref<128x1xf32, #tpu.memory_space<vmem>>, vector<128x1xf32>
    %4 = vector.broadcast %3 : vector<128x1xf32> to vector<128x1024xf32>
    %5 = arith.addf %2, %4 : vector<128x1024xf32>
    %cst_5 = arith.constant 0.000000e+00 : f32
    %6 = vector.broadcast %cst_5 : f32 to vector<128x1024xf32>
    %7 = arith.maximumf %5, %6 : vector<128x1024xf32>
    %c0_6 = arith.constant 0 : index
    %c0_7 = arith.constant 0 : index
    %8 = vector.load %arg4[%c0_6, %c0_7] : memref<1x128xf32, #tpu.memory_space<vmem>>, vector<1x128xf32>
    %cst_8 = arith.constant dense<0.000000e+00> : vector<1x1024xf32>
    %9 = tpu.matmul %8, %7, %cst_8 {dimension_numbers = #tpu.dot_dimension_numbers<[1], [0], [0], [1], [0, 0, 1, 1], [], []>} : vector<1x128xf32>, vector<128x1024xf32>, vector<1x1024xf32> -> vector<1x1024xf32>
    %c0_9 = arith.constant 0 : index
    %c0_10 = arith.constant 0 : index
    %10 = vector.load %arg5[%c0_9, %c0_10] : memref<1x1xf32, #tpu.memory_space<vmem>>, vector<1x1xf32>
    %11 = vector.broadcast %10 : vector<1x1xf32> to vector<1x1024xf32>
    %12 = arith.addf %9, %11 : vector<1x1024xf32>
    %c0_11 = arith.constant 0 : index
    %c0_12 = arith.constant 0 : index
    %13 = vector.load %arg6[%c0_11, %c0_12] : memref<1x1024xf32, #tpu.memory_space<vmem>>, vector<1x1024xf32>
    tpu.vector_store %arg6[%c0_11, %c0_12], %12 {strides = array<i32>} : memref<1x1024xf32, #tpu.memory_space<vmem>>, vector<1x1024xf32>,
    return
  }
  func.func @transform_0(%arg0: i32) -> (i32, i32) {
    %c0_i32 = arith.constant 0 : i32
    %c0_i32_0 = arith.constant 0 : i32
    return %c0_i32, %arg0 : i32, i32
  }
  func.func @transform_1(%arg0: i32) -> (i32, i32) {
    %c0_i32 = arith.constant 0 : i32
    %c0_i32_0 = arith.constant 0 : i32
    %c0_i32_1 = arith.constant 0 : i32
    return %c0_i32, %c0_i32_0 : i32, i32
  }
  func.func @transform_2(%arg0: i32) -> (i32, i32) {
    %c0_i32 = arith.constant 0 : i32
    %c0_i32_0 = arith.constant 0 : i32
    %c0_i32_1 = arith.constant 0 : i32
    return %c0_i32, %c0_i32_0 : i32, i32
  }
  func.func @transform_3(%arg0: i32) -> (i32, i32) {
    %c0_i32 = arith.constant 0 : i32
    %c0_i32_0 = arith.constant 0 : i32
    %c0_i32_1 = arith.constant 0 : i32
    return %c0_i32, %c0_i32_0 : i32, i32
  }
  func.func @transform_4(%arg0: i32) -> (i32, i32) {
    %c0_i32 = arith.constant 0 : i32
    %c0_i32_0 = arith.constant 0 : i32
    %c0_i32_1 = arith.constant 0 : i32
    return %c0_i32, %c0_i32_0 : i32, i32
  }
  func.func @transform_5(%arg0: i32) -> (i32, i32) {
    %c0_i32 = arith.constant 0 : i32
    %c0_i32_0 = arith.constant 0 : i32
    return %c0_i32, %arg0 : i32, i32
  }
}

</mosaic_0001>

<llo_original>
// kernel: simple_block2d_forward.14
$region0: #{simple_block2d_forward.14}
  #allocation0 [shape = 'u32[]', space=smem, size = 0x4, offset = 0x4, fixed_abs, tag = 'smem constant byte address 0x4 - core index']
  #allocation1 [shape = 'u32[144,128]{1,0:T(1,128)}', space=vmem, size = 0x12000, scoped, tag = 'internal scratch']
  %s0 = inlined_call_operand.vmem [shape: f32[4,1024], index: 0, kind: input, shape index: {}]
  %s1 = inlined_call_operand.vmem [shape: f32[8,4], index: 1, kind: input, shape index: {}]
  %s2 = inlined_call_operand.vmem [shape: f32[8,1], index: 2, kind: input, shape index: {}]
  %s3 = inlined_call_operand.vmem [shape: f32[8,1024], index: 3, kind: output, shape index: {}]
  %s4 = sld [smem:[#allocation0]]
  $region22: #{simple_block2d_forward.14} parent=0
    _
  %s6 = ssub.s32 1, %s4
  %s7 = scalar_select 0, %s6, %s4
  // Predicated region
  $region2: #{simple_block2d_forward.14} parent=0 // pred_check
    _
  $region3: #{simple_block2d_forward.14} parent=0 // pred_check_branch
    %9 = sbr.rel (0) target = $region5
  $region4: #{simple_block2d_forward.14} parent=0 // pred_region
    _
  $region5: #{simple_block2d_forward.14} parent=0 // pred_fallthru
    _
  // Predicated region
  $region6: #{simple_block2d_forward.14} parent=0 // pred_check
    _
  $region7: #{simple_block2d_forward.14} parent=0 // pred_check_branch
    %11 = sbr.rel (0) target = $region9
  $region8: #{simple_block2d_forward.14} parent=0 // pred_region
    _
  $region9: #{simple_block2d_forward.14} parent=0 // pred_fallthru
    _
  // Predicated region
  $region10: #{simple_block2d_forward.14} parent=0 // pred_check
    _
  $region11: #{simple_block2d_forward.14} parent=0 // pred_check_branch
    %13 = sbr.rel (0) target = $region13
  $region12: #{simple_block2d_forward.14} parent=0 // pred_region
    _
  $region13: #{simple_block2d_forward.14} parent=0 // pred_fallthru
    _
  %v14 = vld [vmem:[%s1] sm:$0xff]
  %v15 = vld [vmem:[%s0] sm:$0xff]
  %v16 = vld [vmem:[%s0 + $0x8] sm:$0xff]
  %v17 = vld [vmem:[%s0 + $0x10] sm:$0xff]
  %v18 = vld [vmem:[%s0 + $0x18] sm:$0xff]
  %v19 = vld [vmem:[%s2] sm:$0xff]
  %21 = vset.pattern.permute.xlu0 0
  %22 = vperm.xlu0 %21, %v19
  %v23 = vpop.permute.xlu0 %22
  %v29 = vcombine.high %v15, %v15
  %v30 = vcombine.high %v16, %v16
  %v31 = vcombine.high %v17, %v17
  %v32 = vcombine.high %v18, %v18
  %vm33 = vcmask 31744
  %v35 = vsel %vm33, %v14, 0
  %vm37 = vcmask 1043456
  %v38 = vsel %vm37, %v15, 0
  %v40 = vsel %vm37, %v29, 0
  %v42 = vsel %vm37, %v16, 0
  %v44 = vsel %vm37, %v30, 0
  %v46 = vsel %vm37, %v17, 0
  %v48 = vsel %vm37, %v31, 0
  %v50 = vsel %vm37, %v18, 0
  %v52 = vsel %vm37, %v32, 0
  %54 = vmatprep.subr.mxu0 %v40
  %55 = vmatpush1.msra.mxu0 %v38
  %56 = vmatprep.subr.mxu0 0.0
  %57 = vmatpush1.msra.mxu0 0.0
  %58 = vmatprep.subr.mxu0 0.0
  %59 = vmatpush1.msra.mxu0 0.0
  %60 = vmatprep.subr.mxu0 0.0
  %61 = vmatpush1.msra.mxu0 0.0
  %62 = vmatprep.subr.mxu0 0.0
  %63 = vmatpush1.msra.mxu0 0.0
  %64 = vmatprep.subr.mxu0 0.0
  %65 = vmatpush1.msra.mxu0 0.0
  %66 = vmatprep.subr.mxu0 0.0
  %67 = vmatpush1.msra.mxu0 0.0
  %68 = vmatprep.subr.mxu0 0.0
  %69 = vmatpush1.msra.mxu0 0.0
  %70 = vmatprep.subr.mxu0 0.0
  %71 = vmatpush1.msra.mxu0 0.0
  %72 = vmatprep.subr.mxu0 0.0
  %73 = vmatpush1.msra.mxu0 0.0
  %74 = vmatprep.subr.mxu0 0.0
  %75 = vmatpush1.msra.mxu0 0.0
  %76 = vmatprep.subr.mxu0 0.0
  %77 = vmatpush1.msra.mxu0 0.0
  %78 = vmatprep.subr.mxu0 0.0
  %79 = vmatpush1.msra.mxu0 0.0
  %80 = vmatprep.subr.mxu0 0.0
  %81 = vmatpush1.msra.mxu0 0.0
  %82 = vmatprep.subr.mxu0 0.0
  %83 = vmatpush1.msra.mxu0 0.0
  %84 = vmatprep.subr.mxu0 0.0
  %85 = vmatpush1.msra.mxu0 0.0
  %86 = vmatprep.subr.mxu0 0.0
  %87 = vmatpush1.msra.mxu0 0.0
  %88 = vmatprep.subr.mxu0 0.0
  %89 = vmatpush1.msra.mxu0 0.0
  %90 = vmatprep.subr.mxu0 0.0
  %91 = vmatpush1.msra.mxu0 0.0
  %92 = vmatprep.subr.mxu0 0.0
  %93 = vmatpush1.msra.mxu0 0.0
  %94 = vmatprep.subr.mxu0 0.0
  %95 = vmatpush1.msra.mxu0 0.0
  %96 = vmatprep.subr.mxu0 0.0
  %97 = vmatpush1.msra.mxu0 0.0
  %98 = vmatprep.subr.mxu0 0.0
  %99 = vmatpush1.msra.mxu0 0.0
  %100 = vmatprep.subr.mxu0 0.0
  %101 = vmatpush1.msra.mxu0 0.0
  %102 = vmatprep.subr.mxu0 0.0
  %103 = vmatpush1.msra.mxu0 0.0
  %104 = vmatprep.subr.mxu0 0.0
  %105 = vmatpush1.msra.mxu0 0.0
  %106 = vmatprep.subr.mxu0 0.0
  %107 = vmatpush1.msra.mxu0 0.0
  %108 = vmatprep.subr.mxu0 0.0
  %109 = vmatpush1.msra.mxu0 0.0
  %110 = vmatprep.subr.mxu0 0.0
  %111 = vmatpush1.msra.mxu0 0.0
  %112 = vmatprep.subr.mxu0 0.0
  %113 = vmatpush1.msra.mxu0 0.0
  %114 = vmatprep.subr.mxu0 0.0
  %115 = vmatpush1.msra.mxu0 0.0
  %116 = vmatprep.subr.mxu0 0.0
  %117 = vmatpush1.msra.mxu0 0.0
  %118 = vmatprep.mubr.f32.mxu0 0.0
  %119 = vmatmul.mubr.f32.gmra.mrb[0].mxu0 %v35
  %v120 = vpop.f32.mrb[0].mxu0
  %v121 = vadd.f32 %v23, %v120
  %v122 = vpop.f32.mrb[0].mxu0
  %v123 = vadd.f32 %v23, %v122
  %124 = vdwg.mxu0
  %125 = vmatprep.subr.mxu0 %v44
  %126 = vmatpush1.msra.mxu0 %v42
  %127 = vmatprep.subr.mxu0 0.0
  %128 = vmatpush1.msra.mxu0 0.0
  %129 = vmatprep.subr.mxu0 0.0
  %130 = vmatpush1.msra.mxu0 0.0
  %131 = vmatprep.subr.mxu0 0.0
  %132 = vmatpush1.msra.mxu0 0.0
  %133 = vmatprep.subr.mxu0 0.0
  %134 = vmatpush1.msra.mxu0 0.0
  %135 = vmatprep.subr.mxu0 0.0
  %136 = vmatpush1.msra.mxu0 0.0
  %137 = vmatprep.subr.mxu0 0.0
  %138 = vmatpush1.msra.mxu0 0.0
  %139 = vmatprep.subr.mxu0 0.0
  %140 = vmatpush1.msra.mxu0 0.0
  %141 = vmatprep.subr.mxu0 0.0
  %142 = vmatpush1.msra.mxu0 0.0
  %143 = vmatprep.subr.mxu0 0.0
  %144 = vmatpush1.msra.mxu0 0.0
  %145 = vmatprep.subr.mxu0 0.0
  %146 = vmatpush1.msra.mxu0 0.0
  %147 = vmatprep.subr.mxu0 0.0
  %148 = vmatpush1.msra.mxu0 0.0
  %149 = vmatprep.subr.mxu0 0.0
  %150 = vmatpush1.msra.mxu0 0.0
  %151 = vmatprep.subr.mxu0 0.0
  %152 = vmatpush1.msra.mxu0 0.0
  %153 = vmatprep.subr.mxu0 0.0
  %154 = vmatpush1.msra.mxu0 0.0
  %155 = vmatprep.subr.mxu0 0.0
  %156 = vmatpush1.msra.mxu0 0.0
  %157 = vmatprep.subr.mxu0 0.0
  %158 = vmatpush1.msra.mxu0 0.0
  %159 = vmatprep.subr.mxu0 0.0
  %160 = vmatpush1.msra.mxu0 0.0
  %161 = vmatprep.subr.mxu0 0.0
  %162 = vmatpush1.msra.mxu0 0.0
  %163 = vmatprep.subr.mxu0 0.0
  %164 = vmatpush1.msra.mxu0 0.0
  %165 = vmatprep.subr.mxu0 0.0
  %166 = vmatpush1.msra.mxu0 0.0
  %167 = vmatprep.subr.mxu0 0.0
  %168 = vmatpush1.msra.mxu0 0.0
  %169 = vmatprep.subr.mxu0 0.0
  %170 = vmatpush1.msra.mxu0 0.0
  %171 = vmatprep.subr.mxu0 0.0
  %172 = vmatpush1.msra.mxu0 0.0
  %173 = vmatprep.subr.mxu0 0.0
  %174 = vmatpush1.msra.mxu0 0.0
  %175 = vmatprep.subr.mxu0 0.0
  %176 = vmatpush1.msra.mxu0 0.0
  %177 = vmatprep.subr.mxu0 0.0
  %178 = vmatpush1.msra.mxu0 0.0
  %179 = vmatprep.subr.mxu0 0.0
  %180 = vmatpush1.msra.mxu0 0.0
  %181 = vmatprep.subr.mxu0 0.0
  %182 = vmatpush1.msra.mxu0 0.0
  %183 = vmatprep.subr.mxu0 0.0
  %184 = vmatpush1.msra.mxu0 0.0
  %185 = vmatprep.subr.mxu0 0.0
  %186 = vmatpush1.msra.mxu0 0.0
  %187 = vmatprep.subr.mxu0 0.0
  %188 = vmatpush1.msra.mxu0 0.0
  %189 = vmatprep.mubr.f32.mxu0 0.0
  %190 = vmatmul.mubr.f32.gmra.mrb[0].mxu0 %v35
  %v191 = vpop.f32.mrb[0].mxu0
  %v192 = vadd.f32 %v23, %v191
  %v193 = vpop.f32.mrb[0].mxu0
  %v194 = vadd.f32 %v23, %v193
  %195 = vdwg.mxu0
  %196 = vmatprep.subr.mxu0 %v48
  %197 = vmatpush1.msra.mxu0 %v46
  %198 = vmatprep.subr.mxu0 0.0
  %199 = vmatpush1.msra.mxu0 0.0
  %200 = vmatprep.subr.mxu0 0.0
  %201 = vmatpush1.msra.mxu0 0.0
  %202 = vmatprep.subr.mxu0 0.0
  %203 = vmatpush1.msra.mxu0 0.0
  %204 = vmatprep.subr.mxu0 0.0
  %205 = vmatpush1.msra.mxu0 0.0
  %206 = vmatprep.subr.mxu0 0.0
  %207 = vmatpush1.msra.mxu0 0.0
  %208 = vmatprep.subr.mxu0 0.0
  %209 = vmatpush1.msra.mxu0 0.0
  %210 = vmatprep.subr.mxu0 0.0
  %211 = vmatpush1.msra.mxu0 0.0
  %212 = vmatprep.subr.mxu0 0.0
  %213 = vmatpush1.msra.mxu0 0.0
  %214 = vmatprep.subr.mxu0 0.0
  %215 = vmatpush1.msra.mxu0 0.0
  %216 = vmatprep.subr.mxu0 0.0
  %217 = vmatpush1.msra.mxu0 0.0
  %218 = vmatprep.subr.mxu0 0.0
  %219 = vmatpush1.msra.mxu0 0.0
  %220 = vmatprep.subr.mxu0 0.0
  %221 = vmatpush1.msra.mxu0 0.0
  %222 = vmatprep.subr.mxu0 0.0
  %223 = vmatpush1.msra.mxu0 0.0
  %224 = vmatprep.subr.mxu0 0.0
  %225 = vmatpush1.msra.mxu0 0.0
  %226 = vmatprep.subr.mxu0 0.0
  %227 = vmatpush1.msra.mxu0 0.0
  %228 = vmatprep.subr.mxu0 0.0
  %229 = vmatpush1.msra.mxu0 0.0
  %230 = vmatprep.subr.mxu0 0.0
  %231 = vmatpush1.msra.mxu0 0.0
  %232 = vmatprep.subr.mxu0 0.0
  %233 = vmatpush1.msra.mxu0 0.0
  %234 = vmatprep.subr.mxu0 0.0
  %235 = vmatpush1.msra.mxu0 0.0
  %236 = vmatprep.subr.mxu0 0.0
  %237 = vmatpush1.msra.mxu0 0.0
  %238 = vmatprep.subr.mxu0 0.0
  %239 = vmatpush1.msra.mxu0 0.0
  %240 = vmatprep.subr.mxu0 0.0
  %241 = vmatpush1.msra.mxu0 0.0
  %242 = vmatprep.subr.mxu0 0.0
  %243 = vmatpush1.msra.mxu0 0.0
  %244 = vmatprep.subr.mxu0 0.0
  %245 = vmatpush1.msra.mxu0 0.0
  %246 = vmatprep.subr.mxu0 0.0
  %247 = vmatpush1.msra.mxu0 0.0
  %248 = vmatprep.subr.mxu0 0.0
  %249 = vmatpush1.msra.mxu0 0.0
  %250 = vmatprep.subr.mxu0 0.0
  %251 = vmatpush1.msra.mxu0 0.0
  %252 = vmatprep.subr.mxu0 0.0
  %253 = vmatpush1.msra.mxu0 0.0
  %254 = vmatprep.subr.mxu0 0.0
  %255 = vmatpush1.msra.mxu0 0.0
  %256 = vmatprep.subr.mxu0 0.0
  %257 = vmatpush1.msra.mxu0 0.0
  %258 = vmatprep.subr.mxu0 0.0
  %259 = vmatpush1.msra.mxu0 0.0
  %260 = vmatprep.mubr.f32.mxu0 0.0
  %261 = vmatmul.mubr.f32.gmra.mrb[0].mxu0 %v35
  %v262 = vpop.f32.mrb[0].mxu0
  %v263 = vadd.f32 %v23, %v262
  %v264 = vpop.f32.mrb[0].mxu0
  %v265 = vadd.f32 %v23, %v264
  %266 = vdwg.mxu0
  %267 = vmatprep.subr.mxu0 %v52
  %268 = vmatpush1.msra.mxu0 %v50
  %269 = vmatprep.subr.mxu0 0.0
  %270 = vmatpush1.msra.mxu0 0.0
  %271 = vmatprep.subr.mxu0 0.0
  %272 = vmatpush1.msra.mxu0 0.0
  %273 = vmatprep.subr.mxu0 0.0
  %274 = vmatpush1.msra.mxu0 0.0
  %275 = vmatprep.subr.mxu0 0.0
  %276 = vmatpush1.msra.mxu0 0.0
  %277 = vmatprep.subr.mxu0 0.0
  %278 = vmatpush1.msra.mxu0 0.0
  %279 = vmatprep.subr.mxu0 0.0
  %280 = vmatpush1.msra.mxu0 0.0
  %281 = vmatprep.subr.mxu0 0.0
  %282 = vmatpush1.msra.mxu0 0.0
  %283 = vmatprep.subr.mxu0 0.0
  %284 = vmatpush1.msra.mxu0 0.0
  %285 = vmatprep.subr.mxu0 0.0
  %286 = vmatpush1.msra.mxu0 0.0
  %287 = vmatprep.subr.mxu0 0.0
  %288 = vmatpush1.msra.mxu0 0.0
  %289 = vmatprep.subr.mxu0 0.0
  %290 = vmatpush1.msra.mxu0 0.0
  %291 = vmatprep.subr.mxu0 0.0
  %292 = vmatpush1.msra.mxu0 0.0
  %293 = vmatprep.subr.mxu0 0.0
  %294 = vmatpush1.msra.mxu0 0.0
  %295 = vmatprep.subr.mxu0 0.0
  %296 = vmatpush1.msra.mxu0 0.0
  %297 = vmatprep.subr.mxu0 0.0
  %298 = vmatpush1.msra.mxu0 0.0
  %299 = vmatprep.subr.mxu0 0.0
  %300 = vmatpush1.msra.mxu0 0.0
  %301 = vmatprep.subr.mxu0 0.0
  %302 = vmatpush1.msra.mxu0 0.0
  %303 = vmatprep.subr.mxu0 0.0
  %304 = vmatpush1.msra.mxu0 0.0
  %305 = vmatprep.subr.mxu0 0.0
  %306 = vmatpush1.msra.mxu0 0.0
  %307 = vmatprep.subr.mxu0 0.0
  %308 = vmatpush1.msra.mxu0 0.0
  %309 = vmatprep.subr.mxu0 0.0
  %310 = vmatpush1.msra.mxu0 0.0
  %311 = vmatprep.subr.mxu0 0.0
  %312 = vmatpush1.msra.mxu0 0.0
  %313 = vmatprep.subr.mxu0 0.0
  %314 = vmatpush1.msra.mxu0 0.0
  %315 = vmatprep.subr.mxu0 0.0
  %316 = vmatpush1.msra.mxu0 0.0
  %317 = vmatprep.subr.mxu0 0.0
  %318 = vmatpush1.msra.mxu0 0.0
  %319 = vmatprep.subr.mxu0 0.0
  %320 = vmatpush1.msra.mxu0 0.0
  %321 = vmatprep.subr.mxu0 0.0
  %322 = vmatpush1.msra.mxu0 0.0
  %323 = vmatprep.subr.mxu0 0.0
  %324 = vmatpush1.msra.mxu0 0.0
  %325 = vmatprep.subr.mxu0 0.0
  %326 = vmatpush1.msra.mxu0 0.0
  %327 = vmatprep.subr.mxu0 0.0
  %328 = vmatpush1.msra.mxu0 0.0
  %329 = vmatprep.subr.mxu0 0.0
  %330 = vmatpush1.msra.mxu0 0.0
  %331 = vmatprep.mubr.f32.mxu0 0.0
  %332 = vmatmul.mubr.f32.gmra.mrb[0].mxu0 %v35
  %v333 = vpop.f32.mrb[0].mxu0
  %v334 = vadd.f32 %v23, %v333
  %v335 = vpop.f32.mrb[0].mxu0
  %v336 = vadd.f32 %v23, %v335
  %337 = vdwg.mxu0
  %338 = vst [vmem:[%s3] sm:$0xff] %v121
  %339 = vst [vmem:[%s3 + $0x8] sm:$0xff] %v123
  %340 = vst [vmem:[%s3 + $0x10] sm:$0xff] %v192
  %341 = vst [vmem:[%s3 + $0x18] sm:$0xff] %v194
  %342 = vst [vmem:[%s3 + $0x20] sm:$0xff] %v263
  %343 = vst [vmem:[%s3 + $0x28] sm:$0xff] %v265
  %344 = vst [vmem:[%s3 + $0x30] sm:$0xff] %v334
  %345 = vst [vmem:[%s3 + $0x38] sm:$0xff] %v336
  // Predicated region
  $region14: #{simple_block2d_forward.14} parent=0 // pred_check
    _
  $region15: #{simple_block2d_forward.14} parent=0 // pred_check_branch
    %347 = sbr.rel (0) target = $region17
  $region16: #{simple_block2d_forward.14} parent=0 // pred_region
    _
  $region17: #{simple_block2d_forward.14} parent=0 // pred_fallthru
    _
  // Predicated region
  $region18: #{simple_block2d_forward.14} parent=0 // pred_check
    _
  $region19: #{simple_block2d_forward.14} parent=0 // pred_check_branch
    %349 = sbr.rel (0) target = $region21
  $region20: #{simple_block2d_forward.14} parent=0 // pred_region
    _
  $region21: #{simple_block2d_forward.14} parent=0 // pred_fallthru
    _

// kernel: simple_block2d_forward.15
$region0: #{simple_block2d_forward.15}
  #allocation0 [shape = 'u32[]', space=smem, size = 0x4, offset = 0x4, fixed_abs, tag = 'smem constant byte address 0x4 - core index']
  #allocation1 [shape = 'u32[144,128]{1,0:T(1,128)}', space=vmem, size = 0x12000, scoped, tag = 'internal scratch']
  %s0 = inlined_call_operand.vmem [shape: f32[32,2,8], index: 0, kind: input, shape index: {}]
  %s1 = inlined_call_operand.vmem [shape: f32[32,2,8], index: 1, kind: input, shape index: {}]
  %s2 = inlined_call_operand.vmem [shape: f32[32,8,8], index: 2, kind: input, shape index: {}]
  %s3 = inlined_call_operand.vmem [shape: f32[32,8,8], index: 3, kind: input, shape index: {}]
  %s4 = inlined_call_operand.vmem [shape: f32[32,2,8], index: 4, kind: output, shape index: {0}]
  %s5 = inlined_call_operand.vmem [shape: f32[32,2,8], index: 5, kind: output, shape index: {1}]
  %6 = xla_tuple %s4, %s5
  %s7 = sld [smem:[#allocation0]]
  $region34: #{simple_block2d_forward.15} parent=0
    _
  %s9 = ssub.s32 1, %s7
  %s10 = scalar_select 0, %s9, %s7
  // Predicated region
  $region2: #{simple_block2d_forward.15} parent=0 // pred_check
    _
  $region3: #{simple_block2d_forward.15} parent=0 // pred_check_branch
    %12 = sbr.rel (0) target = $region5
  $region4: #{simple_block2d_forward.15} parent=0 // pred_region
    _
  $region5: #{simple_block2d_forward.15} parent=0 // pred_fallthru
    _
  // Predicated region
  $region6: #{simple_block2d_forward.15} parent=0 // pred_check
    _
  $region7: #{simple_block2d_forward.15} parent=0 // pred_check_branch
    %14 = sbr.rel (0) target = $region9
  $region8: #{simple_block2d_forward.15} parent=0 // pred_region
    _
  $region9: #{simple_block2d_forward.15} parent=0 // pred_fallthru
    _
  // Predicated region
  $region10: #{simple_block2d_forward.15} parent=0 // pred_check
    _
  $region11: #{simple_block2d_forward.15} parent=0 // pred_check_branch
    %16 = sbr.rel (0) target = $region13
  $region12: #{simple_block2d_forward.15} parent=0 // pred_region
    _
  $region13: #{simple_block2d_forward.15} parent=0 // pred_fallthru
    _
  // Predicated region
  $region14: #{simple_block2d_forward.15} parent=0 // pred_check
    _
  $region15: #{simple_block2d_forward.15} parent=0 // pred_check_branch
    %18 = sbr.rel (0) target = $region17
  $region16: #{simple_block2d_forward.15} parent=0 // pred_region
    _
  $region17: #{simple_block2d_forward.15} parent=0 // pred_fallthru
    _
  %v19 = vld [vmem:[%s0] sm:$0x3]
  %v20 = vld [vmem:[%s0 + $0x2] sm:$0x3]
  %v21 = vld [vmem:[%s0 + $0x4] sm:$0x3]
  %v22 = vld [vmem:[%s0 + $0x6] sm:$0x3]
  %v23 = vld [vmem:[%s0 + $0x8] sm:$0x3]
  %v24 = vld [vmem:[%s0 + $0xa] sm:$0x3]
  %v25 = vld [vmem:[%s0 + $0xc] sm:$0x3]
  %v26 = vld [vmem:[%s0 + $0xe] sm:$0x3]
  %v27 = vld [vmem:[%s0 + $0x10] sm:$0x3]
  %v28 = vld [vmem:[%s0 + $0x12] sm:$0x3]
  %v29 = vld [vmem:[%s0 + $0x14] sm:$0x3]
  %v30 = vld [vmem:[%s0 + $0x16] sm:$0x3]
  %v31 = vld [vmem:[%s0 + $0x18] sm:$0x3]
  %v32 = vld [vmem:[%s0 + $0x1a] sm:$0x3]
  %v33 = vld [vmem:[%s0 + $0x1c] sm:$0x3]
  %v34 = vld [vmem:[%s0 + $0x1e] sm:$0x3]
  %v35 = vld [vmem:[%s0 + $0x20] sm:$0x3]
  %v36 = vld [vmem:[%s0 + $0x22] sm:$0x3]
  %v37 = vld [vmem:[%s0 + $0x24] sm:$0x3]
  %v38 = vld [vmem:[%s0 + $0x26] sm:$0x3]
  %v39 = vld [vmem:[%s0 + $0x28] sm:$0x3]
  %v40 = vld [vmem:[%s0 + $0x2a] sm:$0x3]
  %v41 = vld [vmem:[%s0 + $0x2c] sm:$0x3]
  %v42 = vld [vmem:[%s0 + $0x2e] sm:$0x3]
  %v43 = vld [vmem:[%s0 + $0x30] sm:$0x3]
  %v44 = vld [vmem:[%s0 + $0x32] sm:$0x3]
  %v45 = vld [vmem:[%s0 + $0x34] sm:$0x3]
  %v46 = vld [vmem:[%s0 + $0x36] sm:$0x3]
  %v47 = vld [vmem:[%s0 + $0x38] sm:$0x3]
  %v48 = vld [vmem:[%s0 + $0x3a] sm:$0x3]
  %v49 = vld [vmem:[%s0 + $0x3c] sm:$0x3]
  %v50 = vld [vmem:[%s0 + $0x3e] sm:$0x3]
  %v51 = vld [vmem:[%s1] sm:$0x3]
  %v52 = vld [vmem:[%s1 + $0x2] sm:$0x3]
  %v53 = vld [vmem:[%s1 + $0x4] sm:$0x3]
  %v54 = vld [vmem:[%s1 + $0x6] sm:$0x3]
  %v55 = vld [vmem:[%s1 + $0x8] sm:$0x3]
  %v56 = vld [vmem:[%s1 + $0xa] sm:$0x3]
  %v57 = vld [vmem:[%s1 + $0xc] sm:$0x3]
  %v58 = vld [vmem:[%s1 + $0xe] sm:$0x3]
  %v59 = vld [vmem:[%s1 + $0x10] sm:$0x3]
  %v60 = vld [vmem:[%s1 + $0x12] sm:$0x3]
  %v61 = vld [vmem:[%s1 + $0x14] sm:$0x3]
  %v62 = vld [vmem:[%s1 + $0x16] sm:$0x3]
  %v63 = vld [vmem:[%s1 + $0x18] sm:$0x3]
  %v64 = vld [vmem:[%s1 + $0x1a] sm:$0x3]
  %v65 = vld [vmem:[%s1 + $0x1c] sm:$0x3]
  %v66 = vld [vmem:[%s1 + $0x1e] sm:$0x3]
  %v67 = vld [vmem:[%s1 + $0x20] sm:$0x3]
  %v68 = vld [vmem:[%s1 + $0x22] sm:$0x3]
  %v69 = vld [vmem:[%s1 + $0x24] sm:$0x3]
  %v70 = vld [vmem:[%s1 + $0x26] sm:$0x3]
  %v71 = vld [vmem:[%s1 + $0x28] sm:$0x3]
  %v72 = vld [vmem:[%s1 + $0x2a] sm:$0x3]
  %v73 = vld [vmem:[%s1 + $0x2c] sm:$0x3]
  %v74 = vld [vmem:[%s1 + $0x2e] sm:$0x3]
  %v75 = vld [vmem:[%s1 + $0x30] sm:$0x3]
  %v76 = vld [vmem:[%s1 + $0x32] sm:$0x3]
  %v77 = vld [vmem:[%s1 + $0x34] sm:$0x3]
  %v78 = vld [vmem:[%s1 + $0x36] sm:$0x3]
  %v79 = vld [vmem:[%s1 + $0x38] sm:$0x3]
  %v80 = vld [vmem:[%s1 + $0x3a] sm:$0x3]
  %v81 = vld [vmem:[%s1 + $0x3c] sm:$0x3]
  %v82 = vld [vmem:[%s1 + $0x3e] sm:$0x3]
  %v83 = vld [vmem:[%s2] sm:$0xff]
  %v84 = vld [vmem:[%s2 + $0x8] sm:$0xff]
  %v85 = vld [vmem:[%s2 + $0x10] sm:$0xff]
  %v86 = vld [vmem:[%s2 + $0x18] sm:$0xff]
  %v87 = vld [vmem:[%s2 + $0x20] sm:$0xff]
  %v88 = vld [vmem:[%s2 + $0x28] sm:$0xff]
  %v89 = vld [vmem:[%s2 + $0x30] sm:$0xff]
  %v90 = vld [vmem:[%s2 + $0x38] sm:$0xff]
  %v91 = vld [vmem:[%s2 + $0x40] sm:$0xff]
  %v92 = vld [vmem:[%s2 + $0x48] sm:$0xff]
  %v93 = vld [vmem:[%s2 + $0x50] sm:$0xff]
  %v94 = vld [vmem:[%s2 + $0x58] sm:$0xff]
  %v95 = vld [vmem:[%s2 + $0x60] sm:$0xff]
  %v96 = vld [vmem:[%s2 + $0x68] sm:$0xff]
  %v97 = vld [vmem:[%s2 + $0x70] sm:$0xff]
  %v98 = vld [vmem:[%s2 + $0x78] sm:$0xff]
  %v99 = vld [vmem:[%s2 + $0x80] sm:$0xff]
  %v100 = vld [vmem:[%s2 + $0x88] sm:$0xff]
  %v101 = vld [vmem:[%s2 + $0x90] sm:$0xff]
  %v102 = vld [vmem:[%s2 + $0x98] sm:$0xff]
  %v103 = vld [vmem:[%s2 + $0xa0] sm:$0xff]
  %v104 = vld [vmem:[%s2 + $0xa8] sm:$0xff]
  %v105 = vld [vmem:[%s2 + $0xb0] sm:$0xff]
  %v106 = vld [vmem:[%s2 + $0xb8] sm:$0xff]
  %v107 = vld [vmem:[%s2 + $0xc0] sm:$0xff]
  %v108 = vld [vmem:[%s2 + $0xc8] sm:$0xff]
  %v109 = vld [vmem:[%s2 + $0xd0] sm:$0xff]
  %v110 = vld [vmem:[%s2 + $0xd8] sm:$0xff]
  %v111 = vld [vmem:[%s2 + $0xe0] sm:$0xff]
  %v112 = vld [vmem:[%s2 + $0xe8] sm:$0xff]
  %v113 = vld [vmem:[%s2 + $0xf0] sm:$0xff]
  %v114 = vld [vmem:[%s2 + $0xf8] sm:$0xff]
  %v115 = vld [vmem:[%s3] sm:$0xff]
  %v116 = vld [vmem:[%s3 + $0x8] sm:$0xff]
  %v117 = vld [vmem:[%s3 + $0x10] sm:$0xff]
  %v118 = vld [vmem:[%s3 + $0x18] sm:$0xff]
  %v119 = vld [vmem:[%s3 + $0x20] sm:$0xff]
  %v120 = vld [vmem:[%s3 + $0x28] sm:$0xff]
  %v121 = vld [vmem:[%s3 + $0x30] sm:$0xff]
  %v122 = vld [vmem:[%s3 + $0x38] sm:$0xff]
  %v123 = vld [vmem:[%s3 + $0x40] sm:$0xff]
  %v124 = vld [vmem:[%s3 + $0x48] sm:$0xff]
  %v125 = vld [vmem:[%s3 + $0x50] sm:$0xff]
  %v126 = vld [vmem:[%s3 + $0x58] sm:$0xff]
  %v127 = vld [vmem:[%s3 + $0x60] sm:$0xff]
  %v128 = vld [vmem:[%s3 + $0x68] sm:$0xff]
  %v129 = vld [vmem:[%s3 + $0x70] sm:$0xff]
  %v130 = vld [vmem:[%s3 + $0x78] sm:$0xff]
  %v131 = vld [vmem:[%s3 + $0x80] sm:$0xff]
  %v132 = vld [vmem:[%s3 + $0x88] sm:$0xff]
  %v133 = vld [vmem:[%s3 + $0x90] sm:$0xff]
  %v134 = vld [vmem:[%s3 + $0x98] sm:$0xff]
  %v135 = vld [vmem:[%s3 + $0xa0] sm:$0xff]
  %v136 = vld [vmem:[%s3 + $0xa8] sm:$0xff]
  %v137 = vld [vmem:[%s3 + $0xb0] sm:$0xff]
  %v138 = vld [vmem:[%s3 + $0xb8] sm:$0xff]
  %v139 = vld [vmem:[%s3 + $0xc0] sm:$0xff]
  %v140 = vld [vmem:[%s3 + $0xc8] sm:$0xff]
  %v141 = vld [vmem:[%s3 + $0xd0] sm:$0xff]
  %v142 = vld [vmem:[%s3 + $0xd8] sm:$0xff]
  %v143 = vld [vmem:[%s3 + $0xe0] sm:$0xff]
  %v144 = vld [vmem:[%s3 + $0xe8] sm:$0xff]
  %v145 = vld [vmem:[%s3 + $0xf0] sm:$0xff]
  %v146 = vld [vmem:[%s3 + $0xf8] sm:$0xff]
  %v147 = vadd.f32 %v19, %v51
  %v148 = vadd.f32 %v20, %v52
  %v149 = vadd.f32 %v21, %v53
  %v150 = vadd.f32 %v22, %v54
  %v151 = vadd.f32 %v23, %v55
  %v152 = vadd.f32 %v24, %v56
  %v153 = vadd.f32 %v25, %v57
  %v154 = vadd.f32 %v26, %v58
  %v155 = vadd.f32 %v27, %v59
  %v156 = vadd.f32 %v28, %v60
  %v157 = vadd.f32 %v29, %v61
  %v158 = vadd.f32 %v30, %v62
  %v159 = vadd.f32 %v31, %v63
  %v160 = vadd.f32 %v32, %v64
  %v161 = vadd.f32 %v33, %v65
  %v162 = vadd.f32 %v34, %v66
  %v163 = vadd.f32 %v35, %v67
  %v164 = vadd.f32 %v36, %v68
  %v165 = vadd.f32 %v37, %v69
  %v166 = vadd.f32 %v38, %v70
  %v167 = vadd.f32 %v39, %v71
  %v168 = vadd.f32 %v40, %v72
  %v169 = vadd.f32 %v41, %v73
  %v170 = vadd.f32 %v42, %v74
  %v171 = vadd.f32 %v43, %v75
  %v172 = vadd.f32 %v44, %v76
  %v173 = vadd.f32 %v45, %v77
  %v174 = vadd.f32 %v46, %v78
  %v175 = vadd.f32 %v47, %v79
  %v176 = vadd.f32 %v48, %v80
  %v177 = vadd.f32 %v49, %v81
  %v178 = vadd.f32 %v50, %v82
  %vm179 = vcmask 64512
  %v181 = vsel %vm179, %v147, 0
  %v184 = vsel %vm179, %v83, 0
  %186 = vmatprep.subr.mxu0 0.0
  %187 = vmatpush1.xpose.msra.mxu0 %v184
  %188 = vmatprep.subr.mxu0 0.0
  %189 = vmatpush1.xpose.msra.mxu0 0.0
  %190 = vmatprep.subr.mxu0 0.0
  %191 = vmatpush1.xpose.msra.mxu0 0.0
  %192 = vmatprep.subr.mxu0 0.0
  %193 = vmatpush1.xpose.msra.mxu0 0.0
  %194 = vmatprep.subr.mxu0 0.0
  %195 = vmatpush1.xpose.msra.mxu0 0.0
  %196 = vmatprep.subr.mxu0 0.0
  %197 = vmatpush1.xpose.msra.mxu0 0.0
  %198 = vmatprep.subr.mxu0 0.0
  %199 = vmatpush1.xpose.msra.mxu0 0.0
  %200 = vmatprep.subr.mxu0 0.0
  %201 = vmatpush1.xpose.msra.mxu0 0.0
  %202 = vmatprep.subr.mxu0 0.0
  %203 = vmatpush1.xpose.msra.mxu0 0.0
  %204 = vmatprep.subr.mxu0 0.0
  %205 = vmatpush1.xpose.msra.mxu0 0.0
  %206 = vmatprep.subr.mxu0 0.0
  %207 = vmatpush1.xpose.msra.mxu0 0.0
  %208 = vmatprep.subr.mxu0 0.0
  %209 = vmatpush1.xpose.msra.mxu0 0.0
  %210 = vmatprep.subr.mxu0 0.0
  %211 = vmatpush1.xpose.msra.mxu0 0.0
  %212 = vmatprep.subr.mxu0 0.0
  %213 = vmatpush1.xpose.msra.mxu0 0.0
  %214 = vmatprep.subr.mxu0 0.0
  %215 = vmatpush1.xpose.msra.mxu0 0.0
  %216 = vmatprep.subr.mxu0 0.0
  %217 = vmatpush1.xpose.msra.mxu0 0.0
  %218 = vmatprep.subr.mxu0 0.0
  %219 = vmatpush1.xpose.msra.mxu0 0.0
  %220 = vmatprep.subr.mxu0 0.0
  %221 = vmatpush1.xpose.msra.mxu0 0.0
  %222 = vmatprep.subr.mxu0 0.0
  %223 = vmatpush1.xpose.msra.mxu0 0.0
  %224 = vmatprep.subr.mxu0 0.0
  %225 = vmatpush1.xpose.msra.mxu0 0.0
  %226 = vmatprep.subr.mxu0 0.0
  %227 = vmatpush1.xpose.msra.mxu0 0.0
  %228 = vmatprep.subr.mxu0 0.0
  %229 = vmatpush1.xpose.msra.mxu0 0.0
  %230 = vmatprep.subr.mxu0 0.0
  %231 = vmatpush1.xpose.msra.mxu0 0.0
  %232 = vmatprep.subr.mxu0 0.0
  %233 = vmatpush1.xpose.msra.mxu0 0.0
  %234 = vmatprep.subr.mxu0 0.0
  %235 = vmatpush1.xpose.msra.mxu0 0.0
  %236 = vmatprep.subr.mxu0 0.0
  %237 = vmatpush1.xpose.msra.mxu0 0.0
  %238 = vmatprep.subr.mxu0 0.0
  %239 = vmatpush1.xpose.msra.mxu0 0.0
  %240 = vmatprep.subr.mxu0 0.0
  %241 = vmatpush1.xpose.msra.mxu0 0.0
  %242 = vmatprep.subr.mxu0 0.0
  %243 = vmatpush1.xpose.msra.mxu0 0.0
  %244 = vmatprep.subr.mxu0 0.0
  %245 = vmatpush1.xpose.msra.mxu0 0.0
  %246 = vmatprep.subr.mxu0 0.0
  %247 = vmatpush1.xpose.msra.mxu0 0.0
  %248 = vmatprep.subr.mxu0 0.0
  %249 = vmatpush1.xpose.msra.mxu0 0.0
  %250 = vmatprep.mubr.f32.mxu0 0.0
  %251 = vmatmul.mubr.f32.gmra.mrb[0].mxu0 %v181
  %v252 = vpop.f32.mrb[0].mxu0
  %v253 = vadd.f32 0.0, %v252
  %v254 = vpop.f32.mrb[0].mxu0
  %255 = vdwg.mxu0
  %v257 = vsel %vm179, %v148, 0
  %v260 = vsel %vm179, %v84, 0
  %262 = vmatprep.subr.mxu0 0.0
  %263 = vmatpush1.xpose.msra.mxu0 %v260
  %264 = vmatprep.subr.mxu0 0.0
  %265 = vmatpush1.xpose.msra.mxu0 0.0
  %266 = vmatprep.subr.mxu0 0.0
  %267 = vmatpush1.xpose.msra.mxu0 0.0
  %268 = vmatprep.subr.mxu0 0.0
  %269 = vmatpush1.xpose.msra.mxu0 0.0
  %270 = vmatprep.subr.mxu0 0.0
  %271 = vmatpush1.xpose.msra.mxu0 0.0
  %272 = vmatprep.subr.mxu0 0.0
  %273 = vmatpush1.xpose.msra.mxu0 0.0
  %274 = vmatprep.subr.mxu0 0.0
  %275 = vmatpush1.xpose.msra.mxu0 0.0
  %276 = vmatprep.subr.mxu0 0.0
  %277 = vmatpush1.xpose.msra.mxu0 0.0
  %278 = vmatprep.subr.mxu0 0.0
  %279 = vmatpush1.xpose.msra.mxu0 0.0
  %280 = vmatprep.subr.mxu0 0.0
  %281 = vmatpush1.xpose.msra.mxu0 0.0
  %282 = vmatprep.subr.mxu0 0.0
  %283 = vmatpush1.xpose.msra.mxu0 0.0
  %284 = vmatprep.subr.mxu0 0.0
  %285 = vmatpush1.xpose.msra.mxu0 0.0
  %286 = vmatprep.subr.mxu0 0.0
  %287 = vmatpush1.xpose.msra.mxu0 0.0
  %288 = vmatprep.subr.mxu0 0.0
  %289 = vmatpush1.xpose.msra.mxu0 0.0
  %290 = vmatprep.subr.mxu0 0.0
  %291 = vmatpush1.xpose.msra.mxu0 0.0
  %292 = vmatprep.subr.mxu0 0.0
  %293 = vmatpush1.xpose.msra.mxu0 0.0
  %294 = vmatprep.subr.mxu0 0.0
  %295 = vmatpush1.xpose.msra.mxu0 0.0
  %296 = vmatprep.subr.mxu0 0.0
  %297 = vmatpush1.xpose.msra.mxu0 0.0
  %298 = vmatprep.subr.mxu0 0.0
  %299 = vmatpush1.xpose.msra.mxu0 0.0
  %300 = vmatprep.subr.mxu0 0.0
  %301 = vmatpush1.xpose.msra.mxu0 0.0
  %302 = vmatprep.subr.mxu0 0.0
  %303 = vmatpush1.xpose.msra.mxu0 0.0
  %304 = vmatprep.subr.mxu0 0.0
  %305 = vmatpush1.xpose.msra.mxu0 0.0
  %306 = vmatprep.subr.mxu0 0.0
  %307 = vmatpush1.xpose.msra.mxu0 0.0
  %308 = vmatprep.subr.mxu0 0.0
  %309 = vmatpush1.xpose.msra.mxu0 0.0
  %310 = vmatprep.subr.mxu0 0.0
  %311 = vmatpush1.xpose.msra.mxu0 0.0
  %312 = vmatprep.subr.mxu0 0.0
  %313 = vmatpush1.xpose.msra.mxu0 0.0
  %314 = vmatprep.subr.mxu0 0.0
  %315 = vmatpush1.xpose.msra.mxu0 0.0
  %316 = vmatprep.subr.mxu0 0.0
  %317 = vmatpush1.xpose.msra.mxu0 0.0
  %318 = vmatprep.subr.mxu0 0.0
  %319 = vmatpush1.xpose.msra.mxu0 0.0
  %320 = vmatprep.subr.mxu0 0.0
  %321 = vmatpush1.xpose.msra.mxu0 0.0
  %322 = vmatprep.subr.mxu0 0.0
  %323 = vmatpush1.xpose.msra.mxu0 0.0
  %324 = vmatprep.subr.mxu0 0.0
  %325 = vmatpush1.xpose.msra.mxu0 0.0
  %326 = vmatprep.mubr.f32.mxu0 0.0
  %327 = vmatmul.mubr.f32.gmra.mrb[0].mxu0 %v257
  %v328 = vpop.f32.mrb[0].mxu0
  %v329 = vadd.f32 0.0, %v328
  %v330 = vpop.f32.mrb[0].mxu0
  %331 = vdwg.mxu0
  %v333 = vsel %vm179, %v149, 0
  %v336 = vsel %vm179, %v85, 0
  %338 = vmatprep.subr.mxu0 0.0
  %339 = vmatpush1.xpose.msra.mxu0 %v336
  %340 = vmatprep.subr.mxu0 0.0
  %341 = vmatpush1.xpose.msra.mxu0 0.0
  %342 = vmatprep.subr.mxu0 0.0
  %343 = vmatpush1.xpose.msra.mxu0 0.0
  %344 = vmatprep.subr.mxu0 0.0
  %345 = vmatpush1.xpose.msra.mxu0 0.0
  %346 = vmatprep.subr.mxu0 0.0
  %347 = vmatpush1.xpose.msra.mxu0 0.0
  %348 = vmatprep.subr.mxu0 0.0
  %349 = vmatpush1.xpose.msra.mxu0 0.0
  %350 = vmatprep.subr.mxu0 0.0
  %351 = vmatpush1.xpose.msra.mxu0 0.0
  %352 = vmatprep.subr.mxu0 0.0
  %353 = vmatpush1.xpose.msra.mxu0 0.0
  %354 = vmatprep.subr.mxu0 0.0
  %355 = vmatpush1.xpose.msra.mxu0 0.0
  %356 = vmatprep.subr.mxu0 0.0
  %357 = vmatpush1.xpose.msra.mxu0 0.0
  %358 = vmatprep.subr.mxu0 0.0
  %359 = vmatpush1.xpose.msra.mxu0 0.0
  %360 = vmatprep.subr.mxu0 0.0
  %361 = vmatpush1.xpose.msra.mxu0 0.0
  %362 = vmatprep.subr.mxu0 0.0
  %363 = vmatpush1.xpose.msra.mxu0 0.0
  %364 = vmatprep.subr.mxu0 0.0
  %365 = vmatpush1.xpose.msra.mxu0 0.0
  %366 = vmatprep.subr.mxu0 0.0
  %367 = vmatpush1.xpose.msra.mxu0 0.0
  %368 = vmatprep.subr.mxu0 0.0
  %369 = vmatpush1.xpose.msra.mxu0 0.0
  %370 = vmatprep.subr.mxu0 0.0
  %371 = vmatpush1.xpose.msra.mxu0 0.0
  %372 = vmatprep.subr.mxu0 0.0
  %373 = vmatpush1.xpose.msra.mxu0 0.0
  %374 = vmatprep.subr.mxu0 0.0
  %375 = vmatpush1.xpose.msra.mxu0 0.0
  %376 = vmatprep.subr.mxu0 0.0
  %377 = vmatpush1.xpose.msra.mxu0 0.0
  %378 = vmatprep.subr.mxu0 0.0
  %379 = vmatpush1.xpose.msra.mxu0 0.0
  %380 = vmatprep.subr.mxu0 0.0
  %381 = vmatpush1.xpose.msra.mxu0 0.0
  %382 = vmatprep.subr.mxu0 0.0
  %383 = vmatpush1.xpose.msra.mxu0 0.0
  %384 = vmatprep.subr.mxu0 0.0
  %385 = vmatpush1.xpose.msra.mxu0 0.0
  %386 = vmatprep.subr.mxu0 0.0
  %387 = vmatpush1.xpose.msra.mxu0 0.0
  %388 = vmatprep.subr.mxu0 0.0
  %389 = vmatpush1.xpose.msra.mxu0 0.0
  %390 = vmatprep.subr.mxu0 0.0
  %391 = vmatpush1.xpose.msra.mxu0 0.0
  %392 = vmatprep.subr.mxu0 0.0
  %393 = vmatpush1.xpose.msra.mxu0 0.0
  %394 = vmatprep.subr.mxu0 0.0
  %395 = vmatpush1.xpose.msra.mxu0 0.0
  %396 = vmatprep.subr.mxu0 0.0
  %397 = vmatpush1.xpose.msra.mxu0 0.0
  %398 = vmatprep.subr.mxu0 0.0
  %399 = vmatpush1.xpose.msra.mxu0 0.0
  %400 = vmatprep.subr.mxu0 0.0
  %401 = vmatpush1.xpose.msra.mxu0 0.0
  %402 = vmatprep.mubr.f32.mxu0 0.0
  %403 = vmatmul.mubr.f32.gmra.mrb[0].mxu0 %v333
  %v404 = vpop.f32.mrb[0].mxu0
  %v405 = vadd.f32 0.0, %v404
  %v406 = vpop.f32.mrb[0].mxu0
  %407 = vdwg.mxu0
  %v409 = vsel %vm179, %v150, 0
  %v412 = vsel %vm179, %v86, 0
  %414 = vmatprep.subr.mxu0 0.0
  %415 = vmatpush1.xpose.msra.mxu0 %v412
  %416 = vmatprep.subr.mxu0 0.0
  %417 = vmatpush1.xpose.msra.mxu0 0.0
  %418 = vmatprep.subr.mxu0 0.0
  %419 = vmatpush1.xpose.msra.mxu0 0.0
  %420 = vmatprep.subr.mxu0 0.0
  %421 = vmatpush1.xpose.msra.mxu0 0.0
  %422 = vmatprep.subr.mxu0 0.0
  %423 = vmatpush1.xpose.msra.mxu0 0.0
  %424 = vmatprep.subr.mxu0 0.0
  %425 = vmatpush1.xpose.msra.mxu0 0.0
  %426 = vmatprep.subr.mxu0 0.0
  %427 = vmatpush1.xpose.msra.mxu0 0.0
  %428 = vmatprep.subr.mxu0 0.0
  %429 = vmatpush1.xpose.msra.mxu0 0.0
  %430 = vmatprep.subr.mxu0 0.0
  %431 = vmatpush1.xpose.msra.mxu0 0.0
  %432 = vmatprep.subr.mxu0 0.0
  %433 = vmatpush1.xpose.msra.mxu0 0.0
  %434 = vmatprep.subr.mxu0 0.0
  %435 = vmatpush1.xpose.msra.mxu0 0.0
  %436 = vmatprep.subr.mxu0 0.0
  %437 = vmatpush1.xpose.msra.mxu0 0.0
  %438 = vmatprep.subr.mxu0 0.0
  %439 = vmatpush1.xpose.msra.mxu0 0.0
  %440 = vmatprep.subr.mxu0 0.0
  %441 = vmatpush1.xpose.msra.mxu0 0.0
  %442 = vmatprep.subr.mxu0 0.0
  %443 = vmatpush1.xpose.msra.mxu0 0.0
  %444 = vmatprep.subr.mxu0 0.0
  %445 = vmatpush1.xpose.msra.mxu0 0.0
  %446 = vmatprep.subr.mxu0 0.0
  %447 = vmatpush1.xpose.msra.mxu0 0.0
  %448 = vmatprep.subr.mxu0 0.0
  %449 = vmatpush1.xpose.msra.mxu0 0.0
  %450 = vmatprep.subr.mxu0 0.0
  %451 = vmatpush1.xpose.msra.mxu0 0.0
  %452 = vmatprep.subr.mxu0 0.0
  %453 = vmatpush1.xpose.msra.mxu0 0.0
  %454 = vmatprep.subr.mxu0 0.0
  %455 = vmatpush1.xpose.msra.mxu0 0.0
  %456 = vmatprep.subr.mxu0 0.0
  %457 = vmatpush1.xpose.msra.mxu0 0.0
  %458 = vmatprep.subr.mxu0 0.0
  %459 = vmatpush1.xpose.msra.mxu0 0.0
  %460 = vmatprep.subr.mxu0 0.0
  %461 = vmatpush1.xpose.msra.mxu0 0.0
  %462 = vmatprep.subr.mxu0 0.0
  %463 = vmatpush1.xpose.msra.mxu0 0.0
  %464 = vmatprep.subr.mxu0 0.0
  %465 = vmatpush1.xpose.msra.mxu0 0.0
  %466 = vmatprep.subr.mxu0 0.0
  %467 = vmatpush1.xpose.msra.mxu0 0.0
  %468 = vmatprep.subr.mxu0 0.0
  %469 = vmatpush1.xpose.msra.mxu0 0.0
  %470 = vmatprep.subr.mxu0 0.0
  %471 = vmatpush1.xpose.msra.mxu0 0.0
  %472 = vmatprep.subr.mxu0 0.0
  %473 = vmatpush1.xpose.msra.mxu0 0.0
  %474 = vmatprep.subr.mxu0 0.0
  %475 = vmatpush1.xpose.msra.mxu0 0.0
  %476 = vmatprep.subr.mxu0 0.0
  %477 = vmatpush1.xpose.msra.mxu0 0.0
  %478 = vmatprep.mubr.f32.mxu0 0.0
  %479 = vmatmul.mubr.f32.gmra.mrb[0].mxu0 %v409
  %v480 = vpop.f32.mrb[0].mxu0
  %v481 = vadd.f32 0.0, %v480
  %v482 = vpop.f32.mrb[0].mxu0
  %483 = vdwg.mxu0
  %v485 = vsel %vm179, %v151, 0
  %v488 = vsel %vm179, %v87, 0
  %490 = vmatprep.subr.mxu0 0.0
  %491 = vmatpush1.xpose.msra.mxu0 %v488
  %492 = vmatprep.subr.mxu0 0.0
  %493 = vmatpush1.xpose.msra.mxu0 0.0
  %494 = vmatprep.subr.mxu0 0.0
  %495 = vmatpush1.xpose.msra.mxu0 0.0
  %496 = vmatprep.subr.mxu0 0.0
  %497 = vmatpush1.xpose.msra.mxu0 0.0
  %498 = vmatprep.subr.mxu0 0.0
  %499 = vmatpush1.xpose.msra.mxu0 0.0
  %500 = vmatprep.subr.mxu0 0.0
  %501 = vmatpush1.xpose.msra.mxu0 0.0
  %502 = vmatprep.subr.mxu0 0.0
  %503 = vmatpush1.xpose.msra.mxu0 0.0
  %504 = vmatprep.subr.mxu0 0.0
  %505 = vmatpush1.xpose.msra.mxu0 0.0
  %506 = vmatprep.subr.mxu0 0.0
  %507 = vmatpush1.xpose.msra.mxu0 0.0
  %508 = vmatprep.subr.mxu0 0.0
  %509 = vmatpush1.xpose.msra.mxu0 0.0
  %510 = vmatprep.subr.mxu0 0.0
  %511 = vmatpush1.xpose.msra.mxu0 0.0
  %512 = vmatprep.subr.mxu0 0.0
  %513 = vmatpush1.xpose.msra.mxu0 0.0
  %514 = vmatprep.subr.mxu0 0.0
  %515 = vmatpush1.xpose.msra.mxu0 0.0
  %516 = vmatprep.subr.mxu0 0.0
  %517 = vmatpush1.xpose.msra.mxu0 0.0
  %518 = vmatprep.subr.mxu0 0.0
  %519 = vmatpush1.xpose.msra.mxu0 0.0
  %520 = vmatprep.subr.mxu0 0.0
  %521 = vmatpush1.xpose.msra.mxu0 0.0
  %522 = vmatprep.subr.mxu0 0.0
  %523 = vmatpush1.xpose.msra.mxu0 0.0
  %524 = vmatprep.subr.mxu0 0.0
  %525 = vmatpush1.xpose.msra.mxu0 0.0
  %526 = vmatprep.subr.mxu0 0.0
  %527 = vmatpush1.xpose.msra.mxu0 0.0
  %528 = vmatprep.subr.mxu0 0.0
  %529 = vmatpush1.xpose.msra.mxu0 0.0
  %530 = vmatprep.subr.mxu0 0.0
  %531 = vmatpush1.xpose.msra.mxu0 0.0
  %532 = vmatprep.subr.mxu0 0.0
  %533 = vmatpush1.xpose.msra.mxu0 0.0
  %534 = vmatprep.subr.mxu0 0.0
  %535 = vmatpush1.xpose.msra.mxu0 0.0
  %536 = vmatprep.subr.mxu0 0.0
  %537 = vmatpush1.xpose.msra.mxu0 0.0
  %538 = vmatprep.subr.mxu0 0.0
  %539 = vmatpush1.xpose.msra.mxu0 0.0
  %540 = vmatprep.subr.mxu0 0.0
  %541 = vmatpush1.xpose.msra.mxu0 0.0
  %542 = vmatprep.subr.mxu0 0.0
  %543 = vmatpush1.xpose.msra.mxu0 0.0
  %544 = vmatprep.subr.mxu0 0.0
  %545 = vmatpush1.xpose.msra.mxu0 0.0
  %546 = vmatprep.subr.mxu0 0.0
  %547 = vmatpush1.xpose.msra.mxu0 0.0
  %548 = vmatprep.subr.mxu0 0.0
  %549 = vmatpush1.xpose.msra.mxu0 0.0
  %550 = vmatprep.subr.mxu0 0.0
  %551 = vmatpush1.xpose.msra.mxu0 0.0
  %552 = vmatprep.subr.mxu0 0.0
  %553 = vmatpush1.xpose.msra.mxu0 0.0
  %554 = vmatprep.mubr.f32.mxu0 0.0
  %555 = vmatmul.mubr.f32.gmra.mrb[0].mxu0 %v485
  %v556 = vpop.f32.mrb[0].mxu0
  %v557 = vadd.f32 0.0, %v556
  %v558 = vpop.f32.mrb[0].mxu0
  %559 = vdwg.mxu0
  %v561 = vsel %vm179, %v152, 0
  %v564 = vsel %vm179, %v88, 0
  %566 = vmatprep.subr.mxu0 0.0
  %567 = vmatpush1.xpose.msra.mxu0 %v564
  %568 = vmatprep.subr.mxu0 0.0
  %569 = vmatpush1.xpose.msra.mxu0 0.0
  %570 = vmatprep.subr.mxu0 0.0
  %571 = vmatpush1.xpose.msra.mxu0 0.0
  %572 = vmatprep.subr.mxu0 0.0
  %573 = vmatpush1.xpose.msra.mxu0 0.0
  %574 = vmatprep.subr.mxu0 0.0
  %575 = vmatpush1.xpose.msra.mxu0 0.0
  %576 = vmatprep.subr.mxu0 0.0
  %577 = vmatpush1.xpose.msra.mxu0 0.0
  %578 = vmatprep.subr.mxu0 0.0
  %579 = vmatpush1.xpose.msra.mxu0 0.0
  %580 = vmatprep.subr.mxu0 0.0
  %581 = vmatpush1.xpose.msra.mxu0 0.0
  %582 = vmatprep.subr.mxu0 0.0
  %583 = vmatpush1.xpose.msra.mxu0 0.0
  %584 = vmatprep.subr.mxu0 0.0
  %585 = vmatpush1.xpose.msra.mxu0 0.0
  %586 = vmatprep.subr.mxu0 0.0
  %587 = vmatpush1.xpose.msra.mxu0 0.0
  %588 = vmatprep.subr.mxu0 0.0
  %589 = vmatpush1.xpose.msra.mxu0 0.0
  %590 = vmatprep.subr.mxu0 0.0
  %591 = vmatpush1.xpose.msra.mxu0 0.0
  %592 = vmatprep.subr.mxu0 0.0
  %593 = vmatpush1.xpose.msra.mxu0 0.0
  %594 = vmatprep.subr.mxu0 0.0
  %595 = vmatpush1.xpose.msra.mxu0 0.0
  %596 = vmatprep.subr.mxu0 0.0
  %597 = vmatpush1.xpose.msra.mxu0 0.0
  %598 = vmatprep.subr.mxu0 0.0
  %599 = vmatpush1.xpose.msra.mxu0 0.0
  %600 = vmatprep.subr.mxu0 0.0
  %601 = vmatpush1.xpose.msra.mxu0 0.0
  %602 = vmatprep.subr.mxu0 0.0
  %603 = vmatpush1.xpose.msra.mxu0 0.0
  %604 = vmatprep.subr.mxu0 0.0
  %605 = vmatpush1.xpose.msra.mxu0 0.0
  %606 = vmatprep.subr.mxu0 0.0
  %607 = vmatpush1.xpose.msra.mxu0 0.0
  %608 = vmatprep.subr.mxu0 0.0
  %609 = vmatpush1.xpose.msra.mxu0 0.0
  %610 = vmatprep.subr.mxu0 0.0
  %611 = vmatpush1.xpose.msra.mxu0 0.0
  %612 = vmatprep.subr.mxu0 0.0
  %613 = vmatpush1.xpose.msra.mxu0 0.0
  %614 = vmatprep.subr.mxu0 0.0
  %615 = vmatpush1.xpose.msra.mxu0 0.0
  %616 = vmatprep.subr.mxu0 0.0
  %617 = vmatpush1.xpose.msra.mxu0 0.0
  %618 = vmatprep.subr.mxu0 0.0
  %619 = vmatpush1.xpose.msra.mxu0 0.0
  %620 = vmatprep.subr.mxu0 0.0
  %621 = vmatpush1.xpose.msra.mxu0 0.0
  %622 = vmatprep.subr.mxu0 0.0
  %623 = vmatpush1.xpose.msra.mxu0 0.0
  %624 = vmatprep.subr.mxu0 0.0
  %625 = vmatpush1.xpose.msra.mxu0 0.0
  %626 = vmatprep.subr.mxu0 0.0
  %627 = vmatpush1.xpose.msra.mxu0 0.0
  %628 = vmatprep.subr.mxu0 0.0
  %629 = vmatpush1.xpose.msra.mxu0 0.0
  %630 = vmatprep.mubr.f32.mxu0 0.0
  %631 = vmatmul.mubr.f32.gmra.mrb[0].mxu0 %v561
  %v632 = vpop.f32.mrb[0].mxu0
  %v633 = vadd.f32 0.0, %v632
  %v634 = vpop.f32.mrb[0].mxu0
  %635 = vdwg.mxu0
  %v637 = vsel %vm179, %v153, 0
  %v640 = vsel %vm179, %v89, 0
  %642 = vmatprep.subr.mxu0 0.0
  %643 = vmatpush1.xpose.msra.mxu0 %v640
  %644 = vmatprep.subr.mxu0 0.0
  %645 = vmatpush1.xpose.msra.mxu0 0.0
  %646 = vmatprep.subr.mxu0 0.0
  %647 = vmatpush1.xpose.msra.mxu0 0.0
  %648 = vmatprep.subr.mxu0 0.0
  %649 = vmatpush1.xpose.msra.mxu0 0.0
  %650 = vmatprep.subr.mxu0 0.0
  %651 = vmatpush1.xpose.msra.mxu0 0.0
  %652 = vmatprep.subr.mxu0 0.0
  %653 = vmatpush1.xpose.msra.mxu0 0.0
  %654 = vmatprep.subr.mxu0 0.0
  %655 = vmatpush1.xpose.msra.mxu0 0.0
  %656 = vmatprep.subr.mxu0 0.0
  %657 = vmatpush1.xpose.msra.mxu0 0.0
  %658 = vmatprep.subr.mxu0 0.0
  %659 = vmatpush1.xpose.msra.mxu0 0.0
  %660 = vmatprep.subr.mxu0 0.0
  %661 = vmatpush1.xpose.msra.mxu0 0.0
  %662 = vmatprep.subr.mxu0 0.0
  %663 = vmatpush1.xpose.msra.mxu0 0.0
  %664 = vmatprep.subr.mxu0 0.0
  %665 = vmatpush1.xpose.msra.mxu0 0.0
  %666 = vmatprep.subr.mxu0 0.0
  %667 = vmatpush1.xpose.msra.mxu0 0.0
  %668 = vmatprep.subr.mxu0 0.0
  %669 = vmatpush1.xpose.msra.mxu0 0.0
  %670 = vmatprep.subr.mxu0 0.0
  %671 = vmatpush1.xpose.msra.mxu0 0.0
  %672 = vmatprep.subr.mxu0 0.0
  %673 = vmatpush1.xpose.msra.mxu0 0.0
  %674 = vmatprep.subr.mxu0 0.0
  %675 = vmatpush1.xpose.msra.mxu0 0.0
  %676 = vmatprep.subr.mxu0 0.0
  %677 = vmatpush1.xpose.msra.mxu0 0.0
  %678 = vmatprep.subr.mxu0 0.0
  %679 = vmatpush1.xpose.msra.mxu0 0.0
  %680 = vmatprep.subr.mxu0 0.0
  %681 = vmatpush1.xpose.msra.mxu0 0.0
  %682 = vmatprep.subr.mxu0 0.0
  %683 = vmatpush1.xpose.msra.mxu0 0.0
  %684 = vmatprep.subr.mxu0 0.0
  %685 = vmatpush1.xpose.msra.mxu0 0.0
  %686 = vmatprep.subr.mxu0 0.0
  %687 = vmatpush1.xpose.msra.mxu0 0.0
  %688 = vmatprep.subr.mxu0 0.0
  %689 = vmatpush1.xpose.msra.mxu0 0.0
  %690 = vmatprep.subr.mxu0 0.0
  %691 = vmatpush1.xpose.msra.mxu0 0.0
  %692 = vmatprep.subr.mxu0 0.0
  %693 = vmatpush1.xpose.msra.mxu0 0.0
  %694 = vmatprep.subr.mxu0 0.0
  %695 = vmatpush1.xpose.msra.mxu0 0.0
  %696 = vmatprep.subr.mxu0 0.0
  %697 = vmatpush1.xpose.msra.mxu0 0.0
  %698 = vmatprep.subr.mxu0 0.0
  %699 = vmatpush1.xpose.msra.mxu0 0.0
  %700 = vmatprep.subr.mxu0 0.0
  %701 = vmatpush1.xpose.msra.mxu0 0.0
  %702 = vmatprep.subr.mxu0 0.0
  %703 = vmatpush1.xpose.msra.mxu0 0.0
  %704 = vmatprep.subr.mxu0 0.0
  %705 = vmatpush1.xpose.msra.mxu0 0.0
  %706 = vmatprep.mubr.f32.mxu0 0.0
  %707 = vmatmul.mubr.f32.gmra.mrb[0].mxu0 %v637
  %v708 = vpop.f32.mrb[0].mxu0
  %v709 = vadd.f32 0.0, %v708
  %v710 = vpop.f32.mrb[0].mxu0
  %711 = vdwg.mxu0
  %v713 = vsel %vm179, %v154, 0
  %v716 = vsel %vm179, %v90, 0
  %718 = vmatprep.subr.mxu0 0.0
  %719 = vmatpush1.xpose.msra.mxu0 %v716
  %720 = vmatprep.subr.mxu0 0.0
  %721 = vmatpush1.xpose.msra.mxu0 0.0
  %722 = vmatprep.subr.mxu0 0.0
  %723 = vmatpush1.xpose.msra.mxu0 0.0
  %724 = vmatprep.subr.mxu0 0.0
  %725 = vmatpush1.xpose.msra.mxu0 0.0
  %726 = vmatprep.subr.mxu0 0.0
  %727 = vmatpush1.xpose.msra.mxu0 0.0
  %728 = vmatprep.subr.mxu0 0.0
  %729 = vmatpush1.xpose.msra.mxu0 0.0
  %730 = vmatprep.subr.mxu0 0.0
  %731 = vmatpush1.xpose.msra.mxu0 0.0
  %732 = vmatprep.subr.mxu0 0.0
  %733 = vmatpush1.xpose.msra.mxu0 0.0
  %734 = vmatprep.subr.mxu0 0.0
  %735 = vmatpush1.xpose.msra.mxu0 0.0
  %736 = vmatprep.subr.mxu0 0.0
  %737 = vmatpush1.xpose.msra.mxu0 0.0
  %738 = vmatprep.subr.mxu0 0.0
  %739 = vmatpush1.xpose.msra.mxu0 0.0
  %740 = vmatprep.subr.mxu0 0.0
  %741 = vmatpush1.xpose.msra.mxu0 0.0
  %742 = vmatprep.subr.mxu0 0.0
  %743 = vmatpush1.xpose.msra.mxu0 0.0
  %744 = vmatprep.subr.mxu0 0.0
  %745 = vmatpush1.xpose.msra.mxu0 0.0
  %746 = vmatprep.subr.mxu0 0.0
  %747 = vmatpush1.xpose.msra.mxu0 0.0
  %748 = vmatprep.subr.mxu0 0.0
  %749 = vmatpush1.xpose.msra.mxu0 0.0
  %750 = vmatprep.subr.mxu0 0.0
  %751 = vmatpush1.xpose.msra.mxu0 0.0
  %752 = vmatprep.subr.mxu0 0.0
  %753 = vmatpush1.xpose.msra.mxu0 0.0
  %754 = vmatprep.subr.mxu0 0.0
  %755 = vmatpush1.xpose.msra.mxu0 0.0
  %756 = vmatprep.subr.mxu0 0.0
  %757 = vmatpush1.xpose.msra.mxu0 0.0
  %758 = vmatprep.subr.mxu0 0.0
  %759 = vmatpush1.xpose.msra.mxu0 0.0
  %760 = vmatprep.subr.mxu0 0.0
  %761 = vmatpush1.xpose.msra.mxu0 0.0
  %762 = vmatprep.subr.mxu0 0.0
  %763 = vmatpush1.xpose.msra.mxu0 0.0
  %764 = vmatprep.subr.mxu0 0.0
  %765 = vmatpush1.xpose.msra.mxu0 0.0
  %766 = vmatprep.subr.mxu0 0.0
  %767 = vmatpush1.xpose.msra.mxu0 0.0
  %768 = vmatprep.subr.mxu0 0.0
  %769 = vmatpush1.xpose.msra.mxu0 0.0
  %770 = vmatprep.subr.mxu0 0.0
  %771 = vmatpush1.xpose.msra.mxu0 0.0
  %772 = vmatprep.subr.mxu0 0.0
  %773 = vmatpush1.xpose.msra.mxu0 0.0
  %774 = vmatprep.subr.mxu0 0.0
  %775 = vmatpush1.xpose.msra.mxu0 0.0
  %776 = vmatprep.subr.mxu0 0.0
  %777 = vmatpush1.xpose.msra.mxu0 0.0
  %778 = vmatprep.subr.mxu0 0.0
  %779 = vmatpush1.xpose.msra.mxu0 0.0
  %780 = vmatprep.subr.mxu0 0.0
  %781 = vmatpush1.xpose.msra.mxu0 0.0
  %782 = vmatprep.mubr.f32.mxu0 0.0
  %783 = vmatmul.mubr.f32.gmra.mrb[0].mxu0 %v713
  %v784 = vpop.f32.mrb[0].mxu0
  %v785 = vadd.f32 0.0, %v784
  %v786 = vpop.f32.mrb[0].mxu0
  %787 = vdwg.mxu0
  %v789 = vsel %vm179, %v155, 0
  %v792 = vsel %vm179, %v91, 0
  %794 = vmatprep.subr.mxu0 0.0
  %795 = vmatpush1.xpose.msra.mxu0 %v792
  %796 = vmatprep.subr.mxu0 0.0
  %797 = vmatpush1.xpose.msra.mxu0 0.0
  %798 = vmatprep.subr.mxu0 0.0
  %799 = vmatpush1.xpose.msra.mxu0 0.0
  %800 = vmatprep.subr.mxu0 0.0
  %801 = vmatpush1.xpose.msra.mxu0 0.0
  %802 = vmatprep.subr.mxu0 0.0
  %803 = vmatpush1.xpose.msra.mxu0 0.0
  %804 = vmatprep.subr.mxu0 0.0
  %805 = vmatpush1.xpose.msra.mxu0 0.0
  %806 = vmatprep.subr.mxu0 0.0
  %807 = vmatpush1.xpose.msra.mxu0 0.0
  %808 = vmatprep.subr.mxu0 0.0
  %809 = vmatpush1.xpose.msra.mxu0 0.0
  %810 = vmatprep.subr.mxu0 0.0
  %811 = vmatpush1.xpose.msra.mxu0 0.0
  %812 = vmatprep.subr.mxu0 0.0
  %813 = vmatpush1.xpose.msra.mxu0 0.0
  %814 = vmatprep.subr.mxu0 0.0
  %815 = vmatpush1.xpose.msra.mxu0 0.0
  %816 = vmatprep.subr.mxu0 0.0
  %817 = vmatpush1.xpose.msra.mxu0 0.0
  %818 = vmatprep.subr.mxu0 0.0
  %819 = vmatpush1.xpose.msra.mxu0 0.0
  %820 = vmatprep.subr.mxu0 0.0
  %821 = vmatpush1.xpose.msra.mxu0 0.0
  %822 = vmatprep.subr.mxu0 0.0
  %823 = vmatpush1.xpose.msra.mxu0 0.0
  %824 = vmatprep.subr.mxu0 0.0
  %825 = vmatpush1.xpose.msra.mxu0 0.0
  %826 = vmatprep.subr.mxu0 0.0
  %827 = vmatpush1.xpose.msra.mxu0 0.0
  %828 = vmatprep.subr.mxu0 0.0
  %829 = vmatpush1.xpose.msra.mxu0 0.0
  %830 = vmatprep.subr.mxu0 0.0
  %831 = vmatpush1.xpose.msra.mxu0 0.0
  %832 = vmatprep.subr.mxu0 0.0
  %833 = vmatpush1.xpose.msra.mxu0 0.0
  %834 = vmatprep.subr.mxu0 0.0
  %835 = vmatpush1.xpose.msra.mxu0 0.0
  %836 = vmatprep.subr.mxu0 0.0
  %837 = vmatpush1.xpose.msra.mxu0 0.0
  %838 = vmatprep.subr.mxu0 0.0
  %839 = vmatpush1.xpose.msra.mxu0 0.0
  %840 = vmatprep.subr.mxu0 0.0
  %841 = vmatpush1.xpose.msra.mxu0 0.0
  %842 = vmatprep.subr.mxu0 0.0
  %843 = vmatpush1.xpose.msra.mxu0 0.0
  %844 = vmatprep.subr.mxu0 0.0
  %845 = vmatpush1.xpose.msra.mxu0 0.0
  %846 = vmatprep.subr.mxu0 0.0
  %847 = vmatpush1.xpose.msra.mxu0 0.0
  %848 = vmatprep.subr.mxu0 0.0
  %849 = vmatpush1.xpose.msra.mxu0 0.0
  %850 = vmatprep.subr.mxu0 0.0
  %851 = vmatpush1.xpose.msra.mxu0 0.0
  %852 = vmatprep.subr.mxu0 0.0
  %853 = vmatpush1.xpose.msra.mxu0 0.0
  %854 = vmatprep.subr.mxu0 0.0
  %855 = vmatpush1.xpose.msra.mxu0 0.0
  %856 = vmatprep.subr.mxu0 0.0
  %857 = vmatpush1.xpose.msra.mxu0 0.0
  %858 = vmatprep.mubr.f32.mxu0 0.0
  %859 = vmatmul.mubr.f32.gmra.mrb[0].mxu0 %v789
  %v860 = vpop.f32.mrb[0].mxu0
  %v861 = vadd.f32 0.0, %v860
  %v862 = vpop.f32.mrb[0].mxu0
  %863 = vdwg.mxu0
  %v865 = vsel %vm179, %v156, 0
  %v868 = vsel %vm179, %v92, 0
  %870 = vmatprep.subr.mxu0 0.0
  %871 = vmatpush1.xpose.msra.mxu0 %v868
  %872 = vmatprep.subr.mxu0 0.0
  %873 = vmatpush1.xpose.msra.mxu0 0.0
  %874 = vmatprep.subr.mxu0 0.0
  %875 = vmatpush1.xpose.msra.mxu0 0.0
  %876 = vmatprep.subr.mxu0 0.0
  %877 = vmatpush1.xpose.msra.mxu0 0.0
  %878 = vmatprep.subr.mxu0 0.0
  %879 = vmatpush1.xpose.msra.mxu0 0.0
  %880 = vmatprep.subr.mxu0 0.0
  %881 = vmatpush1.xpose.msra.mxu0 0.0
  %882 = vmatprep.subr.mxu0 0.0
  %883 = vmatpush1.xpose.msra.mxu0 0.0
  %884 = vmatprep.subr.mxu0 0.0
  %885 = vmatpush1.xpose.msra.mxu0 0.0
  %886 = vmatprep.subr.mxu0 0.0
  %887 = vmatpush1.xpose.msra.mxu0 0.0
  %888 = vmatprep.subr.mxu0 0.0
  %889 = vmatpush1.xpose.msra.mxu0 0.0
  %890 = vmatprep.subr.mxu0 0.0
  %891 = vmatpush1.xpose.msra.mxu0 0.0
  %892 = vmatprep.subr.mxu0 0.0
  %893 = vmatpush1.xpose.msra.mxu0 0.0
  %894 = vmatprep.subr.mxu0 0.0
  %895 = vmatpush1.xpose.msra.mxu0 0.0
  %896 = vmatprep.subr.mxu0 0.0
  %897 = vmatpush1.xpose.msra.mxu0 0.0
  %898 = vmatprep.subr.mxu0 0.0
  %899 = vmatpush1.xpose.msra.mxu0 0.0
  %900 = vmatprep.subr.mxu0 0.0
  %901 = vmatpush1.xpose.msra.mxu0 0.0
  %902 = vmatprep.subr.mxu0 0.0
  %903 = vmatpush1.xpose.msra.mxu0 0.0
  %904 = vmatprep.subr.mxu0 0.0
  %905 = vmatpush1.xpose.msra.mxu0 0.0
  %906 = vmatprep.subr.mxu0 0.0
  %907 = vmatpush1.xpose.msra.mxu0 0.0
  %908 = vmatprep.subr.mxu0 0.0
  %909 = vmatpush1.xpose.msra.mxu0 0.0
  %910 = vmatprep.subr.mxu0 0.0
  %911 = vmatpush1.xpose.msra.mxu0 0.0
  %912 = vmatprep.subr.mxu0 0.0
  %913 = vmatpush1.xpose.msra.mxu0 0.0
  %914 = vmatprep.subr.mxu0 0.0
  %915 = vmatpush1.xpose.msra.mxu0 0.0
  %916 = vmatprep.subr.mxu0 0.0
  %917 = vmatpush1.xpose.msra.mxu0 0.0
  %918 = vmatprep.subr.mxu0 0.0
  %919 = vmatpush1.xpose.msra.mxu0 0.0
  %920 = vmatprep.subr.mxu0 0.0
  %921 = vmatpush1.xpose.msra.mxu0 0.0
  %922 = vmatprep.subr.mxu0 0.0
  %923 = vmatpush1.xpose.msra.mxu0 0.0
  %924 = vmatprep.subr.mxu0 0.0
  %925 = vmatpush1.xpose.msra.mxu0 0.0
  %926 = vmatprep.subr.mxu0 0.0
  %927 = vmatpush1.xpose.msra.mxu0 0.0
  %928 = vmatprep.subr.mxu0 0.0
  %929 = vmatpush1.xpose.msra.mxu0 0.0
  %930 = vmatprep.subr.mxu0 0.0
  %931 = vmatpush1.xpose.msra.mxu0 0.0
  %932 = vmatprep.subr.mxu0 0.0
  %933 = vmatpush1.xpose.msra.mxu0 0.0
  %934 = vmatprep.mubr.f32.mxu0 0.0
  %935 = vmatmul.mubr.f32.gmra.mrb[0].mxu0 %v865
  %v936 = vpop.f32.mrb[0].mxu0
  %v937 = vadd.f32 0.0, %v936
  %v938 = vpop.f32.mrb[0].mxu0
  %939 = vdwg.mxu0
  %v941 = vsel %vm179, %v157, 0
  %v944 = vsel %vm179, %v93, 0
  %946 = vmatprep.subr.mxu0 0.0
  %947 = vmatpush1.xpose.msra.mxu0 %v944
  %948 = vmatprep.subr.mxu0 0.0
  %949 = vmatpush1.xpose.msra.mxu0 0.0
  %950 = vmatprep.subr.mxu0 0.0
  %951 = vmatpush1.xpose.msra.mxu0 0.0
  %952 = vmatprep.subr.mxu0 0.0
  %953 = vmatpush1.xpose.msra.mxu0 0.0
  %954 = vmatprep.subr.mxu0 0.0
  %955 = vmatpush1.xpose.msra.mxu0 0.0
  %956 = vmatprep.subr.mxu0 0.0
  %957 = vmatpush1.xpose.msra.mxu0 0.0
  %958 = vmatprep.subr.mxu0 0.0
  %959 = vmatpush1.xpose.msra.mxu0 0.0
  %960 = vmatprep.subr.mxu0 0.0
  %961 = vmatpush1.xpose.msra.mxu0 0.0
  %962 = vmatprep.subr.mxu0 0.0
  %963 = vmatpush1.xpose.msra.mxu0 0.0
  %964 = vmatprep.subr.mxu0 0.0
  %965 = vmatpush1.xpose.msra.mxu0 0.0
  %966 = vmatprep.subr.mxu0 0.0
  %967 = vmatpush1.xpose.msra.mxu0 0.0
  %968 = vmatprep.subr.mxu0 0.0
  %969 = vmatpush1.xpose.msra.mxu0 0.0
  %970 = vmatprep.subr.mxu0 0.0
  %971 = vmatpush1.xpose.msra.mxu0 0.0
  %972 = vmatprep.subr.mxu0 0.0
  %973 = vmatpush1.xpose.msra.mxu0 0.0
  %974 = vmatprep.subr.mxu0 0.0
  %975 = vmatpush1.xpose.msra.mxu0 0.0
  %976 = vmatprep.subr.mxu0 0.0
  %977 = vmatpush1.xpose.msra.mxu0 0.0
  %978 = vmatprep.subr.mxu0 0.0
  %979 = vmatpush1.xpose.msra.mxu0 0.0
  %980 = vmatprep.subr.mxu0 0.0
  %981 = vmatpush1.xpose.msra.mxu0 0.0
  %982 = vmatprep.subr.mxu0 0.0
  %983 = vmatpush1.xpose.msra.mxu0 0.0
  %984 = vmatprep.subr.mxu0 0.0
  %985 = vmatpush1.xpose.msra.mxu0 0.0
  %986 = vmatprep.subr.mxu0 0.0
  %987 = vmatpush1.xpose.msra.mxu0 0.0
  %988 = vmatprep.subr.mxu0 0.0
  %989 = vmatpush1.xpose.msra.mxu0 0.0
  %990 = vmatprep.subr.mxu0 0.0
  %991 = vmatpush1.xpose.msra.mxu0 0.0
  %992 = vmatprep.subr.mxu0 0.0
  %993 = vmatpush1.xpose.msra.mxu0 0.0
  %994 = vmatprep.subr.mxu0 0.0
  %995 = vmatpush1.xpose.msra.mxu0 0.0
  %996 = vmatprep.subr.mxu0 0.0
  %997 = vmatpush1.xpose.msra.mxu0 0.0
  %998 = vmatprep.subr.mxu0 0.0
  %999 = vmatpush1.xpose.msra.mxu0 0.0
  %1000 = vmatprep.subr.mxu0 0.0
  %1001 = vmatpush1.xpose.msra.mxu0 0.0
  %1002 = vmatprep.subr.mxu0 0.0
  %1003 = vmatpush1.xpose.msra.mxu0 0.0
  %1004 = vmatprep.subr.mxu0 0.0
  %1005 = vmatpush1.xpose.msra.mxu0 0.0
  %1006 = vmatprep.subr.mxu0 0.0
  %1007 = vmatpush1.xpose.msra.mxu0 0.0
  %1008 = vmatprep.subr.mxu0 0.0
  %1009 = vmatpush1.xpose.msra.mxu0 0.0
  %1010 = vmatprep.mubr.f32.mxu0 0.0
  %1011 = vmatmul.mubr.f32.gmra.mrb[0].mxu0 %v941
  %v1012 = vpop.f32.mrb[0].mxu0
  %v1013 = vadd.f32 0.0, %v1012
  %v1014 = vpop.f32.mrb[0].mxu0
  %1015 = vdwg.mxu0
  %v1017 = vsel %vm179, %v158, 0
  %v1020 = vsel %vm179, %v94, 0
  %1022 = vmatprep.subr.mxu0 0.0
  %1023 = vmatpush1.xpose.msra.mxu0 %v1020
  %1024 = vmatprep.subr.mxu0 0.0
  %1025 = vmatpush1.xpose.msra.mxu0 0.0
  %1026 = vmatprep.subr.mxu0 0.0
  %1027 = vmatpush1.xpose.msra.mxu0 0.0
  %1028 = vmatprep.subr.mxu0 0.0
  %1029 = vmatpush1.xpose.msra.mxu0 0.0
  %1030 = vmatprep.subr.mxu0 0.0
  %1031 = vmatpush1.xpose.msra.mxu0 0.0
  %1032 = vmatprep.subr.mxu0 0.0
  %1033 = vmatpush1.xpose.msra.mxu0 0.0
  %1034 = vmatprep.subr.mxu0 0.0
  %1035 = vmatpush1.xpose.msra.mxu0 0.0
  %1036 = vmatprep.subr.mxu0 0.0
  %1037 = vmatpush1.xpose.msra.mxu0 0.0
  %1038 = vmatprep.subr.mxu0 0.0
  %1039 = vmatpush1.xpose.msra.mxu0 0.0
  %1040 = vmatprep.subr.mxu0 0.0
  %1041 = vmatpush1.xpose.msra.mxu0 0.0
  %1042 = vmatprep.subr.mxu0 0.0
  %1043 = vmatpush1.xpose.msra.mxu0 0.0
  %1044 = vmatprep.subr.mxu0 0.0
  %1045 = vmatpush1.xpose.msra.mxu0 0.0
  %1046 = vmatprep.subr.mxu0 0.0
  %1047 = vmatpush1.xpose.msra.mxu0 0.0
  %1048 = vmatprep.subr.mxu0 0.0
  %1049 = vmatpush1.xpose.msra.mxu0 0.0
  %1050 = vmatprep.subr.mxu0 0.0
  %1051 = vmatpush1.xpose.msra.mxu0 0.0
  %1052 = vmatprep.subr.mxu0 0.0
  %1053 = vmatpush1.xpose.msra.mxu0 0.0
  %1054 = vmatprep.subr.mxu0 0.0
  %1055 = vmatpush1.xpose.msra.mxu0 0.0
  %1056 = vmatprep.subr.mxu0 0.0
  %1057 = vmatpush1.xpose.msra.mxu0 0.0
  %1058 = vmatprep.subr.mxu0 0.0
  %1059 = vmatpush1.xpose.msra.mxu0 0.0
  %1060 = vmatprep.subr.mxu0 0.0
  %1061 = vmatpush1.xpose.msra.mxu0 0.0
  %1062 = vmatprep.subr.mxu0 0.0
  %1063 = vmatpush1.xpose.msra.mxu0 0.0
  %1064 = vmatprep.subr.mxu0 0.0
  %1065 = vmatpush1.xpose.msra.mxu0 0.0
  %1066 = vmatprep.subr.mxu0 0.0
  %1067 = vmatpush1.xpose.msra.mxu0 0.0
  %1068 = vmatprep.subr.mxu0 0.0
  %1069 = vmatpush1.xpose.msra.mxu0 0.0
  %1070 = vmatprep.subr.mxu0 0.0
  %1071 = vmatpush1.xpose.msra.mxu0 0.0
  %1072 = vmatprep.subr.mxu0 0.0
  %1073 = vmatpush1.xpose.msra.mxu0 0.0
  %1074 = vmatprep.subr.mxu0 0.0
  %1075 = vmatpush1.xpose.msra.mxu0 0.0
  %1076 = vmatprep.subr.mxu0 0.0
  %1077 = vmatpush1.xpose.msra.mxu0 0.0
  %1078 = vmatprep.subr.mxu0 0.0
  %1079 = vmatpush1.xpose.msra.mxu0 0.0
  %1080 = vmatprep.subr.mxu0 0.0
  %1081 = vmatpush1.xpose.msra.mxu0 0.0
  %1082 = vmatprep.subr.mxu0 0.0
  %1083 = vmatpush1.xpose.msra.mxu0 0.0
  %1084 = vmatprep.subr.mxu0 0.0
  %1085 = vmatpush1.xpose.msra.mxu0 0.0
  %1086 = vmatprep.mubr.f32.mxu0 0.0
  %1087 = vmatmul.mubr.f32.gmra.mrb[0].mxu0 %v1017
  %v1088 = vpop.f32.mrb[0].mxu0
  %v1089 = vadd.f32 0.0, %v1088
  %v1090 = vpop.f32.mrb[0].mxu0
  %1091 = vdwg.mxu0
  %v1093 = vsel %vm179, %v159, 0
  %v1096 = vsel %vm179, %v95, 0
  %1098 = vmatprep.subr.mxu0 0.0
  %1099 = vmatpush1.xpose.msra.mxu0 %v1096
  %1100 = vmatprep.subr.mxu0 0.0
  %1101 = vmatpush1.xpose.msra.mxu0 0.0
  %1102 = vmatprep.subr.mxu0 0.0
  %1103 = vmatpush1.xpose.msra.mxu0 0.0
  %1104 = vmatprep.subr.mxu0 0.0
  %1105 = vmatpush1.xpose.msra.mxu0 0.0
  %1106 = vmatprep.subr.mxu0 0.0
  %1107 = vmatpush1.xpose.msra.mxu0 0.0
  %1108 = vmatprep.subr.mxu0 0.0
  %1109 = vmatpush1.xpose.msra.mxu0 0.0
  %1110 = vmatprep.subr.mxu0 0.0
  %1111 = vmatpush1.xpose.msra.mxu0 0.0
  %1112 = vmatprep.subr.mxu0 0.0
  %1113 = vmatpush1.xpose.msra.mxu0 0.0
  %1114 = vmatprep.subr.mxu0 0.0
  %1115 = vmatpush1.xpose.msra.mxu0 0.0
  %1116 = vmatprep.subr.mxu0 0.0
  %1117 = vmatpush1.xpose.msra.mxu0 0.0
  %1118 = vmatprep.subr.mxu0 0.0
  %1119 = vmatpush1.xpose.msra.mxu0 0.0
  %1120 = vmatprep.subr.mxu0 0.0
  %1121 = vmatpush1.xpose.msra.mxu0 0.0
  %1122 = vmatprep.subr.mxu0 0.0
  %1123 = vmatpush1.xpose.msra.mxu0 0.0
  %1124 = vmatprep.subr.mxu0 0.0
  %1125 = vmatpush1.xpose.msra.mxu0 0.0
  %1126 = vmatprep.subr.mxu0 0.0
  %1127 = vmatpush1.xpose.msra.mxu0 0.0
  %1128 = vmatprep.subr.mxu0 0.0
  %1129 = vmatpush1.xpose.msra.mxu0 0.0
  %1130 = vmatprep.subr.mxu0 0.0
  %1131 = vmatpush1.xpose.msra.mxu0 0.0
  %1132 = vmatprep.subr.mxu0 0.0
  %1133 = vmatpush1.xpose.msra.mxu0 0.0
  %1134 = vmatprep.subr.mxu0 0.0
  %1135 = vmatpush1.xpose.msra.mxu0 0.0
  %1136 = vmatprep.subr.mxu0 0.0
  %1137 = vmatpush1.xpose.msra.mxu0 0.0
  %1138 = vmatprep.subr.mxu0 0.0
  %1139 = vmatpush1.xpose.msra.mxu0 0.0
  %1140 = vmatprep.subr.mxu0 0.0
  %1141 = vmatpush1.xpose.msra.mxu0 0.0
  %1142 = vmatprep.subr.mxu0 0.0
  %1143 = vmatpush1.xpose.msra.mxu0 0.0
  %1144 = vmatprep.subr.mxu0 0.0
  %1145 = vmatpush1.xpose.msra.mxu0 0.0
  %1146 = vmatprep.subr.mxu0 0.0
  %1147 = vmatpush1.xpose.msra.mxu0 0.0
  %1148 = vmatprep.subr.mxu0 0.0
  %1149 = vmatpush1.xpose.msra.mxu0 0.0
  %1150 = vmatprep.subr.mxu0 0.0
  %1151 = vmatpush1.xpose.msra.mxu0 0.0
  %1152 = vmatprep.subr.mxu0 0.0
  %1153 = vmatpush1.xpose.msra.mxu0 0.0
  %1154 = vmatprep.subr.mxu0 0.0
  %1155 = vmatpush1.xpose.msra.mxu0 0.0
  %1156 = vmatprep.subr.mxu0 0.0
  %1157 = vmatpush1.xpose.msra.mxu0 0.0
  %1158 = vmatprep.subr.mxu0 0.0
  %1159 = vmatpush1.xpose.msra.mxu0 0.0
  %1160 = vmatprep.subr.mxu0 0.0
  %1161 = vmatpush1.xpose.msra.mxu0 0.0
  %1162 = vmatprep.mubr.f32.mxu0 0.0
  %1163 = vmatmul.mubr.f32.gmra.mrb[0].mxu0 %v1093
  %v1164 = vpop.f32.mrb[0].mxu0
  %v1165 = vadd.f32 0.0, %v1164
  %v1166 = vpop.f32.mrb[0].mxu0
  %1167 = vdwg.mxu0
  %v1169 = vsel %vm179, %v160, 0
  %v1172 = vsel %vm179, %v96, 0
  %1174 = vmatprep.subr.mxu0 0.0
  %1175 = vmatpush1.xpose.msra.mxu0 %v1172
  %1176 = vmatprep.subr.mxu0 0.0
  %1177 = vmatpush1.xpose.msra.mxu0 0.0
  %1178 = vmatprep.subr.mxu0 0.0
  %1179 = vmatpush1.xpose.msra.mxu0 0.0
  %1180 = vmatprep.subr.mxu0 0.0
  %1181 = vmatpush1.xpose.msra.mxu0 0.0
  %1182 = vmatprep.subr.mxu0 0.0
  %1183 = vmatpush1.xpose.msra.mxu0 0.0
  %1184 = vmatprep.subr.mxu0 0.0
  %1185 = vmatpush1.xpose.msra.mxu0 0.0
  %1186 = vmatprep.subr.mxu0 0.0
  %1187 = vmatpush1.xpose.msra.mxu0 0.0
  %1188 = vmatprep.subr.mxu0 0.0
  %1189 = vmatpush1.xpose.msra.mxu0 0.0
  %1190 = vmatprep.subr.mxu0 0.0
  %1191 = vmatpush1.xpose.msra.mxu0 0.0
  %1192 = vmatprep.subr.mxu0 0.0
  %1193 = vmatpush1.xpose.msra.mxu0 0.0
  %1194 = vmatprep.subr.mxu0 0.0
  %1195 = vmatpush1.xpose.msra.mxu0 0.0
  %1196 = vmatprep.subr.mxu0 0.0
  %1197 = vmatpush1.xpose.msra.mxu0 0.0
  %1198 = vmatprep.subr.mxu0 0.0
  %1199 = vmatpush1.xpose.msra.mxu0 0.0
  %1200 = vmatprep.subr.mxu0 0.0
  %1201 = vmatpush1.xpose.msra.mxu0 0.0
  %1202 = vmatprep.subr.mxu0 0.0
  %1203 = vmatpush1.xpose.msra.mxu0 0.0
  %1204 = vmatprep.subr.mxu0 0.0
  %1205 = vmatpush1.xpose.msra.mxu0 0.0
  %1206 = vmatprep.subr.mxu0 0.0
  %1207 = vmatpush1.xpose.msra.mxu0 0.0
  %1208 = vmatprep.subr.mxu0 0.0
  %1209 = vmatpush1.xpose.msra.mxu0 0.0
  %1210 = vmatprep.subr.mxu0 0.0
  %1211 = vmatpush1.xpose.msra.mxu0 0.0
  %1212 = vmatprep.subr.mxu0 0.0
  %1213 = vmatpush1.xpose.msra.mxu0 0.0
  %1214 = vmatprep.subr.mxu0 0.0
  %1215 = vmatpush1.xpose.msra.mxu0 0.0
  %1216 = vmatprep.subr.mxu0 0.0
  %1217 = vmatpush1.xpose.msra.mxu0 0.0
  %1218 = vmatprep.subr.mxu0 0.0
  %1219 = vmatpush1.xpose.msra.mxu0 0.0
  %1220 = vmatprep.subr.mxu0 0.0
  %1221 = vmatpush1.xpose.msra.mxu0 0.0
  %1222 = vmatprep.subr.mxu0 0.0
  %1223 = vmatpush1.xpose.msra.mxu0 0.0
  %1224 = vmatprep.subr.mxu0 0.0
  %1225 = vmatpush1.xpose.msra.mxu0 0.0
  %1226 = vmatprep.subr.mxu0 0.0
  %1227 = vmatpush1.xpose.msra.mxu0 0.0
  %1228 = vmatprep.subr.mxu0 0.0
  %1229 = vmatpush1.xpose.msra.mxu0 0.0
  %1230 = vmatprep.subr.mxu0 0.0
  %1231 = vmatpush1.xpose.msra.mxu0 0.0
  %1232 = vmatprep.subr.mxu0 0.0
  %1233 = vmatpush1.xpose.msra.mxu0 0.0
  %1234 = vmatprep.subr.mxu0 0.0
  %1235 = vmatpush1.xpose.msra.mxu0 0.0
  %1236 = vmatprep.subr.mxu0 0.0
  %1237 = vmatpush1.xpose.msra.mxu0 0.0
  %1238 = vmatprep.mubr.f32.mxu0 0.0
  %1239 = vmatmul.mubr.f32.gmra.mrb[0].mxu0 %v1169
  %v1240 = vpop.f32.mrb[0].mxu0
  %v1241 = vadd.f32 0.0, %v1240
  %v1242 = vpop.f32.mrb[0].mxu0
  %1243 = vdwg.mxu0
  %v1245 = vsel %vm179, %v161, 0
  %v1248 = vsel %vm179, %v97, 0
  %1250 = vmatprep.subr.mxu0 0.0
  %1251 = vmatpush1.xpose.msra.mxu0 %v1248
  %1252 = vmatprep.subr.mxu0 0.0
  %1253 = vmatpush1.xpose.msra.mxu0 0.0
  %1254 = vmatprep.subr.mxu0 0.0
  %1255 = vmatpush1.xpose.msra.mxu0 0.0
  %1256 = vmatprep.subr.mxu0 0.0
  %1257 = vmatpush1.xpose.msra.mxu0 0.0
  %1258 = vmatprep.subr.mxu0 0.0
  %1259 = vmatpush1.xpose.msra.mxu0 0.0
  %1260 = vmatprep.subr.mxu0 0.0
  %1261 = vmatpush1.xpose.msra.mxu0 0.0
  %1262 = vmatprep.subr.mxu0 0.0
  %1263 = vmatpush1.xpose.msra.mxu0 0.0
  %1264 = vmatprep.subr.mxu0 0.0
  %1265 = vmatpush1.xpose.msra.mxu0 0.0
  %1266 = vmatprep.subr.mxu0 0.0
  %1267 = vmatpush1.xpose.msra.mxu0 0.0
  %1268 = vmatprep.subr.mxu0 0.0
  %1269 = vmatpush1.xpose.msra.mxu0 0.0
  %1270 = vmatprep.subr.mxu0 0.0
  %1271 = vmatpush1.xpose.msra.mxu0 0.0
  %1272 = vmatprep.subr.mxu0 0.0
  %1273 = vmatpush1.xpose.msra.mxu0 0.0
  %1274 = vmatprep.subr.mxu0 0.0
  %1275 = vmatpush1.xpose.msra.mxu0 0.0
  %1276 = vmatprep.subr.mxu0 0.0
  %1277 = vmatpush1.xpose.msra.mxu0 0.0
  %1278 = vmatprep.subr.mxu0 0.0
  %1279 = vmatpush1.xpose.msra.mxu0 0.0
  %1280 = vmatprep.subr.mxu0 0.0
  %1281 = vmatpush1.xpose.msra.mxu0 0.0
  %1282 = vmatprep.subr.mxu0 0.0
  %1283 = vmatpush1.xpose.msra.mxu0 0.0
  %1284 = vmatprep.subr.mxu0 0.0
  %1285 = vmatpush1.xpose.msra.mxu0 0.0
  %1286 = vmatprep.subr.mxu0 0.0
  %1287 = vmatpush1.xpose.msra.mxu0 0.0
  %1288 = vmatprep.subr.mxu0 0.0
  %1289 = vmatpush1.xpose.msra.mxu0 0.0
  %1290 = vmatprep.subr.mxu0 0.0
  %1291 = vmatpush1.xpose.msra.mxu0 0.0
  %1292 = vmatprep.subr.mxu0 0.0
  %1293 = vmatpush1.xpose.msra.mxu0 0.0
  %1294 = vmatprep.subr.mxu0 0.0
  %1295 = vmatpush1.xpose.msra.mxu0 0.0
  %1296 = vmatprep.subr.mxu0 0.0
  %1297 = vmatpush1.xpose.msra.mxu0 0.0
  %1298 = vmatprep.subr.mxu0 0.0
  %1299 = vmatpush1.xpose.msra.mxu0 0.0
  %1300 = vmatprep.subr.mxu0 0.0
  %1301 = vmatpush1.xpose.msra.mxu0 0.0
  %1302 = vmatprep.subr.mxu0 0.0
  %1303 = vmatpush1.xpose.msra.mxu0 0.0
  %1304 = vmatprep.subr.mxu0 0.0
  %1305 = vmatpush1.xpose.msra.mxu0 0.0
  %1306 = vmatprep.subr.mxu0 0.0
  %1307 = vmatpush1.xpose.msra.mxu0 0.0
  %1308 = vmatprep.subr.mxu0 0.0
  %1309 = vmatpush1.xpose.msra.mxu0 0.0
  %1310 = vmatprep.subr.mxu0 0.0
  %1311 = vmatpush1.xpose.msra.mxu0 0.0
  %1312 = vmatprep.subr.mxu0 0.0
  %1313 = vmatpush1.xpose.msra.mxu0 0.0
  %1314 = vmatprep.mubr.f32.mxu0 0.0
  %1315 = vmatmul.mubr.f32.gmra.mrb[0].mxu0 %v1245
  %v1316 = vpop.f32.mrb[0].mxu0
  %v1317 = vadd.f32 0.0, %v1316
  %v1318 = vpop.f32.mrb[0].mxu0
  %1319 = vdwg.mxu0
  %v1321 = vsel %vm179, %v162, 0
  %v1324 = vsel %vm179, %v98, 0
  %1326 = vmatprep.subr.mxu0 0.0
  %1327 = vmatpush1.xpose.msra.mxu0 %v1324
  %1328 = vmatprep.subr.mxu0 0.0
  %1329 = vmatpush1.xpose.msra.mxu0 0.0
  %1330 = vmatprep.subr.mxu0 0.0
  %1331 = vmatpush1.xpose.msra.mxu0 0.0
  %1332 = vmatprep.subr.mxu0 0.0
  %1333 = vmatpush1.xpose.msra.mxu0 0.0
  %1334 = vmatprep.subr.mxu0 0.0
  %1335 = vmatpush1.xpose.msra.mxu0 0.0
  %1336 = vmatprep.subr.mxu0 0.0
  %1337 = vmatpush1.xpose.msra.mxu0 0.0
  %1338 = vmatprep.subr.mxu0 0.0
  %1339 = vmatpush1.xpose.msra.mxu0 0.0
  %1340 = vmatprep.subr.mxu0 0.0
  %1341 = vmatpush1.xpose.msra.mxu0 0.0
  %1342 = vmatprep.subr.mxu0 0.0
  %1343 = vmatpush1.xpose.msra.mxu0 0.0
  %1344 = vmatprep.subr.mxu0 0.0
  %1345 = vmatpush1.xpose.msra.mxu0 0.0
  %1346 = vmatprep.subr.mxu0 0.0
  %1347 = vmatpush1.xpose.msra.mxu0 0.0
  %1348 = vmatprep.subr.mxu0 0.0
  %1349 = vmatpush1.xpose.msra.mxu0 0.0
  %1350 = vmatprep.subr.mxu0 0.0
  %1351 = vmatpush1.xpose.msra.mxu0 0.0
  %1352 = vmatprep.subr.mxu0 0.0
  %1353 = vmatpush1.xpose.msra.mxu0 0.0
  %1354 = vmatprep.subr.mxu0 0.0
  %1355 = vmatpush1.xpose.msra.mxu0 0.0
  %1356 = vmatprep.subr.mxu0 0.0
  %1357 = vmatpush1.xpose.msra.mxu0 0.0
  %1358 = vmatprep.subr.mxu0 0.0
  %1359 = vmatpush1.xpose.msra.mxu0 0.0
  %1360 = vmatprep.subr.mxu0 0.0
  %1361 = vmatpush1.xpose.msra.mxu0 0.0
  %1362 = vmatprep.subr.mxu0 0.0
  %1363 = vmatpush1.xpose.msra.mxu0 0.0
  %1364 = vmatprep.subr.mxu0 0.0
  %1365 = vmatpush1.xpose.msra.mxu0 0.0
  %1366 = vmatprep.subr.mxu0 0.0
  %1367 = vmatpush1.xpose.msra.mxu0 0.0
  %1368 = vmatprep.subr.mxu0 0.0
  %1369 = vmatpush1.xpose.msra.mxu0 0.0
  %1370 = vmatprep.subr.mxu0 0.0
  %1371 = vmatpush1.xpose.msra.mxu0 0.0
  %1372 = vmatprep.subr.mxu0 0.0
  %1373 = vmatpush1.xpose.msra.mxu0 0.0
  %1374 = vmatprep.subr.mxu0 0.0
  %1375 = vmatpush1.xpose.msra.mxu0 0.0
  %1376 = vmatprep.subr.mxu0 0.0
  %1377 = vmatpush1.xpose.msra.mxu0 0.0
  %1378 = vmatprep.subr.mxu0 0.0
  %1379 = vmatpush1.xpose.msra.mxu0 0.0
  %1380 = vmatprep.subr.mxu0 0.0
  %1381 = vmatpush1.xpose.msra.mxu0 0.0
  %1382 = vmatprep.subr.mxu0 0.0
  %1383 = vmatpush1.xpose.msra.mxu0 0.0
  %1384 = vmatprep.subr.mxu0 0.0
  %1385 = vmatpush1.xpose.msra.mxu0 0.0
  %1386 = vmatprep.subr.mxu0 0.0
  %1387 = vmatpush1.xpose.msra.mxu0 0.0
  %1388 = vmatprep.subr.mxu0 0.0
  %1389 = vmatpush1.xpose.msra.mxu0 0.0
  %1390 = vmatprep.mubr.f32.mxu0 0.0
  %1391 = vmatmul.mubr.f32.gmra.mrb[0].mxu0 %v1321
  %v1392 = vpop.f32.mrb[0].mxu0
  %v1393 = vadd.f32 0.0, %v1392
  %v1394 = vpop.f32.mrb[0].mxu0
  %1395 = vdwg.mxu0
  %v1397 = vsel %vm179, %v163, 0
  %v1400 = vsel %vm179, %v99, 0
  %1402 = vmatprep.subr.mxu0 0.0
  %1403 = vmatpush1.xpose.msra.mxu0 %v1400
  %1404 = vmatprep.subr.mxu0 0.0
  %1405 = vmatpush1.xpose.msra.mxu0 0.0
  %1406 = vmatprep.subr.mxu0 0.0
  %1407 = vmatpush1.xpose.msra.mxu0 0.0
  %1408 = vmatprep.subr.mxu0 0.0
  %1409 = vmatpush1.xpose.msra.mxu0 0.0
  %1410 = vmatprep.subr.mxu0 0.0
  %1411 = vmatpush1.xpose.msra.mxu0 0.0
  %1412 = vmatprep.subr.mxu0 0.0
  %1413 = vmatpush1.xpose.msra.mxu0 0.0
  %1414 = vmatprep.subr.mxu0 0.0
  %1415 = vmatpush1.xpose.msra.mxu0 0.0
  %1416 = vmatprep.subr.mxu0 0.0
  %1417 = vmatpush1.xpose.msra.mxu0 0.0
  %1418 = vmatprep.subr.mxu0 0.0
  %1419 = vmatpush1.xpose.msra.mxu0 0.0
  %1420 = vmatprep.subr.mxu0 0.0
  %1421 = vmatpush1.xpose.msra.mxu0 0.0
  %1422 = vmatprep.subr.mxu0 0.0
  %1423 = vmatpush1.xpose.msra.mxu0 0.0
  %1424 = vmatprep.subr.mxu0 0.0
  %1425 = vmatpush1.xpose.msra.mxu0 0.0
  %1426 = vmatprep.subr.mxu0 0.0
  %1427 = vmatpush1.xpose.msra.mxu0 0.0
  %1428 = vmatprep.subr.mxu0 0.0
  %1429 = vmatpush1.xpose.msra.mxu0 0.0
  %1430 = vmatprep.subr.mxu0 0.0
  %1431 = vmatpush1.xpose.msra.mxu0 0.0
  %1432 = vmatprep.subr.mxu0 0.0
  %1433 = vmatpush1.xpose.msra.mxu0 0.0
  %1434 = vmatprep.subr.mxu0 0.0
  %1435 = vmatpush1.xpose.msra.mxu0 0.0
  %1436 = vmatprep.subr.mxu0 0.0
  %1437 = vmatpush1.xpose.msra.mxu0 0.0
  %1438 = vmatprep.subr.mxu0 0.0
  %1439 = vmatpush1.xpose.msra.mxu0 0.0
  %1440 = vmatprep.subr.mxu0 0.0
  %1441 = vmatpush1.xpose.msra.mxu0 0.0
  %1442 = vmatprep.subr.mxu0 0.0
  %1443 = vmatpush1.xpose.msra.mxu0 0.0
  %1444 = vmatprep.subr.mxu0 0.0
  %1445 = vmatpush1.xpose.msra.mxu0 0.0
  %1446 = vmatprep.subr.mxu0 0.0
  %1447 = vmatpush1.xpose.msra.mxu0 0.0
  %1448 = vmatprep.subr.mxu0 0.0
  %1449 = vmatpush1.xpose.msra.mxu0 0.0
  %1450 = vmatprep.subr.mxu0 0.0
  %1451 = vmatpush1.xpose.msra.mxu0 0.0
  %1452 = vmatprep.subr.mxu0 0.0
  %1453 = vmatpush1.xpose.msra.mxu0 0.0
  %1454 = vmatprep.subr.mxu0 0.0
  %1455 = vmatpush1.xpose.msra.mxu0 0.0
  %1456 = vmatprep.subr.mxu0 0.0
  %1457 = vmatpush1.xpose.msra.mxu0 0.0
  %1458 = vmatprep.subr.mxu0 0.0
  %1459 = vmatpush1.xpose.msra.mxu0 0.0
  %1460 = vmatprep.subr.mxu0 0.0
  %1461 = vmatpush1.xpose.msra.mxu0 0.0
  %1462 = vmatprep.subr.mxu0 0.0
  %1463 = vmatpush1.xpose.msra.mxu0 0.0
  %1464 = vmatprep.subr.mxu0 0.0
  %1465 = vmatpush1.xpose.msra.mxu0 0.0
  %1466 = vmatprep.mubr.f32.mxu0 0.0
  %1467 = vmatmul.mubr.f32.gmra.mrb[0].mxu0 %v1397
  %v1468 = vpop.f32.mrb[0].mxu0
  %v1469 = vadd.f32 0.0, %v1468
  %v1470 = vpop.f32.mrb[0].mxu0
  %1471 = vdwg.mxu0
  %v1473 = vsel %vm179, %v164, 0
  %v1476 = vsel %vm179, %v100, 0
  %1478 = vmatprep.subr.mxu0 0.0
  %1479 = vmatpush1.xpose.msra.mxu0 %v1476
  %1480 = vmatprep.subr.mxu0 0.0
  %1481 = vmatpush1.xpose.msra.mxu0 0.0
  %1482 = vmatprep.subr.mxu0 0.0
  %1483 = vmatpush1.xpose.msra.mxu0 0.0
  %1484 = vmatprep.subr.mxu0 0.0
  %1485 = vmatpush1.xpose.msra.mxu0 0.0
  %1486 = vmatprep.subr.mxu0 0.0
  %1487 = vmatpush1.xpose.msra.mxu0 0.0
  %1488 = vmatprep.subr.mxu0 0.0
  %1489 = vmatpush1.xpose.msra.mxu0 0.0
  %1490 = vmatprep.subr.mxu0 0.0
  %1491 = vmatpush1.xpose.msra.mxu0 0.0
  %1492 = vmatprep.subr.mxu0 0.0
  %1493 = vmatpush1.xpose.msra.mxu0 0.0
  %1494 = vmatprep.subr.mxu0 0.0
  %1495 = vmatpush1.xpose.msra.mxu0 0.0
  %1496 = vmatprep.subr.mxu0 0.0
  %1497 = vmatpush1.xpose.msra.mxu0 0.0
  %1498 = vmatprep.subr.mxu0 0.0
  %1499 = vmatpush1.xpose.msra.mxu0 0.0
  %1500 = vmatprep.subr.mxu0 0.0
  %1501 = vmatpush1.xpose.msra.mxu0 0.0
  %1502 = vmatprep.subr.mxu0 0.0
  %1503 = vmatpush1.xpose.msra.mxu0 0.0
  %1504 = vmatprep.subr.mxu0 0.0
  %1505 = vmatpush1.xpose.msra.mxu0 0.0
  %1506 = vmatprep.subr.mxu0 0.0
  %1507 = vmatpush1.xpose.msra.mxu0 0.0
  %1508 = vmatprep.subr.mxu0 0.0
  %1509 = vmatpush1.xpose.msra.mxu0 0.0
  %1510 = vmatprep.subr.mxu0 0.0
  %1511 = vmatpush1.xpose.msra.mxu0 0.0
  %1512 = vmatprep.subr.mxu0 0.0
  %1513 = vmatpush1.xpose.msra.mxu0 0.0
  %1514 = vmatprep.subr.mxu0 0.0
  %1515 = vmatpush1.xpose.msra.mxu0 0.0
  %1516 = vmatprep.subr.mxu0 0.0
  %1517 = vmatpush1.xpose.msra.mxu0 0.0
  %1518 = vmatprep.subr.mxu0 0.0
  %1519 = vmatpush1.xpose.msra.mxu0 0.0
  %1520 = vmatprep.subr.mxu0 0.0
  %1521 = vmatpush1.xpose.msra.mxu0 0.0
  %1522 = vmatprep.subr.mxu0 0.0
  %1523 = vmatpush1.xpose.msra.mxu0 0.0
  %1524 = vmatprep.subr.mxu0 0.0
  %1525 = vmatpush1.xpose.msra.mxu0 0.0
  %1526 = vmatprep.subr.mxu0 0.0
  %1527 = vmatpush1.xpose.msra.mxu0 0.0
  %1528 = vmatprep.subr.mxu0 0.0
  %1529 = vmatpush1.xpose.msra.mxu0 0.0
  %1530 = vmatprep.subr.mxu0 0.0
  %1531 = vmatpush1.xpose.msra.mxu0 0.0
  %1532 = vmatprep.subr.mxu0 0.0
  %1533 = vmatpush1.xpose.msra.mxu0 0.0
  %1534 = vmatprep.subr.mxu0 0.0
  %1535 = vmatpush1.xpose.msra.mxu0 0.0
  %1536 = vmatprep.subr.mxu0 0.0
  %1537 = vmatpush1.xpose.msra.mxu0 0.0
  %1538 = vmatprep.subr.mxu0 0.0
  %1539 = vmatpush1.xpose.msra.mxu0 0.0
  %1540 = vmatprep.subr.mxu0 0.0
  %1541 = vmatpush1.xpose.msra.mxu0 0.0
  %1542 = vmatprep.mubr.f32.mxu0 0.0
  %1543 = vmatmul.mubr.f32.gmra.mrb[0].mxu0 %v1473
  %v1544 = vpop.f32.mrb[0].mxu0
  %v1545 = vadd.f32 0.0, %v1544
  %v1546 = vpop.f32.mrb[0].mxu0
  %1547 = vdwg.mxu0
  %v1549 = vsel %vm179, %v165, 0
  %v1552 = vsel %vm179, %v101, 0
  %1554 = vmatprep.subr.mxu0 0.0
  %1555 = vmatpush1.xpose.msra.mxu0 %v1552
  %1556 = vmatprep.subr.mxu0 0.0
  %1557 = vmatpush1.xpose.msra.mxu0 0.0
  %1558 = vmatprep.subr.mxu0 0.0
  %1559 = vmatpush1.xpose.msra.mxu0 0.0
  %1560 = vmatprep.subr.mxu0 0.0
  %1561 = vmatpush1.xpose.msra.mxu0 0.0
  %1562 = vmatprep.subr.mxu0 0.0
  %1563 = vmatpush1.xpose.msra.mxu0 0.0
  %1564 = vmatprep.subr.mxu0 0.0
  %1565 = vmatpush1.xpose.msra.mxu0 0.0
  %1566 = vmatprep.subr.mxu0 0.0
  %1567 = vmatpush1.xpose.msra.mxu0 0.0
  %1568 = vmatprep.subr.mxu0 0.0
  %1569 = vmatpush1.xpose.msra.mxu0 0.0
  %1570 = vmatprep.subr.mxu0 0.0
  %1571 = vmatpush1.xpose.msra.mxu0 0.0
  %1572 = vmatprep.subr.mxu0 0.0
  %1573 = vmatpush1.xpose.msra.mxu0 0.0
  %1574 = vmatprep.subr.mxu0 0.0
  %1575 = vmatpush1.xpose.msra.mxu0 0.0
  %1576 = vmatprep.subr.mxu0 0.0
  %1577 = vmatpush1.xpose.msra.mxu0 0.0
  %1578 = vmatprep.subr.mxu0 0.0
  %1579 = vmatpush1.xpose.msra.mxu0 0.0
  %1580 = vmatprep.subr.mxu0 0.0
  %1581 = vmatpush1.xpose.msra.mxu0 0.0
  %1582 = vmatprep.subr.mxu0 0.0
  %1583 = vmatpush1.xpose.msra.mxu0 0.0
  %1584 = vmatprep.subr.mxu0 0.0
  %1585 = vmatpush1.xpose.msra.mxu0 0.0
  %1586 = vmatprep.subr.mxu0 0.0
  %1587 = vmatpush1.xpose.msra.mxu0 0.0
  %1588 = vmatprep.subr.mxu0 0.0
  %1589 = vmatpush1.xpose.msra.mxu0 0.0
  %1590 = vmatprep.subr.mxu0 0.0
  %1591 = vmatpush1.xpose.msra.mxu0 0.0
  %1592 = vmatprep.subr.mxu0 0.0
  %1593 = vmatpush1.xpose.msra.mxu0 0.0
  %1594 = vmatprep.subr.mxu0 0.0
  %1595 = vmatpush1.xpose.msra.mxu0 0.0
  %1596 = vmatprep.subr.mxu0 0.0
  %1597 = vmatpush1.xpose.msra.mxu0 0.0
  %1598 = vmatprep.subr.mxu0 0.0
  %1599 = vmatpush1.xpose.msra.mxu0 0.0
  %1600 = vmatprep.subr.mxu0 0.0
  %1601 = vmatpush1.xpose.msra.mxu0 0.0
  %1602 = vmatprep.subr.mxu0 0.0
  %1603 = vmatpush1.xpose.msra.mxu0 0.0
  %1604 = vmatprep.subr.mxu0 0.0
  %1605 = vmatpush1.xpose.msra.mxu0 0.0
  %1606 = vmatprep.subr.mxu0 0.0
  %1607 = vmatpush1.xpose.msra.mxu0 0.0
  %1608 = vmatprep.subr.mxu0 0.0
  %1609 = vmatpush1.xpose.msra.mxu0 0.0
  %1610 = vmatprep.subr.mxu0 0.0
  %1611 = vmatpush1.xpose.msra.mxu0 0.0
  %1612 = vmatprep.subr.mxu0 0.0
  %1613 = vmatpush1.xpose.msra.mxu0 0.0
  %1614 = vmatprep.subr.mxu0 0.0
  %1615 = vmatpush1.xpose.msra.mxu0 0.0
  %1616 = vmatprep.subr.mxu0 0.0
  %1617 = vmatpush1.xpose.msra.mxu0 0.0
  %1618 = vmatprep.mubr.f32.mxu0 0.0
  %1619 = vmatmul.mubr.f32.gmra.mrb[0].mxu0 %v1549
  %v1620 = vpop.f32.mrb[0].mxu0
  %v1621 = vadd.f32 0.0, %v1620
  %v1622 = vpop.f32.mrb[0].mxu0
  %1623 = vdwg.mxu0
  %v1625 = vsel %vm179, %v166, 0
  %v1628 = vsel %vm179, %v102, 0
  %1630 = vmatprep.subr.mxu0 0.0
  %1631 = vmatpush1.xpose.msra.mxu0 %v1628
  %1632 = vmatprep.subr.mxu0 0.0
  %1633 = vmatpush1.xpose.msra.mxu0 0.0
  %1634 = vmatprep.subr.mxu0 0.0
  %1635 = vmatpush1.xpose.msra.mxu0 0.0
  %1636 = vmatprep.subr.mxu0 0.0
  %1637 = vmatpush1.xpose.msra.mxu0 0.0
  %1638 = vmatprep.subr.mxu0 0.0
  %1639 = vmatpush1.xpose.msra.mxu0 0.0
  %1640 = vmatprep.subr.mxu0 0.0
  %1641 = vmatpush1.xpose.msra.mxu0 0.0
  %1642 = vmatprep.subr.mxu0 0.0
  %1643 = vmatpush1.xpose.msra.mxu0 0.0
  %1644 = vmatprep.subr.mxu0 0.0
  %1645 = vmatpush1.xpose.msra.mxu0 0.0
  %1646 = vmatprep.subr.mxu0 0.0
  %1647 = vmatpush1.xpose.msra.mxu0 0.0
  %1648 = vmatprep.subr.mxu0 0.0
  %1649 = vmatpush1.xpose.msra.mxu0 0.0
  %1650 = vmatprep.subr.mxu0 0.0
  %1651 = vmatpush1.xpose.msra.mxu0 0.0
  %1652 = vmatprep.subr.mxu0 0.0
  %1653 = vmatpush1.xpose.msra.mxu0 0.0
  %1654 = vmatprep.subr.mxu0 0.0
  %1655 = vmatpush1.xpose.msra.mxu0 0.0
  %1656 = vmatprep.subr.mxu0 0.0
  %1657 = vmatpush1.xpose.msra.mxu0 0.0
  %1658 = vmatprep.subr.mxu0 0.0
  %1659 = vmatpush1.xpose.msra.mxu0 0.0
  %1660 = vmatprep.subr.mxu0 0.0
  %1661 = vmatpush1.xpose.msra.mxu0 0.0
  %1662 = vmatprep.subr.mxu0 0.0
  %1663 = vmatpush1.xpose.msra.mxu0 0.0
  %1664 = vmatprep.subr.mxu0 0.0
  %1665 = vmatpush1.xpose.msra.mxu0 0.0
  %1666 = vmatprep.subr.mxu0 0.0
  %1667 = vmatpush1.xpose.msra.mxu0 0.0
  %1668 = vmatprep.subr.mxu0 0.0
  %1669 = vmatpush1.xpose.msra.mxu0 0.0
  %1670 = vmatprep.subr.mxu0 0.0
  %1671 = vmatpush1.xpose.msra.mxu0 0.0
  %1672 = vmatprep.subr.mxu0 0.0
  %1673 = vmatpush1.xpose.msra.mxu0 0.0
  %1674 = vmatprep.subr.mxu0 0.0
  %1675 = vmatpush1.xpose.msra.mxu0 0.0
  %1676 = vmatprep.subr.mxu0 0.0
  %1677 = vmatpush1.xpose.msra.mxu0 0.0
  %1678 = vmatprep.subr.mxu0 0.0
  %1679 = vmatpush1.xpose.msra.mxu0 0.0
  %1680 = vmatprep.subr.mxu0 0.0
  %1681 = vmatpush1.xpose.msra.mxu0 0.0
  %1682 = vmatprep.subr.mxu0 0.0
  %1683 = vmatpush1.xpose.msra.mxu0 0.0
  %1684 = vmatprep.subr.mxu0 0.0
  %1685 = vmatpush1.xpose.msra.mxu0 0.0
  %1686 = vmatprep.subr.mxu0 0.0
  %1687 = vmatpush1.xpose.msra.mxu0 0.0
  %1688 = vmatprep.subr.mxu0 0.0
  %1689 = vmatpush1.xpose.msra.mxu0 0.0
  %1690 = vmatprep.subr.mxu0 0.0
  %1691 = vmatpush1.xpose.msra.mxu0 0.0
  %1692 = vmatprep.subr.mxu0 0.0
  %1693 = vmatpush1.xpose.msra.mxu0 0.0
  %1694 = vmatprep.mubr.f32.mxu0 0.0
  %1695 = vmatmul.mubr.f32.gmra.mrb[0].mxu0 %v1625
  %v1696 = vpop.f32.mrb[0].mxu0
  %v1697 = vadd.f32 0.0, %v1696
  %v1698 = vpop.f32.mrb[0].mxu0
  %1699 = vdwg.mxu0
  %v1701 = vsel %vm179, %v167, 0
  %v1704 = vsel %vm179, %v103, 0
  %1706 = vmatprep.subr.mxu0 0.0
  %1707 = vmatpush1.xpose.msra.mxu0 %v1704
  %1708 = vmatprep.subr.mxu0 0.0
  %1709 = vmatpush1.xpose.msra.mxu0 0.0
  %1710 = vmatprep.subr.mxu0 0.0
  %1711 = vmatpush1.xpose.msra.mxu0 0.0
  %1712 = vmatprep.subr.mxu0 0.0
  %1713 = vmatpush1.xpose.msra.mxu0 0.0
  %1714 = vmatprep.subr.mxu0 0.0
  %1715 = vmatpush1.xpose.msra.mxu0 0.0
  %1716 = vmatprep.subr.mxu0 0.0
  %1717 = vmatpush1.xpose.msra.mxu0 0.0
  %1718 = vmatprep.subr.mxu0 0.0
  %1719 = vmatpush1.xpose.msra.mxu0 0.0
  %1720 = vmatprep.subr.mxu0 0.0
  %1721 = vmatpush1.xpose.msra.mxu0 0.0
  %1722 = vmatprep.subr.mxu0 0.0
  %1723 = vmatpush1.xpose.msra.mxu0 0.0
  %1724 = vmatprep.subr.mxu0 0.0
  %1725 = vmatpush1.xpose.msra.mxu0 0.0
  %1726 = vmatprep.subr.mxu0 0.0
  %1727 = vmatpush1.xpose.msra.mxu0 0.0
  %1728 = vmatprep.subr.mxu0 0.0
  %1729 = vmatpush1.xpose.msra.mxu0 0.0
  %1730 = vmatprep.subr.mxu0 0.0
  %1731 = vmatpush1.xpose.msra.mxu0 0.0
  %1732 = vmatprep.subr.mxu0 0.0
  %1733 = vmatpush1.xpose.msra.mxu0 0.0
  %1734 = vmatprep.subr.mxu0 0.0
  %1735 = vmatpush1.xpose.msra.mxu0 0.0
  %1736 = vmatprep.subr.mxu0 0.0
  %1737 = vmatpush1.xpose.msra.mxu0 0.0
  %1738 = vmatprep.subr.mxu0 0.0
  %1739 = vmatpush1.xpose.msra.mxu0 0.0
  %1740 = vmatprep.subr.mxu0 0.0
  %1741 = vmatpush1.xpose.msra.mxu0 0.0
  %1742 = vmatprep.subr.mxu0 0.0
  %1743 = vmatpush1.xpose.msra.mxu0 0.0
  %1744 = vmatprep.subr.mxu0 0.0
  %1745 = vmatpush1.xpose.msra.mxu0 0.0
  %1746 = vmatprep.subr.mxu0 0.0
  %1747 = vmatpush1.xpose.msra.mxu0 0.0
  %1748 = vmatprep.subr.mxu0 0.0
  %1749 = vmatpush1.xpose.msra.mxu0 0.0
  %1750 = vmatprep.subr.mxu0 0.0
  %1751 = vmatpush1.xpose.msra.mxu0 0.0
  %1752 = vmatprep.subr.mxu0 0.0
  %1753 = vmatpush1.xpose.msra.mxu0 0.0
  %1754 = vmatprep.subr.mxu0 0.0
  %1755 = vmatpush1.xpose.msra.mxu0 0.0
  %1756 = vmatprep.subr.mxu0 0.0
  %1757 = vmatpush1.xpose.msra.mxu0 0.0
  %1758 = vmatprep.subr.mxu0 0.0
  %1759 = vmatpush1.xpose.msra.mxu0 0.0
  %1760 = vmatprep.subr.mxu0 0.0
  %1761 = vmatpush1.xpose.msra.mxu0 0.0
  %1762 = vmatprep.subr.mxu0 0.0
  %1763 = vmatpush1.xpose.msra.mxu0 0.0
  %1764 = vmatprep.subr.mxu0 0.0
  %1765 = vmatpush1.xpose.msra.mxu0 0.0
  %1766 = vmatprep.subr.mxu0 0.0
  %1767 = vmatpush1.xpose.msra.mxu0 0.0
  %1768 = vmatprep.subr.mxu0 0.0
  %1769 = vmatpush1.xpose.msra.mxu0 0.0
  %1770 = vmatprep.mubr.f32.mxu0 0.0
  %1771 = vmatmul.mubr.f32.gmra.mrb[0].mxu0 %v1701
  %v1772 = vpop.f32.mrb[0].mxu0
  %v1773 = vadd.f32 0.0, %v1772
  %v1774 = vpop.f32.mrb[0].mxu0
  %1775 = vdwg.mxu0
  %v1777 = vsel %vm179, %v168, 0
  %v1780 = vsel %vm179, %v104, 0
  %1782 = vmatprep.subr.mxu0 0.0
  %1783 = vmatpush1.xpose.msra.mxu0 %v1780
  %1784 = vmatprep.subr.mxu0 0.0
  %1785 = vmatpush1.xpose.msra.mxu0 0.0
  %1786 = vmatprep.subr.mxu0 0.0
  %1787 = vmatpush1.xpose.msra.mxu0 0.0
  %1788 = vmatprep.subr.mxu0 0.0
  %1789 = vmatpush1.xpose.msra.mxu0 0.0
  %1790 = vmatprep.subr.mxu0 0.0
  %1791 = vmatpush1.xpose.msra.mxu0 0.0
  %1792 = vmatprep.subr.mxu0 0.0
  %1793 = vmatpush1.xpose.msra.mxu0 0.0
  %1794 = vmatprep.subr.mxu0 0.0
  %1795 = vmatpush1.xpose.msra.mxu0 0.0
  %1796 = vmatprep.subr.mxu0 0.0
  %1797 = vmatpush1.xpose.msra.mxu0 0.0
  %1798 = vmatprep.subr.mxu0 0.0
  %1799 = vmatpush1.xpose.msra.mxu0 0.0
  %1800 = vmatprep.subr.mxu0 0.0
  %1801 = vmatpush1.xpose.msra.mxu0 0.0
  %1802 = vmatprep.subr.mxu0 0.0
  %1803 = vmatpush1.xpose.msra.mxu0 0.0
  %1804 = vmatprep.subr.mxu0 0.0
  %1805 = vmatpush1.xpose.msra.mxu0 0.0
  %1806 = vmatprep.subr.mxu0 0.0
  %1807 = vmatpush1.xpose.msra.mxu0 0.0
  %1808 = vmatprep.subr.mxu0 0.0
  %1809 = vmatpush1.xpose.msra.mxu0 0.0
  %1810 = vmatprep.subr.mxu0 0.0
  %1811 = vmatpush1.xpose.msra.mxu0 0.0
  %1812 = vmatprep.subr.mxu0 0.0
  %1813 = vmatpush1.xpose.msra.mxu0 0.0
  %1814 = vmatprep.subr.mxu0 0.0
  %1815 = vmatpush1.xpose.msra.mxu0 0.0
  %1816 = vmatprep.subr.mxu0 0.0
  %1817 = vmatpush1.xpose.msra.mxu0 0.0
  %1818 = vmatprep.subr.mxu0 0.0
  %1819 = vmatpush1.xpose.msra.mxu0 0.0
  %1820 = vmatprep.subr.mxu0 0.0
  %1821 = vmatpush1.xpose.msra.mxu0 0.0
  %1822 = vmatprep.subr.mxu0 0.0
  %1823 = vmatpush1.xpose.msra.mxu0 0.0
  %1824 = vmatprep.subr.mxu0 0.0
  %1825 = vmatpush1.xpose.msra.mxu0 0.0
  %1826 = vmatprep.subr.mxu0 0.0
  %1827 = vmatpush1.xpose.msra.mxu0 0.0
  %1828 = vmatprep.subr.mxu0 0.0
  %1829 = vmatpush1.xpose.msra.mxu0 0.0
  %1830 = vmatprep.subr.mxu0 0.0
  %1831 = vmatpush1.xpose.msra.mxu0 0.0
  %1832 = vmatprep.subr.mxu0 0.0
  %1833 = vmatpush1.xpose.msra.mxu0 0.0
  %1834 = vmatprep.subr.mxu0 0.0
  %1835 = vmatpush1.xpose.msra.mxu0 0.0
  %1836 = vmatprep.subr.mxu0 0.0
  %1837 = vmatpush1.xpose.msra.mxu0 0.0
  %1838 = vmatprep.subr.mxu0 0.0
  %1839 = vmatpush1.xpose.msra.mxu0 0.0
  %1840 = vmatprep.subr.mxu0 0.0
  %1841 = vmatpush1.xpose.msra.mxu0 0.0
  %1842 = vmatprep.subr.mxu0 0.0
  %1843 = vmatpush1.xpose.msra.mxu0 0.0
  %1844 = vmatprep.subr.mxu0 0.0
  %1845 = vmatpush1.xpose.msra.mxu0 0.0
  %1846 = vmatprep.mubr.f32.mxu0 0.0
  %1847 = vmatmul.mubr.f32.gmra.mrb[0].mxu0 %v1777
  %v1848 = vpop.f32.mrb[0].mxu0
  %v1849 = vadd.f32 0.0, %v1848
  %v1850 = vpop.f32.mrb[0].mxu0
  %1851 = vdwg.mxu0
  %v1853 = vsel %vm179, %v169, 0
  %v1856 = vsel %vm179, %v105, 0
  %1858 = vmatprep.subr.mxu0 0.0
  %1859 = vmatpush1.xpose.msra.mxu0 %v1856
  %1860 = vmatprep.subr.mxu0 0.0
  %1861 = vmatpush1.xpose.msra.mxu0 0.0
  %1862 = vmatprep.subr.mxu0 0.0
  %1863 = vmatpush1.xpose.msra.mxu0 0.0
  %1864 = vmatprep.subr.mxu0 0.0
  %1865 = vmatpush1.xpose.msra.mxu0 0.0
  %1866 = vmatprep.subr.mxu0 0.0
  %1867 = vmatpush1.xpose.msra.mxu0 0.0
  %1868 = vmatprep.subr.mxu0 0.0
  %1869 = vmatpush1.xpose.msra.mxu0 0.0
  %1870 = vmatprep.subr.mxu0 0.0
  %1871 = vmatpush1.xpose.msra.mxu0 0.0
  %1872 = vmatprep.subr.mxu0 0.0
  %1873 = vmatpush1.xpose.msra.mxu0 0.0
  %1874 = vmatprep.subr.mxu0 0.0
  %1875 = vmatpush1.xpose.msra.mxu0 0.0
  %1876 = vmatprep.subr.mxu0 0.0
  %1877 = vmatpush1.xpose.msra.mxu0 0.0
  %1878 = vmatprep.subr.mxu0 0.0
  %1879 = vmatpush1.xpose.msra.mxu0 0.0
  %1880 = vmatprep.subr.mxu0 0.0
  %1881 = vmatpush1.xpose.msra.mxu0 0.0
  %1882 = vmatprep.subr.mxu0 0.0
  %1883 = vmatpush1.xpose.msra.mxu0 0.0
  %1884 = vmatprep.subr.mxu0 0.0
  %1885 = vmatpush1.xpose.msra.mxu0 0.0
  %1886 = vmatprep.subr.mxu0 0.0
  %1887 = vmatpush1.xpose.msra.mxu0 0.0
  %1888 = vmatprep.subr.mxu0 0.0
  %1889 = vmatpush1.xpose.msra.mxu0 0.0
  %1890 = vmatprep.subr.mxu0 0.0
  %1891 = vmatpush1.xpose.msra.mxu0 0.0
  %1892 = vmatprep.subr.mxu0 0.0
  %1893 = vmatpush1.xpose.msra.mxu0 0.0
  %1894 = vmatprep.subr.mxu0 0.0
  %1895 = vmatpush1.xpose.msra.mxu0 0.0
  %1896 = vmatprep.subr.mxu0 0.0
  %1897 = vmatpush1.xpose.msra.mxu0 0.0
  %1898 = vmatprep.subr.mxu0 0.0
  %1899 = vmatpush1.xpose.msra.mxu0 0.0
  %1900 = vmatprep.subr.mxu0 0.0
  %1901 = vmatpush1.xpose.msra.mxu0 0.0
  %1902 = vmatprep.subr.mxu0 0.0
  %1903 = vmatpush1.xpose.msra.mxu0 0.0
  %1904 = vmatprep.subr.mxu0 0.0
  %1905 = vmatpush1.xpose.msra.mxu0 0.0
  %1906 = vmatprep.subr.mxu0 0.0
  %1907 = vmatpush1.xpose.msra.mxu0 0.0
  %1908 = vmatprep.subr.mxu0 0.0
  %1909 = vmatpush1.xpose.msra.mxu0 0.0
  %1910 = vmatprep.subr.mxu0 0.0
  %1911 = vmatpush1.xpose.msra.mxu0 0.0
  %1912 = vmatprep.subr.mxu0 0.0
  %1913 = vmatpush1.xpose.msra.mxu0 0.0
  %1914 = vmatprep.subr.mxu0 0.0
  %1915 = vmatpush1.xpose.msra.mxu0 0.0
  %1916 = vmatprep.subr.mxu0 0.0
  %1917 = vmatpush1.xpose.msra.mxu0 0.0
  %1918 = vmatprep.subr.mxu0 0.0
  %1919 = vmatpush1.xpose.msra.mxu0 0.0
  %1920 = vmatprep.subr.mxu0 0.0
  %1921 = vmatpush1.xpose.msra.mxu0 0.0
  %1922 = vmatprep.mubr.f32.mxu0 0.0
  %1923 = vmatmul.mubr.f32.gmra.mrb[0].mxu0 %v1853
  %v1924 = vpop.f32.mrb[0].mxu0
  %v1925 = vadd.f32 0.0, %v1924
  %v1926 = vpop.f32.mrb[0].mxu0
  %1927 = vdwg.mxu0
  %v1929 = vsel %vm179, %v170, 0
  %v1932 = vsel %vm179, %v106, 0
  %1934 = vmatprep.subr.mxu0 0.0
  %1935 = vmatpush1.xpose.msra.mxu0 %v1932
  %1936 = vmatprep.subr.mxu0 0.0
  %1937 = vmatpush1.xpose.msra.mxu0 0.0
  %1938 = vmatprep.subr.mxu0 0.0
  %1939 = vmatpush1.xpose.msra.mxu0 0.0
  %1940 = vmatprep.subr.mxu0 0.0
  %1941 = vmatpush1.xpose.msra.mxu0 0.0
  %1942 = vmatprep.subr.mxu0 0.0
  %1943 = vmatpush1.xpose.msra.mxu0 0.0
  %1944 = vmatprep.subr.mxu0 0.0
  %1945 = vmatpush1.xpose.msra.mxu0 0.0
  %1946 = vmatprep.subr.mxu0 0.0
  %1947 = vmatpush1.xpose.msra.mxu0 0.0
  %1948 = vmatprep.subr.mxu0 0.0
  %1949 = vmatpush1.xpose.msra.mxu0 0.0
  %1950 = vmatprep.subr.mxu0 0.0
  %1951 = vmatpush1.xpose.msra.mxu0 0.0
  %1952 = vmatprep.subr.mxu0 0.0
  %1953 = vmatpush1.xpose.msra.mxu0 0.0
  %1954 = vmatprep.subr.mxu0 0.0
  %1955 = vmatpush1.xpose.msra.mxu0 0.0
  %1956 = vmatprep.subr.mxu0 0.0
  %1957 = vmatpush1.xpose.msra.mxu0 0.0
  %1958 = vmatprep.subr.mxu0 0.0
  %1959 = vmatpush1.xpose.msra.mxu0 0.0
  %1960 = vmatprep.subr.mxu0 0.0
  %1961 = vmatpush1.xpose.msra.mxu0 0.0
  %1962 = vmatprep.subr.mxu0 0.0
  %1963 = vmatpush1.xpose.msra.mxu0 0.0
  %1964 = vmatprep.subr.mxu0 0.0
  %1965 = vmatpush1.xpose.msra.mxu0 0.0
  %1966 = vmatprep.subr.mxu0 0.0
  %1967 = vmatpush1.xpose.msra.mxu0 0.0
  %1968 = vmatprep.subr.mxu0 0.0
  %1969 = vmatpush1.xpose.msra.mxu0 0.0
  %1970 = vmatprep.subr.mxu0 0.0
  %1971 = vmatpush1.xpose.msra.mxu0 0.0
  %1972 = vmatprep.subr.mxu0 0.0
  %1973 = vmatpush1.xpose.msra.mxu0 0.0
  %1974 = vmatprep.subr.mxu0 0.0
  %1975 = vmatpush1.xpose.msra.mxu0 0.0
  %1976 = vmatprep.subr.mxu0 0.0
  %1977 = vmatpush1.xpose.msra.mxu0 0.0
  %1978 = vmatprep.subr.mxu0 0.0
  %1979 = vmatpush1.xpose.msra.mxu0 0.0
  %1980 = vmatprep.subr.mxu0 0.0
  %1981 = vmatpush1.xpose.msra.mxu0 0.0
  %1982 = vmatprep.subr.mxu0 0.0
  %1983 = vmatpush1.xpose.msra.mxu0 0.0
  %1984 = vmatprep.subr.mxu0 0.0
  %1985 = vmatpush1.xpose.msra.mxu0 0.0
  %1986 = vmatprep.subr.mxu0 0.0
  %1987 = vmatpush1.xpose.msra.mxu0 0.0
  %1988 = vmatprep.subr.mxu0 0.0
  %1989 = vmatpush1.xpose.msra.mxu0 0.0
  %1990 = vmatprep.subr.mxu0 0.0
  %1991 = vmatpush1.xpose.msra.mxu0 0.0
  %1992 = vmatprep.subr.mxu0 0.0
  %1993 = vmatpush1.xpose.msra.mxu0 0.0
  %1994 = vmatprep.subr.mxu0 0.0
  %1995 = vmatpush1.xpose.msra.mxu0 0.0
  %1996 = vmatprep.subr.mxu0 0.0
  %1997 = vmatpush1.xpose.msra.mxu0 0.0
  %1998 = vmatprep.mubr.f32.mxu0 0.0
  %1999 = vmatmul.mubr.f32.gmra.mrb[0].mxu0 %v1929
  %v2000 = vpop.f32.mrb[0].mxu0
  %v2001 = vadd.f32 0.0, %v2000
  %v2002 = vpop.f32.mrb[0].mxu0
  %2003 = vdwg.mxu0
  %v2005 = vsel %vm179, %v171, 0
  %v2008 = vsel %vm179, %v107, 0
  %2010 = vmatprep.subr.mxu0 0.0
  %2011 = vmatpush1.xpose.msra.mxu0 %v2008
  %2012 = vmatprep.subr.mxu0 0.0
  %2013 = vmatpush1.xpose.msra.mxu0 0.0
  %2014 = vmatprep.subr.mxu0 0.0
  %2015 = vmatpush1.xpose.msra.mxu0 0.0
  %2016 = vmatprep.subr.mxu0 0.0
  %2017 = vmatpush1.xpose.msra.mxu0 0.0
  %2018 = vmatprep.subr.mxu0 0.0
  %2019 = vmatpush1.xpose.msra.mxu0 0.0
  %2020 = vmatprep.subr.mxu0 0.0
  %2021 = vmatpush1.xpose.msra.mxu0 0.0
  %2022 = vmatprep.subr.mxu0 0.0
  %2023 = vmatpush1.xpose.msra.mxu0 0.0
  %2024 = vmatprep.subr.mxu0 0.0
  %2025 = vmatpush1.xpose.msra.mxu0 0.0
  %2026 = vmatprep.subr.mxu0 0.0
  %2027 = vmatpush1.xpose.msra.mxu0 0.0
  %2028 = vmatprep.subr.mxu0 0.0
  %2029 = vmatpush1.xpose.msra.mxu0 0.0
  %2030 = vmatprep.subr.mxu0 0.0
  %2031 = vmatpush1.xpose.msra.mxu0 0.0
  %2032 = vmatprep.subr.mxu0 0.0
  %2033 = vmatpush1.xpose.msra.mxu0 0.0
  %2034 = vmatprep.subr.mxu0 0.0
  %2035 = vmatpush1.xpose.msra.mxu0 0.0
  %2036 = vmatprep.subr.mxu0 0.0
  %2037 = vmatpush1.xpose.msra.mxu0 0.0
  %2038 = vmatprep.subr.mxu0 0.0
  %2039 = vmatpush1.xpose.msra.mxu0 0.0
  %2040 = vmatprep.subr.mxu0 0.0
  %2041 = vmatpush1.xpose.msra.mxu0 0.0
  %2042 = vmatprep.subr.mxu0 0.0
  %2043 = vmatpush1.xpose.msra.mxu0 0.0
  %2044 = vmatprep.subr.mxu0 0.0
  %2045 = vmatpush1.xpose.msra.mxu0 0.0
  %2046 = vmatprep.subr.mxu0 0.0
  %2047 = vmatpush1.xpose.msra.mxu0 0.0
  %2048 = vmatprep.subr.mxu0 0.0
  %2049 = vmatpush1.xpose.msra.mxu0 0.0
  %2050 = vmatprep.subr.mxu0 0.0
  %2051 = vmatpush1.xpose.msra.mxu0 0.0
  %2052 = vmatprep.subr.mxu0 0.0
  %2053 = vmatpush1.xpose.msra.mxu0 0.0
  %2054 = vmatprep.subr.mxu0 0.0
  %2055 = vmatpush1.xpose.msra.mxu0 0.0
  %2056 = vmatprep.subr.mxu0 0.0
  %2057 = vmatpush1.xpose.msra.mxu0 0.0
  %2058 = vmatprep.subr.mxu0 0.0
  %2059 = vmatpush1.xpose.msra.mxu0 0.0
  %2060 = vmatprep.subr.mxu0 0.0
  %2061 = vmatpush1.xpose.msra.mxu0 0.0
  %2062 = vmatprep.subr.mxu0 0.0
  %2063 = vmatpush1.xpose.msra.mxu0 0.0
  %2064 = vmatprep.subr.mxu0 0.0
  %2065 = vmatpush1.xpose.msra.mxu0 0.0
  %2066 = vmatprep.subr.mxu0 0.0
  %2067 = vmatpush1.xpose.msra.mxu0 0.0
  %2068 = vmatprep.subr.mxu0 0.0
  %2069 = vmatpush1.xpose.msra.mxu0 0.0
  %2070 = vmatprep.subr.mxu0 0.0
  %2071 = vmatpush1.xpose.msra.mxu0 0.0
  %2072 = vmatprep.subr.mxu0 0.0
  %2073 = vmatpush1.xpose.msra.mxu0 0.0
  %2074 = vmatprep.mubr.f32.mxu0 0.0
  %2075 = vmatmul.mubr.f32.gmra.mrb[0].mxu0 %v2005
  %v2076 = vpop.f32.mrb[0].mxu0
  %v2077 = vadd.f32 0.0, %v2076
  %v2078 = vpop.f32.mrb[0].mxu0
  %2079 = vdwg.mxu0
  %v2081 = vsel %vm179, %v172, 0
  %v2084 = vsel %vm179, %v108, 0
  %2086 = vmatprep.subr.mxu0 0.0
  %2087 = vmatpush1.xpose.msra.mxu0 %v2084
  %2088 = vmatprep.subr.mxu0 0.0
  %2089 = vmatpush1.xpose.msra.mxu0 0.0
  %2090 = vmatprep.subr.mxu0 0.0
  %2091 = vmatpush1.xpose.msra.mxu0 0.0
  %2092 = vmatprep.subr.mxu0 0.0
  %2093 = vmatpush1.xpose.msra.mxu0 0.0
  %2094 = vmatprep.subr.mxu0 0.0
  %2095 = vmatpush1.xpose.msra.mxu0 0.0
  %2096 = vmatprep.subr.mxu0 0.0
  %2097 = vmatpush1.xpose.msra.mxu0 0.0
  %2098 = vmatprep.subr.mxu0 0.0
  %2099 = vmatpush1.xpose.msra.mxu0 0.0
  %2100 = vmatprep.subr.mxu0 0.0
  %2101 = vmatpush1.xpose.msra.mxu0 0.0
  %2102 = vmatprep.subr.mxu0 0.0
  %2103 = vmatpush1.xpose.msra.mxu0 0.0
  %2104 = vmatprep.subr.mxu0 0.0
  %2105 = vmatpush1.xpose.msra.mxu0 0.0
  %2106 = vmatprep.subr.mxu0 0.0
  %2107 = vmatpush1.xpose.msra.mxu0 0.0
  %2108 = vmatprep.subr.mxu0 0.0
  %2109 = vmatpush1.xpose.msra.mxu0 0.0
  %2110 = vmatprep.subr.mxu0 0.0
  %2111 = vmatpush1.xpose.msra.mxu0 0.0
  %2112 = vmatprep.subr.mxu0 0.0
  %2113 = vmatpush1.xpose.msra.mxu0 0.0
  %2114 = vmatprep.subr.mxu0 0.0
  %2115 = vmatpush1.xpose.msra.mxu0 0.0
  %2116 = vmatprep.subr.mxu0 0.0
  %2117 = vmatpush1.xpose.msra.mxu0 0.0
  %2118 = vmatprep.subr.mxu0 0.0
  %2119 = vmatpush1.xpose.msra.mxu0 0.0
  %2120 = vmatprep.subr.mxu0 0.0
  %2121 = vmatpush1.xpose.msra.mxu0 0.0
  %2122 = vmatprep.subr.mxu0 0.0
  %2123 = vmatpush1.xpose.msra.mxu0 0.0
  %2124 = vmatprep.subr.mxu0 0.0
  %2125 = vmatpush1.xpose.msra.mxu0 0.0
  %2126 = vmatprep.subr.mxu0 0.0
  %2127 = vmatpush1.xpose.msra.mxu0 0.0
  %2128 = vmatprep.subr.mxu0 0.0
  %2129 = vmatpush1.xpose.msra.mxu0 0.0
  %2130 = vmatprep.subr.mxu0 0.0
  %2131 = vmatpush1.xpose.msra.mxu0 0.0
  %2132 = vmatprep.subr.mxu0 0.0
  %2133 = vmatpush1.xpose.msra.mxu0 0.0
  %2134 = vmatprep.subr.mxu0 0.0
  %2135 = vmatpush1.xpose.msra.mxu0 0.0
  %2136 = vmatprep.subr.mxu0 0.0
  %2137 = vmatpush1.xpose.msra.mxu0 0.0
  %2138 = vmatprep.subr.mxu0 0.0
  %2139 = vmatpush1.xpose.msra.mxu0 0.0
  %2140 = vmatprep.subr.mxu0 0.0
  %2141 = vmatpush1.xpose.msra.mxu0 0.0
  %2142 = vmatprep.subr.mxu0 0.0
  %2143 = vmatpush1.xpose.msra.mxu0 0.0
  %2144 = vmatprep.subr.mxu0 0.0
  %2145 = vmatpush1.xpose.msra.mxu0 0.0
  %2146 = vmatprep.subr.mxu0 0.0
  %2147 = vmatpush1.xpose.msra.mxu0 0.0
  %2148 = vmatprep.subr.mxu0 0.0
  %2149 = vmatpush1.xpose.msra.mxu0 0.0
  %2150 = vmatprep.mubr.f32.mxu0 0.0
  %2151 = vmatmul.mubr.f32.gmra.mrb[0].mxu0 %v2081
  %v2152 = vpop.f32.mrb[0].mxu0
  %v2153 = vadd.f32 0.0, %v2152
  %v2154 = vpop.f32.mrb[0].mxu0
  %2155 = vdwg.mxu0
  %v2157 = vsel %vm179, %v173, 0
  %v2160 = vsel %vm179, %v109, 0
  %2162 = vmatprep.subr.mxu0 0.0
  %2163 = vmatpush1.xpose.msra.mxu0 %v2160
  %2164 = vmatprep.subr.mxu0 0.0
  %2165 = vmatpush1.xpose.msra.mxu0 0.0
  %2166 = vmatprep.subr.mxu0 0.0
  %2167 = vmatpush1.xpose.msra.mxu0 0.0
  %2168 = vmatprep.subr.mxu0 0.0
  %2169 = vmatpush1.xpose.msra.mxu0 0.0
  %2170 = vmatprep.subr.mxu0 0.0
  %2171 = vmatpush1.xpose.msra.mxu0 0.0
  %2172 = vmatprep.subr.mxu0 0.0
  %2173 = vmatpush1.xpose.msra.mxu0 0.0
  %2174 = vmatprep.subr.mxu0 0.0
  %2175 = vmatpush1.xpose.msra.mxu0 0.0
  %2176 = vmatprep.subr.mxu0 0.0
  %2177 = vmatpush1.xpose.msra.mxu0 0.0
  %2178 = vmatprep.subr.mxu0 0.0
  %2179 = vmatpush1.xpose.msra.mxu0 0.0
  %2180 = vmatprep.subr.mxu0 0.0
  %2181 = vmatpush1.xpose.msra.mxu0 0.0
  %2182 = vmatprep.subr.mxu0 0.0
  %2183 = vmatpush1.xpose.msra.mxu0 0.0
  %2184 = vmatprep.subr.mxu0 0.0
  %2185 = vmatpush1.xpose.msra.mxu0 0.0
  %2186 = vmatprep.subr.mxu0 0.0
  %2187 = vmatpush1.xpose.msra.mxu0 0.0
  %2188 = vmatprep.subr.mxu0 0.0
  %2189 = vmatpush1.xpose.msra.mxu0 0.0
  %2190 = vmatprep.subr.mxu0 0.0
  %2191 = vmatpush1.xpose.msra.mxu0 0.0
  %2192 = vmatprep.subr.mxu0 0.0
  %2193 = vmatpush1.xpose.msra.mxu0 0.0
  %2194 = vmatprep.subr.mxu0 0.0
  %2195 = vmatpush1.xpose.msra.mxu0 0.0
  %2196 = vmatprep.subr.mxu0 0.0
  %2197 = vmatpush1.xpose.msra.mxu0 0.0
  %2198 = vmatprep.subr.mxu0 0.0
  %2199 = vmatpush1.xpose.msra.mxu0 0.0
  %2200 = vmatprep.subr.mxu0 0.0
  %2201 = vmatpush1.xpose.msra.mxu0 0.0
  %2202 = vmatprep.subr.mxu0 0.0
  %2203 = vmatpush1.xpose.msra.mxu0 0.0
  %2204 = vmatprep.subr.mxu0 0.0
  %2205 = vmatpush1.xpose.msra.mxu0 0.0
  %2206 = vmatprep.subr.mxu0 0.0
  %2207 = vmatpush1.xpose.msra.mxu0 0.0
  %2208 = vmatprep.subr.mxu0 0.0
  %2209 = vmatpush1.xpose.msra.mxu0 0.0
  %2210 = vmatprep.subr.mxu0 0.0
  %2211 = vmatpush1.xpose.msra.mxu0 0.0
  %2212 = vmatprep.subr.mxu0 0.0
  %2213 = vmatpush1.xpose.msra.mxu0 0.0
  %2214 = vmatprep.subr.mxu0 0.0
  %2215 = vmatpush1.xpose.msra.mxu0 0.0
  %2216 = vmatprep.subr.mxu0 0.0
  %2217 = vmatpush1.xpose.msra.mxu0 0.0
  %2218 = vmatprep.subr.mxu0 0.0
  %2219 = vmatpush1.xpose.msra.mxu0 0.0
  %2220 = vmatprep.subr.mxu0 0.0
  %2221 = vmatpush1.xpose.msra.mxu0 0.0
  %2222 = vmatprep.subr.mxu0 0.0
  %2223 = vmatpush1.xpose.msra.mxu0 0.0
  %2224 = vmatprep.subr.mxu0 0.0
  %2225 = vmatpush1.xpose.msra.mxu0 0.0
  %2226 = vmatprep.mubr.f32.mxu0 0.0
  %2227 = vmatmul.mubr.f32.gmra.mrb[0].mxu0 %v2157
  %v2228 = vpop.f32.mrb[0].mxu0
  %v2229 = vadd.f32 0.0, %v2228
  %v2230 = vpop.f32.mrb[0].mxu0
  %2231 = vdwg.mxu0
  %v2233 = vsel %vm179, %v174, 0
  %v2236 = vsel %vm179, %v110, 0
  %2238 = vmatprep.subr.mxu0 0.0
  %2239 = vmatpush1.xpose.msra.mxu0 %v2236
  %2240 = vmatprep.subr.mxu0 0.0
  %2241 = vmatpush1.xpose.msra.mxu0 0.0
  %2242 = vmatprep.subr.mxu0 0.0
  %2243 = vmatpush1.xpose.msra.mxu0 0.0
  %2244 = vmatprep.subr.mxu0 0.0
  %2245 = vmatpush1.xpose.msra.mxu0 0.0
  %2246 = vmatprep.subr.mxu0 0.0
  %2247 = vmatpush1.xpose.msra.mxu0 0.0
  %2248 = vmatprep.subr.mxu0 0.0
  %2249 = vmatpush1.xpose.msra.mxu0 0.0
  %2250 = vmatprep.subr.mxu0 0.0
  %2251 = vmatpush1.xpose.msra.mxu0 0.0
  %2252 = vmatprep.subr.mxu0 0.0
  %2253 = vmatpush1.xpose.msra.mxu0 0.0
  %2254 = vmatprep.subr.mxu0 0.0
  %2255 = vmatpush1.xpose.msra.mxu0 0.0
  %2256 = vmatprep.subr.mxu0 0.0
  %2257 = vmatpush1.xpose.msra.mxu0 0.0
  %2258 = vmatprep.subr.mxu0 0.0
  %2259 = vmatpush1.xpose.msra.mxu0 0.0
  %2260 = vmatprep.subr.mxu0 0.0
  %2261 = vmatpush1.xpose.msra.mxu0 0.0
  %2262 = vmatprep.subr.mxu0 0.0
  %2263 = vmatpush1.xpose.msra.mxu0 0.0
  %2264 = vmatprep.subr.mxu0 0.0
  %2265 = vmatpush1.xpose.msra.mxu0 0.0
  %2266 = vmatprep.subr.mxu0 0.0
  %2267 = vmatpush1.xpose.msra.mxu0 0.0
  %2268 = vmatprep.subr.mxu0 0.0
  %2269 = vmatpush1.xpose.msra.mxu0 0.0
  %2270 = vmatprep.subr.mxu0 0.0
  %2271 = vmatpush1.xpose.msra.mxu0 0.0
  %2272 = vmatprep.subr.mxu0 0.0
  %2273 = vmatpush1.xpose.msra.mxu0 0.0
  %2274 = vmatprep.subr.mxu0 0.0
  %2275 = vmatpush1.xpose.msra.mxu0 0.0
  %2276 = vmatprep.subr.mxu0 0.0
  %2277 = vmatpush1.xpose.msra.mxu0 0.0
  %2278 = vmatprep.subr.mxu0 0.0
  %2279 = vmatpush1.xpose.msra.mxu0 0.0
  %2280 = vmatprep.subr.mxu0 0.0
  %2281 = vmatpush1.xpose.msra.mxu0 0.0
  %2282 = vmatprep.subr.mxu0 0.0
  %2283 = vmatpush1.xpose.msra.mxu0 0.0
  %2284 = vmatprep.subr.mxu0 0.0
  %2285 = vmatpush1.xpose.msra.mxu0 0.0
  %2286 = vmatprep.subr.mxu0 0.0
  %2287 = vmatpush1.xpose.msra.mxu0 0.0
  %2288 = vmatprep.subr.mxu0 0.0
  %2289 = vmatpush1.xpose.msra.mxu0 0.0
  %2290 = vmatprep.subr.mxu0 0.0
  %2291 = vmatpush1.xpose.msra.mxu0 0.0
  %2292 = vmatprep.subr.mxu0 0.0
  %2293 = vmatpush1.xpose.msra.mxu0 0.0
  %2294 = vmatprep.subr.mxu0 0.0
  %2295 = vmatpush1.xpose.msra.mxu0 0.0
  %2296 = vmatprep.subr.mxu0 0.0
  %2297 = vmatpush1.xpose.msra.mxu0 0.0
  %2298 = vmatprep.subr.mxu0 0.0
  %2299 = vmatpush1.xpose.msra.mxu0 0.0
  %2300 = vmatprep.subr.mxu0 0.0
  %2301 = vmatpush1.xpose.msra.mxu0 0.0
  %2302 = vmatprep.mubr.f32.mxu0 0.0
  %2303 = vmatmul.mubr.f32.gmra.mrb[0].mxu0 %v2233
  %v2304 = vpop.f32.mrb[0].mxu0
  %v2305 = vadd.f32 0.0, %v2304
  %v2306 = vpop.f32.mrb[0].mxu0
  %2307 = vdwg.mxu0
  %v2309 = vsel %vm179, %v175, 0
  %v2312 = vsel %vm179, %v111, 0
  %2314 = vmatprep.subr.mxu0 0.0
  %2315 = vmatpush1.xpose.msra.mxu0 %v2312
  %2316 = vmatprep.subr.mxu0 0.0
  %2317 = vmatpush1.xpose.msra.mxu0 0.0
  %2318 = vmatprep.subr.mxu0 0.0
  %2319 = vmatpush1.xpose.msra.mxu0 0.0
  %2320 = vmatprep.subr.mxu0 0.0
  %2321 = vmatpush1.xpose.msra.mxu0 0.0
  %2322 = vmatprep.subr.mxu0 0.0
  %2323 = vmatpush1.xpose.msra.mxu0 0.0
  %2324 = vmatprep.subr.mxu0 0.0
  %2325 = vmatpush1.xpose.msra.mxu0 0.0
  %2326 = vmatprep.subr.mxu0 0.0
  %2327 = vmatpush1.xpose.msra.mxu0 0.0
  %2328 = vmatprep.subr.mxu0 0.0
  %2329 = vmatpush1.xpose.msra.mxu0 0.0
  %2330 = vmatprep.subr.mxu0 0.0
  %2331 = vmatpush1.xpose.msra.mxu0 0.0
  %2332 = vmatprep.subr.mxu0 0.0
  %2333 = vmatpush1.xpose.msra.mxu0 0.0
  %2334 = vmatprep.subr.mxu0 0.0
  %2335 = vmatpush1.xpose.msra.mxu0 0.0
  %2336 = vmatprep.subr.mxu0 0.0
  %2337 = vmatpush1.xpose.msra.mxu0 0.0
  %2338 = vmatprep.subr.mxu0 0.0
  %2339 = vmatpush1.xpose.msra.mxu0 0.0
  %2340 = vmatprep.subr.mxu0 0.0
  %2341 = vmatpush1.xpose.msra.mxu0 0.0
  %2342 = vmatprep.subr.mxu0 0.0
  %2343 = vmatpush1.xpose.msra.mxu0 0.0
  %2344 = vmatprep.subr.mxu0 0.0
  %2345 = vmatpush1.xpose.msra.mxu0 0.0
  %2346 = vmatprep.subr.mxu0 0.0
  %2347 = vmatpush1.xpose.msra.mxu0 0.0
  %2348 = vmatprep.subr.mxu0 0.0
  %2349 = vmatpush1.xpose.msra.mxu0 0.0
  %2350 = vmatprep.subr.mxu0 0.0
  %2351 = vmatpush1.xpose.msra.mxu0 0.0
  %2352 = vmatprep.subr.mxu0 0.0
  %2353 = vmatpush1.xpose.msra.mxu0 0.0
  %2354 = vmatprep.subr.mxu0 0.0
  %2355 = vmatpush1.xpose.msra.mxu0 0.0
  %2356 = vmatprep.subr.mxu0 0.0
  %2357 = vmatpush1.xpose.msra.mxu0 0.0
  %2358 = vmatprep.subr.mxu0 0.0
  %2359 = vmatpush1.xpose.msra.mxu0 0.0
  %2360 = vmatprep.subr.mxu0 0.0
  %2361 = vmatpush1.xpose.msra.mxu0 0.0
  %2362 = vmatprep.subr.mxu0 0.0
  %2363 = vmatpush1.xpose.msra.mxu0 0.0
  %2364 = vmatprep.subr.mxu0 0.0
  %2365 = vmatpush1.xpose.msra.mxu0 0.0
  %2366 = vmatprep.subr.mxu0 0.0
  %2367 = vmatpush1.xpose.msra.mxu0 0.0
  %2368 = vmatprep.subr.mxu0 0.0
  %2369 = vmatpush1.xpose.msra.mxu0 0.0
  %2370 = vmatprep.subr.mxu0 0.0
  %2371 = vmatpush1.xpose.msra.mxu0 0.0
  %2372 = vmatprep.subr.mxu0 0.0
  %2373 = vmatpush1.xpose.msra.mxu0 0.0
  %2374 = vmatprep.subr.mxu0 0.0
  %2375 = vmatpush1.xpose.msra.mxu0 0.0
  %2376 = vmatprep.subr.mxu0 0.0
  %2377 = vmatpush1.xpose.msra.mxu0 0.0
  %2378 = vmatprep.mubr.f32.mxu0 0.0
  %2379 = vmatmul.mubr.f32.gmra.mrb[0].mxu0 %v2309
  %v2380 = vpop.f32.mrb[0].mxu0
  %v2381 = vadd.f32 0.0, %v2380
  %v2382 = vpop.f32.mrb[0].mxu0
  %2383 = vdwg.mxu0
  %v2385 = vsel %vm179, %v176, 0
  %v2388 = vsel %vm179, %v112, 0
  %2390 = vmatprep.subr.mxu0 0.0
  %2391 = vmatpush1.xpose.msra.mxu0 %v2388
  %2392 = vmatprep.subr.mxu0 0.0
  %2393 = vmatpush1.xpose.msra.mxu0 0.0
  %2394 = vmatprep.subr.mxu0 0.0
  %2395 = vmatpush1.xpose.msra.mxu0 0.0
  %2396 = vmatprep.subr.mxu0 0.0
  %2397 = vmatpush1.xpose.msra.mxu0 0.0
  %2398 = vmatprep.subr.mxu0 0.0
  %2399 = vmatpush1.xpose.msra.mxu0 0.0
  %2400 = vmatprep.subr.mxu0 0.0
  %2401 = vmatpush1.xpose.msra.mxu0 0.0
  %2402 = vmatprep.subr.mxu0 0.0
  %2403 = vmatpush1.xpose.msra.mxu0 0.0
  %2404 = vmatprep.subr.mxu0 0.0
  %2405 = vmatpush1.xpose.msra.mxu0 0.0
  %2406 = vmatprep.subr.mxu0 0.0
  %2407 = vmatpush1.xpose.msra.mxu0 0.0
  %2408 = vmatprep.subr.mxu0 0.0
  %2409 = vmatpush1.xpose.msra.mxu0 0.0
  %2410 = vmatprep.subr.mxu0 0.0
  %2411 = vmatpush1.xpose.msra.mxu0 0.0
  %2412 = vmatprep.subr.mxu0 0.0
  %2413 = vmatpush1.xpose.msra.mxu0 0.0
  %2414 = vmatprep.subr.mxu0 0.0
  %2415 = vmatpush1.xpose.msra.mxu0 0.0
  %2416 = vmatprep.subr.mxu0 0.0
  %2417 = vmatpush1.xpose.msra.mxu0 0.0
  %2418 = vmatprep.subr.mxu0 0.0
  %2419 = vmatpush1.xpose.msra.mxu0 0.0
  %2420 = vmatprep.subr.mxu0 0.0
  %2421 = vmatpush1.xpose.msra.mxu0 0.0
  %2422 = vmatprep.subr.mxu0 0.0
  %2423 = vmatpush1.xpose.msra.mxu0 0.0
  %2424 = vmatprep.subr.mxu0 0.0
  %2425 = vmatpush1.xpose.msra.mxu0 0.0
  %2426 = vmatprep.subr.mxu0 0.0
  %2427 = vmatpush1.xpose.msra.mxu0 0.0
  %2428 = vmatprep.subr.mxu0 0.0
  %2429 = vmatpush1.xpose.msra.mxu0 0.0
  %2430 = vmatprep.subr.mxu0 0.0
  %2431 = vmatpush1.xpose.msra.mxu0 0.0
  %2432 = vmatprep.subr.mxu0 0.0
  %2433 = vmatpush1.xpose.msra.mxu0 0.0
  %2434 = vmatprep.subr.mxu0 0.0
  %2435 = vmatpush1.xpose.msra.mxu0 0.0
  %2436 = vmatprep.subr.mxu0 0.0
  %2437 = vmatpush1.xpose.msra.mxu0 0.0
  %2438 = vmatprep.subr.mxu0 0.0
  %2439 = vmatpush1.xpose.msra.mxu0 0.0
  %2440 = vmatprep.subr.mxu0 0.0
  %2441 = vmatpush1.xpose.msra.mxu0 0.0
  %2442 = vmatprep.subr.mxu0 0.0
  %2443 = vmatpush1.xpose.msra.mxu0 0.0
  %2444 = vmatprep.subr.mxu0 0.0
  %2445 = vmatpush1.xpose.msra.mxu0 0.0
  %2446 = vmatprep.subr.mxu0 0.0
  %2447 = vmatpush1.xpose.msra.mxu0 0.0
  %2448 = vmatprep.subr.mxu0 0.0
  %2449 = vmatpush1.xpose.msra.mxu0 0.0
  %2450 = vmatprep.subr.mxu0 0.0
  %2451 = vmatpush1.xpose.msra.mxu0 0.0
  %2452 = vmatprep.subr.mxu0 0.0
  %2453 = vmatpush1.xpose.msra.mxu0 0.0
  %2454 = vmatprep.mubr.f32.mxu0 0.0
  %2455 = vmatmul.mubr.f32.gmra.mrb[0].mxu0 %v2385
  %v2456 = vpop.f32.mrb[0].mxu0
  %v2457 = vadd.f32 0.0, %v2456
  %v2458 = vpop.f32.mrb[0].mxu0
  %2459 = vdwg.mxu0
  %v2461 = vsel %vm179, %v177, 0
  %v2464 = vsel %vm179, %v113, 0
  %2466 = vmatprep.subr.mxu0 0.0
  %2467 = vmatpush1.xpose.msra.mxu0 %v2464
  %2468 = vmatprep.subr.mxu0 0.0
  %2469 = vmatpush1.xpose.msra.mxu0 0.0
  %2470 = vmatprep.subr.mxu0 0.0
  %2471 = vmatpush1.xpose.msra.mxu0 0.0
  %2472 = vmatprep.subr.mxu0 0.0
  %2473 = vmatpush1.xpose.msra.mxu0 0.0
  %2474 = vmatprep.subr.mxu0 0.0
  %2475 = vmatpush1.xpose.msra.mxu0 0.0
  %2476 = vmatprep.subr.mxu0 0.0
  %2477 = vmatpush1.xpose.msra.mxu0 0.0
  %2478 = vmatprep.subr.mxu0 0.0
  %2479 = vmatpush1.xpose.msra.mxu0 0.0
  %2480 = vmatprep.subr.mxu0 0.0
  %2481 = vmatpush1.xpose.msra.mxu0 0.0
  %2482 = vmatprep.subr.mxu0 0.0
  %2483 = vmatpush1.xpose.msra.mxu0 0.0
  %2484 = vmatprep.subr.mxu0 0.0
  %2485 = vmatpush1.xpose.msra.mxu0 0.0
  %2486 = vmatprep.subr.mxu0 0.0
  %2487 = vmatpush1.xpose.msra.mxu0 0.0
  %2488 = vmatprep.subr.mxu0 0.0
  %2489 = vmatpush1.xpose.msra.mxu0 0.0
  %2490 = vmatprep.subr.mxu0 0.0
  %2491 = vmatpush1.xpose.msra.mxu0 0.0
  %2492 = vmatprep.subr.mxu0 0.0
  %2493 = vmatpush1.xpose.msra.mxu0 0.0
  %2494 = vmatprep.subr.mxu0 0.0
  %2495 = vmatpush1.xpose.msra.mxu0 0.0
  %2496 = vmatprep.subr.mxu0 0.0
  %2497 = vmatpush1.xpose.msra.mxu0 0.0
  %2498 = vmatprep.subr.mxu0 0.0
  %2499 = vmatpush1.xpose.msra.mxu0 0.0
  %2500 = vmatprep.subr.mxu0 0.0
  %2501 = vmatpush1.xpose.msra.mxu0 0.0
  %2502 = vmatprep.subr.mxu0 0.0
  %2503 = vmatpush1.xpose.msra.mxu0 0.0
  %2504 = vmatprep.subr.mxu0 0.0
  %2505 = vmatpush1.xpose.msra.mxu0 0.0
  %2506 = vmatprep.subr.mxu0 0.0
  %2507 = vmatpush1.xpose.msra.mxu0 0.0
  %2508 = vmatprep.subr.mxu0 0.0
  %2509 = vmatpush1.xpose.msra.mxu0 0.0
  %2510 = vmatprep.subr.mxu0 0.0
  %2511 = vmatpush1.xpose.msra.mxu0 0.0
  %2512 = vmatprep.subr.mxu0 0.0
  %2513 = vmatpush1.xpose.msra.mxu0 0.0
  %2514 = vmatprep.subr.mxu0 0.0
  %2515 = vmatpush1.xpose.msra.mxu0 0.0
  %2516 = vmatprep.subr.mxu0 0.0
  %2517 = vmatpush1.xpose.msra.mxu0 0.0
  %2518 = vmatprep.subr.mxu0 0.0
  %2519 = vmatpush1.xpose.msra.mxu0 0.0
  %2520 = vmatprep.subr.mxu0 0.0
  %2521 = vmatpush1.xpose.msra.mxu0 0.0
  %2522 = vmatprep.subr.mxu0 0.0
  %2523 = vmatpush1.xpose.msra.mxu0 0.0
  %2524 = vmatprep.subr.mxu0 0.0
  %2525 = vmatpush1.xpose.msra.mxu0 0.0
  %2526 = vmatprep.subr.mxu0 0.0
  %2527 = vmatpush1.xpose.msra.mxu0 0.0
  %2528 = vmatprep.subr.mxu0 0.0
  %2529 = vmatpush1.xpose.msra.mxu0 0.0
  %2530 = vmatprep.mubr.f32.mxu0 0.0
  %2531 = vmatmul.mubr.f32.gmra.mrb[0].mxu0 %v2461
  %v2532 = vpop.f32.mrb[0].mxu0
  %v2533 = vadd.f32 0.0, %v2532
  %v2534 = vpop.f32.mrb[0].mxu0
  %2535 = vdwg.mxu0
  %v2537 = vsel %vm179, %v178, 0
  %v2540 = vsel %vm179, %v114, 0
  %2542 = vmatprep.subr.mxu0 0.0
  %2543 = vmatpush1.xpose.msra.mxu0 %v2540
  %2544 = vmatprep.subr.mxu0 0.0
  %2545 = vmatpush1.xpose.msra.mxu0 0.0
  %2546 = vmatprep.subr.mxu0 0.0
  %2547 = vmatpush1.xpose.msra.mxu0 0.0
  %2548 = vmatprep.subr.mxu0 0.0
  %2549 = vmatpush1.xpose.msra.mxu0 0.0
  %2550 = vmatprep.subr.mxu0 0.0
  %2551 = vmatpush1.xpose.msra.mxu0 0.0
  %2552 = vmatprep.subr.mxu0 0.0
  %2553 = vmatpush1.xpose.msra.mxu0 0.0
  %2554 = vmatprep.subr.mxu0 0.0
  %2555 = vmatpush1.xpose.msra.mxu0 0.0
  %2556 = vmatprep.subr.mxu0 0.0
  %2557 = vmatpush1.xpose.msra.mxu0 0.0
  %2558 = vmatprep.subr.mxu0 0.0
  %2559 = vmatpush1.xpose.msra.mxu0 0.0
  %2560 = vmatprep.subr.mxu0 0.0
  %2561 = vmatpush1.xpose.msra.mxu0 0.0
  %2562 = vmatprep.subr.mxu0 0.0
  %2563 = vmatpush1.xpose.msra.mxu0 0.0
  %2564 = vmatprep.subr.mxu0 0.0
  %2565 = vmatpush1.xpose.msra.mxu0 0.0
  %2566 = vmatprep.subr.mxu0 0.0
  %2567 = vmatpush1.xpose.msra.mxu0 0.0
  %2568 = vmatprep.subr.mxu0 0.0
  %2569 = vmatpush1.xpose.msra.mxu0 0.0
  %2570 = vmatprep.subr.mxu0 0.0
  %2571 = vmatpush1.xpose.msra.mxu0 0.0
  %2572 = vmatprep.subr.mxu0 0.0
  %2573 = vmatpush1.xpose.msra.mxu0 0.0
  %2574 = vmatprep.subr.mxu0 0.0
  %2575 = vmatpush1.xpose.msra.mxu0 0.0
  %2576 = vmatprep.subr.mxu0 0.0
  %2577 = vmatpush1.xpose.msra.mxu0 0.0
  %2578 = vmatprep.subr.mxu0 0.0
  %2579 = vmatpush1.xpose.msra.mxu0 0.0
  %2580 = vmatprep.subr.mxu0 0.0
  %2581 = vmatpush1.xpose.msra.mxu0 0.0
  %2582 = vmatprep.subr.mxu0 0.0
  %2583 = vmatpush1.xpose.msra.mxu0 0.0
  %2584 = vmatprep.subr.mxu0 0.0
  %2585 = vmatpush1.xpose.msra.mxu0 0.0
  %2586 = vmatprep.subr.mxu0 0.0
  %2587 = vmatpush1.xpose.msra.mxu0 0.0
  %2588 = vmatprep.subr.mxu0 0.0
  %2589 = vmatpush1.xpose.msra.mxu0 0.0
  %2590 = vmatprep.subr.mxu0 0.0
  %2591 = vmatpush1.xpose.msra.mxu0 0.0
  %2592 = vmatprep.subr.mxu0 0.0
  %2593 = vmatpush1.xpose.msra.mxu0 0.0
  %2594 = vmatprep.subr.mxu0 0.0
  %2595 = vmatpush1.xpose.msra.mxu0 0.0
  %2596 = vmatprep.subr.mxu0 0.0
  %2597 = vmatpush1.xpose.msra.mxu0 0.0
  %2598 = vmatprep.subr.mxu0 0.0
  %2599 = vmatpush1.xpose.msra.mxu0 0.0
  %2600 = vmatprep.subr.mxu0 0.0
  %2601 = vmatpush1.xpose.msra.mxu0 0.0
  %2602 = vmatprep.subr.mxu0 0.0
  %2603 = vmatpush1.xpose.msra.mxu0 0.0
  %2604 = vmatprep.subr.mxu0 0.0
  %2605 = vmatpush1.xpose.msra.mxu0 0.0
  %2606 = vmatprep.mubr.f32.mxu0 0.0
  %2607 = vmatmul.mubr.f32.gmra.mrb[0].mxu0 %v2537
  %v2608 = vpop.f32.mrb[0].mxu0
  %v2609 = vadd.f32 0.0, %v2608
  %v2610 = vpop.f32.mrb[0].mxu0
  %2611 = vdwg.mxu0
  %v2612 = vsub.f32 %v115, %v83
  %v2613 = vsub.f32 %v116, %v84
  %v2614 = vsub.f32 %v117, %v85
  %v2615 = vsub.f32 %v118, %v86
  %v2616 = vsub.f32 %v119, %v87
  %v2617 = vsub.f32 %v120, %v88
  %v2618 = vsub.f32 %v121, %v89
  %v2619 = vsub.f32 %v122, %v90
  %v2620 = vsub.f32 %v123, %v91
  %v2621 = vsub.f32 %v124, %v92
  %v2622 = vsub.f32 %v125, %v93
  %v2623 = vsub.f32 %v126, %v94
  %v2624 = vsub.f32 %v127, %v95
  %v2625 = vsub.f32 %v128, %v96
  %v2626 = vsub.f32 %v129, %v97
  %v2627 = vsub.f32 %v130, %v98
  %v2628 = vsub.f32 %v131, %v99
  %v2629 = vsub.f32 %v132, %v100
  %v2630 = vsub.f32 %v133, %v101
  %v2631 = vsub.f32 %v134, %v102
  %v2632 = vsub.f32 %v135, %v103
  %v2633 = vsub.f32 %v136, %v104
  %v2634 = vsub.f32 %v137, %v105
  %v2635 = vsub.f32 %v138, %v106
  %v2636 = vsub.f32 %v139, %v107
  %v2637 = vsub.f32 %v140, %v108
  %v2638 = vsub.f32 %v141, %v109
  %v2639 = vsub.f32 %v142, %v110
  %v2640 = vsub.f32 %v143, %v111
  %v2641 = vsub.f32 %v144, %v112
  %v2642 = vsub.f32 %v145, %v113
  %v2643 = vsub.f32 %v146, %v114
  %v2645 = vsel %vm179, %v19, 0
  %v2648 = vsel %vm179, %v2612, 0
  %2650 = vmatprep.subr.mxu0 0.0
  %2651 = vmatpush1.xpose.msra.mxu0 %v2648
  %2652 = vmatprep.subr.mxu0 0.0
  %2653 = vmatpush1.xpose.msra.mxu0 0.0
  %2654 = vmatprep.subr.mxu0 0.0
  %2655 = vmatpush1.xpose.msra.mxu0 0.0
  %2656 = vmatprep.subr.mxu0 0.0
  %2657 = vmatpush1.xpose.msra.mxu0 0.0
  %2658 = vmatprep.subr.mxu0 0.0
  %2659 = vmatpush1.xpose.msra.mxu0 0.0
  %2660 = vmatprep.subr.mxu0 0.0
  %2661 = vmatpush1.xpose.msra.mxu0 0.0
  %2662 = vmatprep.subr.mxu0 0.0
  %2663 = vmatpush1.xpose.msra.mxu0 0.0
  %2664 = vmatprep.subr.mxu0 0.0
  %2665 = vmatpush1.xpose.msra.mxu0 0.0
  %2666 = vmatprep.subr.mxu0 0.0
  %2667 = vmatpush1.xpose.msra.mxu0 0.0
  %2668 = vmatprep.subr.mxu0 0.0
  %2669 = vmatpush1.xpose.msra.mxu0 0.0
  %2670 = vmatprep.subr.mxu0 0.0
  %2671 = vmatpush1.xpose.msra.mxu0 0.0
  %2672 = vmatprep.subr.mxu0 0.0
  %2673 = vmatpush1.xpose.msra.mxu0 0.0
  %2674 = vmatprep.subr.mxu0 0.0
  %2675 = vmatpush1.xpose.msra.mxu0 0.0
  %2676 = vmatprep.subr.mxu0 0.0
  %2677 = vmatpush1.xpose.msra.mxu0 0.0
  %2678 = vmatprep.subr.mxu0 0.0
  %2679 = vmatpush1.xpose.msra.mxu0 0.0
  %2680 = vmatprep.subr.mxu0 0.0
  %2681 = vmatpush1.xpose.msra.mxu0 0.0
  %2682 = vmatprep.subr.mxu0 0.0
  %2683 = vmatpush1.xpose.msra.mxu0 0.0
  %2684 = vmatprep.subr.mxu0 0.0
  %2685 = vmatpush1.xpose.msra.mxu0 0.0
  %2686 = vmatprep.subr.mxu0 0.0
  %2687 = vmatpush1.xpose.msra.mxu0 0.0
  %2688 = vmatprep.subr.mxu0 0.0
  %2689 = vmatpush1.xpose.msra.mxu0 0.0
  %2690 = vmatprep.subr.mxu0 0.0
  %2691 = vmatpush1.xpose.msra.mxu0 0.0
  %2692 = vmatprep.subr.mxu0 0.0
  %2693 = vmatpush1.xpose.msra.mxu0 0.0
  %2694 = vmatprep.subr.mxu0 0.0
  %2695 = vmatpush1.xpose.msra.mxu0 0.0
  %2696 = vmatprep.subr.mxu0 0.0
  %2697 = vmatpush1.xpose.msra.mxu0 0.0
  %2698 = vmatprep.subr.mxu0 0.0
  %2699 = vmatpush1.xpose.msra.mxu0 0.0
  %2700 = vmatprep.subr.mxu0 0.0
  %2701 = vmatpush1.xpose.msra.mxu0 0.0
  %2702 = vmatprep.subr.mxu0 0.0
  %2703 = vmatpush1.xpose.msra.mxu0 0.0
  %2704 = vmatprep.subr.mxu0 0.0
  %2705 = vmatpush1.xpose.msra.mxu0 0.0
  %2706 = vmatprep.subr.mxu0 0.0
  %2707 = vmatpush1.xpose.msra.mxu0 0.0
  %2708 = vmatprep.subr.mxu0 0.0
  %2709 = vmatpush1.xpose.msra.mxu0 0.0
  %2710 = vmatprep.subr.mxu0 0.0
  %2711 = vmatpush1.xpose.msra.mxu0 0.0
  %2712 = vmatprep.subr.mxu0 0.0
  %2713 = vmatpush1.xpose.msra.mxu0 0.0
  %2714 = vmatprep.mubr.f32.mxu0 0.0
  %2715 = vmatmul.mubr.f32.gmra.mrb[0].mxu0 %v2645
  %v2716 = vpop.f32.mrb[0].mxu0
  %v2717 = vadd.f32 0.0, %v2716
  %v2718 = vpop.f32.mrb[0].mxu0
  %2719 = vdwg.mxu0
  %v2721 = vsel %vm179, %v20, 0
  %v2724 = vsel %vm179, %v2613, 0
  %2726 = vmatprep.subr.mxu0 0.0
  %2727 = vmatpush1.xpose.msra.mxu0 %v2724
  %2728 = vmatprep.subr.mxu0 0.0
  %2729 = vmatpush1.xpose.msra.mxu0 0.0
  %2730 = vmatprep.subr.mxu0 0.0
  %2731 = vmatpush1.xpose.msra.mxu0 0.0
  %2732 = vmatprep.subr.mxu0 0.0
  %2733 = vmatpush1.xpose.msra.mxu0 0.0
  %2734 = vmatprep.subr.mxu0 0.0
  %2735 = vmatpush1.xpose.msra.mxu0 0.0
  %2736 = vmatprep.subr.mxu0 0.0
  %2737 = vmatpush1.xpose.msra.mxu0 0.0
  %2738 = vmatprep.subr.mxu0 0.0
  %2739 = vmatpush1.xpose.msra.mxu0 0.0
  %2740 = vmatprep.subr.mxu0 0.0
  %2741 = vmatpush1.xpose.msra.mxu0 0.0
  %2742 = vmatprep.subr.mxu0 0.0
  %2743 = vmatpush1.xpose.msra.mxu0 0.0
  %2744 = vmatprep.subr.mxu0 0.0
  %2745 = vmatpush1.xpose.msra.mxu0 0.0
  %2746 = vmatprep.subr.mxu0 0.0
  %2747 = vmatpush1.xpose.msra.mxu0 0.0
  %2748 = vmatprep.subr.mxu0 0.0
  %2749 = vmatpush1.xpose.msra.mxu0 0.0
  %2750 = vmatprep.subr.mxu0 0.0
  %2751 = vmatpush1.xpose.msra.mxu0 0.0
  %2752 = vmatprep.subr.mxu0 0.0
  %2753 = vmatpush1.xpose.msra.mxu0 0.0
  %2754 = vmatprep.subr.mxu0 0.0
  %2755 = vmatpush1.xpose.msra.mxu0 0.0
  %2756 = vmatprep.subr.mxu0 0.0
  %2757 = vmatpush1.xpose.msra.mxu0 0.0
  %2758 = vmatprep.subr.mxu0 0.0
  %2759 = vmatpush1.xpose.msra.mxu0 0.0
  %2760 = vmatprep.subr.mxu0 0.0
  %2761 = vmatpush1.xpose.msra.mxu0 0.0
  %2762 = vmatprep.subr.mxu0 0.0
  %2763 = vmatpush1.xpose.msra.mxu0 0.0
  %2764 = vmatprep.subr.mxu0 0.0
  %2765 = vmatpush1.xpose.msra.mxu0 0.0
  %2766 = vmatprep.subr.mxu0 0.0
  %2767 = vmatpush1.xpose.msra.mxu0 0.0
  %2768 = vmatprep.subr.mxu0 0.0
  %2769 = vmatpush1.xpose.msra.mxu0 0.0
  %2770 = vmatprep.subr.mxu0 0.0
  %2771 = vmatpush1.xpose.msra.mxu0 0.0
  %2772 = vmatprep.subr.mxu0 0.0
  %2773 = vmatpush1.xpose.msra.mxu0 0.0
  %2774 = vmatprep.subr.mxu0 0.0
  %2775 = vmatpush1.xpose.msra.mxu0 0.0
  %2776 = vmatprep.subr.mxu0 0.0
  %2777 = vmatpush1.xpose.msra.mxu0 0.0
  %2778 = vmatprep.subr.mxu0 0.0
  %2779 = vmatpush1.xpose.msra.mxu0 0.0
  %2780 = vmatprep.subr.mxu0 0.0
  %2781 = vmatpush1.xpose.msra.mxu0 0.0
  %2782 = vmatprep.subr.mxu0 0.0
  %2783 = vmatpush1.xpose.msra.mxu0 0.0
  %2784 = vmatprep.subr.mxu0 0.0
  %2785 = vmatpush1.xpose.msra.mxu0 0.0
  %2786 = vmatprep.subr.mxu0 0.0
  %2787 = vmatpush1.xpose.msra.mxu0 0.0
  %2788 = vmatprep.subr.mxu0 0.0
  %2789 = vmatpush1.xpose.msra.mxu0 0.0
  %2790 = vmatprep.mubr.f32.mxu0 0.0
  %2791 = vmatmul.mubr.f32.gmra.mrb[0].mxu0 %v2721
  %v2792 = vpop.f32.mrb[0].mxu0
  %v2793 = vadd.f32 0.0, %v2792
  %v2794 = vpop.f32.mrb[0].mxu0
  %2795 = vdwg.mxu0
  %v2797 = vsel %vm179, %v21, 0
  %v2800 = vsel %vm179, %v2614, 0
  %2802 = vmatprep.subr.mxu0 0.0
  %2803 = vmatpush1.xpose.msra.mxu0 %v2800
  %2804 = vmatprep.subr.mxu0 0.0
  %2805 = vmatpush1.xpose.msra.mxu0 0.0
  %2806 = vmatprep.subr.mxu0 0.0
  %2807 = vmatpush1.xpose.msra.mxu0 0.0
  %2808 = vmatprep.subr.mxu0 0.0
  %2809 = vmatpush1.xpose.msra.mxu0 0.0
  %2810 = vmatprep.subr.mxu0 0.0
  %2811 = vmatpush1.xpose.msra.mxu0 0.0
  %2812 = vmatprep.subr.mxu0 0.0
  %2813 = vmatpush1.xpose.msra.mxu0 0.0
  %2814 = vmatprep.subr.mxu0 0.0
  %2815 = vmatpush1.xpose.msra.mxu0 0.0
  %2816 = vmatprep.subr.mxu0 0.0
  %2817 = vmatpush1.xpose.msra.mxu0 0.0
  %2818 = vmatprep.subr.mxu0 0.0
  %2819 = vmatpush1.xpose.msra.mxu0 0.0
  %2820 = vmatprep.subr.mxu0 0.0
  %2821 = vmatpush1.xpose.msra.mxu0 0.0
  %2822 = vmatprep.subr.mxu0 0.0
  %2823 = vmatpush1.xpose.msra.mxu0 0.0
  %2824 = vmatprep.subr.mxu0 0.0
  %2825 = vmatpush1.xpose.msra.mxu0 0.0
  %2826 = vmatprep.subr.mxu0 0.0
  %2827 = vmatpush1.xpose.msra.mxu0 0.0
  %2828 = vmatprep.subr.mxu0 0.0
  %2829 = vmatpush1.xpose.msra.mxu0 0.0
  %2830 = vmatprep.subr.mxu0 0.0
  %2831 = vmatpush1.xpose.msra.mxu0 0.0
  %2832 = vmatprep.subr.mxu0 0.0
  %2833 = vmatpush1.xpose.msra.mxu0 0.0
  %2834 = vmatprep.subr.mxu0 0.0
  %2835 = vmatpush1.xpose.msra.mxu0 0.0
  %2836 = vmatprep.subr.mxu0 0.0
  %2837 = vmatpush1.xpose.msra.mxu0 0.0
  %2838 = vmatprep.subr.mxu0 0.0
  %2839 = vmatpush1.xpose.msra.mxu0 0.0
  %2840 = vmatprep.subr.mxu0 0.0
  %2841 = vmatpush1.xpose.msra.mxu0 0.0
  %2842 = vmatprep.subr.mxu0 0.0
  %2843 = vmatpush1.xpose.msra.mxu0 0.0
  %2844 = vmatprep.subr.mxu0 0.0
  %2845 = vmatpush1.xpose.msra.mxu0 0.0
  %2846 = vmatprep.subr.mxu0 0.0
  %2847 = vmatpush1.xpose.msra.mxu0 0.0
  %2848 = vmatprep.subr.mxu0 0.0
  %2849 = vmatpush1.xpose.msra.mxu0 0.0
  %2850 = vmatprep.subr.mxu0 0.0
  %2851 = vmatpush1.xpose.msra.mxu0 0.0
  %2852 = vmatprep.subr.mxu0 0.0
  %2853 = vmatpush1.xpose.msra.mxu0 0.0
  %2854 = vmatprep.subr.mxu0 0.0
  %2855 = vmatpush1.xpose.msra.mxu0 0.0
  %2856 = vmatprep.subr.mxu0 0.0
  %2857 = vmatpush1.xpose.msra.mxu0 0.0
  %2858 = vmatprep.subr.mxu0 0.0
  %2859 = vmatpush1.xpose.msra.mxu0 0.0
  %2860 = vmatprep.subr.mxu0 0.0
  %2861 = vmatpush1.xpose.msra.mxu0 0.0
  %2862 = vmatprep.subr.mxu0 0.0
  %2863 = vmatpush1.xpose.msra.mxu0 0.0
  %2864 = vmatprep.subr.mxu0 0.0
  %2865 = vmatpush1.xpose.msra.mxu0 0.0
  %2866 = vmatprep.mubr.f32.mxu0 0.0
  %2867 = vmatmul.mubr.f32.gmra.mrb[0].mxu0 %v2797
  %v2868 = vpop.f32.mrb[0].mxu0
  %v2869 = vadd.f32 0.0, %v2868
  %v2870 = vpop.f32.mrb[0].mxu0
  %2871 = vdwg.mxu0
  %v2873 = vsel %vm179, %v22, 0
  %v2876 = vsel %vm179, %v2615, 0
  %2878 = vmatprep.subr.mxu0 0.0
  %2879 = vmatpush1.xpose.msra.mxu0 %v2876
  %2880 = vmatprep.subr.mxu0 0.0
  %2881 = vmatpush1.xpose.msra.mxu0 0.0
  %2882 = vmatprep.subr.mxu0 0.0
  %2883 = vmatpush1.xpose.msra.mxu0 0.0
  %2884 = vmatprep.subr.mxu0 0.0
  %2885 = vmatpush1.xpose.msra.mxu0 0.0
  %2886 = vmatprep.subr.mxu0 0.0
  %2887 = vmatpush1.xpose.msra.mxu0 0.0
  %2888 = vmatprep.subr.mxu0 0.0
  %2889 = vmatpush1.xpose.msra.mxu0 0.0
  %2890 = vmatprep.subr.mxu0 0.0
  %2891 = vmatpush1.xpose.msra.mxu0 0.0
  %2892 = vmatprep.subr.mxu0 0.0
  %2893 = vmatpush1.xpose.msra.mxu0 0.0
  %2894 = vmatprep.subr.mxu0 0.0
  %2895 = vmatpush1.xpose.msra.mxu0 0.0
  %2896 = vmatprep.subr.mxu0 0.0
  %2897 = vmatpush1.xpose.msra.mxu0 0.0
  %2898 = vmatprep.subr.mxu0 0.0
  %2899 = vmatpush1.xpose.msra.mxu0 0.0
  %2900 = vmatprep.subr.mxu0 0.0
  %2901 = vmatpush1.xpose.msra.mxu0 0.0
  %2902 = vmatprep.subr.mxu0 0.0
  %2903 = vmatpush1.xpose.msra.mxu0 0.0
  %2904 = vmatprep.subr.mxu0 0.0
  %2905 = vmatpush1.xpose.msra.mxu0 0.0
  %2906 = vmatprep.subr.mxu0 0.0
  %2907 = vmatpush1.xpose.msra.mxu0 0.0
  %2908 = vmatprep.subr.mxu0 0.0
  %2909 = vmatpush1.xpose.msra.mxu0 0.0
  %2910 = vmatprep.subr.mxu0 0.0
  %2911 = vmatpush1.xpose.msra.mxu0 0.0
  %2912 = vmatprep.subr.mxu0 0.0
  %2913 = vmatpush1.xpose.msra.mxu0 0.0
  %2914 = vmatprep.subr.mxu0 0.0
  %2915 = vmatpush1.xpose.msra.mxu0 0.0
  %2916 = vmatprep.subr.mxu0 0.0
  %2917 = vmatpush1.xpose.msra.mxu0 0.0
  %2918 = vmatprep.subr.mxu0 0.0
  %2919 = vmatpush1.xpose.msra.mxu0 0.0
  %2920 = vmatprep.subr.mxu0 0.0
  %2921 = vmatpush1.xpose.msra.mxu0 0.0
  %2922 = vmatprep.subr.mxu0 0.0
  %2923 = vmatpush1.xpose.msra.mxu0 0.0
  %2924 = vmatprep.subr.mxu0 0.0
  %2925 = vmatpush1.xpose.msra.mxu0 0.0
  %2926 = vmatprep.subr.mxu0 0.0
  %2927 = vmatpush1.xpose.msra.mxu0 0.0
  %2928 = vmatprep.subr.mxu0 0.0
  %2929 = vmatpush1.xpose.msra.mxu0 0.0
  %2930 = vmatprep.subr.mxu0 0.0
  %2931 = vmatpush1.xpose.msra.mxu0 0.0
  %2932 = vmatprep.subr.mxu0 0.0
  %2933 = vmatpush1.xpose.msra.mxu0 0.0
  %2934 = vmatprep.subr.mxu0 0.0
  %2935 = vmatpush1.xpose.msra.mxu0 0.0
  %2936 = vmatprep.subr.mxu0 0.0
  %2937 = vmatpush1.xpose.msra.mxu0 0.0
  %2938 = vmatprep.subr.mxu0 0.0
  %2939 = vmatpush1.xpose.msra.mxu0 0.0
  %2940 = vmatprep.subr.mxu0 0.0
  %2941 = vmatpush1.xpose.msra.mxu0 0.0
  %2942 = vmatprep.mubr.f32.mxu0 0.0
  %2943 = vmatmul.mubr.f32.gmra.mrb[0].mxu0 %v2873
  %v2944 = vpop.f32.mrb[0].mxu0
  %v2945 = vadd.f32 0.0, %v2944
  %v2946 = vpop.f32.mrb[0].mxu0
  %2947 = vdwg.mxu0
  %v2949 = vsel %vm179, %v23, 0
  %v2952 = vsel %vm179, %v2616, 0
  %2954 = vmatprep.subr.mxu0 0.0
  %2955 = vmatpush1.xpose.msra.mxu0 %v2952
  %2956 = vmatprep.subr.mxu0 0.0
  %2957 = vmatpush1.xpose.msra.mxu0 0.0
  %2958 = vmatprep.subr.mxu0 0.0
  %2959 = vmatpush1.xpose.msra.mxu0 0.0
  %2960 = vmatprep.subr.mxu0 0.0
  %2961 = vmatpush1.xpose.msra.mxu0 0.0
  %2962 = vmatprep.subr.mxu0 0.0
  %2963 = vmatpush1.xpose.msra.mxu0 0.0
  %2964 = vmatprep.subr.mxu0 0.0
  %2965 = vmatpush1.xpose.msra.mxu0 0.0
  %2966 = vmatprep.subr.mxu0 0.0
  %2967 = vmatpush1.xpose.msra.mxu0 0.0
  %2968 = vmatprep.subr.mxu0 0.0
  %2969 = vmatpush1.xpose.msra.mxu0 0.0
  %2970 = vmatprep.subr.mxu0 0.0
  %2971 = vmatpush1.xpose.msra.mxu0 0.0
  %2972 = vmatprep.subr.mxu0 0.0
  %2973 = vmatpush1.xpose.msra.mxu0 0.0
  %2974 = vmatprep.subr.mxu0 0.0
  %2975 = vmatpush1.xpose.msra.mxu0 0.0
  %2976 = vmatprep.subr.mxu0 0.0
  %2977 = vmatpush1.xpose.msra.mxu0 0.0
  %2978 = vmatprep.subr.mxu0 0.0
  %2979 = vmatpush1.xpose.msra.mxu0 0.0
  %2980 = vmatprep.subr.mxu0 0.0
  %2981 = vmatpush1.xpose.msra.mxu0 0.0
  %2982 = vmatprep.subr.mxu0 0.0
  %2983 = vmatpush1.xpose.msra.mxu0 0.0
  %2984 = vmatprep.subr.mxu0 0.0
  %2985 = vmatpush1.xpose.msra.mxu0 0.0
  %2986 = vmatprep.subr.mxu0 0.0
  %2987 = vmatpush1.xpose.msra.mxu0 0.0
  %2988 = vmatprep.subr.mxu0 0.0
  %2989 = vmatpush1.xpose.msra.mxu0 0.0
  %2990 = vmatprep.subr.mxu0 0.0
  %2991 = vmatpush1.xpose.msra.mxu0 0.0
  %2992 = vmatprep.subr.mxu0 0.0
  %2993 = vmatpush1.xpose.msra.mxu0 0.0
  %2994 = vmatprep.subr.mxu0 0.0
  %2995 = vmatpush1.xpose.msra.mxu0 0.0
  %2996 = vmatprep.subr.mxu0 0.0
  %2997 = vmatpush1.xpose.msra.mxu0 0.0
  %2998 = vmatprep.subr.mxu0 0.0
  %2999 = vmatpush1.xpose.msra.mxu0 0.0
  %3000 = vmatprep.subr.mxu0 0.0
  %3001 = vmatpush1.xpose.msra.mxu0 0.0
  %3002 = vmatprep.subr.mxu0 0.0
  %3003 = vmatpush1.xpose.msra.mxu0 0.0
  %3004 = vmatprep.subr.mxu0 0.0
  %3005 = vmatpush1.xpose.msra.mxu0 0.0
  %3006 = vmatprep.subr.mxu0 0.0
  %3007 = vmatpush1.xpose.msra.mxu0 0.0
  %3008 = vmatprep.subr.mxu0 0.0
  %3009 = vmatpush1.xpose.msra.mxu0 0.0
  %3010 = vmatprep.subr.mxu0 0.0
  %3011 = vmatpush1.xpose.msra.mxu0 0.0
  %3012 = vmatprep.subr.mxu0 0.0
  %3013 = vmatpush1.xpose.msra.mxu0 0.0
  %3014 = vmatprep.subr.mxu0 0.0
  %3015 = vmatpush1.xpose.msra.mxu0 0.0
  %3016 = vmatprep.subr.mxu0 0.0
  %3017 = vmatpush1.xpose.msra.mxu0 0.0
  %3018 = vmatprep.mubr.f32.mxu0 0.0
  %3019 = vmatmul.mubr.f32.gmra.mrb[0].mxu0 %v2949
  %v3020 = vpop.f32.mrb[0].mxu0
  %v3021 = vadd.f32 0.0, %v3020
  %v3022 = vpop.f32.mrb[0].mxu0
  %3023 = vdwg.mxu0
  %v3025 = vsel %vm179, %v24, 0
  %v3028 = vsel %vm179, %v2617, 0
  %3030 = vmatprep.subr.mxu0 0.0
  %3031 = vmatpush1.xpose.msra.mxu0 %v3028
  %3032 = vmatprep.subr.mxu0 0.0
  %3033 = vmatpush1.xpose.msra.mxu0 0.0
  %3034 = vmatprep.subr.mxu0 0.0
  %3035 = vmatpush1.xpose.msra.mxu0 0.0
  %3036 = vmatprep.subr.mxu0 0.0
  %3037 = vmatpush1.xpose.msra.mxu0 0.0
  %3038 = vmatprep.subr.mxu0 0.0
  %3039 = vmatpush1.xpose.msra.mxu0 0.0
  %3040 = vmatprep.subr.mxu0 0.0
  %3041 = vmatpush1.xpose.msra.mxu0 0.0
  %3042 = vmatprep.subr.mxu0 0.0
  %3043 = vmatpush1.xpose.msra.mxu0 0.0
  %3044 = vmatprep.subr.mxu0 0.0
  %3045 = vmatpush1.xpose.msra.mxu0 0.0
  %3046 = vmatprep.subr.mxu0 0.0
  %3047 = vmatpush1.xpose.msra.mxu0 0.0
  %3048 = vmatprep.subr.mxu0 0.0
  %3049 = vmatpush1.xpose.msra.mxu0 0.0
  %3050 = vmatprep.subr.mxu0 0.0
  %3051 = vmatpush1.xpose.msra.mxu0 0.0
  %3052 = vmatprep.subr.mxu0 0.0
  %3053 = vmatpush1.xpose.msra.mxu0 0.0
  %3054 = vmatprep.subr.mxu0 0.0
  %3055 = vmatpush1.xpose.msra.mxu0 0.0
  %3056 = vmatprep.subr.mxu0 0.0
  %3057 = vmatpush1.xpose.msra.mxu0 0.0
  %3058 = vmatprep.subr.mxu0 0.0
  %3059 = vmatpush1.xpose.msra.mxu0 0.0
  %3060 = vmatprep.subr.mxu0 0.0
  %3061 = vmatpush1.xpose.msra.mxu0 0.0
  %3062 = vmatprep.subr.mxu0 0.0
  %3063 = vmatpush1.xpose.msra.mxu0 0.0
  %3064 = vmatprep.subr.mxu0 0.0
  %3065 = vmatpush1.xpose.msra.mxu0 0.0
  %3066 = vmatprep.subr.mxu0 0.0
  %3067 = vmatpush1.xpose.msra.mxu0 0.0
  %3068 = vmatprep.subr.mxu0 0.0
  %3069 = vmatpush1.xpose.msra.mxu0 0.0
  %3070 = vmatprep.subr.mxu0 0.0
  %3071 = vmatpush1.xpose.msra.mxu0 0.0
  %3072 = vmatprep.subr.mxu0 0.0
  %3073 = vmatpush1.xpose.msra.mxu0 0.0
  %3074 = vmatprep.subr.mxu0 0.0
  %3075 = vmatpush1.xpose.msra.mxu0 0.0
  %3076 = vmatprep.subr.mxu0 0.0
  %3077 = vmatpush1.xpose.msra.mxu0 0.0
  %3078 = vmatprep.subr.mxu0 0.0
  %3079 = vmatpush1.xpose.msra.mxu0 0.0
  %3080 = vmatprep.subr.mxu0 0.0
  %3081 = vmatpush1.xpose.msra.mxu0 0.0
  %3082 = vmatprep.subr.mxu0 0.0
  %3083 = vmatpush1.xpose.msra.mxu0 0.0
  %3084 = vmatprep.subr.mxu0 0.0
  %3085 = vmatpush1.xpose.msra.mxu0 0.0
  %3086 = vmatprep.subr.mxu0 0.0
  %3087 = vmatpush1.xpose.msra.mxu0 0.0
  %3088 = vmatprep.subr.mxu0 0.0
  %3089 = vmatpush1.xpose.msra.mxu0 0.0
  %3090 = vmatprep.subr.mxu0 0.0
  %3091 = vmatpush1.xpose.msra.mxu0 0.0
  %3092 = vmatprep.subr.mxu0 0.0
  %3093 = vmatpush1.xpose.msra.mxu0 0.0
  %3094 = vmatprep.mubr.f32.mxu0 0.0
  %3095 = vmatmul.mubr.f32.gmra.mrb[0].mxu0 %v3025
  %v3096 = vpop.f32.mrb[0].mxu0
  %v3097 = vadd.f32 0.0, %v3096
  %v3098 = vpop.f32.mrb[0].mxu0
  %3099 = vdwg.mxu0
  %v3101 = vsel %vm179, %v25, 0
  %v3104 = vsel %vm179, %v2618, 0
  %3106 = vmatprep.subr.mxu0 0.0
  %3107 = vmatpush1.xpose.msra.mxu0 %v3104
  %3108 = vmatprep.subr.mxu0 0.0
  %3109 = vmatpush1.xpose.msra.mxu0 0.0
  %3110 = vmatprep.subr.mxu0 0.0
  %3111 = vmatpush1.xpose.msra.mxu0 0.0
  %3112 = vmatprep.subr.mxu0 0.0
  %3113 = vmatpush1.xpose.msra.mxu0 0.0
  %3114 = vmatprep.subr.mxu0 0.0
  %3115 = vmatpush1.xpose.msra.mxu0 0.0
  %3116 = vmatprep.subr.mxu0 0.0
  %3117 = vmatpush1.xpose.msra.mxu0 0.0
  %3118 = vmatprep.subr.mxu0 0.0
  %3119 = vmatpush1.xpose.msra.mxu0 0.0
  %3120 = vmatprep.subr.mxu0 0.0
  %3121 = vmatpush1.xpose.msra.mxu0 0.0
  %3122 = vmatprep.subr.mxu0 0.0
  %3123 = vmatpush1.xpose.msra.mxu0 0.0
  %3124 = vmatprep.subr.mxu0 0.0
  %3125 = vmatpush1.xpose.msra.mxu0 0.0
  %3126 = vmatprep.subr.mxu0 0.0
  %3127 = vmatpush1.xpose.msra.mxu0 0.0
  %3128 = vmatprep.subr.mxu0 0.0
  %3129 = vmatpush1.xpose.msra.mxu0 0.0
  %3130 = vmatprep.subr.mxu0 0.0
  %3131 = vmatpush1.xpose.msra.mxu0 0.0
  %3132 = vmatprep.subr.mxu0 0.0
  %3133 = vmatpush1.xpose.msra.mxu0 0.0
  %3134 = vmatprep.subr.mxu0 0.0
  %3135 = vmatpush1.xpose.msra.mxu0 0.0
  %3136 = vmatprep.subr.mxu0 0.0
  %3137 = vmatpush1.xpose.msra.mxu0 0.0
  %3138 = vmatprep.subr.mxu0 0.0
  %3139 = vmatpush1.xpose.msra.mxu0 0.0
  %3140 = vmatprep.subr.mxu0 0.0
  %3141 = vmatpush1.xpose.msra.mxu0 0.0
  %3142 = vmatprep.subr.mxu0 0.0
  %3143 = vmatpush1.xpose.msra.mxu0 0.0
  %3144 = vmatprep.subr.mxu0 0.0
  %3145 = vmatpush1.xpose.msra.mxu0 0.0
  %3146 = vmatprep.subr.mxu0 0.0
  %3147 = vmatpush1.xpose.msra.mxu0 0.0
  %3148 = vmatprep.subr.mxu0 0.0
  %3149 = vmatpush1.xpose.msra.mxu0 0.0
  %3150 = vmatprep.subr.mxu0 0.0
  %3151 = vmatpush1.xpose.msra.mxu0 0.0
  %3152 = vmatprep.subr.mxu0 0.0
  %3153 = vmatpush1.xpose.msra.mxu0 0.0
  %3154 = vmatprep.subr.mxu0 0.0
  %3155 = vmatpush1.xpose.msra.mxu0 0.0
  %3156 = vmatprep.subr.mxu0 0.0
  %3157 = vmatpush1.xpose.msra.mxu0 0.0
  %3158 = vmatprep.subr.mxu0 0.0
  %3159 = vmatpush1.xpose.msra.mxu0 0.0
  %3160 = vmatprep.subr.mxu0 0.0
  %3161 = vmatpush1.xpose.msra.mxu0 0.0
  %3162 = vmatprep.subr.mxu0 0.0
  %3163 = vmatpush1.xpose.msra.mxu0 0.0
  %3164 = vmatprep.subr.mxu0 0.0
  %3165 = vmatpush1.xpose.msra.mxu0 0.0
  %3166 = vmatprep.subr.mxu0 0.0
  %3167 = vmatpush1.xpose.msra.mxu0 0.0
  %3168 = vmatprep.subr.mxu0 0.0
  %3169 = vmatpush1.xpose.msra.mxu0 0.0
  %3170 = vmatprep.mubr.f32.mxu0 0.0
  %3171 = vmatmul.mubr.f32.gmra.mrb[0].mxu0 %v3101
  %v3172 = vpop.f32.mrb[0].mxu0
  %v3173 = vadd.f32 0.0, %v3172
  %v3174 = vpop.f32.mrb[0].mxu0
  %3175 = vdwg.mxu0
  %v3177 = vsel %vm179, %v26, 0
  %v3180 = vsel %vm179, %v2619, 0
  %3182 = vmatprep.subr.mxu0 0.0
  %3183 = vmatpush1.xpose.msra.mxu0 %v3180
  %3184 = vmatprep.subr.mxu0 0.0
  %3185 = vmatpush1.xpose.msra.mxu0 0.0
  %3186 = vmatprep.subr.mxu0 0.0
  %3187 = vmatpush1.xpose.msra.mxu0 0.0
  %3188 = vmatprep.subr.mxu0 0.0
  %3189 = vmatpush1.xpose.msra.mxu0 0.0
  %3190 = vmatprep.subr.mxu0 0.0
  %3191 = vmatpush1.xpose.msra.mxu0 0.0
  %3192 = vmatprep.subr.mxu0 0.0
  %3193 = vmatpush1.xpose.msra.mxu0 0.0
  %3194 = vmatprep.subr.mxu0 0.0
  %3195 = vmatpush1.xpose.msra.mxu0 0.0
  %3196 = vmatprep.subr.mxu0 0.0
  %3197 = vmatpush1.xpose.msra.mxu0 0.0
  %3198 = vmatprep.subr.mxu0 0.0
  %3199 = vmatpush1.xpose.msra.mxu0 0.0
  %3200 = vmatprep.subr.mxu0 0.0
  %3201 = vmatpush1.xpose.msra.mxu0 0.0
  %3202 = vmatprep.subr.mxu0 0.0
  %3203 = vmatpush1.xpose.msra.mxu0 0.0
  %3204 = vmatprep.subr.mxu0 0.0
  %3205 = vmatpush1.xpose.msra.mxu0 0.0
  %3206 = vmatprep.subr.mxu0 0.0
  %3207 = vmatpush1.xpose.msra.mxu0 0.0
  %3208 = vmatprep.subr.mxu0 0.0
  %3209 = vmatpush1.xpose.msra.mxu0 0.0
  %3210 = vmatprep.subr.mxu0 0.0
  %3211 = vmatpush1.xpose.msra.mxu0 0.0
  %3212 = vmatprep.subr.mxu0 0.0
  %3213 = vmatpush1.xpose.msra.mxu0 0.0
  %3214 = vmatprep.subr.mxu0 0.0
  %3215 = vmatpush1.xpose.msra.mxu0 0.0
  %3216 = vmatprep.subr.mxu0 0.0
  %3217 = vmatpush1.xpose.msra.mxu0 0.0
  %3218 = vmatprep.subr.mxu0 0.0
  %3219 = vmatpush1.xpose.msra.mxu0 0.0
  %3220 = vmatprep.subr.mxu0 0.0
  %3221 = vmatpush1.xpose.msra.mxu0 0.0
  %3222 = vmatprep.subr.mxu0 0.0
  %3223 = vmatpush1.xpose.msra.mxu0 0.0
  %3224 = vmatprep.subr.mxu0 0.0
  %3225 = vmatpush1.xpose.msra.mxu0 0.0
  %3226 = vmatprep.subr.mxu0 0.0
  %3227 = vmatpush1.xpose.msra.mxu0 0.0
  %3228 = vmatprep.subr.mxu0 0.0
  %3229 = vmatpush1.xpose.msra.mxu0 0.0
  %3230 = vmatprep.subr.mxu0 0.0
  %3231 = vmatpush1.xpose.msra.mxu0 0.0
  %3232 = vmatprep.subr.mxu0 0.0
  %3233 = vmatpush1.xpose.msra.mxu0 0.0
  %3234 = vmatprep.subr.mxu0 0.0
  %3235 = vmatpush1.xpose.msra.mxu0 0.0
  %3236 = vmatprep.subr.mxu0 0.0
  %3237 = vmatpush1.xpose.msra.mxu0 0.0
  %3238 = vmatprep.subr.mxu0 0.0
  %3239 = vmatpush1.xpose.msra.mxu0 0.0
  %3240 = vmatprep.subr.mxu0 0.0
  %3241 = vmatpush1.xpose.msra.mxu0 0.0
  %3242 = vmatprep.subr.mxu0 0.0
  %3243 = vmatpush1.xpose.msra.mxu0 0.0
  %3244 = vmatprep.subr.mxu0 0.0
  %3245 = vmatpush1.xpose.msra.mxu0 0.0
  %3246 = vmatprep.mubr.f32.mxu0 0.0
  %3247 = vmatmul.mubr.f32.gmra.mrb[0].mxu0 %v3177
  %v3248 = vpop.f32.mrb[0].mxu0
  %v3249 = vadd.f32 0.0, %v3248
  %v3250 = vpop.f32.mrb[0].mxu0
  %3251 = vdwg.mxu0
  %v3253 = vsel %vm179, %v27, 0
  %v3256 = vsel %vm179, %v2620, 0
  %3258 = vmatprep.subr.mxu0 0.0
  %3259 = vmatpush1.xpose.msra.mxu0 %v3256
  %3260 = vmatprep.subr.mxu0 0.0
  %3261 = vmatpush1.xpose.msra.mxu0 0.0
  %3262 = vmatprep.subr.mxu0 0.0
  %3263 = vmatpush1.xpose.msra.mxu0 0.0
  %3264 = vmatprep.subr.mxu0 0.0
  %3265 = vmatpush1.xpose.msra.mxu0 0.0
  %3266 = vmatprep.subr.mxu0 0.0
  %3267 = vmatpush1.xpose.msra.mxu0 0.0
  %3268 = vmatprep.subr.mxu0 0.0
  %3269 = vmatpush1.xpose.msra.mxu0 0.0
  %3270 = vmatprep.subr.mxu0 0.0
  %3271 = vmatpush1.xpose.msra.mxu0 0.0
  %3272 = vmatprep.subr.mxu0 0.0
  %3273 = vmatpush1.xpose.msra.mxu0 0.0
  %3274 = vmatprep.subr.mxu0 0.0
  %3275 = vmatpush1.xpose.msra.mxu0 0.0
  %3276 = vmatprep.subr.mxu0 0.0
  %3277 = vmatpush1.xpose.msra.mxu0 0.0
  %3278 = vmatprep.subr.mxu0 0.0
  %3279 = vmatpush1.xpose.msra.mxu0 0.0
  %3280 = vmatprep.subr.mxu0 0.0
  %3281 = vmatpush1.xpose.msra.mxu0 0.0
  %3282 = vmatprep.subr.mxu0 0.0
  %3283 = vmatpush1.xpose.msra.mxu0 0.0
  %3284 = vmatprep.subr.mxu0 0.0
  %3285 = vmatpush1.xpose.msra.mxu0 0.0
  %3286 = vmatprep.subr.mxu0 0.0
  %3287 = vmatpush1.xpose.msra.mxu0 0.0
  %3288 = vmatprep.subr.mxu0 0.0
  %3289 = vmatpush1.xpose.msra.mxu0 0.0
  %3290 = vmatprep.subr.mxu0 0.0
  %3291 = vmatpush1.xpose.msra.mxu0 0.0
  %3292 = vmatprep.subr.mxu0 0.0
  %3293 = vmatpush1.xpose.msra.mxu0 0.0
  %3294 = vmatprep.subr.mxu0 0.0
  %3295 = vmatpush1.xpose.msra.mxu0 0.0
  %3296 = vmatprep.subr.mxu0 0.0
  %3297 = vmatpush1.xpose.msra.mxu0 0.0
  %3298 = vmatprep.subr.mxu0 0.0
  %3299 = vmatpush1.xpose.msra.mxu0 0.0
  %3300 = vmatprep.subr.mxu0 0.0
  %3301 = vmatpush1.xpose.msra.mxu0 0.0
  %3302 = vmatprep.subr.mxu0 0.0
  %3303 = vmatpush1.xpose.msra.mxu0 0.0
  %3304 = vmatprep.subr.mxu0 0.0
  %3305 = vmatpush1.xpose.msra.mxu0 0.0
  %3306 = vmatprep.subr.mxu0 0.0
  %3307 = vmatpush1.xpose.msra.mxu0 0.0
  %3308 = vmatprep.subr.mxu0 0.0
  %3309 = vmatpush1.xpose.msra.mxu0 0.0
  %3310 = vmatprep.subr.mxu0 0.0
  %3311 = vmatpush1.xpose.msra.mxu0 0.0
  %3312 = vmatprep.subr.mxu0 0.0
  %3313 = vmatpush1.xpose.msra.mxu0 0.0
  %3314 = vmatprep.subr.mxu0 0.0
  %3315 = vmatpush1.xpose.msra.mxu0 0.0
  %3316 = vmatprep.subr.mxu0 0.0
  %3317 = vmatpush1.xpose.msra.mxu0 0.0
  %3318 = vmatprep.subr.mxu0 0.0
  %3319 = vmatpush1.xpose.msra.mxu0 0.0
  %3320 = vmatprep.subr.mxu0 0.0
  %3321 = vmatpush1.xpose.msra.mxu0 0.0
  %3322 = vmatprep.mubr.f32.mxu0 0.0
  %3323 = vmatmul.mubr.f32.gmra.mrb[0].mxu0 %v3253
  %v3324 = vpop.f32.mrb[0].mxu0
  %v3325 = vadd.f32 0.0, %v3324
  %v3326 = vpop.f32.mrb[0].mxu0
  %3327 = vdwg.mxu0
  %v3329 = vsel %vm179, %v28, 0
  %v3332 = vsel %vm179, %v2621, 0
  %3334 = vmatprep.subr.mxu0 0.0
  %3335 = vmatpush1.xpose.msra.mxu0 %v3332
  %3336 = vmatprep.subr.mxu0 0.0
  %3337 = vmatpush1.xpose.msra.mxu0 0.0
  %3338 = vmatprep.subr.mxu0 0.0
  %3339 = vmatpush1.xpose.msra.mxu0 0.0
  %3340 = vmatprep.subr.mxu0 0.0
  %3341 = vmatpush1.xpose.msra.mxu0 0.0
  %3342 = vmatprep.subr.mxu0 0.0
  %3343 = vmatpush1.xpose.msra.mxu0 0.0
  %3344 = vmatprep.subr.mxu0 0.0
  %3345 = vmatpush1.xpose.msra.mxu0 0.0
  %3346 = vmatprep.subr.mxu0 0.0
  %3347 = vmatpush1.xpose.msra.mxu0 0.0
  %3348 = vmatprep.subr.mxu0 0.0
  %3349 = vmatpush1.xpose.msra.mxu0 0.0
  %3350 = vmatprep.subr.mxu0 0.0
  %3351 = vmatpush1.xpose.msra.mxu0 0.0
  %3352 = vmatprep.subr.mxu0 0.0
  %3353 = vmatpush1.xpose.msra.mxu0 0.0
  %3354 = vmatprep.subr.mxu0 0.0
  %3355 = vmatpush1.xpose.msra.mxu0 0.0
  %3356 = vmatprep.subr.mxu0 0.0
  %3357 = vmatpush1.xpose.msra.mxu0 0.0
  %3358 = vmatprep.subr.mxu0 0.0
  %3359 = vmatpush1.xpose.msra.mxu0 0.0
  %3360 = vmatprep.subr.mxu0 0.0
  %3361 = vmatpush1.xpose.msra.mxu0 0.0
  %3362 = vmatprep.subr.mxu0 0.0
  %3363 = vmatpush1.xpose.msra.mxu0 0.0
  %3364 = vmatprep.subr.mxu0 0.0
  %3365 = vmatpush1.xpose.msra.mxu0 0.0
  %3366 = vmatprep.subr.mxu0 0.0
  %3367 = vmatpush1.xpose.msra.mxu0 0.0
  %3368 = vmatprep.subr.mxu0 0.0
  %3369 = vmatpush1.xpose.msra.mxu0 0.0
  %3370 = vmatprep.subr.mxu0 0.0
  %3371 = vmatpush1.xpose.msra.mxu0 0.0
  %3372 = vmatprep.subr.mxu0 0.0
  %3373 = vmatpush1.xpose.msra.mxu0 0.0
  %3374 = vmatprep.subr.mxu0 0.0
  %3375 = vmatpush1.xpose.msra.mxu0 0.0
  %3376 = vmatprep.subr.mxu0 0.0
  %3377 = vmatpush1.xpose.msra.mxu0 0.0
  %3378 = vmatprep.subr.mxu0 0.0
  %3379 = vmatpush1.xpose.msra.mxu0 0.0
  %3380 = vmatprep.subr.mxu0 0.0
  %3381 = vmatpush1.xpose.msra.mxu0 0.0
  %3382 = vmatprep.subr.mxu0 0.0
  %3383 = vmatpush1.xpose.msra.mxu0 0.0
  %3384 = vmatprep.subr.mxu0 0.0
  %3385 = vmatpush1.xpose.msra.mxu0 0.0
  %3386 = vmatprep.subr.mxu0 0.0
  %3387 = vmatpush1.xpose.msra.mxu0 0.0
  %3388 = vmatprep.subr.mxu0 0.0
  %3389 = vmatpush1.xpose.msra.mxu0 0.0
  %3390 = vmatprep.subr.mxu0 0.0
  %3391 = vmatpush1.xpose.msra.mxu0 0.0
  %3392 = vmatprep.subr.mxu0 0.0
  %3393 = vmatpush1.xpose.msra.mxu0 0.0
  %3394 = vmatprep.subr.mxu0 0.0
  %3395 = vmatpush1.xpose.msra.mxu0 0.0
  %3396 = vmatprep.subr.mxu0 0.0
  %3397 = vmatpush1.xpose.msra.mxu0 0.0
  %3398 = vmatprep.mubr.f32.mxu0 0.0
  %3399 = vmatmul.mubr.f32.gmra.mrb[0].mxu0 %v3329
  %v3400 = vpop.f32.mrb[0].mxu0
  %v3401 = vadd.f32 0.0, %v3400
  %v3402 = vpop.f32.mrb[0].mxu0
  %3403 = vdwg.mxu0
  %v3405 = vsel %vm179, %v29, 0
  %v3408 = vsel %vm179, %v2622, 0
  %3410 = vmatprep.subr.mxu0 0.0
  %3411 = vmatpush1.xpose.msra.mxu0 %v3408
  %3412 = vmatprep.subr.mxu0 0.0
  %3413 = vmatpush1.xpose.msra.mxu0 0.0
  %3414 = vmatprep.subr.mxu0 0.0
  %3415 = vmatpush1.xpose.msra.mxu0 0.0
  %3416 = vmatprep.subr.mxu0 0.0
  %3417 = vmatpush1.xpose.msra.mxu0 0.0
  %3418 = vmatprep.subr.mxu0 0.0
  %3419 = vmatpush1.xpose.msra.mxu0 0.0
  %3420 = vmatprep.subr.mxu0 0.0
  %3421 = vmatpush1.xpose.msra.mxu0 0.0
  %3422 = vmatprep.subr.mxu0 0.0
  %3423 = vmatpush1.xpose.msra.mxu0 0.0
  %3424 = vmatprep.subr.mxu0 0.0
  %3425 = vmatpush1.xpose.msra.mxu0 0.0
  %3426 = vmatprep.subr.mxu0 0.0
  %3427 = vmatpush1.xpose.msra.mxu0 0.0
  %3428 = vmatprep.subr.mxu0 0.0
  %3429 = vmatpush1.xpose.msra.mxu0 0.0
  %3430 = vmatprep.subr.mxu0 0.0
  %3431 = vmatpush1.xpose.msra.mxu0 0.0
  %3432 = vmatprep.subr.mxu0 0.0
  %3433 = vmatpush1.xpose.msra.mxu0 0.0
  %3434 = vmatprep.subr.mxu0 0.0
  %3435 = vmatpush1.xpose.msra.mxu0 0.0
  %3436 = vmatprep.subr.mxu0 0.0
  %3437 = vmatpush1.xpose.msra.mxu0 0.0
  %3438 = vmatprep.subr.mxu0 0.0
  %3439 = vmatpush1.xpose.msra.mxu0 0.0
  %3440 = vmatprep.subr.mxu0 0.0
  %3441 = vmatpush1.xpose.msra.mxu0 0.0
  %3442 = vmatprep.subr.mxu0 0.0
  %3443 = vmatpush1.xpose.msra.mxu0 0.0
  %3444 = vmatprep.subr.mxu0 0.0
  %3445 = vmatpush1.xpose.msra.mxu0 0.0
  %3446 = vmatprep.subr.mxu0 0.0
  %3447 = vmatpush1.xpose.msra.mxu0 0.0
  %3448 = vmatprep.subr.mxu0 0.0
  %3449 = vmatpush1.xpose.msra.mxu0 0.0
  %3450 = vmatprep.subr.mxu0 0.0
  %3451 = vmatpush1.xpose.msra.mxu0 0.0
  %3452 = vmatprep.subr.mxu0 0.0
  %3453 = vmatpush1.xpose.msra.mxu0 0.0
  %3454 = vmatprep.subr.mxu0 0.0
  %3455 = vmatpush1.xpose.msra.mxu0 0.0
  %3456 = vmatprep.subr.mxu0 0.0
  %3457 = vmatpush1.xpose.msra.mxu0 0.0
  %3458 = vmatprep.subr.mxu0 0.0
  %3459 = vmatpush1.xpose.msra.mxu0 0.0
  %3460 = vmatprep.subr.mxu0 0.0
  %3461 = vmatpush1.xpose.msra.mxu0 0.0
  %3462 = vmatprep.subr.mxu0 0.0
  %3463 = vmatpush1.xpose.msra.mxu0 0.0
  %3464 = vmatprep.subr.mxu0 0.0
  %3465 = vmatpush1.xpose.msra.mxu0 0.0
  %3466 = vmatprep.subr.mxu0 0.0
  %3467 = vmatpush1.xpose.msra.mxu0 0.0
  %3468 = vmatprep.subr.mxu0 0.0
  %3469 = vmatpush1.xpose.msra.mxu0 0.0
  %3470 = vmatprep.subr.mxu0 0.0
  %3471 = vmatpush1.xpose.msra.mxu0 0.0
  %3472 = vmatprep.subr.mxu0 0.0
  %3473 = vmatpush1.xpose.msra.mxu0 0.0
  %3474 = vmatprep.mubr.f32.mxu0 0.0
  %3475 = vmatmul.mubr.f32.gmra.mrb[0].mxu0 %v3405
  %v3476 = vpop.f32.mrb[0].mxu0
  %v3477 = vadd.f32 0.0, %v3476
  %v3478 = vpop.f32.mrb[0].mxu0
  %3479 = vdwg.mxu0
  %v3481 = vsel %vm179, %v30, 0
  %v3484 = vsel %vm179, %v2623, 0
  %3486 = vmatprep.subr.mxu0 0.0
  %3487 = vmatpush1.xpose.msra.mxu0 %v3484
  %3488 = vmatprep.subr.mxu0 0.0
  %3489 = vmatpush1.xpose.msra.mxu0 0.0
  %3490 = vmatprep.subr.mxu0 0.0
  %3491 = vmatpush1.xpose.msra.mxu0 0.0
  %3492 = vmatprep.subr.mxu0 0.0
  %3493 = vmatpush1.xpose.msra.mxu0 0.0
  %3494 = vmatprep.subr.mxu0 0.0
  %3495 = vmatpush1.xpose.msra.mxu0 0.0
  %3496 = vmatprep.subr.mxu0 0.0
  %3497 = vmatpush1.xpose.msra.mxu0 0.0
  %3498 = vmatprep.subr.mxu0 0.0
  %3499 = vmatpush1.xpose.msra.mxu0 0.0
  %3500 = vmatprep.subr.mxu0 0.0
  %3501 = vmatpush1.xpose.msra.mxu0 0.0
  %3502 = vmatprep.subr.mxu0 0.0
  %3503 = vmatpush1.xpose.msra.mxu0 0.0
  %3504 = vmatprep.subr.mxu0 0.0
  %3505 = vmatpush1.xpose.msra.mxu0 0.0
  %3506 = vmatprep.subr.mxu0 0.0
  %3507 = vmatpush1.xpose.msra.mxu0 0.0
  %3508 = vmatprep.subr.mxu0 0.0
  %3509 = vmatpush1.xpose.msra.mxu0 0.0
  %3510 = vmatprep.subr.mxu0 0.0
  %3511 = vmatpush1.xpose.msra.mxu0 0.0
  %3512 = vmatprep.subr.mxu0 0.0
  %3513 = vmatpush1.xpose.msra.mxu0 0.0
  %3514 = vmatprep.subr.mxu0 0.0
  %3515 = vmatpush1.xpose.msra.mxu0 0.0
  %3516 = vmatprep.subr.mxu0 0.0
  %3517 = vmatpush1.xpose.msra.mxu0 0.0
  %3518 = vmatprep.subr.mxu0 0.0
  %3519 = vmatpush1.xpose.msra.mxu0 0.0
  %3520 = vmatprep.subr.mxu0 0.0
  %3521 = vmatpush1.xpose.msra.mxu0 0.0
  %3522 = vmatprep.subr.mxu0 0.0
  %3523 = vmatpush1.xpose.msra.mxu0 0.0
  %3524 = vmatprep.subr.mxu0 0.0
  %3525 = vmatpush1.xpose.msra.mxu0 0.0
  %3526 = vmatprep.subr.mxu0 0.0
  %3527 = vmatpush1.xpose.msra.mxu0 0.0
  %3528 = vmatprep.subr.mxu0 0.0
  %3529 = vmatpush1.xpose.msra.mxu0 0.0
  %3530 = vmatprep.subr.mxu0 0.0
  %3531 = vmatpush1.xpose.msra.mxu0 0.0
  %3532 = vmatprep.subr.mxu0 0.0
  %3533 = vmatpush1.xpose.msra.mxu0 0.0
  %3534 = vmatprep.subr.mxu0 0.0
  %3535 = vmatpush1.xpose.msra.mxu0 0.0
  %3536 = vmatprep.subr.mxu0 0.0
  %3537 = vmatpush1.xpose.msra.mxu0 0.0
  %3538 = vmatprep.subr.mxu0 0.0
  %3539 = vmatpush1.xpose.msra.mxu0 0.0
  %3540 = vmatprep.subr.mxu0 0.0
  %3541 = vmatpush1.xpose.msra.mxu0 0.0
  %3542 = vmatprep.subr.mxu0 0.0
  %3543 = vmatpush1.xpose.msra.mxu0 0.0
  %3544 = vmatprep.subr.mxu0 0.0
  %3545 = vmatpush1.xpose.msra.mxu0 0.0
  %3546 = vmatprep.subr.mxu0 0.0
  %3547 = vmatpush1.xpose.msra.mxu0 0.0
  %3548 = vmatprep.subr.mxu0 0.0
  %3549 = vmatpush1.xpose.msra.mxu0 0.0
  %3550 = vmatprep.mubr.f32.mxu0 0.0
  %3551 = vmatmul.mubr.f32.gmra.mrb[0].mxu0 %v3481
  %v3552 = vpop.f32.mrb[0].mxu0
  %v3553 = vadd.f32 0.0, %v3552
  %v3554 = vpop.f32.mrb[0].mxu0
  %3555 = vdwg.mxu0
  %v3557 = vsel %vm179, %v31, 0
  %v3560 = vsel %vm179, %v2624, 0
  %3562 = vmatprep.subr.mxu0 0.0
  %3563 = vmatpush1.xpose.msra.mxu0 %v3560
  %3564 = vmatprep.subr.mxu0 0.0
  %3565 = vmatpush1.xpose.msra.mxu0 0.0
  %3566 = vmatprep.subr.mxu0 0.0
  %3567 = vmatpush1.xpose.msra.mxu0 0.0
  %3568 = vmatprep.subr.mxu0 0.0
  %3569 = vmatpush1.xpose.msra.mxu0 0.0
  %3570 = vmatprep.subr.mxu0 0.0
  %3571 = vmatpush1.xpose.msra.mxu0 0.0
  %3572 = vmatprep.subr.mxu0 0.0
  %3573 = vmatpush1.xpose.msra.mxu0 0.0
  %3574 = vmatprep.subr.mxu0 0.0
  %3575 = vmatpush1.xpose.msra.mxu0 0.0
  %3576 = vmatprep.subr.mxu0 0.0
  %3577 = vmatpush1.xpose.msra.mxu0 0.0
  %3578 = vmatprep.subr.mxu0 0.0
  %3579 = vmatpush1.xpose.msra.mxu0 0.0
  %3580 = vmatprep.subr.mxu0 0.0
  %3581 = vmatpush1.xpose.msra.mxu0 0.0
  %3582 = vmatprep.subr.mxu0 0.0
  %3583 = vmatpush1.xpose.msra.mxu0 0.0
  %3584 = vmatprep.subr.mxu0 0.0
  %3585 = vmatpush1.xpose.msra.mxu0 0.0
  %3586 = vmatprep.subr.mxu0 0.0
  %3587 = vmatpush1.xpose.msra.mxu0 0.0
  %3588 = vmatprep.subr.mxu0 0.0
  %3589 = vmatpush1.xpose.msra.mxu0 0.0
  %3590 = vmatprep.subr.mxu0 0.0
  %3591 = vmatpush1.xpose.msra.mxu0 0.0
  %3592 = vmatprep.subr.mxu0 0.0
  %3593 = vmatpush1.xpose.msra.mxu0 0.0
  %3594 = vmatprep.subr.mxu0 0.0
  %3595 = vmatpush1.xpose.msra.mxu0 0.0
  %3596 = vmatprep.subr.mxu0 0.0
  %3597 = vmatpush1.xpose.msra.mxu0 0.0
  %3598 = vmatprep.subr.mxu0 0.0
  %3599 = vmatpush1.xpose.msra.mxu0 0.0
  %3600 = vmatprep.subr.mxu0 0.0
  %3601 = vmatpush1.xpose.msra.mxu0 0.0
  %3602 = vmatprep.subr.mxu0 0.0
  %3603 = vmatpush1.xpose.msra.mxu0 0.0
  %3604 = vmatprep.subr.mxu0 0.0
  %3605 = vmatpush1.xpose.msra.mxu0 0.0
  %3606 = vmatprep.subr.mxu0 0.0
  %3607 = vmatpush1.xpose.msra.mxu0 0.0
  %3608 = vmatprep.subr.mxu0 0.0
  %3609 = vmatpush1.xpose.msra.mxu0 0.0
  %3610 = vmatprep.subr.mxu0 0.0
  %3611 = vmatpush1.xpose.msra.mxu0 0.0
  %3612 = vmatprep.subr.mxu0 0.0
  %3613 = vmatpush1.xpose.msra.mxu0 0.0
  %3614 = vmatprep.subr.mxu0 0.0
  %3615 = vmatpush1.xpose.msra.mxu0 0.0
  %3616 = vmatprep.subr.mxu0 0.0
  %3617 = vmatpush1.xpose.msra.mxu0 0.0
  %3618 = vmatprep.subr.mxu0 0.0
  %3619 = vmatpush1.xpose.msra.mxu0 0.0
  %3620 = vmatprep.subr.mxu0 0.0
  %3621 = vmatpush1.xpose.msra.mxu0 0.0
  %3622 = vmatprep.subr.mxu0 0.0
  %3623 = vmatpush1.xpose.msra.mxu0 0.0
  %3624 = vmatprep.subr.mxu0 0.0
  %3625 = vmatpush1.xpose.msra.mxu0 0.0
  %3626 = vmatprep.mubr.f32.mxu0 0.0
  %3627 = vmatmul.mubr.f32.gmra.mrb[0].mxu0 %v3557
  %v3628 = vpop.f32.mrb[0].mxu0
  %v3629 = vadd.f32 0.0, %v3628
  %v3630 = vpop.f32.mrb[0].mxu0
  %3631 = vdwg.mxu0
  %v3633 = vsel %vm179, %v32, 0
  %v3636 = vsel %vm179, %v2625, 0
  %3638 = vmatprep.subr.mxu0 0.0
  %3639 = vmatpush1.xpose.msra.mxu0 %v3636
  %3640 = vmatprep.subr.mxu0 0.0
  %3641 = vmatpush1.xpose.msra.mxu0 0.0
  %3642 = vmatprep.subr.mxu0 0.0
  %3643 = vmatpush1.xpose.msra.mxu0 0.0
  %3644 = vmatprep.subr.mxu0 0.0
  %3645 = vmatpush1.xpose.msra.mxu0 0.0
  %3646 = vmatprep.subr.mxu0 0.0
  %3647 = vmatpush1.xpose.msra.mxu0 0.0
  %3648 = vmatprep.subr.mxu0 0.0
  %3649 = vmatpush1.xpose.msra.mxu0 0.0
  %3650 = vmatprep.subr.mxu0 0.0
  %3651 = vmatpush1.xpose.msra.mxu0 0.0
  %3652 = vmatprep.subr.mxu0 0.0
  %3653 = vmatpush1.xpose.msra.mxu0 0.0
  %3654 = vmatprep.subr.mxu0 0.0
  %3655 = vmatpush1.xpose.msra.mxu0 0.0
  %3656 = vmatprep.subr.mxu0 0.0
  %3657 = vmatpush1.xpose.msra.mxu0 0.0
  %3658 = vmatprep.subr.mxu0 0.0
  %3659 = vmatpush1.xpose.msra.mxu0 0.0
  %3660 = vmatprep.subr.mxu0 0.0
  %3661 = vmatpush1.xpose.msra.mxu0 0.0
  %3662 = vmatprep.subr.mxu0 0.0
  %3663 = vmatpush1.xpose.msra.mxu0 0.0
  %3664 = vmatprep.subr.mxu0 0.0
  %3665 = vmatpush1.xpose.msra.mxu0 0.0
  %3666 = vmatprep.subr.mxu0 0.0
  %3667 = vmatpush1.xpose.msra.mxu0 0.0
  %3668 = vmatprep.subr.mxu0 0.0
  %3669 = vmatpush1.xpose.msra.mxu0 0.0
  %3670 = vmatprep.subr.mxu0 0.0
  %3671 = vmatpush1.xpose.msra.mxu0 0.0
  %3672 = vmatprep.subr.mxu0 0.0
  %3673 = vmatpush1.xpose.msra.mxu0 0.0
  %3674 = vmatprep.subr.mxu0 0.0
  %3675 = vmatpush1.xpose.msra.mxu0 0.0
  %3676 = vmatprep.subr.mxu0 0.0
  %3677 = vmatpush1.xpose.msra.mxu0 0.0
  %3678 = vmatprep.subr.mxu0 0.0
  %3679 = vmatpush1.xpose.msra.mxu0 0.0
  %3680 = vmatprep.subr.mxu0 0.0
  %3681 = vmatpush1.xpose.msra.mxu0 0.0
  %3682 = vmatprep.subr.mxu0 0.0
  %3683 = vmatpush1.xpose.msra.mxu0 0.0
  %3684 = vmatprep.subr.mxu0 0.0
  %3685 = vmatpush1.xpose.msra.mxu0 0.0
  %3686 = vmatprep.subr.mxu0 0.0
  %3687 = vmatpush1.xpose.msra.mxu0 0.0
  %3688 = vmatprep.subr.mxu0 0.0
  %3689 = vmatpush1.xpose.msra.mxu0 0.0
  %3690 = vmatprep.subr.mxu0 0.0
  %3691 = vmatpush1.xpose.msra.mxu0 0.0
  %3692 = vmatprep.subr.mxu0 0.0
  %3693 = vmatpush1.xpose.msra.mxu0 0.0
  %3694 = vmatprep.subr.mxu0 0.0
  %3695 = vmatpush1.xpose.msra.mxu0 0.0
  %3696 = vmatprep.subr.mxu0 0.0
  %3697 = vmatpush1.xpose.msra.mxu0 0.0
  %3698 = vmatprep.subr.mxu0 0.0
  %3699 = vmatpush1.xpose.msra.mxu0 0.0
  %3700 = vmatprep.subr.mxu0 0.0
  %3701 = vmatpush1.xpose.msra.mxu0 0.0
  %3702 = vmatprep.mubr.f32.mxu0 0.0
  %3703 = vmatmul.mubr.f32.gmra.mrb[0].mxu0 %v3633
  %v3704 = vpop.f32.mrb[0].mxu0
  %v3705 = vadd.f32 0.0, %v3704
  %v3706 = vpop.f32.mrb[0].mxu0
  %3707 = vdwg.mxu0
  %v3709 = vsel %vm179, %v33, 0
  %v3712 = vsel %vm179, %v2626, 0
  %3714 = vmatprep.subr.mxu0 0.0
  %3715 = vmatpush1.xpose.msra.mxu0 %v3712
  %3716 = vmatprep.subr.mxu0 0.0
  %3717 = vmatpush1.xpose.msra.mxu0 0.0
  %3718 = vmatprep.subr.mxu0 0.0
  %3719 = vmatpush1.xpose.msra.mxu0 0.0
  %3720 = vmatprep.subr.mxu0 0.0
  %3721 = vmatpush1.xpose.msra.mxu0 0.0
  %3722 = vmatprep.subr.mxu0 0.0
  %3723 = vmatpush1.xpose.msra.mxu0 0.0
  %3724 = vmatprep.subr.mxu0 0.0
  %3725 = vmatpush1.xpose.msra.mxu0 0.0
  %3726 = vmatprep.subr.mxu0 0.0
  %3727 = vmatpush1.xpose.msra.mxu0 0.0
  %3728 = vmatprep.subr.mxu0 0.0
  %3729 = vmatpush1.xpose.msra.mxu0 0.0
  %3730 = vmatprep.subr.mxu0 0.0
  %3731 = vmatpush1.xpose.msra.mxu0 0.0
  %3732 = vmatprep.subr.mxu0 0.0
  %3733 = vmatpush1.xpose.msra.mxu0 0.0
  %3734 = vmatprep.subr.mxu0 0.0
  %3735 = vmatpush1.xpose.msra.mxu0 0.0
  %3736 = vmatprep.subr.mxu0 0.0
  %3737 = vmatpush1.xpose.msra.mxu0 0.0
  %3738 = vmatprep.subr.mxu0 0.0
  %3739 = vmatpush1.xpose.msra.mxu0 0.0
  %3740 = vmatprep.subr.mxu0 0.0
  %3741 = vmatpush1.xpose.msra.mxu0 0.0
  %3742 = vmatprep.subr.mxu0 0.0
  %3743 = vmatpush1.xpose.msra.mxu0 0.0
  %3744 = vmatprep.subr.mxu0 0.0
  %3745 = vmatpush1.xpose.msra.mxu0 0.0
  %3746 = vmatprep.subr.mxu0 0.0
  %3747 = vmatpush1.xpose.msra.mxu0 0.0
  %3748 = vmatprep.subr.mxu0 0.0
  %3749 = vmatpush1.xpose.msra.mxu0 0.0
  %3750 = vmatprep.subr.mxu0 0.0
  %3751 = vmatpush1.xpose.msra.mxu0 0.0
  %3752 = vmatprep.subr.mxu0 0.0
  %3753 = vmatpush1.xpose.msra.mxu0 0.0
  %3754 = vmatprep.subr.mxu0 0.0
  %3755 = vmatpush1.xpose.msra.mxu0 0.0
  %3756 = vmatprep.subr.mxu0 0.0
  %3757 = vmatpush1.xpose.msra.mxu0 0.0
  %3758 = vmatprep.subr.mxu0 0.0
  %3759 = vmatpush1.xpose.msra.mxu0 0.0
  %3760 = vmatprep.subr.mxu0 0.0
  %3761 = vmatpush1.xpose.msra.mxu0 0.0
  %3762 = vmatprep.subr.mxu0 0.0
  %3763 = vmatpush1.xpose.msra.mxu0 0.0
  %3764 = vmatprep.subr.mxu0 0.0
  %3765 = vmatpush1.xpose.msra.mxu0 0.0
  %3766 = vmatprep.subr.mxu0 0.0
  %3767 = vmatpush1.xpose.msra.mxu0 0.0
  %3768 = vmatprep.subr.mxu0 0.0
  %3769 = vmatpush1.xpose.msra.mxu0 0.0
  %3770 = vmatprep.subr.mxu0 0.0
  %3771 = vmatpush1.xpose.msra.mxu0 0.0
  %3772 = vmatprep.subr.mxu0 0.0
  %3773 = vmatpush1.xpose.msra.mxu0 0.0
  %3774 = vmatprep.subr.mxu0 0.0
  %3775 = vmatpush1.xpose.msra.mxu0 0.0
  %3776 = vmatprep.subr.mxu0 0.0
  %3777 = vmatpush1.xpose.msra.mxu0 0.0
  %3778 = vmatprep.mubr.f32.mxu0 0.0
  %3779 = vmatmul.mubr.f32.gmra.mrb[0].mxu0 %v3709
  %v3780 = vpop.f32.mrb[0].mxu0
  %v3781 = vadd.f32 0.0, %v3780
  %v3782 = vpop.f32.mrb[0].mxu0
  %3783 = vdwg.mxu0
  %v3785 = vsel %vm179, %v34, 0
  %v3788 = vsel %vm179, %v2627, 0
  %3790 = vmatprep.subr.mxu0 0.0
  %3791 = vmatpush1.xpose.msra.mxu0 %v3788
  %3792 = vmatprep.subr.mxu0 0.0
  %3793 = vmatpush1.xpose.msra.mxu0 0.0
  %3794 = vmatprep.subr.mxu0 0.0
  %3795 = vmatpush1.xpose.msra.mxu0 0.0
  %3796 = vmatprep.subr.mxu0 0.0
  %3797 = vmatpush1.xpose.msra.mxu0 0.0
  %3798 = vmatprep.subr.mxu0 0.0
  %3799 = vmatpush1.xpose.msra.mxu0 0.0
  %3800 = vmatprep.subr.mxu0 0.0
  %3801 = vmatpush1.xpose.msra.mxu0 0.0
  %3802 = vmatprep.subr.mxu0 0.0
  %3803 = vmatpush1.xpose.msra.mxu0 0.0
  %3804 = vmatprep.subr.mxu0 0.0
  %3805 = vmatpush1.xpose.msra.mxu0 0.0
  %3806 = vmatprep.subr.mxu0 0.0
  %3807 = vmatpush1.xpose.msra.mxu0 0.0
  %3808 = vmatprep.subr.mxu0 0.0
  %3809 = vmatpush1.xpose.msra.mxu0 0.0
  %3810 = vmatprep.subr.mxu0 0.0
  %3811 = vmatpush1.xpose.msra.mxu0 0.0
  %3812 = vmatprep.subr.mxu0 0.0
  %3813 = vmatpush1.xpose.msra.mxu0 0.0
  %3814 = vmatprep.subr.mxu0 0.0
  %3815 = vmatpush1.xpose.msra.mxu0 0.0
  %3816 = vmatprep.subr.mxu0 0.0
  %3817 = vmatpush1.xpose.msra.mxu0 0.0
  %3818 = vmatprep.subr.mxu0 0.0
  %3819 = vmatpush1.xpose.msra.mxu0 0.0
  %3820 = vmatprep.subr.mxu0 0.0
  %3821 = vmatpush1.xpose.msra.mxu0 0.0
  %3822 = vmatprep.subr.mxu0 0.0
  %3823 = vmatpush1.xpose.msra.mxu0 0.0
  %3824 = vmatprep.subr.mxu0 0.0
  %3825 = vmatpush1.xpose.msra.mxu0 0.0
  %3826 = vmatprep.subr.mxu0 0.0
  %3827 = vmatpush1.xpose.msra.mxu0 0.0
  %3828 = vmatprep.subr.mxu0 0.0
  %3829 = vmatpush1.xpose.msra.mxu0 0.0
  %3830 = vmatprep.subr.mxu0 0.0
  %3831 = vmatpush1.xpose.msra.mxu0 0.0
  %3832 = vmatprep.subr.mxu0 0.0
  %3833 = vmatpush1.xpose.msra.mxu0 0.0
  %3834 = vmatprep.subr.mxu0 0.0
  %3835 = vmatpush1.xpose.msra.mxu0 0.0
  %3836 = vmatprep.subr.mxu0 0.0
  %3837 = vmatpush1.xpose.msra.mxu0 0.0
  %3838 = vmatprep.subr.mxu0 0.0
  %3839 = vmatpush1.xpose.msra.mxu0 0.0
  %3840 = vmatprep.subr.mxu0 0.0
  %3841 = vmatpush1.xpose.msra.mxu0 0.0
  %3842 = vmatprep.subr.mxu0 0.0
  %3843 = vmatpush1.xpose.msra.mxu0 0.0
  %3844 = vmatprep.subr.mxu0 0.0
  %3845 = vmatpush1.xpose.msra.mxu0 0.0
  %3846 = vmatprep.subr.mxu0 0.0
  %3847 = vmatpush1.xpose.msra.mxu0 0.0
  %3848 = vmatprep.subr.mxu0 0.0
  %3849 = vmatpush1.xpose.msra.mxu0 0.0
  %3850 = vmatprep.subr.mxu0 0.0
  %3851 = vmatpush1.xpose.msra.mxu0 0.0
  %3852 = vmatprep.subr.mxu0 0.0
  %3853 = vmatpush1.xpose.msra.mxu0 0.0
  %3854 = vmatprep.mubr.f32.mxu0 0.0
  %3855 = vmatmul.mubr.f32.gmra.mrb[0].mxu0 %v3785
  %v3856 = vpop.f32.mrb[0].mxu0
  %v3857 = vadd.f32 0.0, %v3856
  %v3858 = vpop.f32.mrb[0].mxu0
  %3859 = vdwg.mxu0
  %v3861 = vsel %vm179, %v35, 0
  %v3864 = vsel %vm179, %v2628, 0
  %3866 = vmatprep.subr.mxu0 0.0
  %3867 = vmatpush1.xpose.msra.mxu0 %v3864
  %3868 = vmatprep.subr.mxu0 0.0
  %3869 = vmatpush1.xpose.msra.mxu0 0.0
  %3870 = vmatprep.subr.mxu0 0.0
  %3871 = vmatpush1.xpose.msra.mxu0 0.0
  %3872 = vmatprep.subr.mxu0 0.0
  %3873 = vmatpush1.xpose.msra.mxu0 0.0
  %3874 = vmatprep.subr.mxu0 0.0
  %3875 = vmatpush1.xpose.msra.mxu0 0.0
  %3876 = vmatprep.subr.mxu0 0.0
  %3877 = vmatpush1.xpose.msra.mxu0 0.0
  %3878 = vmatprep.subr.mxu0 0.0
  %3879 = vmatpush1.xpose.msra.mxu0 0.0
  %3880 = vmatprep.subr.mxu0 0.0
  %3881 = vmatpush1.xpose.msra.mxu0 0.0
  %3882 = vmatprep.subr.mxu0 0.0
  %3883 = vmatpush1.xpose.msra.mxu0 0.0
  %3884 = vmatprep.subr.mxu0 0.0
  %3885 = vmatpush1.xpose.msra.mxu0 0.0
  %3886 = vmatprep.subr.mxu0 0.0
  %3887 = vmatpush1.xpose.msra.mxu0 0.0
  %3888 = vmatprep.subr.mxu0 0.0
  %3889 = vmatpush1.xpose.msra.mxu0 0.0
  %3890 = vmatprep.subr.mxu0 0.0
  %3891 = vmatpush1.xpose.msra.mxu0 0.0
  %3892 = vmatprep.subr.mxu0 0.0
  %3893 = vmatpush1.xpose.msra.mxu0 0.0
  %3894 = vmatprep.subr.mxu0 0.0
  %3895 = vmatpush1.xpose.msra.mxu0 0.0
  %3896 = vmatprep.subr.mxu0 0.0
  %3897 = vmatpush1.xpose.msra.mxu0 0.0
  %3898 = vmatprep.subr.mxu0 0.0
  %3899 = vmatpush1.xpose.msra.mxu0 0.0
  %3900 = vmatprep.subr.mxu0 0.0
  %3901 = vmatpush1.xpose.msra.mxu0 0.0
  %3902 = vmatprep.subr.mxu0 0.0
  %3903 = vmatpush1.xpose.msra.mxu0 0.0
  %3904 = vmatprep.subr.mxu0 0.0
  %3905 = vmatpush1.xpose.msra.mxu0 0.0
  %3906 = vmatprep.subr.mxu0 0.0
  %3907 = vmatpush1.xpose.msra.mxu0 0.0
  %3908 = vmatprep.subr.mxu0 0.0
  %3909 = vmatpush1.xpose.msra.mxu0 0.0
  %3910 = vmatprep.subr.mxu0 0.0
  %3911 = vmatpush1.xpose.msra.mxu0 0.0
  %3912 = vmatprep.subr.mxu0 0.0
  %3913 = vmatpush1.xpose.msra.mxu0 0.0
  %3914 = vmatprep.subr.mxu0 0.0
  %3915 = vmatpush1.xpose.msra.mxu0 0.0
  %3916 = vmatprep.subr.mxu0 0.0
  %3917 = vmatpush1.xpose.msra.mxu0 0.0
  %3918 = vmatprep.subr.mxu0 0.0
  %3919 = vmatpush1.xpose.msra.mxu0 0.0
  %3920 = vmatprep.subr.mxu0 0.0
  %3921 = vmatpush1.xpose.msra.mxu0 0.0
  %3922 = vmatprep.subr.mxu0 0.0
  %3923 = vmatpush1.xpose.msra.mxu0 0.0
  %3924 = vmatprep.subr.mxu0 0.0
  %3925 = vmatpush1.xpose.msra.mxu0 0.0
  %3926 = vmatprep.subr.mxu0 0.0
  %3927 = vmatpush1.xpose.msra.mxu0 0.0
  %3928 = vmatprep.subr.mxu0 0.0
  %3929 = vmatpush1.xpose.msra.mxu0 0.0
  %3930 = vmatprep.mubr.f32.mxu0 0.0
  %3931 = vmatmul.mubr.f32.gmra.mrb[0].mxu0 %v3861
  %v3932 = vpop.f32.mrb[0].mxu0
  %v3933 = vadd.f32 0.0, %v3932
  %v3934 = vpop.f32.mrb[0].mxu0
  %3935 = vdwg.mxu0
  %v3937 = vsel %vm179, %v36, 0
  %v3940 = vsel %vm179, %v2629, 0
  %3942 = vmatprep.subr.mxu0 0.0
  %3943 = vmatpush1.xpose.msra.mxu0 %v3940
  %3944 = vmatprep.subr.mxu0 0.0
  %3945 = vmatpush1.xpose.msra.mxu0 0.0
  %3946 = vmatprep.subr.mxu0 0.0
  %3947 = vmatpush1.xpose.msra.mxu0 0.0
  %3948 = vmatprep.subr.mxu0 0.0
  %3949 = vmatpush1.xpose.msra.mxu0 0.0
  %3950 = vmatprep.subr.mxu0 0.0
  %3951 = vmatpush1.xpose.msra.mxu0 0.0
  %3952 = vmatprep.subr.mxu0 0.0
  %3953 = vmatpush1.xpose.msra.mxu0 0.0
  %3954 = vmatprep.subr.mxu0 0.0
  %3955 = vmatpush1.xpose.msra.mxu0 0.0
  %3956 = vmatprep.subr.mxu0 0.0
  %3957 = vmatpush1.xpose.msra.mxu0 0.0
  %3958 = vmatprep.subr.mxu0 0.0
  %3959 = vmatpush1.xpose.msra.mxu0 0.0
  %3960 = vmatprep.subr.mxu0 0.0
  %3961 = vmatpush1.xpose.msra.mxu0 0.0
  %3962 = vmatprep.subr.mxu0 0.0
  %3963 = vmatpush1.xpose.msra.mxu0 0.0
  %3964 = vmatprep.subr.mxu0 0.0
  %3965 = vmatpush1.xpose.msra.mxu0 0.0
  %3966 = vmatprep.subr.mxu0 0.0
  %3967 = vmatpush1.xpose.msra.mxu0 0.0
  %3968 = vmatprep.subr.mxu0 0.0
  %3969 = vmatpush1.xpose.msra.mxu0 0.0
  %3970 = vmatprep.subr.mxu0 0.0
  %3971 = vmatpush1.xpose.msra.mxu0 0.0
  %3972 = vmatprep.subr.mxu0 0.0
  %3973 = vmatpush1.xpose.msra.mxu0 0.0
  %3974 = vmatprep.subr.mxu0 0.0
  %3975 = vmatpush1.xpose.msra.mxu0 0.0
  %3976 = vmatprep.subr.mxu0 0.0
  %3977 = vmatpush1.xpose.msra.mxu0 0.0
  %3978 = vmatprep.subr.mxu0 0.0
  %3979 = vmatpush1.xpose.msra.mxu0 0.0
  %3980 = vmatprep.subr.mxu0 0.0
  %3981 = vmatpush1.xpose.msra.mxu0 0.0
  %3982 = vmatprep.subr.mxu0 0.0
  %3983 = vmatpush1.xpose.msra.mxu0 0.0
  %3984 = vmatprep.subr.mxu0 0.0
  %3985 = vmatpush1.xpose.msra.mxu0 0.0
  %3986 = vmatprep.subr.mxu0 0.0
  %3987 = vmatpush1.xpose.msra.mxu0 0.0
  %3988 = vmatprep.subr.mxu0 0.0
  %3989 = vmatpush1.xpose.msra.mxu0 0.0
  %3990 = vmatprep.subr.mxu0 0.0
  %3991 = vmatpush1.xpose.msra.mxu0 0.0
  %3992 = vmatprep.subr.mxu0 0.0
  %3993 = vmatpush1.xpose.msra.mxu0 0.0
  %3994 = vmatprep.subr.mxu0 0.0
  %3995 = vmatpush1.xpose.msra.mxu0 0.0
  %3996 = vmatprep.subr.mxu0 0.0
  %3997 = vmatpush1.xpose.msra.mxu0 0.0
  %3998 = vmatprep.subr.mxu0 0.0
  %3999 = vmatpush1.xpose.msra.mxu0 0.0
  %4000 = vmatprep.subr.mxu0 0.0
  %4001 = vmatpush1.xpose.msra.mxu0 0.0
  %4002 = vmatprep.subr.mxu0 0.0
  %4003 = vmatpush1.xpose.msra.mxu0 0.0
  %4004 = vmatprep.subr.mxu0 0.0
  %4005 = vmatpush1.xpose.msra.mxu0 0.0
  %4006 = vmatprep.mubr.f32.mxu0 0.0
  %4007 = vmatmul.mubr.f32.gmra.mrb[0].mxu0 %v3937
  %v4008 = vpop.f32.mrb[0].mxu0
  %v4009 = vadd.f32 0.0, %v4008
  %v4010 = vpop.f32.mrb[0].mxu0
  %4011 = vdwg.mxu0
  %v4013 = vsel %vm179, %v37, 0
  %v4016 = vsel %vm179, %v2630, 0
  %4018 = vmatprep.subr.mxu0 0.0
  %4019 = vmatpush1.xpose.msra.mxu0 %v4016
  %4020 = vmatprep.subr.mxu0 0.0
  %4021 = vmatpush1.xpose.msra.mxu0 0.0
  %4022 = vmatprep.subr.mxu0 0.0
  %4023 = vmatpush1.xpose.msra.mxu0 0.0
  %4024 = vmatprep.subr.mxu0 0.0
  %4025 = vmatpush1.xpose.msra.mxu0 0.0
  %4026 = vmatprep.subr.mxu0 0.0
  %4027 = vmatpush1.xpose.msra.mxu0 0.0
  %4028 = vmatprep.subr.mxu0 0.0
  %4029 = vmatpush1.xpose.msra.mxu0 0.0
  %4030 = vmatprep.subr.mxu0 0.0
  %4031 = vmatpush1.xpose.msra.mxu0 0.0
  %4032 = vmatprep.subr.mxu0 0.0
  %4033 = vmatpush1.xpose.msra.mxu0 0.0
  %4034 = vmatprep.subr.mxu0 0.0
  %4035 = vmatpush1.xpose.msra.mxu0 0.0
  %4036 = vmatprep.subr.mxu0 0.0
  %4037 = vmatpush1.xpose.msra.mxu0 0.0
  %4038 = vmatprep.subr.mxu0 0.0
  %4039 = vmatpush1.xpose.msra.mxu0 0.0
  %4040 = vmatprep.subr.mxu0 0.0
  %4041 = vmatpush1.xpose.msra.mxu0 0.0
  %4042 = vmatprep.subr.mxu0 0.0
  %4043 = vmatpush1.xpose.msra.mxu0 0.0
  %4044 = vmatprep.subr.mxu0 0.0
  %4045 = vmatpush1.xpose.msra.mxu0 0.0
  %4046 = vmatprep.subr.mxu0 0.0
  %4047 = vmatpush1.xpose.msra.mxu0 0.0
  %4048 = vmatprep.subr.mxu0 0.0
  %4049 = vmatpush1.xpose.msra.mxu0 0.0
  %4050 = vmatprep.subr.mxu0 0.0
  %4051 = vmatpush1.xpose.msra.mxu0 0.0
  %4052 = vmatprep.subr.mxu0 0.0
  %4053 = vmatpush1.xpose.msra.mxu0 0.0
  %4054 = vmatprep.subr.mxu0 0.0
  %4055 = vmatpush1.xpose.msra.mxu0 0.0
  %4056 = vmatprep.subr.mxu0 0.0
  %4057 = vmatpush1.xpose.msra.mxu0 0.0
  %4058 = vmatprep.subr.mxu0 0.0
  %4059 = vmatpush1.xpose.msra.mxu0 0.0
  %4060 = vmatprep.subr.mxu0 0.0
  %4061 = vmatpush1.xpose.msra.mxu0 0.0
  %4062 = vmatprep.subr.mxu0 0.0
  %4063 = vmatpush1.xpose.msra.mxu0 0.0
  %4064 = vmatprep.subr.mxu0 0.0
  %4065 = vmatpush1.xpose.msra.mxu0 0.0
  %4066 = vmatprep.subr.mxu0 0.0
  %4067 = vmatpush1.xpose.msra.mxu0 0.0
  %4068 = vmatprep.subr.mxu0 0.0
  %4069 = vmatpush1.xpose.msra.mxu0 0.0
  %4070 = vmatprep.subr.mxu0 0.0
  %4071 = vmatpush1.xpose.msra.mxu0 0.0
  %4072 = vmatprep.subr.mxu0 0.0
  %4073 = vmatpush1.xpose.msra.mxu0 0.0
  %4074 = vmatprep.subr.mxu0 0.0
  %4075 = vmatpush1.xpose.msra.mxu0 0.0
  %4076 = vmatprep.subr.mxu0 0.0
  %4077 = vmatpush1.xpose.msra.mxu0 0.0
  %4078 = vmatprep.subr.mxu0 0.0
  %4079 = vmatpush1.xpose.msra.mxu0 0.0
  %4080 = vmatprep.subr.mxu0 0.0
  %4081 = vmatpush1.xpose.msra.mxu0 0.0
  %4082 = vmatprep.mubr.f32.mxu0 0.0
  %4083 = vmatmul.mubr.f32.gmra.mrb[0].mxu0 %v4013
  %v4084 = vpop.f32.mrb[0].mxu0
  %v4085 = vadd.f32 0.0, %v4084
  %v4086 = vpop.f32.mrb[0].mxu0
  %4087 = vdwg.mxu0
  %v4089 = vsel %vm179, %v38, 0
  %v4092 = vsel %vm179, %v2631, 0
  %4094 = vmatprep.subr.mxu0 0.0
  %4095 = vmatpush1.xpose.msra.mxu0 %v4092
  %4096 = vmatprep.subr.mxu0 0.0
  %4097 = vmatpush1.xpose.msra.mxu0 0.0
  %4098 = vmatprep.subr.mxu0 0.0
  %4099 = vmatpush1.xpose.msra.mxu0 0.0
  %4100 = vmatprep.subr.mxu0 0.0
  %4101 = vmatpush1.xpose.msra.mxu0 0.0
  %4102 = vmatprep.subr.mxu0 0.0
  %4103 = vmatpush1.xpose.msra.mxu0 0.0
  %4104 = vmatprep.subr.mxu0 0.0
  %4105 = vmatpush1.xpose.msra.mxu0 0.0
  %4106 = vmatprep.subr.mxu0 0.0
  %4107 = vmatpush1.xpose.msra.mxu0 0.0
  %4108 = vmatprep.subr.mxu0 0.0
  %4109 = vmatpush1.xpose.msra.mxu0 0.0
  %4110 = vmatprep.subr.mxu0 0.0
  %4111 = vmatpush1.xpose.msra.mxu0 0.0
  %4112 = vmatprep.subr.mxu0 0.0
  %4113 = vmatpush1.xpose.msra.mxu0 0.0
  %4114 = vmatprep.subr.mxu0 0.0
  %4115 = vmatpush1.xpose.msra.mxu0 0.0
  %4116 = vmatprep.subr.mxu0 0.0
  %4117 = vmatpush1.xpose.msra.mxu0 0.0
  %4118 = vmatprep.subr.mxu0 0.0
  %4119 = vmatpush1.xpose.msra.mxu0 0.0
  %4120 = vmatprep.subr.mxu0 0.0
  %4121 = vmatpush1.xpose.msra.mxu0 0.0
  %4122 = vmatprep.subr.mxu0 0.0
  %4123 = vmatpush1.xpose.msra.mxu0 0.0
  %4124 = vmatprep.subr.mxu0 0.0
  %4125 = vmatpush1.xpose.msra.mxu0 0.0
  %4126 = vmatprep.subr.mxu0 0.0
  %4127 = vmatpush1.xpose.msra.mxu0 0.0
  %4128 = vmatprep.subr.mxu0 0.0
  %4129 = vmatpush1.xpose.msra.mxu0 0.0
  %4130 = vmatprep.subr.mxu0 0.0
  %4131 = vmatpush1.xpose.msra.mxu0 0.0
  %4132 = vmatprep.subr.mxu0 0.0
  %4133 = vmatpush1.xpose.msra.mxu0 0.0
  %4134 = vmatprep.subr.mxu0 0.0
  %4135 = vmatpush1.xpose.msra.mxu0 0.0
  %4136 = vmatprep.subr.mxu0 0.0
  %4137 = vmatpush1.xpose.msra.mxu0 0.0
  %4138 = vmatprep.subr.mxu0 0.0
  %4139 = vmatpush1.xpose.msra.mxu0 0.0
  %4140 = vmatprep.subr.mxu0 0.0
  %4141 = vmatpush1.xpose.msra.mxu0 0.0
  %4142 = vmatprep.subr.mxu0 0.0
  %4143 = vmatpush1.xpose.msra.mxu0 0.0
  %4144 = vmatprep.subr.mxu0 0.0
  %4145 = vmatpush1.xpose.msra.mxu0 0.0
  %4146 = vmatprep.subr.mxu0 0.0
  %4147 = vmatpush1.xpose.msra.mxu0 0.0
  %4148 = vmatprep.subr.mxu0 0.0
  %4149 = vmatpush1.xpose.msra.mxu0 0.0
  %4150 = vmatprep.subr.mxu0 0.0
  %4151 = vmatpush1.xpose.msra.mxu0 0.0
  %4152 = vmatprep.subr.mxu0 0.0
  %4153 = vmatpush1.xpose.msra.mxu0 0.0
  %4154 = vmatprep.subr.mxu0 0.0
  %4155 = vmatpush1.xpose.msra.mxu0 0.0
  %4156 = vmatprep.subr.mxu0 0.0
  %4157 = vmatpush1.xpose.msra.mxu0 0.0
  %4158 = vmatprep.mubr.f32.mxu0 0.0
  %4159 = vmatmul.mubr.f32.gmra.mrb[0].mxu0 %v4089
  %v4160 = vpop.f32.mrb[0].mxu0
  %v4161 = vadd.f32 0.0, %v4160
  %v4162 = vpop.f32.mrb[0].mxu0
  %4163 = vdwg.mxu0
  %v4165 = vsel %vm179, %v39, 0
  %v4168 = vsel %vm179, %v2632, 0
  %4170 = vmatprep.subr.mxu0 0.0
  %4171 = vmatpush1.xpose.msra.mxu0 %v4168
  %4172 = vmatprep.subr.mxu0 0.0
  %4173 = vmatpush1.xpose.msra.mxu0 0.0
  %4174 = vmatprep.subr.mxu0 0.0
  %4175 = vmatpush1.xpose.msra.mxu0 0.0
  %4176 = vmatprep.subr.mxu0 0.0
  %4177 = vmatpush1.xpose.msra.mxu0 0.0
  %4178 = vmatprep.subr.mxu0 0.0
  %4179 = vmatpush1.xpose.msra.mxu0 0.0
  %4180 = vmatprep.subr.mxu0 0.0
  %4181 = vmatpush1.xpose.msra.mxu0 0.0
  %4182 = vmatprep.subr.mxu0 0.0
  %4183 = vmatpush1.xpose.msra.mxu0 0.0
  %4184 = vmatprep.subr.mxu0 0.0
  %4185 = vmatpush1.xpose.msra.mxu0 0.0
  %4186 = vmatprep.subr.mxu0 0.0
  %4187 = vmatpush1.xpose.msra.mxu0 0.0
  %4188 = vmatprep.subr.mxu0 0.0
  %4189 = vmatpush1.xpose.msra.mxu0 0.0
  %4190 = vmatprep.subr.mxu0 0.0
  %4191 = vmatpush1.xpose.msra.mxu0 0.0
  %4192 = vmatprep.subr.mxu0 0.0
  %4193 = vmatpush1.xpose.msra.mxu0 0.0
  %4194 = vmatprep.subr.mxu0 0.0
  %4195 = vmatpush1.xpose.msra.mxu0 0.0
  %4196 = vmatprep.subr.mxu0 0.0
  %4197 = vmatpush1.xpose.msra.mxu0 0.0
  %4198 = vmatprep.subr.mxu0 0.0
  %4199 = vmatpush1.xpose.msra.mxu0 0.0
  %4200 = vmatprep.subr.mxu0 0.0
  %4201 = vmatpush1.xpose.msra.mxu0 0.0
  %4202 = vmatprep.subr.mxu0 0.0
  %4203 = vmatpush1.xpose.msra.mxu0 0.0
  %4204 = vmatprep.subr.mxu0 0.0
  %4205 = vmatpush1.xpose.msra.mxu0 0.0
  %4206 = vmatprep.subr.mxu0 0.0
  %4207 = vmatpush1.xpose.msra.mxu0 0.0
  %4208 = vmatprep.subr.mxu0 0.0
  %4209 = vmatpush1.xpose.msra.mxu0 0.0
  %4210 = vmatprep.subr.mxu0 0.0
  %4211 = vmatpush1.xpose.msra.mxu0 0.0
  %4212 = vmatprep.subr.mxu0 0.0
  %4213 = vmatpush1.xpose.msra.mxu0 0.0
  %4214 = vmatprep.subr.mxu0 0.0
  %4215 = vmatpush1.xpose.msra.mxu0 0.0
  %4216 = vmatprep.subr.mxu0 0.0
  %4217 = vmatpush1.xpose.msra.mxu0 0.0
  %4218 = vmatprep.subr.mxu0 0.0
  %4219 = vmatpush1.xpose.msra.mxu0 0.0
  %4220 = vmatprep.subr.mxu0 0.0
  %4221 = vmatpush1.xpose.msra.mxu0 0.0
  %4222 = vmatprep.subr.mxu0 0.0
  %4223 = vmatpush1.xpose.msra.mxu0 0.0
  %4224 = vmatprep.subr.mxu0 0.0
  %4225 = vmatpush1.xpose.msra.mxu0 0.0
  %4226 = vmatprep.subr.mxu0 0.0
  %4227 = vmatpush1.xpose.msra.mxu0 0.0
  %4228 = vmatprep.subr.mxu0 0.0
  %4229 = vmatpush1.xpose.msra.mxu0 0.0
  %4230 = vmatprep.subr.mxu0 0.0
  %4231 = vmatpush1.xpose.msra.mxu0 0.0
  %4232 = vmatprep.subr.mxu0 0.0
  %4233 = vmatpush1.xpose.msra.mxu0 0.0
  %4234 = vmatprep.mubr.f32.mxu0 0.0
  %4235 = vmatmul.mubr.f32.gmra.mrb[0].mxu0 %v4165
  %v4236 = vpop.f32.mrb[0].mxu0
  %v4237 = vadd.f32 0.0, %v4236
  %v4238 = vpop.f32.mrb[0].mxu0
  %4239 = vdwg.mxu0
  %v4241 = vsel %vm179, %v40, 0
  %v4244 = vsel %vm179, %v2633, 0
  %4246 = vmatprep.subr.mxu0 0.0
  %4247 = vmatpush1.xpose.msra.mxu0 %v4244
  %4248 = vmatprep.subr.mxu0 0.0
  %4249 = vmatpush1.xpose.msra.mxu0 0.0
  %4250 = vmatprep.subr.mxu0 0.0
  %4251 = vmatpush1.xpose.msra.mxu0 0.0
  %4252 = vmatprep.subr.mxu0 0.0
  %4253 = vmatpush1.xpose.msra.mxu0 0.0
  %4254 = vmatprep.subr.mxu0 0.0
  %4255 = vmatpush1.xpose.msra.mxu0 0.0
  %4256 = vmatprep.subr.mxu0 0.0
  %4257 = vmatpush1.xpose.msra.mxu0 0.0
  %4258 = vmatprep.subr.mxu0 0.0
  %4259 = vmatpush1.xpose.msra.mxu0 0.0
  %4260 = vmatprep.subr.mxu0 0.0
  %4261 = vmatpush1.xpose.msra.mxu0 0.0
  %4262 = vmatprep.subr.mxu0 0.0
  %4263 = vmatpush1.xpose.msra.mxu0 0.0
  %4264 = vmatprep.subr.mxu0 0.0
  %4265 = vmatpush1.xpose.msra.mxu0 0.0
  %4266 = vmatprep.subr.mxu0 0.0
  %4267 = vmatpush1.xpose.msra.mxu0 0.0
  %4268 = vmatprep.subr.mxu0 0.0
  %4269 = vmatpush1.xpose.msra.mxu0 0.0
  %4270 = vmatprep.subr.mxu0 0.0
  %4271 = vmatpush1.xpose.msra.mxu0 0.0
  %4272 = vmatprep.subr.mxu0 0.0
  %4273 = vmatpush1.xpose.msra.mxu0 0.0
  %4274 = vmatprep.subr.mxu0 0.0
  %4275 = vmatpush1.xpose.msra.mxu0 0.0
  %4276 = vmatprep.subr.mxu0 0.0
  %4277 = vmatpush1.xpose.msra.mxu0 0.0
  %4278 = vmatprep.subr.mxu0 0.0
  %4279 = vmatpush1.xpose.msra.mxu0 0.0
  %4280 = vmatprep.subr.mxu0 0.0
  %4281 = vmatpush1.xpose.msra.mxu0 0.0
  %4282 = vmatprep.subr.mxu0 0.0
  %4283 = vmatpush1.xpose.msra.mxu0 0.0
  %4284 = vmatprep.subr.mxu0 0.0
  %4285 = vmatpush1.xpose.msra.mxu0 0.0
  %4286 = vmatprep.subr.mxu0 0.0
  %4287 = vmatpush1.xpose.msra.mxu0 0.0
  %4288 = vmatprep.subr.mxu0 0.0
  %4289 = vmatpush1.xpose.msra.mxu0 0.0
  %4290 = vmatprep.subr.mxu0 0.0
  %4291 = vmatpush1.xpose.msra.mxu0 0.0
  %4292 = vmatprep.subr.mxu0 0.0
  %4293 = vmatpush1.xpose.msra.mxu0 0.0
  %4294 = vmatprep.subr.mxu0 0.0
  %4295 = vmatpush1.xpose.msra.mxu0 0.0
  %4296 = vmatprep.subr.mxu0 0.0
  %4297 = vmatpush1.xpose.msra.mxu0 0.0
  %4298 = vmatprep.subr.mxu0 0.0
  %4299 = vmatpush1.xpose.msra.mxu0 0.0
  %4300 = vmatprep.subr.mxu0 0.0
  %4301 = vmatpush1.xpose.msra.mxu0 0.0
  %4302 = vmatprep.subr.mxu0 0.0
  %4303 = vmatpush1.xpose.msra.mxu0 0.0
  %4304 = vmatprep.subr.mxu0 0.0
  %4305 = vmatpush1.xpose.msra.mxu0 0.0
  %4306 = vmatprep.subr.mxu0 0.0
  %4307 = vmatpush1.xpose.msra.mxu0 0.0
  %4308 = vmatprep.subr.mxu0 0.0
  %4309 = vmatpush1.xpose.msra.mxu0 0.0
  %4310 = vmatprep.mubr.f32.mxu0 0.0
  %4311 = vmatmul.mubr.f32.gmra.mrb[0].mxu0 %v4241
  %v4312 = vpop.f32.mrb[0].mxu0
  %v4313 = vadd.f32 0.0, %v4312
  %v4314 = vpop.f32.mrb[0].mxu0
  %4315 = vdwg.mxu0
  %v4317 = vsel %vm179, %v41, 0
  %v4320 = vsel %vm179, %v2634, 0
  %4322 = vmatprep.subr.mxu0 0.0
  %4323 = vmatpush1.xpose.msra.mxu0 %v4320
  %4324 = vmatprep.subr.mxu0 0.0
  %4325 = vmatpush1.xpose.msra.mxu0 0.0
  %4326 = vmatprep.subr.mxu0 0.0
  %4327 = vmatpush1.xpose.msra.mxu0 0.0
  %4328 = vmatprep.subr.mxu0 0.0
  %4329 = vmatpush1.xpose.msra.mxu0 0.0
  %4330 = vmatprep.subr.mxu0 0.0
  %4331 = vmatpush1.xpose.msra.mxu0 0.0
  %4332 = vmatprep.subr.mxu0 0.0
  %4333 = vmatpush1.xpose.msra.mxu0 0.0
  %4334 = vmatprep.subr.mxu0 0.0
  %4335 = vmatpush1.xpose.msra.mxu0 0.0
  %4336 = vmatprep.subr.mxu0 0.0
  %4337 = vmatpush1.xpose.msra.mxu0 0.0
  %4338 = vmatprep.subr.mxu0 0.0
  %4339 = vmatpush1.xpose.msra.mxu0 0.0
  %4340 = vmatprep.subr.mxu0 0.0
  %4341 = vmatpush1.xpose.msra.mxu0 0.0
  %4342 = vmatprep.subr.mxu0 0.0
  %4343 = vmatpush1.xpose.msra.mxu0 0.0
  %4344 = vmatprep.subr.mxu0 0.0
  %4345 = vmatpush1.xpose.msra.mxu0 0.0
  %4346 = vmatprep.subr.mxu0 0.0
  %4347 = vmatpush1.xpose.msra.mxu0 0.0
  %4348 = vmatprep.subr.mxu0 0.0
  %4349 = vmatpush1.xpose.msra.mxu0 0.0
  %4350 = vmatprep.subr.mxu0 0.0
  %4351 = vmatpush1.xpose.msra.mxu0 0.0
  %4352 = vmatprep.subr.mxu0 0.0
  %4353 = vmatpush1.xpose.msra.mxu0 0.0
  %4354 = vmatprep.subr.mxu0 0.0
  %4355 = vmatpush1.xpose.msra.mxu0 0.0
  %4356 = vmatprep.subr.mxu0 0.0
  %4357 = vmatpush1.xpose.msra.mxu0 0.0
  %4358 = vmatprep.subr.mxu0 0.0
  %4359 = vmatpush1.xpose.msra.mxu0 0.0
  %4360 = vmatprep.subr.mxu0 0.0
  %4361 = vmatpush1.xpose.msra.mxu0 0.0
  %4362 = vmatprep.subr.mxu0 0.0
  %4363 = vmatpush1.xpose.msra.mxu0 0.0
  %4364 = vmatprep.subr.mxu0 0.0
  %4365 = vmatpush1.xpose.msra.mxu0 0.0
  %4366 = vmatprep.subr.mxu0 0.0
  %4367 = vmatpush1.xpose.msra.mxu0 0.0
  %4368 = vmatprep.subr.mxu0 0.0
  %4369 = vmatpush1.xpose.msra.mxu0 0.0
  %4370 = vmatprep.subr.mxu0 0.0
  %4371 = vmatpush1.xpose.msra.mxu0 0.0
  %4372 = vmatprep.subr.mxu0 0.0
  %4373 = vmatpush1.xpose.msra.mxu0 0.0
  %4374 = vmatprep.subr.mxu0 0.0
  %4375 = vmatpush1.xpose.msra.mxu0 0.0
  %4376 = vmatprep.subr.mxu0 0.0
  %4377 = vmatpush1.xpose.msra.mxu0 0.0
  %4378 = vmatprep.subr.mxu0 0.0
  %4379 = vmatpush1.xpose.msra.mxu0 0.0
  %4380 = vmatprep.subr.mxu0 0.0
  %4381 = vmatpush1.xpose.msra.mxu0 0.0
  %4382 = vmatprep.subr.mxu0 0.0
  %4383 = vmatpush1.xpose.msra.mxu0 0.0
  %4384 = vmatprep.subr.mxu0 0.0
  %4385 = vmatpush1.xpose.msra.mxu0 0.0
  %4386 = vmatprep.mubr.f32.mxu0 0.0
  %4387 = vmatmul.mubr.f32.gmra.mrb[0].mxu0 %v4317
  %v4388 = vpop.f32.mrb[0].mxu0
  %v4389 = vadd.f32 0.0, %v4388
  %v4390 = vpop.f32.mrb[0].mxu0
  %4391 = vdwg.mxu0
  %v4393 = vsel %vm179, %v42, 0
  %v4396 = vsel %vm179, %v2635, 0
  %4398 = vmatprep.subr.mxu0 0.0
  %4399 = vmatpush1.xpose.msra.mxu0 %v4396
  %4400 = vmatprep.subr.mxu0 0.0
  %4401 = vmatpush1.xpose.msra.mxu0 0.0
  %4402 = vmatprep.subr.mxu0 0.0
  %4403 = vmatpush1.xpose.msra.mxu0 0.0
  %4404 = vmatprep.subr.mxu0 0.0
  %4405 = vmatpush1.xpose.msra.mxu0 0.0
  %4406 = vmatprep.subr.mxu0 0.0
  %4407 = vmatpush1.xpose.msra.mxu0 0.0
  %4408 = vmatprep.subr.mxu0 0.0
  %4409 = vmatpush1.xpose.msra.mxu0 0.0
  %4410 = vmatprep.subr.mxu0 0.0
  %4411 = vmatpush1.xpose.msra.mxu0 0.0
  %4412 = vmatprep.subr.mxu0 0.0
  %4413 = vmatpush1.xpose.msra.mxu0 0.0
  %4414 = vmatprep.subr.mxu0 0.0
  %4415 = vmatpush1.xpose.msra.mxu0 0.0
  %4416 = vmatprep.subr.mxu0 0.0
  %4417 = vmatpush1.xpose.msra.mxu0 0.0
  %4418 = vmatprep.subr.mxu0 0.0
  %4419 = vmatpush1.xpose.msra.mxu0 0.0
  %4420 = vmatprep.subr.mxu0 0.0
  %4421 = vmatpush1.xpose.msra.mxu0 0.0
  %4422 = vmatprep.subr.mxu0 0.0
  %4423 = vmatpush1.xpose.msra.mxu0 0.0
  %4424 = vmatprep.subr.mxu0 0.0
  %4425 = vmatpush1.xpose.msra.mxu0 0.0
  %4426 = vmatprep.subr.mxu0 0.0
  %4427 = vmatpush1.xpose.msra.mxu0 0.0
  %4428 = vmatprep.subr.mxu0 0.0
  %4429 = vmatpush1.xpose.msra.mxu0 0.0
  %4430 = vmatprep.subr.mxu0 0.0
  %4431 = vmatpush1.xpose.msra.mxu0 0.0
  %4432 = vmatprep.subr.mxu0 0.0
  %4433 = vmatpush1.xpose.msra.mxu0 0.0
  %4434 = vmatprep.subr.mxu0 0.0
  %4435 = vmatpush1.xpose.msra.mxu0 0.0
  %4436 = vmatprep.subr.mxu0 0.0
  %4437 = vmatpush1.xpose.msra.mxu0 0.0
  %4438 = vmatprep.subr.mxu0 0.0
  %4439 = vmatpush1.xpose.msra.mxu0 0.0
  %4440 = vmatprep.subr.mxu0 0.0
  %4441 = vmatpush1.xpose.msra.mxu0 0.0
  %4442 = vmatprep.subr.mxu0 0.0
  %4443 = vmatpush1.xpose.msra.mxu0 0.0
  %4444 = vmatprep.subr.mxu0 0.0
  %4445 = vmatpush1.xpose.msra.mxu0 0.0
  %4446 = vmatprep.subr.mxu0 0.0
  %4447 = vmatpush1.xpose.msra.mxu0 0.0
  %4448 = vmatprep.subr.mxu0 0.0
  %4449 = vmatpush1.xpose.msra.mxu0 0.0
  %4450 = vmatprep.subr.mxu0 0.0
  %4451 = vmatpush1.xpose.msra.mxu0 0.0
  %4452 = vmatprep.subr.mxu0 0.0
  %4453 = vmatpush1.xpose.msra.mxu0 0.0
  %4454 = vmatprep.subr.mxu0 0.0
  %4455 = vmatpush1.xpose.msra.mxu0 0.0
  %4456 = vmatprep.subr.mxu0 0.0
  %4457 = vmatpush1.xpose.msra.mxu0 0.0
  %4458 = vmatprep.subr.mxu0 0.0
  %4459 = vmatpush1.xpose.msra.mxu0 0.0
  %4460 = vmatprep.subr.mxu0 0.0
  %4461 = vmatpush1.xpose.msra.mxu0 0.0
  %4462 = vmatprep.mubr.f32.mxu0 0.0
  %4463 = vmatmul.mubr.f32.gmra.mrb[0].mxu0 %v4393
  %v4464 = vpop.f32.mrb[0].mxu0
  %v4465 = vadd.f32 0.0, %v4464
  %v4466 = vpop.f32.mrb[0].mxu0
  %4467 = vdwg.mxu0
  %v4469 = vsel %vm179, %v43, 0
  %v4472 = vsel %vm179, %v2636, 0
  %4474 = vmatprep.subr.mxu0 0.0
  %4475 = vmatpush1.xpose.msra.mxu0 %v4472
  %4476 = vmatprep.subr.mxu0 0.0
  %4477 = vmatpush1.xpose.msra.mxu0 0.0
  %4478 = vmatprep.subr.mxu0 0.0
  %4479 = vmatpush1.xpose.msra.mxu0 0.0
  %4480 = vmatprep.subr.mxu0 0.0
  %4481 = vmatpush1.xpose.msra.mxu0 0.0
  %4482 = vmatprep.subr.mxu0 0.0
  %4483 = vmatpush1.xpose.msra.mxu0 0.0
  %4484 = vmatprep.subr.mxu0 0.0
  %4485 = vmatpush1.xpose.msra.mxu0 0.0
  %4486 = vmatprep.subr.mxu0 0.0
  %4487 = vmatpush1.xpose.msra.mxu0 0.0
  %4488 = vmatprep.subr.mxu0 0.0
  %4489 = vmatpush1.xpose.msra.mxu0 0.0
  %4490 = vmatprep.subr.mxu0 0.0
  %4491 = vmatpush1.xpose.msra.mxu0 0.0
  %4492 = vmatprep.subr.mxu0 0.0
  %4493 = vmatpush1.xpose.msra.mxu0 0.0
  %4494 = vmatprep.subr.mxu0 0.0
  %4495 = vmatpush1.xpose.msra.mxu0 0.0
  %4496 = vmatprep.subr.mxu0 0.0
  %4497 = vmatpush1.xpose.msra.mxu0 0.0
  %4498 = vmatprep.subr.mxu0 0.0
  %4499 = vmatpush1.xpose.msra.mxu0 0.0
  %4500 = vmatprep.subr.mxu0 0.0
  %4501 = vmatpush1.xpose.msra.mxu0 0.0
  %4502 = vmatprep.subr.mxu0 0.0
  %4503 = vmatpush1.xpose.msra.mxu0 0.0
  %4504 = vmatprep.subr.mxu0 0.0
  %4505 = vmatpush1.xpose.msra.mxu0 0.0
  %4506 = vmatprep.subr.mxu0 0.0
  %4507 = vmatpush1.xpose.msra.mxu0 0.0
  %4508 = vmatprep.subr.mxu0 0.0
  %4509 = vmatpush1.xpose.msra.mxu0 0.0
  %4510 = vmatprep.subr.mxu0 0.0
  %4511 = vmatpush1.xpose.msra.mxu0 0.0
  %4512 = vmatprep.subr.mxu0 0.0
  %4513 = vmatpush1.xpose.msra.mxu0 0.0
  %4514 = vmatprep.subr.mxu0 0.0
  %4515 = vmatpush1.xpose.msra.mxu0 0.0
  %4516 = vmatprep.subr.mxu0 0.0
  %4517 = vmatpush1.xpose.msra.mxu0 0.0
  %4518 = vmatprep.subr.mxu0 0.0
  %4519 = vmatpush1.xpose.msra.mxu0 0.0
  %4520 = vmatprep.subr.mxu0 0.0
  %4521 = vmatpush1.xpose.msra.mxu0 0.0
  %4522 = vmatprep.subr.mxu0 0.0
  %4523 = vmatpush1.xpose.msra.mxu0 0.0
  %4524 = vmatprep.subr.mxu0 0.0
  %4525 = vmatpush1.xpose.msra.mxu0 0.0
  %4526 = vmatprep.subr.mxu0 0.0
  %4527 = vmatpush1.xpose.msra.mxu0 0.0
  %4528 = vmatprep.subr.mxu0 0.0
  %4529 = vmatpush1.xpose.msra.mxu0 0.0
  %4530 = vmatprep.subr.mxu0 0.0
  %4531 = vmatpush1.xpose.msra.mxu0 0.0
  %4532 = vmatprep.subr.mxu0 0.0
  %4533 = vmatpush1.xpose.msra.mxu0 0.0
  %4534 = vmatprep.subr.mxu0 0.0
  %4535 = vmatpush1.xpose.msra.mxu0 0.0
  %4536 = vmatprep.subr.mxu0 0.0
  %4537 = vmatpush1.xpose.msra.mxu0 0.0
  %4538 = vmatprep.mubr.f32.mxu0 0.0
  %4539 = vmatmul.mubr.f32.gmra.mrb[0].mxu0 %v4469
  %v4540 = vpop.f32.mrb[0].mxu0
  %v4541 = vadd.f32 0.0, %v4540
  %v4542 = vpop.f32.mrb[0].mxu0
  %4543 = vdwg.mxu0
  %v4545 = vsel %vm179, %v44, 0
  %v4548 = vsel %vm179, %v2637, 0
  %4550 = vmatprep.subr.mxu0 0.0
  %4551 = vmatpush1.xpose.msra.mxu0 %v4548
  %4552 = vmatprep.subr.mxu0 0.0
  %4553 = vmatpush1.xpose.msra.mxu0 0.0
  %4554 = vmatprep.subr.mxu0 0.0
  %4555 = vmatpush1.xpose.msra.mxu0 0.0
  %4556 = vmatprep.subr.mxu0 0.0
  %4557 = vmatpush1.xpose.msra.mxu0 0.0
  %4558 = vmatprep.subr.mxu0 0.0
  %4559 = vmatpush1.xpose.msra.mxu0 0.0
  %4560 = vmatprep.subr.mxu0 0.0
  %4561 = vmatpush1.xpose.msra.mxu0 0.0
  %4562 = vmatprep.subr.mxu0 0.0
  %4563 = vmatpush1.xpose.msra.mxu0 0.0
  %4564 = vmatprep.subr.mxu0 0.0
  %4565 = vmatpush1.xpose.msra.mxu0 0.0
  %4566 = vmatprep.subr.mxu0 0.0
  %4567 = vmatpush1.xpose.msra.mxu0 0.0
  %4568 = vmatprep.subr.mxu0 0.0
  %4569 = vmatpush1.xpose.msra.mxu0 0.0
  %4570 = vmatprep.subr.mxu0 0.0
  %4571 = vmatpush1.xpose.msra.mxu0 0.0
  %4572 = vmatprep.subr.mxu0 0.0
  %4573 = vmatpush1.xpose.msra.mxu0 0.0
  %4574 = vmatprep.subr.mxu0 0.0
  %4575 = vmatpush1.xpose.msra.mxu0 0.0
  %4576 = vmatprep.subr.mxu0 0.0
  %4577 = vmatpush1.xpose.msra.mxu0 0.0
  %4578 = vmatprep.subr.mxu0 0.0
  %4579 = vmatpush1.xpose.msra.mxu0 0.0
  %4580 = vmatprep.subr.mxu0 0.0
  %4581 = vmatpush1.xpose.msra.mxu0 0.0
  %4582 = vmatprep.subr.mxu0 0.0
  %4583 = vmatpush1.xpose.msra.mxu0 0.0
  %4584 = vmatprep.subr.mxu0 0.0
  %4585 = vmatpush1.xpose.msra.mxu0 0.0
  %4586 = vmatprep.subr.mxu0 0.0
  %4587 = vmatpush1.xpose.msra.mxu0 0.0
  %4588 = vmatprep.subr.mxu0 0.0
  %4589 = vmatpush1.xpose.msra.mxu0 0.0
  %4590 = vmatprep.subr.mxu0 0.0
  %4591 = vmatpush1.xpose.msra.mxu0 0.0
  %4592 = vmatprep.subr.mxu0 0.0
  %4593 = vmatpush1.xpose.msra.mxu0 0.0
  %4594 = vmatprep.subr.mxu0 0.0
  %4595 = vmatpush1.xpose.msra.mxu0 0.0
  %4596 = vmatprep.subr.mxu0 0.0
  %4597 = vmatpush1.xpose.msra.mxu0 0.0
  %4598 = vmatprep.subr.mxu0 0.0
  %4599 = vmatpush1.xpose.msra.mxu0 0.0
  %4600 = vmatprep.subr.mxu0 0.0
  %4601 = vmatpush1.xpose.msra.mxu0 0.0
  %4602 = vmatprep.subr.mxu0 0.0
  %4603 = vmatpush1.xpose.msra.mxu0 0.0
  %4604 = vmatprep.subr.mxu0 0.0
  %4605 = vmatpush1.xpose.msra.mxu0 0.0
  %4606 = vmatprep.subr.mxu0 0.0
  %4607 = vmatpush1.xpose.msra.mxu0 0.0
  %4608 = vmatprep.subr.mxu0 0.0
  %4609 = vmatpush1.xpose.msra.mxu0 0.0
  %4610 = vmatprep.subr.mxu0 0.0
  %4611 = vmatpush1.xpose.msra.mxu0 0.0
  %4612 = vmatprep.subr.mxu0 0.0
  %4613 = vmatpush1.xpose.msra.mxu0 0.0
  %4614 = vmatprep.mubr.f32.mxu0 0.0
  %4615 = vmatmul.mubr.f32.gmra.mrb[0].mxu0 %v4545
  %v4616 = vpop.f32.mrb[0].mxu0
  %v4617 = vadd.f32 0.0, %v4616
  %v4618 = vpop.f32.mrb[0].mxu0
  %4619 = vdwg.mxu0
  %v4621 = vsel %vm179, %v45, 0
  %v4624 = vsel %vm179, %v2638, 0
  %4626 = vmatprep.subr.mxu0 0.0
  %4627 = vmatpush1.xpose.msra.mxu0 %v4624
  %4628 = vmatprep.subr.mxu0 0.0
  %4629 = vmatpush1.xpose.msra.mxu0 0.0
  %4630 = vmatprep.subr.mxu0 0.0
  %4631 = vmatpush1.xpose.msra.mxu0 0.0
  %4632 = vmatprep.subr.mxu0 0.0
  %4633 = vmatpush1.xpose.msra.mxu0 0.0
  %4634 = vmatprep.subr.mxu0 0.0
  %4635 = vmatpush1.xpose.msra.mxu0 0.0
  %4636 = vmatprep.subr.mxu0 0.0
  %4637 = vmatpush1.xpose.msra.mxu0 0.0
  %4638 = vmatprep.subr.mxu0 0.0
  %4639 = vmatpush1.xpose.msra.mxu0 0.0
  %4640 = vmatprep.subr.mxu0 0.0
  %4641 = vmatpush1.xpose.msra.mxu0 0.0
  %4642 = vmatprep.subr.mxu0 0.0
  %4643 = vmatpush1.xpose.msra.mxu0 0.0
  %4644 = vmatprep.subr.mxu0 0.0
  %4645 = vmatpush1.xpose.msra.mxu0 0.0
  %4646 = vmatprep.subr.mxu0 0.0
  %4647 = vmatpush1.xpose.msra.mxu0 0.0
  %4648 = vmatprep.subr.mxu0 0.0
  %4649 = vmatpush1.xpose.msra.mxu0 0.0
  %4650 = vmatprep.subr.mxu0 0.0
  %4651 = vmatpush1.xpose.msra.mxu0 0.0
  %4652 = vmatprep.subr.mxu0 0.0
  %4653 = vmatpush1.xpose.msra.mxu0 0.0
  %4654 = vmatprep.subr.mxu0 0.0
  %4655 = vmatpush1.xpose.msra.mxu0 0.0
  %4656 = vmatprep.subr.mxu0 0.0
  %4657 = vmatpush1.xpose.msra.mxu0 0.0
  %4658 = vmatprep.subr.mxu0 0.0
  %4659 = vmatpush1.xpose.msra.mxu0 0.0
  %4660 = vmatprep.subr.mxu0 0.0
  %4661 = vmatpush1.xpose.msra.mxu0 0.0
  %4662 = vmatprep.subr.mxu0 0.0
  %4663 = vmatpush1.xpose.msra.mxu0 0.0
  %4664 = vmatprep.subr.mxu0 0.0
  %4665 = vmatpush1.xpose.msra.mxu0 0.0
  %4666 = vmatprep.subr.mxu0 0.0
  %4667 = vmatpush1.xpose.msra.mxu0 0.0
  %4668 = vmatprep.subr.mxu0 0.0
  %4669 = vmatpush1.xpose.msra.mxu0 0.0
  %4670 = vmatprep.subr.mxu0 0.0
  %4671 = vmatpush1.xpose.msra.mxu0 0.0
  %4672 = vmatprep.subr.mxu0 0.0
  %4673 = vmatpush1.xpose.msra.mxu0 0.0
  %4674 = vmatprep.subr.mxu0 0.0
  %4675 = vmatpush1.xpose.msra.mxu0 0.0
  %4676 = vmatprep.subr.mxu0 0.0
  %4677 = vmatpush1.xpose.msra.mxu0 0.0
  %4678 = vmatprep.subr.mxu0 0.0
  %4679 = vmatpush1.xpose.msra.mxu0 0.0
  %4680 = vmatprep.subr.mxu0 0.0
  %4681 = vmatpush1.xpose.msra.mxu0 0.0
  %4682 = vmatprep.subr.mxu0 0.0
  %4683 = vmatpush1.xpose.msra.mxu0 0.0
  %4684 = vmatprep.subr.mxu0 0.0
  %4685 = vmatpush1.xpose.msra.mxu0 0.0
  %4686 = vmatprep.subr.mxu0 0.0
  %4687 = vmatpush1.xpose.msra.mxu0 0.0
  %4688 = vmatprep.subr.mxu0 0.0
  %4689 = vmatpush1.xpose.msra.mxu0 0.0
  %4690 = vmatprep.mubr.f32.mxu0 0.0
  %4691 = vmatmul.mubr.f32.gmra.mrb[0].mxu0 %v4621
  %v4692 = vpop.f32.mrb[0].mxu0
  %v4693 = vadd.f32 0.0, %v4692
  %v4694 = vpop.f32.mrb[0].mxu0
  %4695 = vdwg.mxu0
  %v4697 = vsel %vm179, %v46, 0
  %v4700 = vsel %vm179, %v2639, 0
  %4702 = vmatprep.subr.mxu0 0.0
  %4703 = vmatpush1.xpose.msra.mxu0 %v4700
  %4704 = vmatprep.subr.mxu0 0.0
  %4705 = vmatpush1.xpose.msra.mxu0 0.0
  %4706 = vmatprep.subr.mxu0 0.0
  %4707 = vmatpush1.xpose.msra.mxu0 0.0
  %4708 = vmatprep.subr.mxu0 0.0
  %4709 = vmatpush1.xpose.msra.mxu0 0.0
  %4710 = vmatprep.subr.mxu0 0.0
  %4711 = vmatpush1.xpose.msra.mxu0 0.0
  %4712 = vmatprep.subr.mxu0 0.0
  %4713 = vmatpush1.xpose.msra.mxu0 0.0
  %4714 = vmatprep.subr.mxu0 0.0
  %4715 = vmatpush1.xpose.msra.mxu0 0.0
  %4716 = vmatprep.subr.mxu0 0.0
  %4717 = vmatpush1.xpose.msra.mxu0 0.0
  %4718 = vmatprep.subr.mxu0 0.0
  %4719 = vmatpush1.xpose.msra.mxu0 0.0
  %4720 = vmatprep.subr.mxu0 0.0
  %4721 = vmatpush1.xpose.msra.mxu0 0.0
  %4722 = vmatprep.subr.mxu0 0.0
  %4723 = vmatpush1.xpose.msra.mxu0 0.0
  %4724 = vmatprep.subr.mxu0 0.0
  %4725 = vmatpush1.xpose.msra.mxu0 0.0
  %4726 = vmatprep.subr.mxu0 0.0
  %4727 = vmatpush1.xpose.msra.mxu0 0.0
  %4728 = vmatprep.subr.mxu0 0.0
  %4729 = vmatpush1.xpose.msra.mxu0 0.0
  %4730 = vmatprep.subr.mxu0 0.0
  %4731 = vmatpush1.xpose.msra.mxu0 0.0
  %4732 = vmatprep.subr.mxu0 0.0
  %4733 = vmatpush1.xpose.msra.mxu0 0.0
  %4734 = vmatprep.subr.mxu0 0.0
  %4735 = vmatpush1.xpose.msra.mxu0 0.0
  %4736 = vmatprep.subr.mxu0 0.0
  %4737 = vmatpush1.xpose.msra.mxu0 0.0
  %4738 = vmatprep.subr.mxu0 0.0
  %4739 = vmatpush1.xpose.msra.mxu0 0.0
  %4740 = vmatprep.subr.mxu0 0.0
  %4741 = vmatpush1.xpose.msra.mxu0 0.0
  %4742 = vmatprep.subr.mxu0 0.0
  %4743 = vmatpush1.xpose.msra.mxu0 0.0
  %4744 = vmatprep.subr.mxu0 0.0
  %4745 = vmatpush1.xpose.msra.mxu0 0.0
  %4746 = vmatprep.subr.mxu0 0.0
  %4747 = vmatpush1.xpose.msra.mxu0 0.0
  %4748 = vmatprep.subr.mxu0 0.0
  %4749 = vmatpush1.xpose.msra.mxu0 0.0
  %4750 = vmatprep.subr.mxu0 0.0
  %4751 = vmatpush1.xpose.msra.mxu0 0.0
  %4752 = vmatprep.subr.mxu0 0.0
  %4753 = vmatpush1.xpose.msra.mxu0 0.0
  %4754 = vmatprep.subr.mxu0 0.0
  %4755 = vmatpush1.xpose.msra.mxu0 0.0
  %4756 = vmatprep.subr.mxu0 0.0
  %4757 = vmatpush1.xpose.msra.mxu0 0.0
  %4758 = vmatprep.subr.mxu0 0.0
  %4759 = vmatpush1.xpose.msra.mxu0 0.0
  %4760 = vmatprep.subr.mxu0 0.0
  %4761 = vmatpush1.xpose.msra.mxu0 0.0
  %4762 = vmatprep.subr.mxu0 0.0
  %4763 = vmatpush1.xpose.msra.mxu0 0.0
  %4764 = vmatprep.subr.mxu0 0.0
  %4765 = vmatpush1.xpose.msra.mxu0 0.0
  %4766 = vmatprep.mubr.f32.mxu0 0.0
  %4767 = vmatmul.mubr.f32.gmra.mrb[0].mxu0 %v4697
  %v4768 = vpop.f32.mrb[0].mxu0
  %v4769 = vadd.f32 0.0, %v4768
  %v4770 = vpop.f32.mrb[0].mxu0
  %4771 = vdwg.mxu0
  %v4773 = vsel %vm179, %v47, 0
  %v4776 = vsel %vm179, %v2640, 0
  %4778 = vmatprep.subr.mxu0 0.0
  %4779 = vmatpush1.xpose.msra.mxu0 %v4776
  %4780 = vmatprep.subr.mxu0 0.0
  %4781 = vmatpush1.xpose.msra.mxu0 0.0
  %4782 = vmatprep.subr.mxu0 0.0
  %4783 = vmatpush1.xpose.msra.mxu0 0.0
  %4784 = vmatprep.subr.mxu0 0.0
  %4785 = vmatpush1.xpose.msra.mxu0 0.0
  %4786 = vmatprep.subr.mxu0 0.0
  %4787 = vmatpush1.xpose.msra.mxu0 0.0
  %4788 = vmatprep.subr.mxu0 0.0
  %4789 = vmatpush1.xpose.msra.mxu0 0.0
  %4790 = vmatprep.subr.mxu0 0.0
  %4791 = vmatpush1.xpose.msra.mxu0 0.0
  %4792 = vmatprep.subr.mxu0 0.0
  %4793 = vmatpush1.xpose.msra.mxu0 0.0
  %4794 = vmatprep.subr.mxu0 0.0
  %4795 = vmatpush1.xpose.msra.mxu0 0.0
  %4796 = vmatprep.subr.mxu0 0.0
  %4797 = vmatpush1.xpose.msra.mxu0 0.0
  %4798 = vmatprep.subr.mxu0 0.0
  %4799 = vmatpush1.xpose.msra.mxu0 0.0
  %4800 = vmatprep.subr.mxu0 0.0
  %4801 = vmatpush1.xpose.msra.mxu0 0.0
  %4802 = vmatprep.subr.mxu0 0.0
  %4803 = vmatpush1.xpose.msra.mxu0 0.0
  %4804 = vmatprep.subr.mxu0 0.0
  %4805 = vmatpush1.xpose.msra.mxu0 0.0
  %4806 = vmatprep.subr.mxu0 0.0
  %4807 = vmatpush1.xpose.msra.mxu0 0.0
  %4808 = vmatprep.subr.mxu0 0.0
  %4809 = vmatpush1.xpose.msra.mxu0 0.0
  %4810 = vmatprep.subr.mxu0 0.0
  %4811 = vmatpush1.xpose.msra.mxu0 0.0
  %4812 = vmatprep.subr.mxu0 0.0
  %4813 = vmatpush1.xpose.msra.mxu0 0.0
  %4814 = vmatprep.subr.mxu0 0.0
  %4815 = vmatpush1.xpose.msra.mxu0 0.0
  %4816 = vmatprep.subr.mxu0 0.0
  %4817 = vmatpush1.xpose.msra.mxu0 0.0
  %4818 = vmatprep.subr.mxu0 0.0
  %4819 = vmatpush1.xpose.msra.mxu0 0.0
  %4820 = vmatprep.subr.mxu0 0.0
  %4821 = vmatpush1.xpose.msra.mxu0 0.0
  %4822 = vmatprep.subr.mxu0 0.0
  %4823 = vmatpush1.xpose.msra.mxu0 0.0
  %4824 = vmatprep.subr.mxu0 0.0
  %4825 = vmatpush1.xpose.msra.mxu0 0.0
  %4826 = vmatprep.subr.mxu0 0.0
  %4827 = vmatpush1.xpose.msra.mxu0 0.0
  %4828 = vmatprep.subr.mxu0 0.0
  %4829 = vmatpush1.xpose.msra.mxu0 0.0
  %4830 = vmatprep.subr.mxu0 0.0
  %4831 = vmatpush1.xpose.msra.mxu0 0.0
  %4832 = vmatprep.subr.mxu0 0.0
  %4833 = vmatpush1.xpose.msra.mxu0 0.0
  %4834 = vmatprep.subr.mxu0 0.0
  %4835 = vmatpush1.xpose.msra.mxu0 0.0
  %4836 = vmatprep.subr.mxu0 0.0
  %4837 = vmatpush1.xpose.msra.mxu0 0.0
  %4838 = vmatprep.subr.mxu0 0.0
  %4839 = vmatpush1.xpose.msra.mxu0 0.0
  %4840 = vmatprep.subr.mxu0 0.0
  %4841 = vmatpush1.xpose.msra.mxu0 0.0
  %4842 = vmatprep.mubr.f32.mxu0 0.0
  %4843 = vmatmul.mubr.f32.gmra.mrb[0].mxu0 %v4773
  %v4844 = vpop.f32.mrb[0].mxu0
  %v4845 = vadd.f32 0.0, %v4844
  %v4846 = vpop.f32.mrb[0].mxu0
  %4847 = vdwg.mxu0
  %v4849 = vsel %vm179, %v48, 0
  %v4852 = vsel %vm179, %v2641, 0
  %4854 = vmatprep.subr.mxu0 0.0
  %4855 = vmatpush1.xpose.msra.mxu0 %v4852
  %4856 = vmatprep.subr.mxu0 0.0
  %4857 = vmatpush1.xpose.msra.mxu0 0.0
  %4858 = vmatprep.subr.mxu0 0.0
  %4859 = vmatpush1.xpose.msra.mxu0 0.0
  %4860 = vmatprep.subr.mxu0 0.0
  %4861 = vmatpush1.xpose.msra.mxu0 0.0
  %4862 = vmatprep.subr.mxu0 0.0
  %4863 = vmatpush1.xpose.msra.mxu0 0.0
  %4864 = vmatprep.subr.mxu0 0.0
  %4865 = vmatpush1.xpose.msra.mxu0 0.0
  %4866 = vmatprep.subr.mxu0 0.0
  %4867 = vmatpush1.xpose.msra.mxu0 0.0
  %4868 = vmatprep.subr.mxu0 0.0
  %4869 = vmatpush1.xpose.msra.mxu0 0.0
  %4870 = vmatprep.subr.mxu0 0.0
  %4871 = vmatpush1.xpose.msra.mxu0 0.0
  %4872 = vmatprep.subr.mxu0 0.0
  %4873 = vmatpush1.xpose.msra.mxu0 0.0
  %4874 = vmatprep.subr.mxu0 0.0
  %4875 = vmatpush1.xpose.msra.mxu0 0.0
  %4876 = vmatprep.subr.mxu0 0.0
  %4877 = vmatpush1.xpose.msra.mxu0 0.0
  %4878 = vmatprep.subr.mxu0 0.0
  %4879 = vmatpush1.xpose.msra.mxu0 0.0
  %4880 = vmatprep.subr.mxu0 0.0
  %4881 = vmatpush1.xpose.msra.mxu0 0.0
  %4882 = vmatprep.subr.mxu0 0.0
  %4883 = vmatpush1.xpose.msra.mxu0 0.0
  %4884 = vmatprep.subr.mxu0 0.0
  %4885 = vmatpush1.xpose.msra.mxu0 0.0
  %4886 = vmatprep.subr.mxu0 0.0
  %4887 = vmatpush1.xpose.msra.mxu0 0.0
  %4888 = vmatprep.subr.mxu0 0.0
  %4889 = vmatpush1.xpose.msra.mxu0 0.0
  %4890 = vmatprep.subr.mxu0 0.0
  %4891 = vmatpush1.xpose.msra.mxu0 0.0
  %4892 = vmatprep.subr.mxu0 0.0
  %4893 = vmatpush1.xpose.msra.mxu0 0.0
  %4894 = vmatprep.subr.mxu0 0.0
  %4895 = vmatpush1.xpose.msra.mxu0 0.0
  %4896 = vmatprep.subr.mxu0 0.0
  %4897 = vmatpush1.xpose.msra.mxu0 0.0
  %4898 = vmatprep.subr.mxu0 0.0
  %4899 = vmatpush1.xpose.msra.mxu0 0.0
  %4900 = vmatprep.subr.mxu0 0.0
  %4901 = vmatpush1.xpose.msra.mxu0 0.0
  %4902 = vmatprep.subr.mxu0 0.0
  %4903 = vmatpush1.xpose.msra.mxu0 0.0
  %4904 = vmatprep.subr.mxu0 0.0
  %4905 = vmatpush1.xpose.msra.mxu0 0.0
  %4906 = vmatprep.subr.mxu0 0.0
  %4907 = vmatpush1.xpose.msra.mxu0 0.0
  %4908 = vmatprep.subr.mxu0 0.0
  %4909 = vmatpush1.xpose.msra.mxu0 0.0
  %4910 = vmatprep.subr.mxu0 0.0
  %4911 = vmatpush1.xpose.msra.mxu0 0.0
  %4912 = vmatprep.subr.mxu0 0.0
  %4913 = vmatpush1.xpose.msra.mxu0 0.0
  %4914 = vmatprep.subr.mxu0 0.0
  %4915 = vmatpush1.xpose.msra.mxu0 0.0
  %4916 = vmatprep.subr.mxu0 0.0
  %4917 = vmatpush1.xpose.msra.mxu0 0.0
  %4918 = vmatprep.mubr.f32.mxu0 0.0
  %4919 = vmatmul.mubr.f32.gmra.mrb[0].mxu0 %v4849
  %v4920 = vpop.f32.mrb[0].mxu0
  %v4921 = vadd.f32 0.0, %v4920
  %v4922 = vpop.f32.mrb[0].mxu0
  %4923 = vdwg.mxu0
  %v4925 = vsel %vm179, %v49, 0
  %v4928 = vsel %vm179, %v2642, 0
  %4930 = vmatprep.subr.mxu0 0.0
  %4931 = vmatpush1.xpose.msra.mxu0 %v4928
  %4932 = vmatprep.subr.mxu0 0.0
  %4933 = vmatpush1.xpose.msra.mxu0 0.0
  %4934 = vmatprep.subr.mxu0 0.0
  %4935 = vmatpush1.xpose.msra.mxu0 0.0
  %4936 = vmatprep.subr.mxu0 0.0
  %4937 = vmatpush1.xpose.msra.mxu0 0.0
  %4938 = vmatprep.subr.mxu0 0.0
  %4939 = vmatpush1.xpose.msra.mxu0 0.0
  %4940 = vmatprep.subr.mxu0 0.0
  %4941 = vmatpush1.xpose.msra.mxu0 0.0
  %4942 = vmatprep.subr.mxu0 0.0
  %4943 = vmatpush1.xpose.msra.mxu0 0.0
  %4944 = vmatprep.subr.mxu0 0.0
  %4945 = vmatpush1.xpose.msra.mxu0 0.0
  %4946 = vmatprep.subr.mxu0 0.0
  %4947 = vmatpush1.xpose.msra.mxu0 0.0
  %4948 = vmatprep.subr.mxu0 0.0
  %4949 = vmatpush1.xpose.msra.mxu0 0.0
  %4950 = vmatprep.subr.mxu0 0.0
  %4951 = vmatpush1.xpose.msra.mxu0 0.0
  %4952 = vmatprep.subr.mxu0 0.0
  %4953 = vmatpush1.xpose.msra.mxu0 0.0
  %4954 = vmatprep.subr.mxu0 0.0
  %4955 = vmatpush1.xpose.msra.mxu0 0.0
  %4956 = vmatprep.subr.mxu0 0.0
  %4957 = vmatpush1.xpose.msra.mxu0 0.0
  %4958 = vmatprep.subr.mxu0 0.0
  %4959 = vmatpush1.xpose.msra.mxu0 0.0
  %4960 = vmatprep.subr.mxu0 0.0
  %4961 = vmatpush1.xpose.msra.mxu0 0.0
  %4962 = vmatprep.subr.mxu0 0.0
  %4963 = vmatpush1.xpose.msra.mxu0 0.0
  %4964 = vmatprep.subr.mxu0 0.0
  %4965 = vmatpush1.xpose.msra.mxu0 0.0
  %4966 = vmatprep.subr.mxu0 0.0
  %4967 = vmatpush1.xpose.msra.mxu0 0.0
  %4968 = vmatprep.subr.mxu0 0.0
  %4969 = vmatpush1.xpose.msra.mxu0 0.0
  %4970 = vmatprep.subr.mxu0 0.0
  %4971 = vmatpush1.xpose.msra.mxu0 0.0
  %4972 = vmatprep.subr.mxu0 0.0
  %4973 = vmatpush1.xpose.msra.mxu0 0.0
  %4974 = vmatprep.subr.mxu0 0.0
  %4975 = vmatpush1.xpose.msra.mxu0 0.0
  %4976 = vmatprep.subr.mxu0 0.0
  %4977 = vmatpush1.xpose.msra.mxu0 0.0
  %4978 = vmatprep.subr.mxu0 0.0
  %4979 = vmatpush1.xpose.msra.mxu0 0.0
  %4980 = vmatprep.subr.mxu0 0.0
  %4981 = vmatpush1.xpose.msra.mxu0 0.0
  %4982 = vmatprep.subr.mxu0 0.0
  %4983 = vmatpush1.xpose.msra.mxu0 0.0
  %4984 = vmatprep.subr.mxu0 0.0
  %4985 = vmatpush1.xpose.msra.mxu0 0.0
  %4986 = vmatprep.subr.mxu0 0.0
  %4987 = vmatpush1.xpose.msra.mxu0 0.0
  %4988 = vmatprep.subr.mxu0 0.0
  %4989 = vmatpush1.xpose.msra.mxu0 0.0
  %4990 = vmatprep.subr.mxu0 0.0
  %4991 = vmatpush1.xpose.msra.mxu0 0.0
  %4992 = vmatprep.subr.mxu0 0.0
  %4993 = vmatpush1.xpose.msra.mxu0 0.0
  %4994 = vmatprep.mubr.f32.mxu0 0.0
  %4995 = vmatmul.mubr.f32.gmra.mrb[0].mxu0 %v4925
  %v4996 = vpop.f32.mrb[0].mxu0
  %v4997 = vadd.f32 0.0, %v4996
  %v4998 = vpop.f32.mrb[0].mxu0
  %4999 = vdwg.mxu0
  %v5001 = vsel %vm179, %v50, 0
  %v5004 = vsel %vm179, %v2643, 0
  %5006 = vmatprep.subr.mxu0 0.0
  %5007 = vmatpush1.xpose.msra.mxu0 %v5004
  %5008 = vmatprep.subr.mxu0 0.0
  %5009 = vmatpush1.xpose.msra.mxu0 0.0
  %5010 = vmatprep.subr.mxu0 0.0
  %5011 = vmatpush1.xpose.msra.mxu0 0.0
  %5012 = vmatprep.subr.mxu0 0.0
  %5013 = vmatpush1.xpose.msra.mxu0 0.0
  %5014 = vmatprep.subr.mxu0 0.0
  %5015 = vmatpush1.xpose.msra.mxu0 0.0
  %5016 = vmatprep.subr.mxu0 0.0
  %5017 = vmatpush1.xpose.msra.mxu0 0.0
  %5018 = vmatprep.subr.mxu0 0.0
  %5019 = vmatpush1.xpose.msra.mxu0 0.0
  %5020 = vmatprep.subr.mxu0 0.0
  %5021 = vmatpush1.xpose.msra.mxu0 0.0
  %5022 = vmatprep.subr.mxu0 0.0
  %5023 = vmatpush1.xpose.msra.mxu0 0.0
  %5024 = vmatprep.subr.mxu0 0.0
  %5025 = vmatpush1.xpose.msra.mxu0 0.0
  %5026 = vmatprep.subr.mxu0 0.0
  %5027 = vmatpush1.xpose.msra.mxu0 0.0
  %5028 = vmatprep.subr.mxu0 0.0
  %5029 = vmatpush1.xpose.msra.mxu0 0.0
  %5030 = vmatprep.subr.mxu0 0.0
  %5031 = vmatpush1.xpose.msra.mxu0 0.0
  %5032 = vmatprep.subr.mxu0 0.0
  %5033 = vmatpush1.xpose.msra.mxu0 0.0
  %5034 = vmatprep.subr.mxu0 0.0
  %5035 = vmatpush1.xpose.msra.mxu0 0.0
  %5036 = vmatprep.subr.mxu0 0.0
  %5037 = vmatpush1.xpose.msra.mxu0 0.0
  %5038 = vmatprep.subr.mxu0 0.0
  %5039 = vmatpush1.xpose.msra.mxu0 0.0
  %5040 = vmatprep.subr.mxu0 0.0
  %5041 = vmatpush1.xpose.msra.mxu0 0.0
  %5042 = vmatprep.subr.mxu0 0.0
  %5043 = vmatpush1.xpose.msra.mxu0 0.0
  %5044 = vmatprep.subr.mxu0 0.0
  %5045 = vmatpush1.xpose.msra.mxu0 0.0
  %5046 = vmatprep.subr.mxu0 0.0
  %5047 = vmatpush1.xpose.msra.mxu0 0.0
  %5048 = vmatprep.subr.mxu0 0.0
  %5049 = vmatpush1.xpose.msra.mxu0 0.0
  %5050 = vmatprep.subr.mxu0 0.0
  %5051 = vmatpush1.xpose.msra.mxu0 0.0
  %5052 = vmatprep.subr.mxu0 0.0
  %5053 = vmatpush1.xpose.msra.mxu0 0.0
  %5054 = vmatprep.subr.mxu0 0.0
  %5055 = vmatpush1.xpose.msra.mxu0 0.0
  %5056 = vmatprep.subr.mxu0 0.0
  %5057 = vmatpush1.xpose.msra.mxu0 0.0
  %5058 = vmatprep.subr.mxu0 0.0
  %5059 = vmatpush1.xpose.msra.mxu0 0.0
  %5060 = vmatprep.subr.mxu0 0.0
  %5061 = vmatpush1.xpose.msra.mxu0 0.0
  %5062 = vmatprep.subr.mxu0 0.0
  %5063 = vmatpush1.xpose.msra.mxu0 0.0
  %5064 = vmatprep.subr.mxu0 0.0
  %5065 = vmatpush1.xpose.msra.mxu0 0.0
  %5066 = vmatprep.subr.mxu0 0.0
  %5067 = vmatpush1.xpose.msra.mxu0 0.0
  %5068 = vmatprep.subr.mxu0 0.0
  %5069 = vmatpush1.xpose.msra.mxu0 0.0
  %5070 = vmatprep.mubr.f32.mxu0 0.0
  %5071 = vmatmul.mubr.f32.gmra.mrb[0].mxu0 %v5001
  %v5072 = vpop.f32.mrb[0].mxu0
  %v5073 = vadd.f32 0.0, %v5072
  %v5074 = vpop.f32.mrb[0].mxu0
  %5075 = vdwg.mxu0
  %v5076 = vadd.f32 %v83, %v115
  %v5077 = vadd.f32 %v84, %v116
  %v5078 = vadd.f32 %v85, %v117
  %v5079 = vadd.f32 %v86, %v118
  %v5080 = vadd.f32 %v87, %v119
  %v5081 = vadd.f32 %v88, %v120
  %v5082 = vadd.f32 %v89, %v121
  %v5083 = vadd.f32 %v90, %v122
  %v5084 = vadd.f32 %v91, %v123
  %v5085 = vadd.f32 %v92, %v124
  %v5086 = vadd.f32 %v93, %v125
  %v5087 = vadd.f32 %v94, %v126
  %v5088 = vadd.f32 %v95, %v127
  %v5089 = vadd.f32 %v96, %v128
  %v5090 = vadd.f32 %v97, %v129
  %v5091 = vadd.f32 %v98, %v130
  %v5092 = vadd.f32 %v99, %v131
  %v5093 = vadd.f32 %v100, %v132
  %v5094 = vadd.f32 %v101, %v133
  %v5095 = vadd.f32 %v102, %v134
  %v5096 = vadd.f32 %v103, %v135
  %v5097 = vadd.f32 %v104, %v136
  %v5098 = vadd.f32 %v105, %v137
  %v5099 = vadd.f32 %v106, %v138
  %v5100 = vadd.f32 %v107, %v139
  %v5101 = vadd.f32 %v108, %v140
  %v5102 = vadd.f32 %v109, %v141
  %v5103 = vadd.f32 %v110, %v142
  %v5104 = vadd.f32 %v111, %v143
  %v5105 = vadd.f32 %v112, %v144
  %v5106 = vadd.f32 %v113, %v145
  %v5107 = vadd.f32 %v114, %v146
  %v5109 = vsel %vm179, %v51, 0
  %v5112 = vsel %vm179, %v5076, 0
  %5114 = vmatprep.subr.mxu0 0.0
  %5115 = vmatpush1.xpose.msra.mxu0 %v5112
  %5116 = vmatprep.subr.mxu0 0.0
  %5117 = vmatpush1.xpose.msra.mxu0 0.0
  %5118 = vmatprep.subr.mxu0 0.0
  %5119 = vmatpush1.xpose.msra.mxu0 0.0
  %5120 = vmatprep.subr.mxu0 0.0
  %5121 = vmatpush1.xpose.msra.mxu0 0.0
  %5122 = vmatprep.subr.mxu0 0.0
  %5123 = vmatpush1.xpose.msra.mxu0 0.0
  %5124 = vmatprep.subr.mxu0 0.0
  %5125 = vmatpush1.xpose.msra.mxu0 0.0
  %5126 = vmatprep.subr.mxu0 0.0
  %5127 = vmatpush1.xpose.msra.mxu0 0.0
  %5128 = vmatprep.subr.mxu0 0.0
  %5129 = vmatpush1.xpose.msra.mxu0 0.0
  %5130 = vmatprep.subr.mxu0 0.0
  %5131 = vmatpush1.xpose.msra.mxu0 0.0
  %5132 = vmatprep.subr.mxu0 0.0
  %5133 = vmatpush1.xpose.msra.mxu0 0.0
  %5134 = vmatprep.subr.mxu0 0.0
  %5135 = vmatpush1.xpose.msra.mxu0 0.0
  %5136 = vmatprep.subr.mxu0 0.0
  %5137 = vmatpush1.xpose.msra.mxu0 0.0
  %5138 = vmatprep.subr.mxu0 0.0
  %5139 = vmatpush1.xpose.msra.mxu0 0.0
  %5140 = vmatprep.subr.mxu0 0.0
  %5141 = vmatpush1.xpose.msra.mxu0 0.0
  %5142 = vmatprep.subr.mxu0 0.0
  %5143 = vmatpush1.xpose.msra.mxu0 0.0
  %5144 = vmatprep.subr.mxu0 0.0
  %5145 = vmatpush1.xpose.msra.mxu0 0.0
  %5146 = vmatprep.subr.mxu0 0.0
  %5147 = vmatpush1.xpose.msra.mxu0 0.0
  %5148 = vmatprep.subr.mxu0 0.0
  %5149 = vmatpush1.xpose.msra.mxu0 0.0
  %5150 = vmatprep.subr.mxu0 0.0
  %5151 = vmatpush1.xpose.msra.mxu0 0.0
  %5152 = vmatprep.subr.mxu0 0.0
  %5153 = vmatpush1.xpose.msra.mxu0 0.0
  %5154 = vmatprep.subr.mxu0 0.0
  %5155 = vmatpush1.xpose.msra.mxu0 0.0
  %5156 = vmatprep.subr.mxu0 0.0
  %5157 = vmatpush1.xpose.msra.mxu0 0.0
  %5158 = vmatprep.subr.mxu0 0.0
  %5159 = vmatpush1.xpose.msra.mxu0 0.0
  %5160 = vmatprep.subr.mxu0 0.0
  %5161 = vmatpush1.xpose.msra.mxu0 0.0
  %5162 = vmatprep.subr.mxu0 0.0
  %5163 = vmatpush1.xpose.msra.mxu0 0.0
  %5164 = vmatprep.subr.mxu0 0.0
  %5165 = vmatpush1.xpose.msra.mxu0 0.0
  %5166 = vmatprep.subr.mxu0 0.0
  %5167 = vmatpush1.xpose.msra.mxu0 0.0
  %5168 = vmatprep.subr.mxu0 0.0
  %5169 = vmatpush1.xpose.msra.mxu0 0.0
  %5170 = vmatprep.subr.mxu0 0.0
  %5171 = vmatpush1.xpose.msra.mxu0 0.0
  %5172 = vmatprep.subr.mxu0 0.0
  %5173 = vmatpush1.xpose.msra.mxu0 0.0
  %5174 = vmatprep.subr.mxu0 0.0
  %5175 = vmatpush1.xpose.msra.mxu0 0.0
  %5176 = vmatprep.subr.mxu0 0.0
  %5177 = vmatpush1.xpose.msra.mxu0 0.0
  %5178 = vmatprep.mubr.f32.mxu0 0.0
  %5179 = vmatmul.mubr.f32.gmra.mrb[0].mxu0 %v5109
  %v5180 = vpop.f32.mrb[0].mxu0
  %v5181 = vadd.f32 0.0, %v5180
  %v5182 = vpop.f32.mrb[0].mxu0
  %5183 = vdwg.mxu0
  %v5185 = vsel %vm179, %v52, 0
  %v5188 = vsel %vm179, %v5077, 0
  %5190 = vmatprep.subr.mxu0 0.0
  %5191 = vmatpush1.xpose.msra.mxu0 %v5188
  %5192 = vmatprep.subr.mxu0 0.0
  %5193 = vmatpush1.xpose.msra.mxu0 0.0
  %5194 = vmatprep.subr.mxu0 0.0
  %5195 = vmatpush1.xpose.msra.mxu0 0.0
  %5196 = vmatprep.subr.mxu0 0.0
  %5197 = vmatpush1.xpose.msra.mxu0 0.0
  %5198 = vmatprep.subr.mxu0 0.0
  %5199 = vmatpush1.xpose.msra.mxu0 0.0
  %5200 = vmatprep.subr.mxu0 0.0
  %5201 = vmatpush1.xpose.msra.mxu0 0.0
  %5202 = vmatprep.subr.mxu0 0.0
  %5203 = vmatpush1.xpose.msra.mxu0 0.0
  %5204 = vmatprep.subr.mxu0 0.0
  %5205 = vmatpush1.xpose.msra.mxu0 0.0
  %5206 = vmatprep.subr.mxu0 0.0
  %5207 = vmatpush1.xpose.msra.mxu0 0.0
  %5208 = vmatprep.subr.mxu0 0.0
  %5209 = vmatpush1.xpose.msra.mxu0 0.0
  %5210 = vmatprep.subr.mxu0 0.0
  %5211 = vmatpush1.xpose.msra.mxu0 0.0
  %5212 = vmatprep.subr.mxu0 0.0
  %5213 = vmatpush1.xpose.msra.mxu0 0.0
  %5214 = vmatprep.subr.mxu0 0.0
  %5215 = vmatpush1.xpose.msra.mxu0 0.0
  %5216 = vmatprep.subr.mxu0 0.0
  %5217 = vmatpush1.xpose.msra.mxu0 0.0
  %5218 = vmatprep.subr.mxu0 0.0
  %5219 = vmatpush1.xpose.msra.mxu0 0.0
  %5220 = vmatprep.subr.mxu0 0.0
  %5221 = vmatpush1.xpose.msra.mxu0 0.0
  %5222 = vmatprep.subr.mxu0 0.0
  %5223 = vmatpush1.xpose.msra.mxu0 0.0
  %5224 = vmatprep.subr.mxu0 0.0
  %5225 = vmatpush1.xpose.msra.mxu0 0.0
  %5226 = vmatprep.subr.mxu0 0.0
  %5227 = vmatpush1.xpose.msra.mxu0 0.0
  %5228 = vmatprep.subr.mxu0 0.0
  %5229 = vmatpush1.xpose.msra.mxu0 0.0
  %5230 = vmatprep.subr.mxu0 0.0
  %5231 = vmatpush1.xpose.msra.mxu0 0.0
  %5232 = vmatprep.subr.mxu0 0.0
  %5233 = vmatpush1.xpose.msra.mxu0 0.0
  %5234 = vmatprep.subr.mxu0 0.0
  %5235 = vmatpush1.xpose.msra.mxu0 0.0
  %5236 = vmatprep.subr.mxu0 0.0
  %5237 = vmatpush1.xpose.msra.mxu0 0.0
  %5238 = vmatprep.subr.mxu0 0.0
  %5239 = vmatpush1.xpose.msra.mxu0 0.0
  %5240 = vmatprep.subr.mxu0 0.0
  %5241 = vmatpush1.xpose.msra.mxu0 0.0
  %5242 = vmatprep.subr.mxu0 0.0
  %5243 = vmatpush1.xpose.msra.mxu0 0.0
  %5244 = vmatprep.subr.mxu0 0.0
  %5245 = vmatpush1.xpose.msra.mxu0 0.0
  %5246 = vmatprep.subr.mxu0 0.0
  %5247 = vmatpush1.xpose.msra.mxu0 0.0
  %5248 = vmatprep.subr.mxu0 0.0
  %5249 = vmatpush1.xpose.msra.mxu0 0.0
  %5250 = vmatprep.subr.mxu0 0.0
  %5251 = vmatpush1.xpose.msra.mxu0 0.0
  %5252 = vmatprep.subr.mxu0 0.0
  %5253 = vmatpush1.xpose.msra.mxu0 0.0
  %5254 = vmatprep.mubr.f32.mxu0 0.0
  %5255 = vmatmul.mubr.f32.gmra.mrb[0].mxu0 %v5185
  %v5256 = vpop.f32.mrb[0].mxu0
  %v5257 = vadd.f32 0.0, %v5256
  %v5258 = vpop.f32.mrb[0].mxu0
  %5259 = vdwg.mxu0
  %v5261 = vsel %vm179, %v53, 0
  %v5264 = vsel %vm179, %v5078, 0
  %5266 = vmatprep.subr.mxu0 0.0
  %5267 = vmatpush1.xpose.msra.mxu0 %v5264
  %5268 = vmatprep.subr.mxu0 0.0
  %5269 = vmatpush1.xpose.msra.mxu0 0.0
  %5270 = vmatprep.subr.mxu0 0.0
  %5271 = vmatpush1.xpose.msra.mxu0 0.0
  %5272 = vmatprep.subr.mxu0 0.0
  %5273 = vmatpush1.xpose.msra.mxu0 0.0
  %5274 = vmatprep.subr.mxu0 0.0
  %5275 = vmatpush1.xpose.msra.mxu0 0.0
  %5276 = vmatprep.subr.mxu0 0.0
  %5277 = vmatpush1.xpose.msra.mxu0 0.0
  %5278 = vmatprep.subr.mxu0 0.0
  %5279 = vmatpush1.xpose.msra.mxu0 0.0
  %5280 = vmatprep.subr.mxu0 0.0
  %5281 = vmatpush1.xpose.msra.mxu0 0.0
  %5282 = vmatprep.subr.mxu0 0.0
  %5283 = vmatpush1.xpose.msra.mxu0 0.0
  %5284 = vmatprep.subr.mxu0 0.0
  %5285 = vmatpush1.xpose.msra.mxu0 0.0
  %5286 = vmatprep.subr.mxu0 0.0
  %5287 = vmatpush1.xpose.msra.mxu0 0.0
  %5288 = vmatprep.subr.mxu0 0.0
  %5289 = vmatpush1.xpose.msra.mxu0 0.0
  %5290 = vmatprep.subr.mxu0 0.0
  %5291 = vmatpush1.xpose.msra.mxu0 0.0
  %5292 = vmatprep.subr.mxu0 0.0
  %5293 = vmatpush1.xpose.msra.mxu0 0.0
  %5294 = vmatprep.subr.mxu0 0.0
  %5295 = vmatpush1.xpose.msra.mxu0 0.0
  %5296 = vmatprep.subr.mxu0 0.0
  %5297 = vmatpush1.xpose.msra.mxu0 0.0
  %5298 = vmatprep.subr.mxu0 0.0
  %5299 = vmatpush1.xpose.msra.mxu0 0.0
  %5300 = vmatprep.subr.mxu0 0.0
  %5301 = vmatpush1.xpose.msra.mxu0 0.0
  %5302 = vmatprep.subr.mxu0 0.0
  %5303 = vmatpush1.xpose.msra.mxu0 0.0
  %5304 = vmatprep.subr.mxu0 0.0
  %5305 = vmatpush1.xpose.msra.mxu0 0.0
  %5306 = vmatprep.subr.mxu0 0.0
  %5307 = vmatpush1.xpose.msra.mxu0 0.0
  %5308 = vmatprep.subr.mxu0 0.0
  %5309 = vmatpush1.xpose.msra.mxu0 0.0
  %5310 = vmatprep.subr.mxu0 0.0
  %5311 = vmatpush1.xpose.msra.mxu0 0.0
  %5312 = vmatprep.subr.mxu0 0.0
  %5313 = vmatpush1.xpose.msra.mxu0 0.0
  %5314 = vmatprep.subr.mxu0 0.0
  %5315 = vmatpush1.xpose.msra.mxu0 0.0
  %5316 = vmatprep.subr.mxu0 0.0
  %5317 = vmatpush1.xpose.msra.mxu0 0.0
  %5318 = vmatprep.subr.mxu0 0.0
  %5319 = vmatpush1.xpose.msra.mxu0 0.0
  %5320 = vmatprep.subr.mxu0 0.0
  %5321 = vmatpush1.xpose.msra.mxu0 0.0
  %5322 = vmatprep.subr.mxu0 0.0
  %5323 = vmatpush1.xpose.msra.mxu0 0.0
  %5324 = vmatprep.subr.mxu0 0.0
  %5325 = vmatpush1.xpose.msra.mxu0 0.0
  %5326 = vmatprep.subr.mxu0 0.0
  %5327 = vmatpush1.xpose.msra.mxu0 0.0
  %5328 = vmatprep.subr.mxu0 0.0
  %5329 = vmatpush1.xpose.msra.mxu0 0.0
  %5330 = vmatprep.mubr.f32.mxu0 0.0
  %5331 = vmatmul.mubr.f32.gmra.mrb[0].mxu0 %v5261
  %v5332 = vpop.f32.mrb[0].mxu0
  %v5333 = vadd.f32 0.0, %v5332
  %v5334 = vpop.f32.mrb[0].mxu0
  %5335 = vdwg.mxu0
  %v5337 = vsel %vm179, %v54, 0
  %v5340 = vsel %vm179, %v5079, 0
  %5342 = vmatprep.subr.mxu0 0.0
  %5343 = vmatpush1.xpose.msra.mxu0 %v5340
  %5344 = vmatprep.subr.mxu0 0.0
  %5345 = vmatpush1.xpose.msra.mxu0 0.0
  %5346 = vmatprep.subr.mxu0 0.0
  %5347 = vmatpush1.xpose.msra.mxu0 0.0
  %5348 = vmatprep.subr.mxu0 0.0
  %5349 = vmatpush1.xpose.msra.mxu0 0.0
  %5350 = vmatprep.subr.mxu0 0.0
  %5351 = vmatpush1.xpose.msra.mxu0 0.0
  %5352 = vmatprep.subr.mxu0 0.0
  %5353 = vmatpush1.xpose.msra.mxu0 0.0
  %5354 = vmatprep.subr.mxu0 0.0
  %5355 = vmatpush1.xpose.msra.mxu0 0.0
  %5356 = vmatprep.subr.mxu0 0.0
  %5357 = vmatpush1.xpose.msra.mxu0 0.0
  %5358 = vmatprep.subr.mxu0 0.0
  %5359 = vmatpush1.xpose.msra.mxu0 0.0
  %5360 = vmatprep.subr.mxu0 0.0
  %5361 = vmatpush1.xpose.msra.mxu0 0.0
  %5362 = vmatprep.subr.mxu0 0.0
  %5363 = vmatpush1.xpose.msra.mxu0 0.0
  %5364 = vmatprep.subr.mxu0 0.0
  %5365 = vmatpush1.xpose.msra.mxu0 0.0
  %5366 = vmatprep.subr.mxu0 0.0
  %5367 = vmatpush1.xpose.msra.mxu0 0.0
  %5368 = vmatprep.subr.mxu0 0.0
  %5369 = vmatpush1.xpose.msra.mxu0 0.0
  %5370 = vmatprep.subr.mxu0 0.0
  %5371 = vmatpush1.xpose.msra.mxu0 0.0
  %5372 = vmatprep.subr.mxu0 0.0
  %5373 = vmatpush1.xpose.msra.mxu0 0.0
  %5374 = vmatprep.subr.mxu0 0.0
  %5375 = vmatpush1.xpose.msra.mxu0 0.0
  %5376 = vmatprep.subr.mxu0 0.0
  %5377 = vmatpush1.xpose.msra.mxu0 0.0
  %5378 = vmatprep.subr.mxu0 0.0
  %5379 = vmatpush1.xpose.msra.mxu0 0.0
  %5380 = vmatprep.subr.mxu0 0.0
  %5381 = vmatpush1.xpose.msra.mxu0 0.0
  %5382 = vmatprep.subr.mxu0 0.0
  %5383 = vmatpush1.xpose.msra.mxu0 0.0
  %5384 = vmatprep.subr.mxu0 0.0
  %5385 = vmatpush1.xpose.msra.mxu0 0.0
  %5386 = vmatprep.subr.mxu0 0.0
  %5387 = vmatpush1.xpose.msra.mxu0 0.0
  %5388 = vmatprep.subr.mxu0 0.0
  %5389 = vmatpush1.xpose.msra.mxu0 0.0
  %5390 = vmatprep.subr.mxu0 0.0
  %5391 = vmatpush1.xpose.msra.mxu0 0.0
  %5392 = vmatprep.subr.mxu0 0.0
  %5393 = vmatpush1.xpose.msra.mxu0 0.0
  %5394 = vmatprep.subr.mxu0 0.0
  %5395 = vmatpush1.xpose.msra.mxu0 0.0
  %5396 = vmatprep.subr.mxu0 0.0
  %5397 = vmatpush1.xpose.msra.mxu0 0.0
  %5398 = vmatprep.subr.mxu0 0.0
  %5399 = vmatpush1.xpose.msra.mxu0 0.0
  %5400 = vmatprep.subr.mxu0 0.0
  %5401 = vmatpush1.xpose.msra.mxu0 0.0
  %5402 = vmatprep.subr.mxu0 0.0
  %5403 = vmatpush1.xpose.msra.mxu0 0.0
  %5404 = vmatprep.subr.mxu0 0.0
  %5405 = vmatpush1.xpose.msra.mxu0 0.0
  %5406 = vmatprep.mubr.f32.mxu0 0.0
  %5407 = vmatmul.mubr.f32.gmra.mrb[0].mxu0 %v5337
  %v5408 = vpop.f32.mrb[0].mxu0
  %v5409 = vadd.f32 0.0, %v5408
  %v5410 = vpop.f32.mrb[0].mxu0
  %5411 = vdwg.mxu0
  %v5413 = vsel %vm179, %v55, 0
  %v5416 = vsel %vm179, %v5080, 0
  %5418 = vmatprep.subr.mxu0 0.0
  %5419 = vmatpush1.xpose.msra.mxu0 %v5416
  %5420 = vmatprep.subr.mxu0 0.0
  %5421 = vmatpush1.xpose.msra.mxu0 0.0
  %5422 = vmatprep.subr.mxu0 0.0
  %5423 = vmatpush1.xpose.msra.mxu0 0.0
  %5424 = vmatprep.subr.mxu0 0.0
  %5425 = vmatpush1.xpose.msra.mxu0 0.0
  %5426 = vmatprep.subr.mxu0 0.0
  %5427 = vmatpush1.xpose.msra.mxu0 0.0
  %5428 = vmatprep.subr.mxu0 0.0
  %5429 = vmatpush1.xpose.msra.mxu0 0.0
  %5430 = vmatprep.subr.mxu0 0.0
  %5431 = vmatpush1.xpose.msra.mxu0 0.0
  %5432 = vmatprep.subr.mxu0 0.0
  %5433 = vmatpush1.xpose.msra.mxu0 0.0
  %5434 = vmatprep.subr.mxu0 0.0
  %5435 = vmatpush1.xpose.msra.mxu0 0.0
  %5436 = vmatprep.subr.mxu0 0.0
  %5437 = vmatpush1.xpose.msra.mxu0 0.0
  %5438 = vmatprep.subr.mxu0 0.0
  %5439 = vmatpush1.xpose.msra.mxu0 0.0
  %5440 = vmatprep.subr.mxu0 0.0
  %5441 = vmatpush1.xpose.msra.mxu0 0.0
  %5442 = vmatprep.subr.mxu0 0.0
  %5443 = vmatpush1.xpose.msra.mxu0 0.0
  %5444 = vmatprep.subr.mxu0 0.0
  %5445 = vmatpush1.xpose.msra.mxu0 0.0
  %5446 = vmatprep.subr.mxu0 0.0
  %5447 = vmatpush1.xpose.msra.mxu0 0.0
  %5448 = vmatprep.subr.mxu0 0.0
  %5449 = vmatpush1.xpose.msra.mxu0 0.0
  %5450 = vmatprep.subr.mxu0 0.0
  %5451 = vmatpush1.xpose.msra.mxu0 0.0
  %5452 = vmatprep.subr.mxu0 0.0
  %5453 = vmatpush1.xpose.msra.mxu0 0.0
  %5454 = vmatprep.subr.mxu0 0.0
  %5455 = vmatpush1.xpose.msra.mxu0 0.0
  %5456 = vmatprep.subr.mxu0 0.0
  %5457 = vmatpush1.xpose.msra.mxu0 0.0
  %5458 = vmatprep.subr.mxu0 0.0
  %5459 = vmatpush1.xpose.msra.mxu0 0.0
  %5460 = vmatprep.subr.mxu0 0.0
  %5461 = vmatpush1.xpose.msra.mxu0 0.0
  %5462 = vmatprep.subr.mxu0 0.0
  %5463 = vmatpush1.xpose.msra.mxu0 0.0
  %5464 = vmatprep.subr.mxu0 0.0
  %5465 = vmatpush1.xpose.msra.mxu0 0.0
  %5466 = vmatprep.subr.mxu0 0.0
  %5467 = vmatpush1.xpose.msra.mxu0 0.0
  %5468 = vmatprep.subr.mxu0 0.0
  %5469 = vmatpush1.xpose.msra.mxu0 0.0
  %5470 = vmatprep.subr.mxu0 0.0
  %5471 = vmatpush1.xpose.msra.mxu0 0.0
  %5472 = vmatprep.subr.mxu0 0.0
  %5473 = vmatpush1.xpose.msra.mxu0 0.0
  %5474 = vmatprep.subr.mxu0 0.0
  %5475 = vmatpush1.xpose.msra.mxu0 0.0
  %5476 = vmatprep.subr.mxu0 0.0
  %5477 = vmatpush1.xpose.msra.mxu0 0.0
  %5478 = vmatprep.subr.mxu0 0.0
  %5479 = vmatpush1.xpose.msra.mxu0 0.0
  %5480 = vmatprep.subr.mxu0 0.0
  %5481 = vmatpush1.xpose.msra.mxu0 0.0
  %5482 = vmatprep.mubr.f32.mxu0 0.0
  %5483 = vmatmul.mubr.f32.gmra.mrb[0].mxu0 %v5413
  %v5484 = vpop.f32.mrb[0].mxu0
  %v5485 = vadd.f32 0.0, %v5484
  %v5486 = vpop.f32.mrb[0].mxu0
  %5487 = vdwg.mxu0
  %v5489 = vsel %vm179, %v56, 0
  %v5492 = vsel %vm179, %v5081, 0
  %5494 = vmatprep.subr.mxu0 0.0
  %5495 = vmatpush1.xpose.msra.mxu0 %v5492
  %5496 = vmatprep.subr.mxu0 0.0
  %5497 = vmatpush1.xpose.msra.mxu0 0.0
  %5498 = vmatprep.subr.mxu0 0.0
  %5499 = vmatpush1.xpose.msra.mxu0 0.0
  %5500 = vmatprep.subr.mxu0 0.0
  %5501 = vmatpush1.xpose.msra.mxu0 0.0
  %5502 = vmatprep.subr.mxu0 0.0
  %5503 = vmatpush1.xpose.msra.mxu0 0.0
  %5504 = vmatprep.subr.mxu0 0.0
  %5505 = vmatpush1.xpose.msra.mxu0 0.0
  %5506 = vmatprep.subr.mxu0 0.0
  %5507 = vmatpush1.xpose.msra.mxu0 0.0
  %5508 = vmatprep.subr.mxu0 0.0
  %5509 = vmatpush1.xpose.msra.mxu0 0.0
  %5510 = vmatprep.subr.mxu0 0.0
  %5511 = vmatpush1.xpose.msra.mxu0 0.0
  %5512 = vmatprep.subr.mxu0 0.0
  %5513 = vmatpush1.xpose.msra.mxu0 0.0
  %5514 = vmatprep.subr.mxu0 0.0
  %5515 = vmatpush1.xpose.msra.mxu0 0.0
  %5516 = vmatprep.subr.mxu0 0.0
  %5517 = vmatpush1.xpose.msra.mxu0 0.0
  %5518 = vmatprep.subr.mxu0 0.0
  %5519 = vmatpush1.xpose.msra.mxu0 0.0
  %5520 = vmatprep.subr.mxu0 0.0
  %5521 = vmatpush1.xpose.msra.mxu0 0.0
  %5522 = vmatprep.subr.mxu0 0.0
  %5523 = vmatpush1.xpose.msra.mxu0 0.0
  %5524 = vmatprep.subr.mxu0 0.0
  %5525 = vmatpush1.xpose.msra.mxu0 0.0
  %5526 = vmatprep.subr.mxu0 0.0
  %5527 = vmatpush1.xpose.msra.mxu0 0.0
  %5528 = vmatprep.subr.mxu0 0.0
  %5529 = vmatpush1.xpose.msra.mxu0 0.0
  %5530 = vmatprep.subr.mxu0 0.0
  %5531 = vmatpush1.xpose.msra.mxu0 0.0
  %5532 = vmatprep.subr.mxu0 0.0
  %5533 = vmatpush1.xpose.msra.mxu0 0.0
  %5534 = vmatprep.subr.mxu0 0.0
  %5535 = vmatpush1.xpose.msra.mxu0 0.0
  %5536 = vmatprep.subr.mxu0 0.0
  %5537 = vmatpush1.xpose.msra.mxu0 0.0
  %5538 = vmatprep.subr.mxu0 0.0
  %5539 = vmatpush1.xpose.msra.mxu0 0.0
  %5540 = vmatprep.subr.mxu0 0.0
  %5541 = vmatpush1.xpose.msra.mxu0 0.0
  %5542 = vmatprep.subr.mxu0 0.0
  %5543 = vmatpush1.xpose.msra.mxu0 0.0
  %5544 = vmatprep.subr.mxu0 0.0
  %5545 = vmatpush1.xpose.msra.mxu0 0.0
  %5546 = vmatprep.subr.mxu0 0.0
  %5547 = vmatpush1.xpose.msra.mxu0 0.0
  %5548 = vmatprep.subr.mxu0 0.0
  %5549 = vmatpush1.xpose.msra.mxu0 0.0
  %5550 = vmatprep.subr.mxu0 0.0
  %5551 = vmatpush1.xpose.msra.mxu0 0.0
  %5552 = vmatprep.subr.mxu0 0.0
  %5553 = vmatpush1.xpose.msra.mxu0 0.0
  %5554 = vmatprep.subr.mxu0 0.0
  %5555 = vmatpush1.xpose.msra.mxu0 0.0
  %5556 = vmatprep.subr.mxu0 0.0
  %5557 = vmatpush1.xpose.msra.mxu0 0.0
  %5558 = vmatprep.mubr.f32.mxu0 0.0
  %5559 = vmatmul.mubr.f32.gmra.mrb[0].mxu0 %v5489
  %v5560 = vpop.f32.mrb[0].mxu0
  %v5561 = vadd.f32 0.0, %v5560
  %v5562 = vpop.f32.mrb[0].mxu0
  %5563 = vdwg.mxu0
  %v5565 = vsel %vm179, %v57, 0
  %v5568 = vsel %vm179, %v5082, 0
  %5570 = vmatprep.subr.mxu0 0.0
  %5571 = vmatpush1.xpose.msra.mxu0 %v5568
  %5572 = vmatprep.subr.mxu0 0.0
  %5573 = vmatpush1.xpose.msra.mxu0 0.0
  %5574 = vmatprep.subr.mxu0 0.0
  %5575 = vmatpush1.xpose.msra.mxu0 0.0
  %5576 = vmatprep.subr.mxu0 0.0
  %5577 = vmatpush1.xpose.msra.mxu0 0.0
  %5578 = vmatprep.subr.mxu0 0.0
  %5579 = vmatpush1.xpose.msra.mxu0 0.0
  %5580 = vmatprep.subr.mxu0 0.0
  %5581 = vmatpush1.xpose.msra.mxu0 0.0
  %5582 = vmatprep.subr.mxu0 0.0
  %5583 = vmatpush1.xpose.msra.mxu0 0.0
  %5584 = vmatprep.subr.mxu0 0.0
  %5585 = vmatpush1.xpose.msra.mxu0 0.0
  %5586 = vmatprep.subr.mxu0 0.0
  %5587 = vmatpush1.xpose.msra.mxu0 0.0
  %5588 = vmatprep.subr.mxu0 0.0
  %5589 = vmatpush1.xpose.msra.mxu0 0.0
  %5590 = vmatprep.subr.mxu0 0.0
  %5591 = vmatpush1.xpose.msra.mxu0 0.0
  %5592 = vmatprep.subr.mxu0 0.0
  %5593 = vmatpush1.xpose.msra.mxu0 0.0
  %5594 = vmatprep.subr.mxu0 0.0
  %5595 = vmatpush1.xpose.msra.mxu0 0.0
  %5596 = vmatprep.subr.mxu0 0.0
  %5597 = vmatpush1.xpose.msra.mxu0 0.0
  %5598 = vmatprep.subr.mxu0 0.0
  %5599 = vmatpush1.xpose.msra.mxu0 0.0
  %5600 = vmatprep.subr.mxu0 0.0
  %5601 = vmatpush1.xpose.msra.mxu0 0.0
  %5602 = vmatprep.subr.mxu0 0.0
  %5603 = vmatpush1.xpose.msra.mxu0 0.0
  %5604 = vmatprep.subr.mxu0 0.0
  %5605 = vmatpush1.xpose.msra.mxu0 0.0
  %5606 = vmatprep.subr.mxu0 0.0
  %5607 = vmatpush1.xpose.msra.mxu0 0.0
  %5608 = vmatprep.subr.mxu0 0.0
  %5609 = vmatpush1.xpose.msra.mxu0 0.0
  %5610 = vmatprep.subr.mxu0 0.0
  %5611 = vmatpush1.xpose.msra.mxu0 0.0
  %5612 = vmatprep.subr.mxu0 0.0
  %5613 = vmatpush1.xpose.msra.mxu0 0.0
  %5614 = vmatprep.subr.mxu0 0.0
  %5615 = vmatpush1.xpose.msra.mxu0 0.0
  %5616 = vmatprep.subr.mxu0 0.0
  %5617 = vmatpush1.xpose.msra.mxu0 0.0
  %5618 = vmatprep.subr.mxu0 0.0
  %5619 = vmatpush1.xpose.msra.mxu0 0.0
  %5620 = vmatprep.subr.mxu0 0.0
  %5621 = vmatpush1.xpose.msra.mxu0 0.0
  %5622 = vmatprep.subr.mxu0 0.0
  %5623 = vmatpush1.xpose.msra.mxu0 0.0
  %5624 = vmatprep.subr.mxu0 0.0
  %5625 = vmatpush1.xpose.msra.mxu0 0.0
  %5626 = vmatprep.subr.mxu0 0.0
  %5627 = vmatpush1.xpose.msra.mxu0 0.0
  %5628 = vmatprep.subr.mxu0 0.0
  %5629 = vmatpush1.xpose.msra.mxu0 0.0
  %5630 = vmatprep.subr.mxu0 0.0
  %5631 = vmatpush1.xpose.msra.mxu0 0.0
  %5632 = vmatprep.subr.mxu0 0.0
  %5633 = vmatpush1.xpose.msra.mxu0 0.0
  %5634 = vmatprep.mubr.f32.mxu0 0.0
  %5635 = vmatmul.mubr.f32.gmra.mrb[0].mxu0 %v5565
  %v5636 = vpop.f32.mrb[0].mxu0
  %v5637 = vadd.f32 0.0, %v5636
  %v5638 = vpop.f32.mrb[0].mxu0
  %5639 = vdwg.mxu0
  %v5641 = vsel %vm179, %v58, 0
  %v5644 = vsel %vm179, %v5083, 0
  %5646 = vmatprep.subr.mxu0 0.0
  %5647 = vmatpush1.xpose.msra.mxu0 %v5644
  %5648 = vmatprep.subr.mxu0 0.0
  %5649 = vmatpush1.xpose.msra.mxu0 0.0
  %5650 = vmatprep.subr.mxu0 0.0
  %5651 = vmatpush1.xpose.msra.mxu0 0.0
  %5652 = vmatprep.subr.mxu0 0.0
  %5653 = vmatpush1.xpose.msra.mxu0 0.0
  %5654 = vmatprep.subr.mxu0 0.0
  %5655 = vmatpush1.xpose.msra.mxu0 0.0
  %5656 = vmatprep.subr.mxu0 0.0
  %5657 = vmatpush1.xpose.msra.mxu0 0.0
  %5658 = vmatprep.subr.mxu0 0.0
  %5659 = vmatpush1.xpose.msra.mxu0 0.0
  %5660 = vmatprep.subr.mxu0 0.0
  %5661 = vmatpush1.xpose.msra.mxu0 0.0
  %5662 = vmatprep.subr.mxu0 0.0
  %5663 = vmatpush1.xpose.msra.mxu0 0.0
  %5664 = vmatprep.subr.mxu0 0.0
  %5665 = vmatpush1.xpose.msra.mxu0 0.0
  %5666 = vmatprep.subr.mxu0 0.0
  %5667 = vmatpush1.xpose.msra.mxu0 0.0
  %5668 = vmatprep.subr.mxu0 0.0
  %5669 = vmatpush1.xpose.msra.mxu0 0.0
  %5670 = vmatprep.subr.mxu0 0.0
  %5671 = vmatpush1.xpose.msra.mxu0 0.0
  %5672 = vmatprep.subr.mxu0 0.0
  %5673 = vmatpush1.xpose.msra.mxu0 0.0
  %5674 = vmatprep.subr.mxu0 0.0
  %5675 = vmatpush1.xpose.msra.mxu0 0.0
  %5676 = vmatprep.subr.mxu0 0.0
  %5677 = vmatpush1.xpose.msra.mxu0 0.0
  %5678 = vmatprep.subr.mxu0 0.0
  %5679 = vmatpush1.xpose.msra.mxu0 0.0
  %5680 = vmatprep.subr.mxu0 0.0
  %5681 = vmatpush1.xpose.msra.mxu0 0.0
  %5682 = vmatprep.subr.mxu0 0.0
  %5683 = vmatpush1.xpose.msra.mxu0 0.0
  %5684 = vmatprep.subr.mxu0 0.0
  %5685 = vmatpush1.xpose.msra.mxu0 0.0
  %5686 = vmatprep.subr.mxu0 0.0
  %5687 = vmatpush1.xpose.msra.mxu0 0.0
  %5688 = vmatprep.subr.mxu0 0.0
  %5689 = vmatpush1.xpose.msra.mxu0 0.0
  %5690 = vmatprep.subr.mxu0 0.0
  %5691 = vmatpush1.xpose.msra.mxu0 0.0
  %5692 = vmatprep.subr.mxu0 0.0
  %5693 = vmatpush1.xpose.msra.mxu0 0.0
  %5694 = vmatprep.subr.mxu0 0.0
  %5695 = vmatpush1.xpose.msra.mxu0 0.0
  %5696 = vmatprep.subr.mxu0 0.0
  %5697 = vmatpush1.xpose.msra.mxu0 0.0
  %5698 = vmatprep.subr.mxu0 0.0
  %5699 = vmatpush1.xpose.msra.mxu0 0.0
  %5700 = vmatprep.subr.mxu0 0.0
  %5701 = vmatpush1.xpose.msra.mxu0 0.0
  %5702 = vmatprep.subr.mxu0 0.0
  %5703 = vmatpush1.xpose.msra.mxu0 0.0
  %5704 = vmatprep.subr.mxu0 0.0
  %5705 = vmatpush1.xpose.msra.mxu0 0.0
  %5706 = vmatprep.subr.mxu0 0.0
  %5707 = vmatpush1.xpose.msra.mxu0 0.0
  %5708 = vmatprep.subr.mxu0 0.0
  %5709 = vmatpush1.xpose.msra.mxu0 0.0
  %5710 = vmatprep.mubr.f32.mxu0 0.0
  %5711 = vmatmul.mubr.f32.gmra.mrb[0].mxu0 %v5641
  %v5712 = vpop.f32.mrb[0].mxu0
  %v5713 = vadd.f32 0.0, %v5712
  %v5714 = vpop.f32.mrb[0].mxu0
  %5715 = vdwg.mxu0
  %v5717 = vsel %vm179, %v59, 0
  %v5720 = vsel %vm179, %v5084, 0
  %5722 = vmatprep.subr.mxu0 0.0
  %5723 = vmatpush1.xpose.msra.mxu0 %v5720
  %5724 = vmatprep.subr.mxu0 0.0
  %5725 = vmatpush1.xpose.msra.mxu0 0.0
  %5726 = vmatprep.subr.mxu0 0.0
  %5727 = vmatpush1.xpose.msra.mxu0 0.0
  %5728 = vmatprep.subr.mxu0 0.0
  %5729 = vmatpush1.xpose.msra.mxu0 0.0
  %5730 = vmatprep.subr.mxu0 0.0
  %5731 = vmatpush1.xpose.msra.mxu0 0.0
  %5732 = vmatprep.subr.mxu0 0.0
  %5733 = vmatpush1.xpose.msra.mxu0 0.0
  %5734 = vmatprep.subr.mxu0 0.0
  %5735 = vmatpush1.xpose.msra.mxu0 0.0
  %5736 = vmatprep.subr.mxu0 0.0
  %5737 = vmatpush1.xpose.msra.mxu0 0.0
  %5738 = vmatprep.subr.mxu0 0.0
  %5739 = vmatpush1.xpose.msra.mxu0 0.0
  %5740 = vmatprep.subr.mxu0 0.0
  %5741 = vmatpush1.xpose.msra.mxu0 0.0
  %5742 = vmatprep.subr.mxu0 0.0
  %5743 = vmatpush1.xpose.msra.mxu0 0.0
  %5744 = vmatprep.subr.mxu0 0.0
  %5745 = vmatpush1.xpose.msra.mxu0 0.0
  %5746 = vmatprep.subr.mxu0 0.0
  %5747 = vmatpush1.xpose.msra.mxu0 0.0
  %5748 = vmatprep.subr.mxu0 0.0
  %5749 = vmatpush1.xpose.msra.mxu0 0.0
  %5750 = vmatprep.subr.mxu0 0.0
  %5751 = vmatpush1.xpose.msra.mxu0 0.0
  %5752 = vmatprep.subr.mxu0 0.0
  %5753 = vmatpush1.xpose.msra.mxu0 0.0
  %5754 = vmatprep.subr.mxu0 0.0
  %5755 = vmatpush1.xpose.msra.mxu0 0.0
  %5756 = vmatprep.subr.mxu0 0.0
  %5757 = vmatpush1.xpose.msra.mxu0 0.0
  %5758 = vmatprep.subr.mxu0 0.0
  %5759 = vmatpush1.xpose.msra.mxu0 0.0
  %5760 = vmatprep.subr.mxu0 0.0
  %5761 = vmatpush1.xpose.msra.mxu0 0.0
  %5762 = vmatprep.subr.mxu0 0.0
  %5763 = vmatpush1.xpose.msra.mxu0 0.0
  %5764 = vmatprep.subr.mxu0 0.0
  %5765 = vmatpush1.xpose.msra.mxu0 0.0
  %5766 = vmatprep.subr.mxu0 0.0
  %5767 = vmatpush1.xpose.msra.mxu0 0.0
  %5768 = vmatprep.subr.mxu0 0.0
  %5769 = vmatpush1.xpose.msra.mxu0 0.0
  %5770 = vmatprep.subr.mxu0 0.0
  %5771 = vmatpush1.xpose.msra.mxu0 0.0
  %5772 = vmatprep.subr.mxu0 0.0
  %5773 = vmatpush1.xpose.msra.mxu0 0.0
  %5774 = vmatprep.subr.mxu0 0.0
  %5775 = vmatpush1.xpose.msra.mxu0 0.0
  %5776 = vmatprep.subr.mxu0 0.0
  %5777 = vmatpush1.xpose.msra.mxu0 0.0
  %5778 = vmatprep.subr.mxu0 0.0
  %5779 = vmatpush1.xpose.msra.mxu0 0.0
  %5780 = vmatprep.subr.mxu0 0.0
  %5781 = vmatpush1.xpose.msra.mxu0 0.0
  %5782 = vmatprep.subr.mxu0 0.0
  %5783 = vmatpush1.xpose.msra.mxu0 0.0
  %5784 = vmatprep.subr.mxu0 0.0
  %5785 = vmatpush1.xpose.msra.mxu0 0.0
  %5786 = vmatprep.mubr.f32.mxu0 0.0
  %5787 = vmatmul.mubr.f32.gmra.mrb[0].mxu0 %v5717
  %v5788 = vpop.f32.mrb[0].mxu0
  %v5789 = vadd.f32 0.0, %v5788
  %v5790 = vpop.f32.mrb[0].mxu0
  %5791 = vdwg.mxu0
  %v5793 = vsel %vm179, %v60, 0
  %v5796 = vsel %vm179, %v5085, 0
  %5798 = vmatprep.subr.mxu0 0.0
  %5799 = vmatpush1.xpose.msra.mxu0 %v5796
  %5800 = vmatprep.subr.mxu0 0.0
  %5801 = vmatpush1.xpose.msra.mxu0 0.0
  %5802 = vmatprep.subr.mxu0 0.0
  %5803 = vmatpush1.xpose.msra.mxu0 0.0
  %5804 = vmatprep.subr.mxu0 0.0
  %5805 = vmatpush1.xpose.msra.mxu0 0.0
  %5806 = vmatprep.subr.mxu0 0.0
  %5807 = vmatpush1.xpose.msra.mxu0 0.0
  %5808 = vmatprep.subr.mxu0 0.0
  %5809 = vmatpush1.xpose.msra.mxu0 0.0
  %5810 = vmatprep.subr.mxu0 0.0
  %5811 = vmatpush1.xpose.msra.mxu0 0.0
  %5812 = vmatprep.subr.mxu0 0.0
  %5813 = vmatpush1.xpose.msra.mxu0 0.0
  %5814 = vmatprep.subr.mxu0 0.0
  %5815 = vmatpush1.xpose.msra.mxu0 0.0
  %5816 = vmatprep.subr.mxu0 0.0
  %5817 = vmatpush1.xpose.msra.mxu0 0.0
  %5818 = vmatprep.subr.mxu0 0.0
  %5819 = vmatpush1.xpose.msra.mxu0 0.0
  %5820 = vmatprep.subr.mxu0 0.0
  %5821 = vmatpush1.xpose.msra.mxu0 0.0
  %5822 = vmatprep.subr.mxu0 0.0
  %5823 = vmatpush1.xpose.msra.mxu0 0.0
  %5824 = vmatprep.subr.mxu0 0.0
  %5825 = vmatpush1.xpose.msra.mxu0 0.0
  %5826 = vmatprep.subr.mxu0 0.0
  %5827 = vmatpush1.xpose.msra.mxu0 0.0
  %5828 = vmatprep.subr.mxu0 0.0
  %5829 = vmatpush1.xpose.msra.mxu0 0.0
  %5830 = vmatprep.subr.mxu0 0.0
  %5831 = vmatpush1.xpose.msra.mxu0 0.0
  %5832 = vmatprep.subr.mxu0 0.0
  %5833 = vmatpush1.xpose.msra.mxu0 0.0
  %5834 = vmatprep.subr.mxu0 0.0
  %5835 = vmatpush1.xpose.msra.mxu0 0.0
  %5836 = vmatprep.subr.mxu0 0.0
  %5837 = vmatpush1.xpose.msra.mxu0 0.0
  %5838 = vmatprep.subr.mxu0 0.0
  %5839 = vmatpush1.xpose.msra.mxu0 0.0
  %5840 = vmatprep.subr.mxu0 0.0
  %5841 = vmatpush1.xpose.msra.mxu0 0.0
  %5842 = vmatprep.subr.mxu0 0.0
  %5843 = vmatpush1.xpose.msra.mxu0 0.0
  %5844 = vmatprep.subr.mxu0 0.0
  %5845 = vmatpush1.xpose.msra.mxu0 0.0
  %5846 = vmatprep.subr.mxu0 0.0
  %5847 = vmatpush1.xpose.msra.mxu0 0.0
  %5848 = vmatprep.subr.mxu0 0.0
  %5849 = vmatpush1.xpose.msra.mxu0 0.0
  %5850 = vmatprep.subr.mxu0 0.0
  %5851 = vmatpush1.xpose.msra.mxu0 0.0
  %5852 = vmatprep.subr.mxu0 0.0
  %5853 = vmatpush1.xpose.msra.mxu0 0.0
  %5854 = vmatprep.subr.mxu0 0.0
  %5855 = vmatpush1.xpose.msra.mxu0 0.0
  %5856 = vmatprep.subr.mxu0 0.0
  %5857 = vmatpush1.xpose.msra.mxu0 0.0
  %5858 = vmatprep.subr.mxu0 0.0
  %5859 = vmatpush1.xpose.msra.mxu0 0.0
  %5860 = vmatprep.subr.mxu0 0.0
  %5861 = vmatpush1.xpose.msra.mxu0 0.0
  %5862 = vmatprep.mubr.f32.mxu0 0.0
  %5863 = vmatmul.mubr.f32.gmra.mrb[0].mxu0 %v5793
  %v5864 = vpop.f32.mrb[0].mxu0
  %v5865 = vadd.f32 0.0, %v5864
  %v5866 = vpop.f32.mrb[0].mxu0
  %5867 = vdwg.mxu0
  %v5869 = vsel %vm179, %v61, 0
  %v5872 = vsel %vm179, %v5086, 0
  %5874 = vmatprep.subr.mxu0 0.0
  %5875 = vmatpush1.xpose.msra.mxu0 %v5872
  %5876 = vmatprep.subr.mxu0 0.0
  %5877 = vmatpush1.xpose.msra.mxu0 0.0
  %5878 = vmatprep.subr.mxu0 0.0
  %5879 = vmatpush1.xpose.msra.mxu0 0.0
  %5880 = vmatprep.subr.mxu0 0.0
  %5881 = vmatpush1.xpose.msra.mxu0 0.0
  %5882 = vmatprep.subr.mxu0 0.0
  %5883 = vmatpush1.xpose.msra.mxu0 0.0
  %5884 = vmatprep.subr.mxu0 0.0
  %5885 = vmatpush1.xpose.msra.mxu0 0.0
  %5886 = vmatprep.subr.mxu0 0.0
  %5887 = vmatpush1.xpose.msra.mxu0 0.0
  %5888 = vmatprep.subr.mxu0 0.0
  %5889 = vmatpush1.xpose.msra.mxu0 0.0
  %5890 = vmatprep.subr.mxu0 0.0
  %5891 = vmatpush1.xpose.msra.mxu0 0.0
  %5892 = vmatprep.subr.mxu0 0.0
  %5893 = vmatpush1.xpose.msra.mxu0 0.0
  %5894 = vmatprep.subr.mxu0 0.0
  %5895 = vmatpush1.xpose.msra.mxu0 0.0
  %5896 = vmatprep.subr.mxu0 0.0
  %5897 = vmatpush1.xpose.msra.mxu0 0.0
  %5898 = vmatprep.subr.mxu0 0.0
  %5899 = vmatpush1.xpose.msra.mxu0 0.0
  %5900 = vmatprep.subr.mxu0 0.0
  %5901 = vmatpush1.xpose.msra.mxu0 0.0
  %5902 = vmatprep.subr.mxu0 0.0
  %5903 = vmatpush1.xpose.msra.mxu0 0.0
  %5904 = vmatprep.subr.mxu0 0.0
  %5905 = vmatpush1.xpose.msra.mxu0 0.0
  %5906 = vmatprep.subr.mxu0 0.0
  %5907 = vmatpush1.xpose.msra.mxu0 0.0
  %5908 = vmatprep.subr.mxu0 0.0
  %5909 = vmatpush1.xpose.msra.mxu0 0.0
  %5910 = vmatprep.subr.mxu0 0.0
  %5911 = vmatpush1.xpose.msra.mxu0 0.0
  %5912 = vmatprep.subr.mxu0 0.0
  %5913 = vmatpush1.xpose.msra.mxu0 0.0
  %5914 = vmatprep.subr.mxu0 0.0
  %5915 = vmatpush1.xpose.msra.mxu0 0.0
  %5916 = vmatprep.subr.mxu0 0.0
  %5917 = vmatpush1.xpose.msra.mxu0 0.0
  %5918 = vmatprep.subr.mxu0 0.0
  %5919 = vmatpush1.xpose.msra.mxu0 0.0
  %5920 = vmatprep.subr.mxu0 0.0
  %5921 = vmatpush1.xpose.msra.mxu0 0.0
  %5922 = vmatprep.subr.mxu0 0.0
  %5923 = vmatpush1.xpose.msra.mxu0 0.0
  %5924 = vmatprep.subr.mxu0 0.0
  %5925 = vmatpush1.xpose.msra.mxu0 0.0
  %5926 = vmatprep.subr.mxu0 0.0
  %5927 = vmatpush1.xpose.msra.mxu0 0.0
  %5928 = vmatprep.subr.mxu0 0.0
  %5929 = vmatpush1.xpose.msra.mxu0 0.0
  %5930 = vmatprep.subr.mxu0 0.0
  %5931 = vmatpush1.xpose.msra.mxu0 0.0
  %5932 = vmatprep.subr.mxu0 0.0
  %5933 = vmatpush1.xpose.msra.mxu0 0.0
  %5934 = vmatprep.subr.mxu0 0.0
  %5935 = vmatpush1.xpose.msra.mxu0 0.0
  %5936 = vmatprep.subr.mxu0 0.0
  %5937 = vmatpush1.xpose.msra.mxu0 0.0
  %5938 = vmatprep.mubr.f32.mxu0 0.0
  %5939 = vmatmul.mubr.f32.gmra.mrb[0].mxu0 %v5869
  %v5940 = vpop.f32.mrb[0].mxu0
  %v5941 = vadd.f32 0.0, %v5940
  %v5942 = vpop.f32.mrb[0].mxu0
  %5943 = vdwg.mxu0
  %v5945 = vsel %vm179, %v62, 0
  %v5948 = vsel %vm179, %v5087, 0
  %5950 = vmatprep.subr.mxu0 0.0
  %5951 = vmatpush1.xpose.msra.mxu0 %v5948
  %5952 = vmatprep.subr.mxu0 0.0
  %5953 = vmatpush1.xpose.msra.mxu0 0.0
  %5954 = vmatprep.subr.mxu0 0.0
  %5955 = vmatpush1.xpose.msra.mxu0 0.0
  %5956 = vmatprep.subr.mxu0 0.0
  %5957 = vmatpush1.xpose.msra.mxu0 0.0
  %5958 = vmatprep.subr.mxu0 0.0
  %5959 = vmatpush1.xpose.msra.mxu0 0.0
  %5960 = vmatprep.subr.mxu0 0.0
  %5961 = vmatpush1.xpose.msra.mxu0 0.0
  %5962 = vmatprep.subr.mxu0 0.0
  %5963 = vmatpush1.xpose.msra.mxu0 0.0
  %5964 = vmatprep.subr.mxu0 0.0
  %5965 = vmatpush1.xpose.msra.mxu0 0.0
  %5966 = vmatprep.subr.mxu0 0.0
  %5967 = vmatpush1.xpose.msra.mxu0 0.0
  %5968 = vmatprep.subr.mxu0 0.0
  %5969 = vmatpush1.xpose.msra.mxu0 0.0
  %5970 = vmatprep.subr.mxu0 0.0
  %5971 = vmatpush1.xpose.msra.mxu0 0.0
  %5972 = vmatprep.subr.mxu0 0.0
  %5973 = vmatpush1.xpose.msra.mxu0 0.0
  %5974 = vmatprep.subr.mxu0 0.0
  %5975 = vmatpush1.xpose.msra.mxu0 0.0
  %5976 = vmatprep.subr.mxu0 0.0
  %5977 = vmatpush1.xpose.msra.mxu0 0.0
  %5978 = vmatprep.subr.mxu0 0.0
  %5979 = vmatpush1.xpose.msra.mxu0 0.0
  %5980 = vmatprep.subr.mxu0 0.0
  %5981 = vmatpush1.xpose.msra.mxu0 0.0
  %5982 = vmatprep.subr.mxu0 0.0
  %5983 = vmatpush1.xpose.msra.mxu0 0.0
  %5984 = vmatprep.subr.mxu0 0.0
  %5985 = vmatpush1.xpose.msra.mxu0 0.0
  %5986 = vmatprep.subr.mxu0 0.0
  %5987 = vmatpush1.xpose.msra.mxu0 0.0
  %5988 = vmatprep.subr.mxu0 0.0
  %5989 = vmatpush1.xpose.msra.mxu0 0.0
  %5990 = vmatprep.subr.mxu0 0.0
  %5991 = vmatpush1.xpose.msra.mxu0 0.0
  %5992 = vmatprep.subr.mxu0 0.0
  %5993 = vmatpush1.xpose.msra.mxu0 0.0
  %5994 = vmatprep.subr.mxu0 0.0
  %5995 = vmatpush1.xpose.msra.mxu0 0.0
  %5996 = vmatprep.subr.mxu0 0.0
  %5997 = vmatpush1.xpose.msra.mxu0 0.0
  %5998 = vmatprep.subr.mxu0 0.0
  %5999 = vmatpush1.xpose.msra.mxu0 0.0
  %6000 = vmatprep.subr.mxu0 0.0
  %6001 = vmatpush1.xpose.msra.mxu0 0.0
  %6002 = vmatprep.subr.mxu0 0.0
  %6003 = vmatpush1.xpose.msra.mxu0 0.0
  %6004 = vmatprep.subr.mxu0 0.0
  %6005 = vmatpush1.xpose.msra.mxu0 0.0
  %6006 = vmatprep.subr.mxu0 0.0
  %6007 = vmatpush1.xpose.msra.mxu0 0.0
  %6008 = vmatprep.subr.mxu0 0.0
  %6009 = vmatpush1.xpose.msra.mxu0 0.0
  %6010 = vmatprep.subr.mxu0 0.0
  %6011 = vmatpush1.xpose.msra.mxu0 0.0
  %6012 = vmatprep.subr.mxu0 0.0
  %6013 = vmatpush1.xpose.msra.mxu0 0.0
  %6014 = vmatprep.mubr.f32.mxu0 0.0
  %6015 = vmatmul.mubr.f32.gmra.mrb[0].mxu0 %v5945
  %v6016 = vpop.f32.mrb[0].mxu0
  %v6017 = vadd.f32 0.0, %v6016
  %v6018 = vpop.f32.mrb[0].mxu0
  %6019 = vdwg.mxu0
  %v6021 = vsel %vm179, %v63, 0
  %v6024 = vsel %vm179, %v5088, 0
  %6026 = vmatprep.subr.mxu0 0.0
  %6027 = vmatpush1.xpose.msra.mxu0 %v6024
  %6028 = vmatprep.subr.mxu0 0.0
  %6029 = vmatpush1.xpose.msra.mxu0 0.0
  %6030 = vmatprep.subr.mxu0 0.0
  %6031 = vmatpush1.xpose.msra.mxu0 0.0
  %6032 = vmatprep.subr.mxu0 0.0
  %6033 = vmatpush1.xpose.msra.mxu0 0.0
  %6034 = vmatprep.subr.mxu0 0.0
  %6035 = vmatpush1.xpose.msra.mxu0 0.0
  %6036 = vmatprep.subr.mxu0 0.0
  %6037 = vmatpush1.xpose.msra.mxu0 0.0
  %6038 = vmatprep.subr.mxu0 0.0
  %6039 = vmatpush1.xpose.msra.mxu0 0.0
  %6040 = vmatprep.subr.mxu0 0.0
  %6041 = vmatpush1.xpose.msra.mxu0 0.0
  %6042 = vmatprep.subr.mxu0 0.0
  %6043 = vmatpush1.xpose.msra.mxu0 0.0
  %6044 = vmatprep.subr.mxu0 0.0
  %6045 = vmatpush1.xpose.msra.mxu0 0.0
  %6046 = vmatprep.subr.mxu0 0.0
  %6047 = vmatpush1.xpose.msra.mxu0 0.0
  %6048 = vmatprep.subr.mxu0 0.0
  %6049 = vmatpush1.xpose.msra.mxu0 0.0
  %6050 = vmatprep.subr.mxu0 0.0
  %6051 = vmatpush1.xpose.msra.mxu0 0.0
  %6052 = vmatprep.subr.mxu0 0.0
  %6053 = vmatpush1.xpose.msra.mxu0 0.0
  %6054 = vmatprep.subr.mxu0 0.0
  %6055 = vmatpush1.xpose.msra.mxu0 0.0
  %6056 = vmatprep.subr.mxu0 0.0
  %6057 = vmatpush1.xpose.msra.mxu0 0.0
  %6058 = vmatprep.subr.mxu0 0.0
  %6059 = vmatpush1.xpose.msra.mxu0 0.0
  %6060 = vmatprep.subr.mxu0 0.0
  %6061 = vmatpush1.xpose.msra.mxu0 0.0
  %6062 = vmatprep.subr.mxu0 0.0
  %6063 = vmatpush1.xpose.msra.mxu0 0.0
  %6064 = vmatprep.subr.mxu0 0.0
  %6065 = vmatpush1.xpose.msra.mxu0 0.0
  %6066 = vmatprep.subr.mxu0 0.0
  %6067 = vmatpush1.xpose.msra.mxu0 0.0
  %6068 = vmatprep.subr.mxu0 0.0
  %6069 = vmatpush1.xpose.msra.mxu0 0.0
  %6070 = vmatprep.subr.mxu0 0.0
  %6071 = vmatpush1.xpose.msra.mxu0 0.0
  %6072 = vmatprep.subr.mxu0 0.0
  %6073 = vmatpush1.xpose.msra.mxu0 0.0
  %6074 = vmatprep.subr.mxu0 0.0
  %6075 = vmatpush1.xpose.msra.mxu0 0.0
  %6076 = vmatprep.subr.mxu0 0.0
  %6077 = vmatpush1.xpose.msra.mxu0 0.0
  %6078 = vmatprep.subr.mxu0 0.0
  %6079 = vmatpush1.xpose.msra.mxu0 0.0
  %6080 = vmatprep.subr.mxu0 0.0
  %6081 = vmatpush1.xpose.msra.mxu0 0.0
  %6082 = vmatprep.subr.mxu0 0.0
  %6083 = vmatpush1.xpose.msra.mxu0 0.0
  %6084 = vmatprep.subr.mxu0 0.0
  %6085 = vmatpush1.xpose.msra.mxu0 0.0
  %6086 = vmatprep.subr.mxu0 0.0
  %6087 = vmatpush1.xpose.msra.mxu0 0.0
  %6088 = vmatprep.subr.mxu0 0.0
  %6089 = vmatpush1.xpose.msra.mxu0 0.0
  %6090 = vmatprep.mubr.f32.mxu0 0.0
  %6091 = vmatmul.mubr.f32.gmra.mrb[0].mxu0 %v6021
  %v6092 = vpop.f32.mrb[0].mxu0
  %v6093 = vadd.f32 0.0, %v6092
  %v6094 = vpop.f32.mrb[0].mxu0
  %6095 = vdwg.mxu0
  %v6097 = vsel %vm179, %v64, 0
  %v6100 = vsel %vm179, %v5089, 0
  %6102 = vmatprep.subr.mxu0 0.0
  %6103 = vmatpush1.xpose.msra.mxu0 %v6100
  %6104 = vmatprep.subr.mxu0 0.0
  %6105 = vmatpush1.xpose.msra.mxu0 0.0
  %6106 = vmatprep.subr.mxu0 0.0
  %6107 = vmatpush1.xpose.msra.mxu0 0.0
  %6108 = vmatprep.subr.mxu0 0.0
  %6109 = vmatpush1.xpose.msra.mxu0 0.0
  %6110 = vmatprep.subr.mxu0 0.0
  %6111 = vmatpush1.xpose.msra.mxu0 0.0
  %6112 = vmatprep.subr.mxu0 0.0
  %6113 = vmatpush1.xpose.msra.mxu0 0.0
  %6114 = vmatprep.subr.mxu0 0.0
  %6115 = vmatpush1.xpose.msra.mxu0 0.0
  %6116 = vmatprep.subr.mxu0 0.0
  %6117 = vmatpush1.xpose.msra.mxu0 0.0
  %6118 = vmatprep.subr.mxu0 0.0
  %6119 = vmatpush1.xpose.msra.mxu0 0.0
  %6120 = vmatprep.subr.mxu0 0.0
  %6121 = vmatpush1.xpose.msra.mxu0 0.0
  %6122 = vmatprep.subr.mxu0 0.0
  %6123 = vmatpush1.xpose.msra.mxu0 0.0
  %6124 = vmatprep.subr.mxu0 0.0
  %6125 = vmatpush1.xpose.msra.mxu0 0.0
  %6126 = vmatprep.subr.mxu0 0.0
  %6127 = vmatpush1.xpose.msra.mxu0 0.0
  %6128 = vmatprep.subr.mxu0 0.0
  %6129 = vmatpush1.xpose.msra.mxu0 0.0
  %6130 = vmatprep.subr.mxu0 0.0
  %6131 = vmatpush1.xpose.msra.mxu0 0.0
  %6132 = vmatprep.subr.mxu0 0.0
  %6133 = vmatpush1.xpose.msra.mxu0 0.0
  %6134 = vmatprep.subr.mxu0 0.0
  %6135 = vmatpush1.xpose.msra.mxu0 0.0
  %6136 = vmatprep.subr.mxu0 0.0
  %6137 = vmatpush1.xpose.msra.mxu0 0.0
  %6138 = vmatprep.subr.mxu0 0.0
  %6139 = vmatpush1.xpose.msra.mxu0 0.0
  %6140 = vmatprep.subr.mxu0 0.0
  %6141 = vmatpush1.xpose.msra.mxu0 0.0
  %6142 = vmatprep.subr.mxu0 0.0
  %6143 = vmatpush1.xpose.msra.mxu0 0.0
  %6144 = vmatprep.subr.mxu0 0.0
  %6145 = vmatpush1.xpose.msra.mxu0 0.0
  %6146 = vmatprep.subr.mxu0 0.0
  %6147 = vmatpush1.xpose.msra.mxu0 0.0
  %6148 = vmatprep.subr.mxu0 0.0
  %6149 = vmatpush1.xpose.msra.mxu0 0.0
  %6150 = vmatprep.subr.mxu0 0.0
  %6151 = vmatpush1.xpose.msra.mxu0 0.0
  %6152 = vmatprep.subr.mxu0 0.0
  %6153 = vmatpush1.xpose.msra.mxu0 0.0
  %6154 = vmatprep.subr.mxu0 0.0
  %6155 = vmatpush1.xpose.msra.mxu0 0.0
  %6156 = vmatprep.subr.mxu0 0.0
  %6157 = vmatpush1.xpose.msra.mxu0 0.0
  %6158 = vmatprep.subr.mxu0 0.0
  %6159 = vmatpush1.xpose.msra.mxu0 0.0
  %6160 = vmatprep.subr.mxu0 0.0
  %6161 = vmatpush1.xpose.msra.mxu0 0.0
  %6162 = vmatprep.subr.mxu0 0.0
  %6163 = vmatpush1.xpose.msra.mxu0 0.0
  %6164 = vmatprep.subr.mxu0 0.0
  %6165 = vmatpush1.xpose.msra.mxu0 0.0
  %6166 = vmatprep.mubr.f32.mxu0 0.0
  %6167 = vmatmul.mubr.f32.gmra.mrb[0].mxu0 %v6097
  %v6168 = vpop.f32.mrb[0].mxu0
  %v6169 = vadd.f32 0.0, %v6168
  %v6170 = vpop.f32.mrb[0].mxu0
  %6171 = vdwg.mxu0
  %v6173 = vsel %vm179, %v65, 0
  %v6176 = vsel %vm179, %v5090, 0
  %6178 = vmatprep.subr.mxu0 0.0
  %6179 = vmatpush1.xpose.msra.mxu0 %v6176
  %6180 = vmatprep.subr.mxu0 0.0
  %6181 = vmatpush1.xpose.msra.mxu0 0.0
  %6182 = vmatprep.subr.mxu0 0.0
  %6183 = vmatpush1.xpose.msra.mxu0 0.0
  %6184 = vmatprep.subr.mxu0 0.0
  %6185 = vmatpush1.xpose.msra.mxu0 0.0
  %6186 = vmatprep.subr.mxu0 0.0
  %6187 = vmatpush1.xpose.msra.mxu0 0.0
  %6188 = vmatprep.subr.mxu0 0.0
  %6189 = vmatpush1.xpose.msra.mxu0 0.0
  %6190 = vmatprep.subr.mxu0 0.0
  %6191 = vmatpush1.xpose.msra.mxu0 0.0
  %6192 = vmatprep.subr.mxu0 0.0
  %6193 = vmatpush1.xpose.msra.mxu0 0.0
  %6194 = vmatprep.subr.mxu0 0.0
  %6195 = vmatpush1.xpose.msra.mxu0 0.0
  %6196 = vmatprep.subr.mxu0 0.0
  %6197 = vmatpush1.xpose.msra.mxu0 0.0
  %6198 = vmatprep.subr.mxu0 0.0
  %6199 = vmatpush1.xpose.msra.mxu0 0.0
  %6200 = vmatprep.subr.mxu0 0.0
  %6201 = vmatpush1.xpose.msra.mxu0 0.0
  %6202 = vmatprep.subr.mxu0 0.0
  %6203 = vmatpush1.xpose.msra.mxu0 0.0
  %6204 = vmatprep.subr.mxu0 0.0
  %6205 = vmatpush1.xpose.msra.mxu0 0.0
  %6206 = vmatprep.subr.mxu0 0.0
  %6207 = vmatpush1.xpose.msra.mxu0 0.0
  %6208 = vmatprep.subr.mxu0 0.0
  %6209 = vmatpush1.xpose.msra.mxu0 0.0
  %6210 = vmatprep.subr.mxu0 0.0
  %6211 = vmatpush1.xpose.msra.mxu0 0.0
  %6212 = vmatprep.subr.mxu0 0.0
  %6213 = vmatpush1.xpose.msra.mxu0 0.0
  %6214 = vmatprep.subr.mxu0 0.0
  %6215 = vmatpush1.xpose.msra.mxu0 0.0
  %6216 = vmatprep.subr.mxu0 0.0
  %6217 = vmatpush1.xpose.msra.mxu0 0.0
  %6218 = vmatprep.subr.mxu0 0.0
  %6219 = vmatpush1.xpose.msra.mxu0 0.0
  %6220 = vmatprep.subr.mxu0 0.0
  %6221 = vmatpush1.xpose.msra.mxu0 0.0
  %6222 = vmatprep.subr.mxu0 0.0
  %6223 = vmatpush1.xpose.msra.mxu0 0.0
  %6224 = vmatprep.subr.mxu0 0.0
  %6225 = vmatpush1.xpose.msra.mxu0 0.0
  %6226 = vmatprep.subr.mxu0 0.0
  %6227 = vmatpush1.xpose.msra.mxu0 0.0
  %6228 = vmatprep.subr.mxu0 0.0
  %6229 = vmatpush1.xpose.msra.mxu0 0.0
  %6230 = vmatprep.subr.mxu0 0.0
  %6231 = vmatpush1.xpose.msra.mxu0 0.0
  %6232 = vmatprep.subr.mxu0 0.0
  %6233 = vmatpush1.xpose.msra.mxu0 0.0
  %6234 = vmatprep.subr.mxu0 0.0
  %6235 = vmatpush1.xpose.msra.mxu0 0.0
  %6236 = vmatprep.subr.mxu0 0.0
  %6237 = vmatpush1.xpose.msra.mxu0 0.0
  %6238 = vmatprep.subr.mxu0 0.0
  %6239 = vmatpush1.xpose.msra.mxu0 0.0
  %6240 = vmatprep.subr.mxu0 0.0
  %6241 = vmatpush1.xpose.msra.mxu0 0.0
  %6242 = vmatprep.mubr.f32.mxu0 0.0
  %6243 = vmatmul.mubr.f32.gmra.mrb[0].mxu0 %v6173
  %v6244 = vpop.f32.mrb[0].mxu0
  %v6245 = vadd.f32 0.0, %v6244
  %v6246 = vpop.f32.mrb[0].mxu0
  %6247 = vdwg.mxu0
  %v6249 = vsel %vm179, %v66, 0
  %v6252 = vsel %vm179, %v5091, 0
  %6254 = vmatprep.subr.mxu0 0.0
  %6255 = vmatpush1.xpose.msra.mxu0 %v6252
  %6256 = vmatprep.subr.mxu0 0.0
  %6257 = vmatpush1.xpose.msra.mxu0 0.0
  %6258 = vmatprep.subr.mxu0 0.0
  %6259 = vmatpush1.xpose.msra.mxu0 0.0
  %6260 = vmatprep.subr.mxu0 0.0
  %6261 = vmatpush1.xpose.msra.mxu0 0.0
  %6262 = vmatprep.subr.mxu0 0.0
  %6263 = vmatpush1.xpose.msra.mxu0 0.0
  %6264 = vmatprep.subr.mxu0 0.0
  %6265 = vmatpush1.xpose.msra.mxu0 0.0
  %6266 = vmatprep.subr.mxu0 0.0
  %6267 = vmatpush1.xpose.msra.mxu0 0.0
  %6268 = vmatprep.subr.mxu0 0.0
  %6269 = vmatpush1.xpose.msra.mxu0 0.0
  %6270 = vmatprep.subr.mxu0 0.0
  %6271 = vmatpush1.xpose.msra.mxu0 0.0
  %6272 = vmatprep.subr.mxu0 0.0
  %6273 = vmatpush1.xpose.msra.mxu0 0.0
  %6274 = vmatprep.subr.mxu0 0.0
  %6275 = vmatpush1.xpose.msra.mxu0 0.0
  %6276 = vmatprep.subr.mxu0 0.0
  %6277 = vmatpush1.xpose.msra.mxu0 0.0
  %6278 = vmatprep.subr.mxu0 0.0
  %6279 = vmatpush1.xpose.msra.mxu0 0.0
  %6280 = vmatprep.subr.mxu0 0.0
  %6281 = vmatpush1.xpose.msra.mxu0 0.0
  %6282 = vmatprep.subr.mxu0 0.0
  %6283 = vmatpush1.xpose.msra.mxu0 0.0
  %6284 = vmatprep.subr.mxu0 0.0
  %6285 = vmatpush1.xpose.msra.mxu0 0.0
  %6286 = vmatprep.subr.mxu0 0.0
  %6287 = vmatpush1.xpose.msra.mxu0 0.0
  %6288 = vmatprep.subr.mxu0 0.0
  %6289 = vmatpush1.xpose.msra.mxu0 0.0
  %6290 = vmatprep.subr.mxu0 0.0
  %6291 = vmatpush1.xpose.msra.mxu0 0.0
  %6292 = vmatprep.subr.mxu0 0.0
  %6293 = vmatpush1.xpose.msra.mxu0 0.0
  %6294 = vmatprep.subr.mxu0 0.0
  %6295 = vmatpush1.xpose.msra.mxu0 0.0
  %6296 = vmatprep.subr.mxu0 0.0
  %6297 = vmatpush1.xpose.msra.mxu0 0.0
  %6298 = vmatprep.subr.mxu0 0.0
  %6299 = vmatpush1.xpose.msra.mxu0 0.0
  %6300 = vmatprep.subr.mxu0 0.0
  %6301 = vmatpush1.xpose.msra.mxu0 0.0
  %6302 = vmatprep.subr.mxu0 0.0
  %6303 = vmatpush1.xpose.msra.mxu0 0.0
  %6304 = vmatprep.subr.mxu0 0.0
  %6305 = vmatpush1.xpose.msra.mxu0 0.0
  %6306 = vmatprep.subr.mxu0 0.0
  %6307 = vmatpush1.xpose.msra.mxu0 0.0
  %6308 = vmatprep.subr.mxu0 0.0
  %6309 = vmatpush1.xpose.msra.mxu0 0.0
  %6310 = vmatprep.subr.mxu0 0.0
  %6311 = vmatpush1.xpose.msra.mxu0 0.0
  %6312 = vmatprep.subr.mxu0 0.0
  %6313 = vmatpush1.xpose.msra.mxu0 0.0
  %6314 = vmatprep.subr.mxu0 0.0
  %6315 = vmatpush1.xpose.msra.mxu0 0.0
  %6316 = vmatprep.subr.mxu0 0.0
  %6317 = vmatpush1.xpose.msra.mxu0 0.0
  %6318 = vmatprep.mubr.f32.mxu0 0.0
  %6319 = vmatmul.mubr.f32.gmra.mrb[0].mxu0 %v6249
  %v6320 = vpop.f32.mrb[0].mxu0
  %v6321 = vadd.f32 0.0, %v6320
  %v6322 = vpop.f32.mrb[0].mxu0
  %6323 = vdwg.mxu0
  %v6325 = vsel %vm179, %v67, 0
  %v6328 = vsel %vm179, %v5092, 0
  %6330 = vmatprep.subr.mxu0 0.0
  %6331 = vmatpush1.xpose.msra.mxu0 %v6328
  %6332 = vmatprep.subr.mxu0 0.0
  %6333 = vmatpush1.xpose.msra.mxu0 0.0
  %6334 = vmatprep.subr.mxu0 0.0
  %6335 = vmatpush1.xpose.msra.mxu0 0.0
  %6336 = vmatprep.subr.mxu0 0.0
  %6337 = vmatpush1.xpose.msra.mxu0 0.0
  %6338 = vmatprep.subr.mxu0 0.0
  %6339 = vmatpush1.xpose.msra.mxu0 0.0
  %6340 = vmatprep.subr.mxu0 0.0
  %6341 = vmatpush1.xpose.msra.mxu0 0.0
  %6342 = vmatprep.subr.mxu0 0.0
  %6343 = vmatpush1.xpose.msra.mxu0 0.0
  %6344 = vmatprep.subr.mxu0 0.0
  %6345 = vmatpush1.xpose.msra.mxu0 0.0
  %6346 = vmatprep.subr.mxu0 0.0
  %6347 = vmatpush1.xpose.msra.mxu0 0.0
  %6348 = vmatprep.subr.mxu0 0.0
  %6349 = vmatpush1.xpose.msra.mxu0 0.0
  %6350 = vmatprep.subr.mxu0 0.0
  %6351 = vmatpush1.xpose.msra.mxu0 0.0
  %6352 = vmatprep.subr.mxu0 0.0
  %6353 = vmatpush1.xpose.msra.mxu0 0.0
  %6354 = vmatprep.subr.mxu0 0.0
  %6355 = vmatpush1.xpose.msra.mxu0 0.0
  %6356 = vmatprep.subr.mxu0 0.0
  %6357 = vmatpush1.xpose.msra.mxu0 0.0
  %6358 = vmatprep.subr.mxu0 0.0
  %6359 = vmatpush1.xpose.msra.mxu0 0.0
  %6360 = vmatprep.subr.mxu0 0.0
  %6361 = vmatpush1.xpose.msra.mxu0 0.0
  %6362 = vmatprep.subr.mxu0 0.0
  %6363 = vmatpush1.xpose.msra.mxu0 0.0
  %6364 = vmatprep.subr.mxu0 0.0
  %6365 = vmatpush1.xpose.msra.mxu0 0.0
  %6366 = vmatprep.subr.mxu0 0.0
  %6367 = vmatpush1.xpose.msra.mxu0 0.0
  %6368 = vmatprep.subr.mxu0 0.0
  %6369 = vmatpush1.xpose.msra.mxu0 0.0
  %6370 = vmatprep.subr.mxu0 0.0
  %6371 = vmatpush1.xpose.msra.mxu0 0.0
  %6372 = vmatprep.subr.mxu0 0.0
  %6373 = vmatpush1.xpose.msra.mxu0 0.0
  %6374 = vmatprep.subr.mxu0 0.0
  %6375 = vmatpush1.xpose.msra.mxu0 0.0
  %6376 = vmatprep.subr.mxu0 0.0
  %6377 = vmatpush1.xpose.msra.mxu0 0.0
  %6378 = vmatprep.subr.mxu0 0.0
  %6379 = vmatpush1.xpose.msra.mxu0 0.0
  %6380 = vmatprep.subr.mxu0 0.0
  %6381 = vmatpush1.xpose.msra.mxu0 0.0
  %6382 = vmatprep.subr.mxu0 0.0
  %6383 = vmatpush1.xpose.msra.mxu0 0.0
  %6384 = vmatprep.subr.mxu0 0.0
  %6385 = vmatpush1.xpose.msra.mxu0 0.0
  %6386 = vmatprep.subr.mxu0 0.0
  %6387 = vmatpush1.xpose.msra.mxu0 0.0
  %6388 = vmatprep.subr.mxu0 0.0
  %6389 = vmatpush1.xpose.msra.mxu0 0.0
  %6390 = vmatprep.subr.mxu0 0.0
  %6391 = vmatpush1.xpose.msra.mxu0 0.0
  %6392 = vmatprep.subr.mxu0 0.0
  %6393 = vmatpush1.xpose.msra.mxu0 0.0
  %6394 = vmatprep.mubr.f32.mxu0 0.0
  %6395 = vmatmul.mubr.f32.gmra.mrb[0].mxu0 %v6325
  %v6396 = vpop.f32.mrb[0].mxu0
  %v6397 = vadd.f32 0.0, %v6396
  %v6398 = vpop.f32.mrb[0].mxu0
  %6399 = vdwg.mxu0
  %v6401 = vsel %vm179, %v68, 0
  %v6404 = vsel %vm179, %v5093, 0
  %6406 = vmatprep.subr.mxu0 0.0
  %6407 = vmatpush1.xpose.msra.mxu0 %v6404
  %6408 = vmatprep.subr.mxu0 0.0
  %6409 = vmatpush1.xpose.msra.mxu0 0.0
  %6410 = vmatprep.subr.mxu0 0.0
  %6411 = vmatpush1.xpose.msra.mxu0 0.0
  %6412 = vmatprep.subr.mxu0 0.0
  %6413 = vmatpush1.xpose.msra.mxu0 0.0
  %6414 = vmatprep.subr.mxu0 0.0
  %6415 = vmatpush1.xpose.msra.mxu0 0.0
  %6416 = vmatprep.subr.mxu0 0.0
  %6417 = vmatpush1.xpose.msra.mxu0 0.0
  %6418 = vmatprep.subr.mxu0 0.0
  %6419 = vmatpush1.xpose.msra.mxu0 0.0
  %6420 = vmatprep.subr.mxu0 0.0
  %6421 = vmatpush1.xpose.msra.mxu0 0.0
  %6422 = vmatprep.subr.mxu0 0.0
  %6423 = vmatpush1.xpose.msra.mxu0 0.0
  %6424 = vmatprep.subr.mxu0 0.0
  %6425 = vmatpush1.xpose.msra.mxu0 0.0
  %6426 = vmatprep.subr.mxu0 0.0
  %6427 = vmatpush1.xpose.msra.mxu0 0.0
  %6428 = vmatprep.subr.mxu0 0.0
  %6429 = vmatpush1.xpose.msra.mxu0 0.0
  %6430 = vmatprep.subr.mxu0 0.0
  %6431 = vmatpush1.xpose.msra.mxu0 0.0
  %6432 = vmatprep.subr.mxu0 0.0
  %6433 = vmatpush1.xpose.msra.mxu0 0.0
  %6434 = vmatprep.subr.mxu0 0.0
  %6435 = vmatpush1.xpose.msra.mxu0 0.0
  %6436 = vmatprep.subr.mxu0 0.0
  %6437 = vmatpush1.xpose.msra.mxu0 0.0
  %6438 = vmatprep.subr.mxu0 0.0
  %6439 = vmatpush1.xpose.msra.mxu0 0.0
  %6440 = vmatprep.subr.mxu0 0.0
  %6441 = vmatpush1.xpose.msra.mxu0 0.0
  %6442 = vmatprep.subr.mxu0 0.0
  %6443 = vmatpush1.xpose.msra.mxu0 0.0
  %6444 = vmatprep.subr.mxu0 0.0
  %6445 = vmatpush1.xpose.msra.mxu0 0.0
  %6446 = vmatprep.subr.mxu0 0.0
  %6447 = vmatpush1.xpose.msra.mxu0 0.0
  %6448 = vmatprep.subr.mxu0 0.0
  %6449 = vmatpush1.xpose.msra.mxu0 0.0
  %6450 = vmatprep.subr.mxu0 0.0
  %6451 = vmatpush1.xpose.msra.mxu0 0.0
  %6452 = vmatprep.subr.mxu0 0.0
  %6453 = vmatpush1.xpose.msra.mxu0 0.0
  %6454 = vmatprep.subr.mxu0 0.0
  %6455 = vmatpush1.xpose.msra.mxu0 0.0
  %6456 = vmatprep.subr.mxu0 0.0
  %6457 = vmatpush1.xpose.msra.mxu0 0.0
  %6458 = vmatprep.subr.mxu0 0.0
  %6459 = vmatpush1.xpose.msra.mxu0 0.0
  %6460 = vmatprep.subr.mxu0 0.0
  %6461 = vmatpush1.xpose.msra.mxu0 0.0
  %6462 = vmatprep.subr.mxu0 0.0
  %6463 = vmatpush1.xpose.msra.mxu0 0.0
  %6464 = vmatprep.subr.mxu0 0.0
  %6465 = vmatpush1.xpose.msra.mxu0 0.0
  %6466 = vmatprep.subr.mxu0 0.0
  %6467 = vmatpush1.xpose.msra.mxu0 0.0
  %6468 = vmatprep.subr.mxu0 0.0
  %6469 = vmatpush1.xpose.msra.mxu0 0.0
  %6470 = vmatprep.mubr.f32.mxu0 0.0
  %6471 = vmatmul.mubr.f32.gmra.mrb[0].mxu0 %v6401
  %v6472 = vpop.f32.mrb[0].mxu0
  %v6473 = vadd.f32 0.0, %v6472
  %v6474 = vpop.f32.mrb[0].mxu0
  %6475 = vdwg.mxu0
  %v6477 = vsel %vm179, %v69, 0
  %v6480 = vsel %vm179, %v5094, 0
  %6482 = vmatprep.subr.mxu0 0.0
  %6483 = vmatpush1.xpose.msra.mxu0 %v6480
  %6484 = vmatprep.subr.mxu0 0.0
  %6485 = vmatpush1.xpose.msra.mxu0 0.0
  %6486 = vmatprep.subr.mxu0 0.0
  %6487 = vmatpush1.xpose.msra.mxu0 0.0
  %6488 = vmatprep.subr.mxu0 0.0
  %6489 = vmatpush1.xpose.msra.mxu0 0.0
  %6490 = vmatprep.subr.mxu0 0.0
  %6491 = vmatpush1.xpose.msra.mxu0 0.0
  %6492 = vmatprep.subr.mxu0 0.0
  %6493 = vmatpush1.xpose.msra.mxu0 0.0
  %6494 = vmatprep.subr.mxu0 0.0
  %6495 = vmatpush1.xpose.msra.mxu0 0.0
  %6496 = vmatprep.subr.mxu0 0.0
  %6497 = vmatpush1.xpose.msra.mxu0 0.0
  %6498 = vmatprep.subr.mxu0 0.0
  %6499 = vmatpush1.xpose.msra.mxu0 0.0
  %6500 = vmatprep.subr.mxu0 0.0
  %6501 = vmatpush1.xpose.msra.mxu0 0.0
  %6502 = vmatprep.subr.mxu0 0.0
  %6503 = vmatpush1.xpose.msra.mxu0 0.0
  %6504 = vmatprep.subr.mxu0 0.0
  %6505 = vmatpush1.xpose.msra.mxu0 0.0
  %6506 = vmatprep.subr.mxu0 0.0
  %6507 = vmatpush1.xpose.msra.mxu0 0.0
  %6508 = vmatprep.subr.mxu0 0.0
  %6509 = vmatpush1.xpose.msra.mxu0 0.0
  %6510 = vmatprep.subr.mxu0 0.0
  %6511 = vmatpush1.xpose.msra.mxu0 0.0
  %6512 = vmatprep.subr.mxu0 0.0
  %6513 = vmatpush1.xpose.msra.mxu0 0.0
  %6514 = vmatprep.subr.mxu0 0.0
  %6515 = vmatpush1.xpose.msra.mxu0 0.0
  %6516 = vmatprep.subr.mxu0 0.0
  %6517 = vmatpush1.xpose.msra.mxu0 0.0
  %6518 = vmatprep.subr.mxu0 0.0
  %6519 = vmatpush1.xpose.msra.mxu0 0.0
  %6520 = vmatprep.subr.mxu0 0.0
  %6521 = vmatpush1.xpose.msra.mxu0 0.0
  %6522 = vmatprep.subr.mxu0 0.0
  %6523 = vmatpush1.xpose.msra.mxu0 0.0
  %6524 = vmatprep.subr.mxu0 0.0
  %6525 = vmatpush1.xpose.msra.mxu0 0.0
  %6526 = vmatprep.subr.mxu0 0.0
  %6527 = vmatpush1.xpose.msra.mxu0 0.0
  %6528 = vmatprep.subr.mxu0 0.0
  %6529 = vmatpush1.xpose.msra.mxu0 0.0
  %6530 = vmatprep.subr.mxu0 0.0
  %6531 = vmatpush1.xpose.msra.mxu0 0.0
  %6532 = vmatprep.subr.mxu0 0.0
  %6533 = vmatpush1.xpose.msra.mxu0 0.0
  %6534 = vmatprep.subr.mxu0 0.0
  %6535 = vmatpush1.xpose.msra.mxu0 0.0
  %6536 = vmatprep.subr.mxu0 0.0
  %6537 = vmatpush1.xpose.msra.mxu0 0.0
  %6538 = vmatprep.subr.mxu0 0.0
  %6539 = vmatpush1.xpose.msra.mxu0 0.0
  %6540 = vmatprep.subr.mxu0 0.0
  %6541 = vmatpush1.xpose.msra.mxu0 0.0
  %6542 = vmatprep.subr.mxu0 0.0
  %6543 = vmatpush1.xpose.msra.mxu0 0.0
  %6544 = vmatprep.subr.mxu0 0.0
  %6545 = vmatpush1.xpose.msra.mxu0 0.0
  %6546 = vmatprep.mubr.f32.mxu0 0.0
  %6547 = vmatmul.mubr.f32.gmra.mrb[0].mxu0 %v6477
  %v6548 = vpop.f32.mrb[0].mxu0
  %v6549 = vadd.f32 0.0, %v6548
  %v6550 = vpop.f32.mrb[0].mxu0
  %6551 = vdwg.mxu0
  %v6553 = vsel %vm179, %v70, 0
  %v6556 = vsel %vm179, %v5095, 0
  %6558 = vmatprep.subr.mxu0 0.0
  %6559 = vmatpush1.xpose.msra.mxu0 %v6556
  %6560 = vmatprep.subr.mxu0 0.0
  %6561 = vmatpush1.xpose.msra.mxu0 0.0
  %6562 = vmatprep.subr.mxu0 0.0
  %6563 = vmatpush1.xpose.msra.mxu0 0.0
  %6564 = vmatprep.subr.mxu0 0.0
  %6565 = vmatpush1.xpose.msra.mxu0 0.0
  %6566 = vmatprep.subr.mxu0 0.0
  %6567 = vmatpush1.xpose.msra.mxu0 0.0
  %6568 = vmatprep.subr.mxu0 0.0
  %6569 = vmatpush1.xpose.msra.mxu0 0.0
  %6570 = vmatprep.subr.mxu0 0.0
  %6571 = vmatpush1.xpose.msra.mxu0 0.0
  %6572 = vmatprep.subr.mxu0 0.0
  %6573 = vmatpush1.xpose.msra.mxu0 0.0
  %6574 = vmatprep.subr.mxu0 0.0
  %6575 = vmatpush1.xpose.msra.mxu0 0.0
  %6576 = vmatprep.subr.mxu0 0.0
  %6577 = vmatpush1.xpose.msra.mxu0 0.0
  %6578 = vmatprep.subr.mxu0 0.0
  %6579 = vmatpush1.xpose.msra.mxu0 0.0
  %6580 = vmatprep.subr.mxu0 0.0
  %6581 = vmatpush1.xpose.msra.mxu0 0.0
  %6582 = vmatprep.subr.mxu0 0.0
  %6583 = vmatpush1.xpose.msra.mxu0 0.0
  %6584 = vmatprep.subr.mxu0 0.0
  %6585 = vmatpush1.xpose.msra.mxu0 0.0
  %6586 = vmatprep.subr.mxu0 0.0
  %6587 = vmatpush1.xpose.msra.mxu0 0.0
  %6588 = vmatprep.subr.mxu0 0.0
  %6589 = vmatpush1.xpose.msra.mxu0 0.0
  %6590 = vmatprep.subr.mxu0 0.0
  %6591 = vmatpush1.xpose.msra.mxu0 0.0
  %6592 = vmatprep.subr.mxu0 0.0
  %6593 = vmatpush1.xpose.msra.mxu0 0.0
  %6594 = vmatprep.subr.mxu0 0.0
  %6595 = vmatpush1.xpose.msra.mxu0 0.0
  %6596 = vmatprep.subr.mxu0 0.0
  %6597 = vmatpush1.xpose.msra.mxu0 0.0
  %6598 = vmatprep.subr.mxu0 0.0
  %6599 = vmatpush1.xpose.msra.mxu0 0.0
  %6600 = vmatprep.subr.mxu0 0.0
  %6601 = vmatpush1.xpose.msra.mxu0 0.0
  %6602 = vmatprep.subr.mxu0 0.0
  %6603 = vmatpush1.xpose.msra.mxu0 0.0
  %6604 = vmatprep.subr.mxu0 0.0
  %6605 = vmatpush1.xpose.msra.mxu0 0.0
  %6606 = vmatprep.subr.mxu0 0.0
  %6607 = vmatpush1.xpose.msra.mxu0 0.0
  %6608 = vmatprep.subr.mxu0 0.0
  %6609 = vmatpush1.xpose.msra.mxu0 0.0
  %6610 = vmatprep.subr.mxu0 0.0
  %6611 = vmatpush1.xpose.msra.mxu0 0.0
  %6612 = vmatprep.subr.mxu0 0.0
  %6613 = vmatpush1.xpose.msra.mxu0 0.0
  %6614 = vmatprep.subr.mxu0 0.0
  %6615 = vmatpush1.xpose.msra.mxu0 0.0
  %6616 = vmatprep.subr.mxu0 0.0
  %6617 = vmatpush1.xpose.msra.mxu0 0.0
  %6618 = vmatprep.subr.mxu0 0.0
  %6619 = vmatpush1.xpose.msra.mxu0 0.0
  %6620 = vmatprep.subr.mxu0 0.0
  %6621 = vmatpush1.xpose.msra.mxu0 0.0
  %6622 = vmatprep.mubr.f32.mxu0 0.0
  %6623 = vmatmul.mubr.f32.gmra.mrb[0].mxu0 %v6553
  %v6624 = vpop.f32.mrb[0].mxu0
  %v6625 = vadd.f32 0.0, %v6624
  %v6626 = vpop.f32.mrb[0].mxu0
  %6627 = vdwg.mxu0
  %v6629 = vsel %vm179, %v71, 0
  %v6632 = vsel %vm179, %v5096, 0
  %6634 = vmatprep.subr.mxu0 0.0
  %6635 = vmatpush1.xpose.msra.mxu0 %v6632
  %6636 = vmatprep.subr.mxu0 0.0
  %6637 = vmatpush1.xpose.msra.mxu0 0.0
  %6638 = vmatprep.subr.mxu0 0.0
  %6639 = vmatpush1.xpose.msra.mxu0 0.0
  %6640 = vmatprep.subr.mxu0 0.0
  %6641 = vmatpush1.xpose.msra.mxu0 0.0
  %6642 = vmatprep.subr.mxu0 0.0
  %6643 = vmatpush1.xpose.msra.mxu0 0.0
  %6644 = vmatprep.subr.mxu0 0.0
  %6645 = vmatpush1.xpose.msra.mxu0 0.0
  %6646 = vmatprep.subr.mxu0 0.0
  %6647 = vmatpush1.xpose.msra.mxu0 0.0
  %6648 = vmatprep.subr.mxu0 0.0
  %6649 = vmatpush1.xpose.msra.mxu0 0.0
  %6650 = vmatprep.subr.mxu0 0.0
  %6651 = vmatpush1.xpose.msra.mxu0 0.0
  %6652 = vmatprep.subr.mxu0 0.0
  %6653 = vmatpush1.xpose.msra.mxu0 0.0
  %6654 = vmatprep.subr.mxu0 0.0
  %6655 = vmatpush1.xpose.msra.mxu0 0.0
  %6656 = vmatprep.subr.mxu0 0.0
  %6657 = vmatpush1.xpose.msra.mxu0 0.0
  %6658 = vmatprep.subr.mxu0 0.0
  %6659 = vmatpush1.xpose.msra.mxu0 0.0
  %6660 = vmatprep.subr.mxu0 0.0
  %6661 = vmatpush1.xpose.msra.mxu0 0.0
  %6662 = vmatprep.subr.mxu0 0.0
  %6663 = vmatpush1.xpose.msra.mxu0 0.0
  %6664 = vmatprep.subr.mxu0 0.0
  %6665 = vmatpush1.xpose.msra.mxu0 0.0
  %6666 = vmatprep.subr.mxu0 0.0
  %6667 = vmatpush1.xpose.msra.mxu0 0.0
  %6668 = vmatprep.subr.mxu0 0.0
  %6669 = vmatpush1.xpose.msra.mxu0 0.0
  %6670 = vmatprep.subr.mxu0 0.0
  %6671 = vmatpush1.xpose.msra.mxu0 0.0
  %6672 = vmatprep.subr.mxu0 0.0
  %6673 = vmatpush1.xpose.msra.mxu0 0.0
  %6674 = vmatprep.subr.mxu0 0.0
  %6675 = vmatpush1.xpose.msra.mxu0 0.0
  %6676 = vmatprep.subr.mxu0 0.0
  %6677 = vmatpush1.xpose.msra.mxu0 0.0
  %6678 = vmatprep.subr.mxu0 0.0
  %6679 = vmatpush1.xpose.msra.mxu0 0.0
  %6680 = vmatprep.subr.mxu0 0.0
  %6681 = vmatpush1.xpose.msra.mxu0 0.0
  %6682 = vmatprep.subr.mxu0 0.0
  %6683 = vmatpush1.xpose.msra.mxu0 0.0
  %6684 = vmatprep.subr.mxu0 0.0
  %6685 = vmatpush1.xpose.msra.mxu0 0.0
  %6686 = vmatprep.subr.mxu0 0.0
  %6687 = vmatpush1.xpose.msra.mxu0 0.0
  %6688 = vmatprep.subr.mxu0 0.0
  %6689 = vmatpush1.xpose.msra.mxu0 0.0
  %6690 = vmatprep.subr.mxu0 0.0
  %6691 = vmatpush1.xpose.msra.mxu0 0.0
  %6692 = vmatprep.subr.mxu0 0.0
  %6693 = vmatpush1.xpose.msra.mxu0 0.0
  %6694 = vmatprep.subr.mxu0 0.0
  %6695 = vmatpush1.xpose.msra.mxu0 0.0
  %6696 = vmatprep.subr.mxu0 0.0
  %6697 = vmatpush1.xpose.msra.mxu0 0.0
  %6698 = vmatprep.mubr.f32.mxu0 0.0
  %6699 = vmatmul.mubr.f32.gmra.mrb[0].mxu0 %v6629
  %v6700 = vpop.f32.mrb[0].mxu0
  %v6701 = vadd.f32 0.0, %v6700
  %v6702 = vpop.f32.mrb[0].mxu0
  %6703 = vdwg.mxu0
  %v6705 = vsel %vm179, %v72, 0
  %v6708 = vsel %vm179, %v5097, 0
  %6710 = vmatprep.subr.mxu0 0.0
  %6711 = vmatpush1.xpose.msra.mxu0 %v6708
  %6712 = vmatprep.subr.mxu0 0.0
  %6713 = vmatpush1.xpose.msra.mxu0 0.0
  %6714 = vmatprep.subr.mxu0 0.0
  %6715 = vmatpush1.xpose.msra.mxu0 0.0
  %6716 = vmatprep.subr.mxu0 0.0
  %6717 = vmatpush1.xpose.msra.mxu0 0.0
  %6718 = vmatprep.subr.mxu0 0.0
  %6719 = vmatpush1.xpose.msra.mxu0 0.0
  %6720 = vmatprep.subr.mxu0 0.0
  %6721 = vmatpush1.xpose.msra.mxu0 0.0
  %6722 = vmatprep.subr.mxu0 0.0
  %6723 = vmatpush1.xpose.msra.mxu0 0.0
  %6724 = vmatprep.subr.mxu0 0.0
  %6725 = vmatpush1.xpose.msra.mxu0 0.0
  %6726 = vmatprep.subr.mxu0 0.0
  %6727 = vmatpush1.xpose.msra.mxu0 0.0
  %6728 = vmatprep.subr.mxu0 0.0
  %6729 = vmatpush1.xpose.msra.mxu0 0.0
  %6730 = vmatprep.subr.mxu0 0.0
  %6731 = vmatpush1.xpose.msra.mxu0 0.0
  %6732 = vmatprep.subr.mxu0 0.0
  %6733 = vmatpush1.xpose.msra.mxu0 0.0
  %6734 = vmatprep.subr.mxu0 0.0
  %6735 = vmatpush1.xpose.msra.mxu0 0.0
  %6736 = vmatprep.subr.mxu0 0.0
  %6737 = vmatpush1.xpose.msra.mxu0 0.0
  %6738 = vmatprep.subr.mxu0 0.0
  %6739 = vmatpush1.xpose.msra.mxu0 0.0
  %6740 = vmatprep.subr.mxu0 0.0
  %6741 = vmatpush1.xpose.msra.mxu0 0.0
  %6742 = vmatprep.subr.mxu0 0.0
  %6743 = vmatpush1.xpose.msra.mxu0 0.0
  %6744 = vmatprep.subr.mxu0 0.0
  %6745 = vmatpush1.xpose.msra.mxu0 0.0
  %6746 = vmatprep.subr.mxu0 0.0
  %6747 = vmatpush1.xpose.msra.mxu0 0.0
  %6748 = vmatprep.subr.mxu0 0.0
  %6749 = vmatpush1.xpose.msra.mxu0 0.0
  %6750 = vmatprep.subr.mxu0 0.0
  %6751 = vmatpush1.xpose.msra.mxu0 0.0
  %6752 = vmatprep.subr.mxu0 0.0
  %6753 = vmatpush1.xpose.msra.mxu0 0.0
  %6754 = vmatprep.subr.mxu0 0.0
  %6755 = vmatpush1.xpose.msra.mxu0 0.0
  %6756 = vmatprep.subr.mxu0 0.0
  %6757 = vmatpush1.xpose.msra.mxu0 0.0
  %6758 = vmatprep.subr.mxu0 0.0
  %6759 = vmatpush1.xpose.msra.mxu0 0.0
  %6760 = vmatprep.subr.mxu0 0.0
  %6761 = vmatpush1.xpose.msra.mxu0 0.0
  %6762 = vmatprep.subr.mxu0 0.0
  %6763 = vmatpush1.xpose.msra.mxu0 0.0
  %6764 = vmatprep.subr.mxu0 0.0
  %6765 = vmatpush1.xpose.msra.mxu0 0.0
  %6766 = vmatprep.subr.mxu0 0.0
  %6767 = vmatpush1.xpose.msra.mxu0 0.0
  %6768 = vmatprep.subr.mxu0 0.0
  %6769 = vmatpush1.xpose.msra.mxu0 0.0
  %6770 = vmatprep.subr.mxu0 0.0
  %6771 = vmatpush1.xpose.msra.mxu0 0.0
  %6772 = vmatprep.subr.mxu0 0.0
  %6773 = vmatpush1.xpose.msra.mxu0 0.0
  %6774 = vmatprep.mubr.f32.mxu0 0.0
  %6775 = vmatmul.mubr.f32.gmra.mrb[0].mxu0 %v6705
  %v6776 = vpop.f32.mrb[0].mxu0
  %v6777 = vadd.f32 0.0, %v6776
  %v6778 = vpop.f32.mrb[0].mxu0
  %6779 = vdwg.mxu0
  %v6781 = vsel %vm179, %v73, 0
  %v6784 = vsel %vm179, %v5098, 0
  %6786 = vmatprep.subr.mxu0 0.0
  %6787 = vmatpush1.xpose.msra.mxu0 %v6784
  %6788 = vmatprep.subr.mxu0 0.0
  %6789 = vmatpush1.xpose.msra.mxu0 0.0
  %6790 = vmatprep.subr.mxu0 0.0
  %6791 = vmatpush1.xpose.msra.mxu0 0.0
  %6792 = vmatprep.subr.mxu0 0.0
  %6793 = vmatpush1.xpose.msra.mxu0 0.0
  %6794 = vmatprep.subr.mxu0 0.0
  %6795 = vmatpush1.xpose.msra.mxu0 0.0
  %6796 = vmatprep.subr.mxu0 0.0
  %6797 = vmatpush1.xpose.msra.mxu0 0.0
  %6798 = vmatprep.subr.mxu0 0.0
  %6799 = vmatpush1.xpose.msra.mxu0 0.0
  %6800 = vmatprep.subr.mxu0 0.0
  %6801 = vmatpush1.xpose.msra.mxu0 0.0
  %6802 = vmatprep.subr.mxu0 0.0
  %6803 = vmatpush1.xpose.msra.mxu0 0.0
  %6804 = vmatprep.subr.mxu0 0.0
  %6805 = vmatpush1.xpose.msra.mxu0 0.0
  %6806 = vmatprep.subr.mxu0 0.0
  %6807 = vmatpush1.xpose.msra.mxu0 0.0
  %6808 = vmatprep.subr.mxu0 0.0
  %6809 = vmatpush1.xpose.msra.mxu0 0.0
  %6810 = vmatprep.subr.mxu0 0.0
  %6811 = vmatpush1.xpose.msra.mxu0 0.0
  %6812 = vmatprep.subr.mxu0 0.0
  %6813 = vmatpush1.xpose.msra.mxu0 0.0
  %6814 = vmatprep.subr.mxu0 0.0
  %6815 = vmatpush1.xpose.msra.mxu0 0.0
  %6816 = vmatprep.subr.mxu0 0.0
  %6817 = vmatpush1.xpose.msra.mxu0 0.0
  %6818 = vmatprep.subr.mxu0 0.0
  %6819 = vmatpush1.xpose.msra.mxu0 0.0
  %6820 = vmatprep.subr.mxu0 0.0
  %6821 = vmatpush1.xpose.msra.mxu0 0.0
  %6822 = vmatprep.subr.mxu0 0.0
  %6823 = vmatpush1.xpose.msra.mxu0 0.0
  %6824 = vmatprep.subr.mxu0 0.0
  %6825 = vmatpush1.xpose.msra.mxu0 0.0
  %6826 = vmatprep.subr.mxu0 0.0
  %6827 = vmatpush1.xpose.msra.mxu0 0.0
  %6828 = vmatprep.subr.mxu0 0.0
  %6829 = vmatpush1.xpose.msra.mxu0 0.0
  %6830 = vmatprep.subr.mxu0 0.0
  %6831 = vmatpush1.xpose.msra.mxu0 0.0
  %6832 = vmatprep.subr.mxu0 0.0
  %6833 = vmatpush1.xpose.msra.mxu0 0.0
  %6834 = vmatprep.subr.mxu0 0.0
  %6835 = vmatpush1.xpose.msra.mxu0 0.0
  %6836 = vmatprep.subr.mxu0 0.0
  %6837 = vmatpush1.xpose.msra.mxu0 0.0
  %6838 = vmatprep.subr.mxu0 0.0
  %6839 = vmatpush1.xpose.msra.mxu0 0.0
  %6840 = vmatprep.subr.mxu0 0.0
  %6841 = vmatpush1.xpose.msra.mxu0 0.0
  %6842 = vmatprep.subr.mxu0 0.0
  %6843 = vmatpush1.xpose.msra.mxu0 0.0
  %6844 = vmatprep.subr.mxu0 0.0
  %6845 = vmatpush1.xpose.msra.mxu0 0.0
  %6846 = vmatprep.subr.mxu0 0.0
  %6847 = vmatpush1.xpose.msra.mxu0 0.0
  %6848 = vmatprep.subr.mxu0 0.0
  %6849 = vmatpush1.xpose.msra.mxu0 0.0
  %6850 = vmatprep.mubr.f32.mxu0 0.0
  %6851 = vmatmul.mubr.f32.gmra.mrb[0].mxu0 %v6781
  %v6852 = vpop.f32.mrb[0].mxu0
  %v6853 = vadd.f32 0.0, %v6852
  %v6854 = vpop.f32.mrb[0].mxu0
  %6855 = vdwg.mxu0
  %v6857 = vsel %vm179, %v74, 0
  %v6860 = vsel %vm179, %v5099, 0
  %6862 = vmatprep.subr.mxu0 0.0
  %6863 = vmatpush1.xpose.msra.mxu0 %v6860
  %6864 = vmatprep.subr.mxu0 0.0
  %6865 = vmatpush1.xpose.msra.mxu0 0.0
  %6866 = vmatprep.subr.mxu0 0.0
  %6867 = vmatpush1.xpose.msra.mxu0 0.0
  %6868 = vmatprep.subr.mxu0 0.0
  %6869 = vmatpush1.xpose.msra.mxu0 0.0
  %6870 = vmatprep.subr.mxu0 0.0
  %6871 = vmatpush1.xpose.msra.mxu0 0.0
  %6872 = vmatprep.subr.mxu0 0.0
  %6873 = vmatpush1.xpose.msra.mxu0 0.0
  %6874 = vmatprep.subr.mxu0 0.0
  %6875 = vmatpush1.xpose.msra.mxu0 0.0
  %6876 = vmatprep.subr.mxu0 0.0
  %6877 = vmatpush1.xpose.msra.mxu0 0.0
  %6878 = vmatprep.subr.mxu0 0.0
  %6879 = vmatpush1.xpose.msra.mxu0 0.0
  %6880 = vmatprep.subr.mxu0 0.0
  %6881 = vmatpush1.xpose.msra.mxu0 0.0
  %6882 = vmatprep.subr.mxu0 0.0
  %6883 = vmatpush1.xpose.msra.mxu0 0.0
  %6884 = vmatprep.subr.mxu0 0.0
  %6885 = vmatpush1.xpose.msra.mxu0 0.0
  %6886 = vmatprep.subr.mxu0 0.0
  %6887 = vmatpush1.xpose.msra.mxu0 0.0
  %6888 = vmatprep.subr.mxu0 0.0
  %6889 = vmatpush1.xpose.msra.mxu0 0.0
  %6890 = vmatprep.subr.mxu0 0.0
  %6891 = vmatpush1.xpose.msra.mxu0 0.0
  %6892 = vmatprep.subr.mxu0 0.0
  %6893 = vmatpush1.xpose.msra.mxu0 0.0
  %6894 = vmatprep.subr.mxu0 0.0
  %6895 = vmatpush1.xpose.msra.mxu0 0.0
  %6896 = vmatprep.subr.mxu0 0.0
  %6897 = vmatpush1.xpose.msra.mxu0 0.0
  %6898 = vmatprep.subr.mxu0 0.0
  %6899 = vmatpush1.xpose.msra.mxu0 0.0
  %6900 = vmatprep.subr.mxu0 0.0
  %6901 = vmatpush1.xpose.msra.mxu0 0.0
  %6902 = vmatprep.subr.mxu0 0.0
  %6903 = vmatpush1.xpose.msra.mxu0 0.0
  %6904 = vmatprep.subr.mxu0 0.0
  %6905 = vmatpush1.xpose.msra.mxu0 0.0
  %6906 = vmatprep.subr.mxu0 0.0
  %6907 = vmatpush1.xpose.msra.mxu0 0.0
  %6908 = vmatprep.subr.mxu0 0.0
  %6909 = vmatpush1.xpose.msra.mxu0 0.0
  %6910 = vmatprep.subr.mxu0 0.0
  %6911 = vmatpush1.xpose.msra.mxu0 0.0
  %6912 = vmatprep.subr.mxu0 0.0
  %6913 = vmatpush1.xpose.msra.mxu0 0.0
  %6914 = vmatprep.subr.mxu0 0.0
  %6915 = vmatpush1.xpose.msra.mxu0 0.0
  %6916 = vmatprep.subr.mxu0 0.0
  %6917 = vmatpush1.xpose.msra.mxu0 0.0
  %6918 = vmatprep.subr.mxu0 0.0
  %6919 = vmatpush1.xpose.msra.mxu0 0.0
  %6920 = vmatprep.subr.mxu0 0.0
  %6921 = vmatpush1.xpose.msra.mxu0 0.0
  %6922 = vmatprep.subr.mxu0 0.0
  %6923 = vmatpush1.xpose.msra.mxu0 0.0
  %6924 = vmatprep.subr.mxu0 0.0
  %6925 = vmatpush1.xpose.msra.mxu0 0.0
  %6926 = vmatprep.mubr.f32.mxu0 0.0
  %6927 = vmatmul.mubr.f32.gmra.mrb[0].mxu0 %v6857
  %v6928 = vpop.f32.mrb[0].mxu0
  %v6929 = vadd.f32 0.0, %v6928
  %v6930 = vpop.f32.mrb[0].mxu0
  %6931 = vdwg.mxu0
  %v6933 = vsel %vm179, %v75, 0
  %v6936 = vsel %vm179, %v5100, 0
  %6938 = vmatprep.subr.mxu0 0.0
  %6939 = vmatpush1.xpose.msra.mxu0 %v6936
  %6940 = vmatprep.subr.mxu0 0.0
  %6941 = vmatpush1.xpose.msra.mxu0 0.0
  %6942 = vmatprep.subr.mxu0 0.0
  %6943 = vmatpush1.xpose.msra.mxu0 0.0
  %6944 = vmatprep.subr.mxu0 0.0
  %6945 = vmatpush1.xpose.msra.mxu0 0.0
  %6946 = vmatprep.subr.mxu0 0.0
  %6947 = vmatpush1.xpose.msra.mxu0 0.0
  %6948 = vmatprep.subr.mxu0 0.0
  %6949 = vmatpush1.xpose.msra.mxu0 0.0
  %6950 = vmatprep.subr.mxu0 0.0
  %6951 = vmatpush1.xpose.msra.mxu0 0.0
  %6952 = vmatprep.subr.mxu0 0.0
  %6953 = vmatpush1.xpose.msra.mxu0 0.0
  %6954 = vmatprep.subr.mxu0 0.0
  %6955 = vmatpush1.xpose.msra.mxu0 0.0
  %6956 = vmatprep.subr.mxu0 0.0
  %6957 = vmatpush1.xpose.msra.mxu0 0.0
  %6958 = vmatprep.subr.mxu0 0.0
  %6959 = vmatpush1.xpose.msra.mxu0 0.0
  %6960 = vmatprep.subr.mxu0 0.0
  %6961 = vmatpush1.xpose.msra.mxu0 0.0
  %6962 = vmatprep.subr.mxu0 0.0
  %6963 = vmatpush1.xpose.msra.mxu0 0.0
  %6964 = vmatprep.subr.mxu0 0.0
  %6965 = vmatpush1.xpose.msra.mxu0 0.0
  %6966 = vmatprep.subr.mxu0 0.0
  %6967 = vmatpush1.xpose.msra.mxu0 0.0
  %6968 = vmatprep.subr.mxu0 0.0
  %6969 = vmatpush1.xpose.msra.mxu0 0.0
  %6970 = vmatprep.subr.mxu0 0.0
  %6971 = vmatpush1.xpose.msra.mxu0 0.0
  %6972 = vmatprep.subr.mxu0 0.0
  %6973 = vmatpush1.xpose.msra.mxu0 0.0
  %6974 = vmatprep.subr.mxu0 0.0
  %6975 = vmatpush1.xpose.msra.mxu0 0.0
  %6976 = vmatprep.subr.mxu0 0.0
  %6977 = vmatpush1.xpose.msra.mxu0 0.0
  %6978 = vmatprep.subr.mxu0 0.0
  %6979 = vmatpush1.xpose.msra.mxu0 0.0
  %6980 = vmatprep.subr.mxu0 0.0
  %6981 = vmatpush1.xpose.msra.mxu0 0.0
  %6982 = vmatprep.subr.mxu0 0.0
  %6983 = vmatpush1.xpose.msra.mxu0 0.0
  %6984 = vmatprep.subr.mxu0 0.0
  %6985 = vmatpush1.xpose.msra.mxu0 0.0
  %6986 = vmatprep.subr.mxu0 0.0
  %6987 = vmatpush1.xpose.msra.mxu0 0.0
  %6988 = vmatprep.subr.mxu0 0.0
  %6989 = vmatpush1.xpose.msra.mxu0 0.0
  %6990 = vmatprep.subr.mxu0 0.0
  %6991 = vmatpush1.xpose.msra.mxu0 0.0
  %6992 = vmatprep.subr.mxu0 0.0
  %6993 = vmatpush1.xpose.msra.mxu0 0.0
  %6994 = vmatprep.subr.mxu0 0.0
  %6995 = vmatpush1.xpose.msra.mxu0 0.0
  %6996 = vmatprep.subr.mxu0 0.0
  %6997 = vmatpush1.xpose.msra.mxu0 0.0
  %6998 = vmatprep.subr.mxu0 0.0
  %6999 = vmatpush1.xpose.msra.mxu0 0.0
  %7000 = vmatprep.subr.mxu0 0.0
  %7001 = vmatpush1.xpose.msra.mxu0 0.0
  %7002 = vmatprep.mubr.f32.mxu0 0.0
  %7003 = vmatmul.mubr.f32.gmra.mrb[0].mxu0 %v6933
  %v7004 = vpop.f32.mrb[0].mxu0
  %v7005 = vadd.f32 0.0, %v7004
  %v7006 = vpop.f32.mrb[0].mxu0
  %7007 = vdwg.mxu0
  %v7009 = vsel %vm179, %v76, 0
  %v7012 = vsel %vm179, %v5101, 0
  %7014 = vmatprep.subr.mxu0 0.0
  %7015 = vmatpush1.xpose.msra.mxu0 %v7012
  %7016 = vmatprep.subr.mxu0 0.0
  %7017 = vmatpush1.xpose.msra.mxu0 0.0
  %7018 = vmatprep.subr.mxu0 0.0
  %7019 = vmatpush1.xpose.msra.mxu0 0.0
  %7020 = vmatprep.subr.mxu0 0.0
  %7021 = vmatpush1.xpose.msra.mxu0 0.0
  %7022 = vmatprep.subr.mxu0 0.0
  %7023 = vmatpush1.xpose.msra.mxu0 0.0
  %7024 = vmatprep.subr.mxu0 0.0
  %7025 = vmatpush1.xpose.msra.mxu0 0.0
  %7026 = vmatprep.subr.mxu0 0.0
  %7027 = vmatpush1.xpose.msra.mxu0 0.0
  %7028 = vmatprep.subr.mxu0 0.0
  %7029 = vmatpush1.xpose.msra.mxu0 0.0
  %7030 = vmatprep.subr.mxu0 0.0
  %7031 = vmatpush1.xpose.msra.mxu0 0.0
  %7032 = vmatprep.subr.mxu0 0.0
  %7033 = vmatpush1.xpose.msra.mxu0 0.0
  %7034 = vmatprep.subr.mxu0 0.0
  %7035 = vmatpush1.xpose.msra.mxu0 0.0
  %7036 = vmatprep.subr.mxu0 0.0
  %7037 = vmatpush1.xpose.msra.mxu0 0.0
  %7038 = vmatprep.subr.mxu0 0.0
  %7039 = vmatpush1.xpose.msra.mxu0 0.0
  %7040 = vmatprep.subr.mxu0 0.0
  %7041 = vmatpush1.xpose.msra.mxu0 0.0
  %7042 = vmatprep.subr.mxu0 0.0
  %7043 = vmatpush1.xpose.msra.mxu0 0.0
  %7044 = vmatprep.subr.mxu0 0.0
  %7045 = vmatpush1.xpose.msra.mxu0 0.0
  %7046 = vmatprep.subr.mxu0 0.0
  %7047 = vmatpush1.xpose.msra.mxu0 0.0
  %7048 = vmatprep.subr.mxu0 0.0
  %7049 = vmatpush1.xpose.msra.mxu0 0.0
  %7050 = vmatprep.subr.mxu0 0.0
  %7051 = vmatpush1.xpose.msra.mxu0 0.0
  %7052 = vmatprep.subr.mxu0 0.0
  %7053 = vmatpush1.xpose.msra.mxu0 0.0
  %7054 = vmatprep.subr.mxu0 0.0
  %7055 = vmatpush1.xpose.msra.mxu0 0.0
  %7056 = vmatprep.subr.mxu0 0.0
  %7057 = vmatpush1.xpose.msra.mxu0 0.0
  %7058 = vmatprep.subr.mxu0 0.0
  %7059 = vmatpush1.xpose.msra.mxu0 0.0
  %7060 = vmatprep.subr.mxu0 0.0
  %7061 = vmatpush1.xpose.msra.mxu0 0.0
  %7062 = vmatprep.subr.mxu0 0.0
  %7063 = vmatpush1.xpose.msra.mxu0 0.0
  %7064 = vmatprep.subr.mxu0 0.0
  %7065 = vmatpush1.xpose.msra.mxu0 0.0
  %7066 = vmatprep.subr.mxu0 0.0
  %7067 = vmatpush1.xpose.msra.mxu0 0.0
  %7068 = vmatprep.subr.mxu0 0.0
  %7069 = vmatpush1.xpose.msra.mxu0 0.0
  %7070 = vmatprep.subr.mxu0 0.0
  %7071 = vmatpush1.xpose.msra.mxu0 0.0
  %7072 = vmatprep.subr.mxu0 0.0
  %7073 = vmatpush1.xpose.msra.mxu0 0.0
  %7074 = vmatprep.subr.mxu0 0.0
  %7075 = vmatpush1.xpose.msra.mxu0 0.0
  %7076 = vmatprep.subr.mxu0 0.0
  %7077 = vmatpush1.xpose.msra.mxu0 0.0
  %7078 = vmatprep.mubr.f32.mxu0 0.0
  %7079 = vmatmul.mubr.f32.gmra.mrb[0].mxu0 %v7009
  %v7080 = vpop.f32.mrb[0].mxu0
  %v7081 = vadd.f32 0.0, %v7080
  %v7082 = vpop.f32.mrb[0].mxu0
  %7083 = vdwg.mxu0
  %v7085 = vsel %vm179, %v77, 0
  %v7088 = vsel %vm179, %v5102, 0
  %7090 = vmatprep.subr.mxu0 0.0
  %7091 = vmatpush1.xpose.msra.mxu0 %v7088
  %7092 = vmatprep.subr.mxu0 0.0
  %7093 = vmatpush1.xpose.msra.mxu0 0.0
  %7094 = vmatprep.subr.mxu0 0.0
  %7095 = vmatpush1.xpose.msra.mxu0 0.0
  %7096 = vmatprep.subr.mxu0 0.0
  %7097 = vmatpush1.xpose.msra.mxu0 0.0
  %7098 = vmatprep.subr.mxu0 0.0
  %7099 = vmatpush1.xpose.msra.mxu0 0.0
  %7100 = vmatprep.subr.mxu0 0.0
  %7101 = vmatpush1.xpose.msra.mxu0 0.0
  %7102 = vmatprep.subr.mxu0 0.0
  %7103 = vmatpush1.xpose.msra.mxu0 0.0
  %7104 = vmatprep.subr.mxu0 0.0
  %7105 = vmatpush1.xpose.msra.mxu0 0.0
  %7106 = vmatprep.subr.mxu0 0.0
  %7107 = vmatpush1.xpose.msra.mxu0 0.0
  %7108 = vmatprep.subr.mxu0 0.0
  %7109 = vmatpush1.xpose.msra.mxu0 0.0
  %7110 = vmatprep.subr.mxu0 0.0
  %7111 = vmatpush1.xpose.msra.mxu0 0.0
  %7112 = vmatprep.subr.mxu0 0.0
  %7113 = vmatpush1.xpose.msra.mxu0 0.0
  %7114 = vmatprep.subr.mxu0 0.0
  %7115 = vmatpush1.xpose.msra.mxu0 0.0
  %7116 = vmatprep.subr.mxu0 0.0
  %7117 = vmatpush1.xpose.msra.mxu0 0.0
  %7118 = vmatprep.subr.mxu0 0.0
  %7119 = vmatpush1.xpose.msra.mxu0 0.0
  %7120 = vmatprep.subr.mxu0 0.0
  %7121 = vmatpush1.xpose.msra.mxu0 0.0
  %7122 = vmatprep.subr.mxu0 0.0
  %7123 = vmatpush1.xpose.msra.mxu0 0.0
  %7124 = vmatprep.subr.mxu0 0.0
  %7125 = vmatpush1.xpose.msra.mxu0 0.0
  %7126 = vmatprep.subr.mxu0 0.0
  %7127 = vmatpush1.xpose.msra.mxu0 0.0
  %7128 = vmatprep.subr.mxu0 0.0
  %7129 = vmatpush1.xpose.msra.mxu0 0.0
  %7130 = vmatprep.subr.mxu0 0.0
  %7131 = vmatpush1.xpose.msra.mxu0 0.0
  %7132 = vmatprep.subr.mxu0 0.0
  %7133 = vmatpush1.xpose.msra.mxu0 0.0
  %7134 = vmatprep.subr.mxu0 0.0
  %7135 = vmatpush1.xpose.msra.mxu0 0.0
  %7136 = vmatprep.subr.mxu0 0.0
  %7137 = vmatpush1.xpose.msra.mxu0 0.0
  %7138 = vmatprep.subr.mxu0 0.0
  %7139 = vmatpush1.xpose.msra.mxu0 0.0
  %7140 = vmatprep.subr.mxu0 0.0
  %7141 = vmatpush1.xpose.msra.mxu0 0.0
  %7142 = vmatprep.subr.mxu0 0.0
  %7143 = vmatpush1.xpose.msra.mxu0 0.0
  %7144 = vmatprep.subr.mxu0 0.0
  %7145 = vmatpush1.xpose.msra.mxu0 0.0
  %7146 = vmatprep.subr.mxu0 0.0
  %7147 = vmatpush1.xpose.msra.mxu0 0.0
  %7148 = vmatprep.subr.mxu0 0.0
  %7149 = vmatpush1.xpose.msra.mxu0 0.0
  %7150 = vmatprep.subr.mxu0 0.0
  %7151 = vmatpush1.xpose.msra.mxu0 0.0
  %7152 = vmatprep.subr.mxu0 0.0
  %7153 = vmatpush1.xpose.msra.mxu0 0.0
  %7154 = vmatprep.mubr.f32.mxu0 0.0
  %7155 = vmatmul.mubr.f32.gmra.mrb[0].mxu0 %v7085
  %v7156 = vpop.f32.mrb[0].mxu0
  %v7157 = vadd.f32 0.0, %v7156
  %v7158 = vpop.f32.mrb[0].mxu0
  %7159 = vdwg.mxu0
  %v7161 = vsel %vm179, %v78, 0
  %v7164 = vsel %vm179, %v5103, 0
  %7166 = vmatprep.subr.mxu0 0.0
  %7167 = vmatpush1.xpose.msra.mxu0 %v7164
  %7168 = vmatprep.subr.mxu0 0.0
  %7169 = vmatpush1.xpose.msra.mxu0 0.0
  %7170 = vmatprep.subr.mxu0 0.0
  %7171 = vmatpush1.xpose.msra.mxu0 0.0
  %7172 = vmatprep.subr.mxu0 0.0
  %7173 = vmatpush1.xpose.msra.mxu0 0.0
  %7174 = vmatprep.subr.mxu0 0.0
  %7175 = vmatpush1.xpose.msra.mxu0 0.0
  %7176 = vmatprep.subr.mxu0 0.0
  %7177 = vmatpush1.xpose.msra.mxu0 0.0
  %7178 = vmatprep.subr.mxu0 0.0
  %7179 = vmatpush1.xpose.msra.mxu0 0.0
  %7180 = vmatprep.subr.mxu0 0.0
  %7181 = vmatpush1.xpose.msra.mxu0 0.0
  %7182 = vmatprep.subr.mxu0 0.0
  %7183 = vmatpush1.xpose.msra.mxu0 0.0
  %7184 = vmatprep.subr.mxu0 0.0
  %7185 = vmatpush1.xpose.msra.mxu0 0.0
  %7186 = vmatprep.subr.mxu0 0.0
  %7187 = vmatpush1.xpose.msra.mxu0 0.0
  %7188 = vmatprep.subr.mxu0 0.0
  %7189 = vmatpush1.xpose.msra.mxu0 0.0
  %7190 = vmatprep.subr.mxu0 0.0
  %7191 = vmatpush1.xpose.msra.mxu0 0.0
  %7192 = vmatprep.subr.mxu0 0.0
  %7193 = vmatpush1.xpose.msra.mxu0 0.0
  %7194 = vmatprep.subr.mxu0 0.0
  %7195 = vmatpush1.xpose.msra.mxu0 0.0
  %7196 = vmatprep.subr.mxu0 0.0
  %7197 = vmatpush1.xpose.msra.mxu0 0.0
  %7198 = vmatprep.subr.mxu0 0.0
  %7199 = vmatpush1.xpose.msra.mxu0 0.0
  %7200 = vmatprep.subr.mxu0 0.0
  %7201 = vmatpush1.xpose.msra.mxu0 0.0
  %7202 = vmatprep.subr.mxu0 0.0
  %7203 = vmatpush1.xpose.msra.mxu0 0.0
  %7204 = vmatprep.subr.mxu0 0.0
  %7205 = vmatpush1.xpose.msra.mxu0 0.0
  %7206 = vmatprep.subr.mxu0 0.0
  %7207 = vmatpush1.xpose.msra.mxu0 0.0
  %7208 = vmatprep.subr.mxu0 0.0
  %7209 = vmatpush1.xpose.msra.mxu0 0.0
  %7210 = vmatprep.subr.mxu0 0.0
  %7211 = vmatpush1.xpose.msra.mxu0 0.0
  %7212 = vmatprep.subr.mxu0 0.0
  %7213 = vmatpush1.xpose.msra.mxu0 0.0
  %7214 = vmatprep.subr.mxu0 0.0
  %7215 = vmatpush1.xpose.msra.mxu0 0.0
  %7216 = vmatprep.subr.mxu0 0.0
  %7217 = vmatpush1.xpose.msra.mxu0 0.0
  %7218 = vmatprep.subr.mxu0 0.0
  %7219 = vmatpush1.xpose.msra.mxu0 0.0
  %7220 = vmatprep.subr.mxu0 0.0
  %7221 = vmatpush1.xpose.msra.mxu0 0.0
  %7222 = vmatprep.subr.mxu0 0.0
  %7223 = vmatpush1.xpose.msra.mxu0 0.0
  %7224 = vmatprep.subr.mxu0 0.0
  %7225 = vmatpush1.xpose.msra.mxu0 0.0
  %7226 = vmatprep.subr.mxu0 0.0
  %7227 = vmatpush1.xpose.msra.mxu0 0.0
  %7228 = vmatprep.subr.mxu0 0.0
  %7229 = vmatpush1.xpose.msra.mxu0 0.0
  %7230 = vmatprep.mubr.f32.mxu0 0.0
  %7231 = vmatmul.mubr.f32.gmra.mrb[0].mxu0 %v7161
  %v7232 = vpop.f32.mrb[0].mxu0
  %v7233 = vadd.f32 0.0, %v7232
  %v7234 = vpop.f32.mrb[0].mxu0
  %7235 = vdwg.mxu0
  %v7237 = vsel %vm179, %v79, 0
  %v7240 = vsel %vm179, %v5104, 0
  %7242 = vmatprep.subr.mxu0 0.0
  %7243 = vmatpush1.xpose.msra.mxu0 %v7240
  %7244 = vmatprep.subr.mxu0 0.0
  %7245 = vmatpush1.xpose.msra.mxu0 0.0
  %7246 = vmatprep.subr.mxu0 0.0
  %7247 = vmatpush1.xpose.msra.mxu0 0.0
  %7248 = vmatprep.subr.mxu0 0.0
  %7249 = vmatpush1.xpose.msra.mxu0 0.0
  %7250 = vmatprep.subr.mxu0 0.0
  %7251 = vmatpush1.xpose.msra.mxu0 0.0
  %7252 = vmatprep.subr.mxu0 0.0
  %7253 = vmatpush1.xpose.msra.mxu0 0.0
  %7254 = vmatprep.subr.mxu0 0.0
  %7255 = vmatpush1.xpose.msra.mxu0 0.0
  %7256 = vmatprep.subr.mxu0 0.0
  %7257 = vmatpush1.xpose.msra.mxu0 0.0
  %7258 = vmatprep.subr.mxu0 0.0
  %7259 = vmatpush1.xpose.msra.mxu0 0.0
  %7260 = vmatprep.subr.mxu0 0.0
  %7261 = vmatpush1.xpose.msra.mxu0 0.0
  %7262 = vmatprep.subr.mxu0 0.0
  %7263 = vmatpush1.xpose.msra.mxu0 0.0
  %7264 = vmatprep.subr.mxu0 0.0
  %7265 = vmatpush1.xpose.msra.mxu0 0.0
  %7266 = vmatprep.subr.mxu0 0.0
  %7267 = vmatpush1.xpose.msra.mxu0 0.0
  %7268 = vmatprep.subr.mxu0 0.0
  %7269 = vmatpush1.xpose.msra.mxu0 0.0
  %7270 = vmatprep.subr.mxu0 0.0
  %7271 = vmatpush1.xpose.msra.mxu0 0.0
  %7272 = vmatprep.subr.mxu0 0.0
  %7273 = vmatpush1.xpose.msra.mxu0 0.0
  %7274 = vmatprep.subr.mxu0 0.0
  %7275 = vmatpush1.xpose.msra.mxu0 0.0
  %7276 = vmatprep.subr.mxu0 0.0
  %7277 = vmatpush1.xpose.msra.mxu0 0.0
  %7278 = vmatprep.subr.mxu0 0.0
  %7279 = vmatpush1.xpose.msra.mxu0 0.0
  %7280 = vmatprep.subr.mxu0 0.0
  %7281 = vmatpush1.xpose.msra.mxu0 0.0
  %7282 = vmatprep.subr.mxu0 0.0
  %7283 = vmatpush1.xpose.msra.mxu0 0.0
  %7284 = vmatprep.subr.mxu0 0.0
  %7285 = vmatpush1.xpose.msra.mxu0 0.0
  %7286 = vmatprep.subr.mxu0 0.0
  %7287 = vmatpush1.xpose.msra.mxu0 0.0
  %7288 = vmatprep.subr.mxu0 0.0
  %7289 = vmatpush1.xpose.msra.mxu0 0.0
  %7290 = vmatprep.subr.mxu0 0.0
  %7291 = vmatpush1.xpose.msra.mxu0 0.0
  %7292 = vmatprep.subr.mxu0 0.0
  %7293 = vmatpush1.xpose.msra.mxu0 0.0
  %7294 = vmatprep.subr.mxu0 0.0
  %7295 = vmatpush1.xpose.msra.mxu0 0.0
  %7296 = vmatprep.subr.mxu0 0.0
  %7297 = vmatpush1.xpose.msra.mxu0 0.0
  %7298 = vmatprep.subr.mxu0 0.0
  %7299 = vmatpush1.xpose.msra.mxu0 0.0
  %7300 = vmatprep.subr.mxu0 0.0
  %7301 = vmatpush1.xpose.msra.mxu0 0.0
  %7302 = vmatprep.subr.mxu0 0.0
  %7303 = vmatpush1.xpose.msra.mxu0 0.0
  %7304 = vmatprep.subr.mxu0 0.0
  %7305 = vmatpush1.xpose.msra.mxu0 0.0
  %7306 = vmatprep.mubr.f32.mxu0 0.0
  %7307 = vmatmul.mubr.f32.gmra.mrb[0].mxu0 %v7237
  %v7308 = vpop.f32.mrb[0].mxu0
  %v7309 = vadd.f32 0.0, %v7308
  %v7310 = vpop.f32.mrb[0].mxu0
  %7311 = vdwg.mxu0
  %v7313 = vsel %vm179, %v80, 0
  %v7316 = vsel %vm179, %v5105, 0
  %7318 = vmatprep.subr.mxu0 0.0
  %7319 = vmatpush1.xpose.msra.mxu0 %v7316
  %7320 = vmatprep.subr.mxu0 0.0
  %7321 = vmatpush1.xpose.msra.mxu0 0.0
  %7322 = vmatprep.subr.mxu0 0.0
  %7323 = vmatpush1.xpose.msra.mxu0 0.0
  %7324 = vmatprep.subr.mxu0 0.0
  %7325 = vmatpush1.xpose.msra.mxu0 0.0
  %7326 = vmatprep.subr.mxu0 0.0
  %7327 = vmatpush1.xpose.msra.mxu0 0.0
  %7328 = vmatprep.subr.mxu0 0.0
  %7329 = vmatpush1.xpose.msra.mxu0 0.0
  %7330 = vmatprep.subr.mxu0 0.0
  %7331 = vmatpush1.xpose.msra.mxu0 0.0
  %7332 = vmatprep.subr.mxu0 0.0
  %7333 = vmatpush1.xpose.msra.mxu0 0.0
  %7334 = vmatprep.subr.mxu0 0.0
  %7335 = vmatpush1.xpose.msra.mxu0 0.0
  %7336 = vmatprep.subr.mxu0 0.0
  %7337 = vmatpush1.xpose.msra.mxu0 0.0
  %7338 = vmatprep.subr.mxu0 0.0
  %7339 = vmatpush1.xpose.msra.mxu0 0.0
  %7340 = vmatprep.subr.mxu0 0.0
  %7341 = vmatpush1.xpose.msra.mxu0 0.0
  %7342 = vmatprep.subr.mxu0 0.0
  %7343 = vmatpush1.xpose.msra.mxu0 0.0
  %7344 = vmatprep.subr.mxu0 0.0
  %7345 = vmatpush1.xpose.msra.mxu0 0.0
  %7346 = vmatprep.subr.mxu0 0.0
  %7347 = vmatpush1.xpose.msra.mxu0 0.0
  %7348 = vmatprep.subr.mxu0 0.0
  %7349 = vmatpush1.xpose.msra.mxu0 0.0
  %7350 = vmatprep.subr.mxu0 0.0
  %7351 = vmatpush1.xpose.msra.mxu0 0.0
  %7352 = vmatprep.subr.mxu0 0.0
  %7353 = vmatpush1.xpose.msra.mxu0 0.0
  %7354 = vmatprep.subr.mxu0 0.0
  %7355 = vmatpush1.xpose.msra.mxu0 0.0
  %7356 = vmatprep.subr.mxu0 0.0
  %7357 = vmatpush1.xpose.msra.mxu0 0.0
  %7358 = vmatprep.subr.mxu0 0.0
  %7359 = vmatpush1.xpose.msra.mxu0 0.0
  %7360 = vmatprep.subr.mxu0 0.0
  %7361 = vmatpush1.xpose.msra.mxu0 0.0
  %7362 = vmatprep.subr.mxu0 0.0
  %7363 = vmatpush1.xpose.msra.mxu0 0.0
  %7364 = vmatprep.subr.mxu0 0.0
  %7365 = vmatpush1.xpose.msra.mxu0 0.0
  %7366 = vmatprep.subr.mxu0 0.0
  %7367 = vmatpush1.xpose.msra.mxu0 0.0
  %7368 = vmatprep.subr.mxu0 0.0
  %7369 = vmatpush1.xpose.msra.mxu0 0.0
  %7370 = vmatprep.subr.mxu0 0.0
  %7371 = vmatpush1.xpose.msra.mxu0 0.0
  %7372 = vmatprep.subr.mxu0 0.0
  %7373 = vmatpush1.xpose.msra.mxu0 0.0
  %7374 = vmatprep.subr.mxu0 0.0
  %7375 = vmatpush1.xpose.msra.mxu0 0.0
  %7376 = vmatprep.subr.mxu0 0.0
  %7377 = vmatpush1.xpose.msra.mxu0 0.0
  %7378 = vmatprep.subr.mxu0 0.0
  %7379 = vmatpush1.xpose.msra.mxu0 0.0
  %7380 = vmatprep.subr.mxu0 0.0
  %7381 = vmatpush1.xpose.msra.mxu0 0.0
  %7382 = vmatprep.mubr.f32.mxu0 0.0
  %7383 = vmatmul.mubr.f32.gmra.mrb[0].mxu0 %v7313
  %v7384 = vpop.f32.mrb[0].mxu0
  %v7385 = vadd.f32 0.0, %v7384
  %v7386 = vpop.f32.mrb[0].mxu0
  %7387 = vdwg.mxu0
  %v7389 = vsel %vm179, %v81, 0
  %v7392 = vsel %vm179, %v5106, 0
  %7394 = vmatprep.subr.mxu0 0.0
  %7395 = vmatpush1.xpose.msra.mxu0 %v7392
  %7396 = vmatprep.subr.mxu0 0.0
  %7397 = vmatpush1.xpose.msra.mxu0 0.0
  %7398 = vmatprep.subr.mxu0 0.0
  %7399 = vmatpush1.xpose.msra.mxu0 0.0
  %7400 = vmatprep.subr.mxu0 0.0
  %7401 = vmatpush1.xpose.msra.mxu0 0.0
  %7402 = vmatprep.subr.mxu0 0.0
  %7403 = vmatpush1.xpose.msra.mxu0 0.0
  %7404 = vmatprep.subr.mxu0 0.0
  %7405 = vmatpush1.xpose.msra.mxu0 0.0
  %7406 = vmatprep.subr.mxu0 0.0
  %7407 = vmatpush1.xpose.msra.mxu0 0.0
  %7408 = vmatprep.subr.mxu0 0.0
  %7409 = vmatpush1.xpose.msra.mxu0 0.0
  %7410 = vmatprep.subr.mxu0 0.0
  %7411 = vmatpush1.xpose.msra.mxu0 0.0
  %7412 = vmatprep.subr.mxu0 0.0
  %7413 = vmatpush1.xpose.msra.mxu0 0.0
  %7414 = vmatprep.subr.mxu0 0.0
  %7415 = vmatpush1.xpose.msra.mxu0 0.0
  %7416 = vmatprep.subr.mxu0 0.0
  %7417 = vmatpush1.xpose.msra.mxu0 0.0
  %7418 = vmatprep.subr.mxu0 0.0
  %7419 = vmatpush1.xpose.msra.mxu0 0.0
  %7420 = vmatprep.subr.mxu0 0.0
  %7421 = vmatpush1.xpose.msra.mxu0 0.0
  %7422 = vmatprep.subr.mxu0 0.0
  %7423 = vmatpush1.xpose.msra.mxu0 0.0
  %7424 = vmatprep.subr.mxu0 0.0
  %7425 = vmatpush1.xpose.msra.mxu0 0.0
  %7426 = vmatprep.subr.mxu0 0.0
  %7427 = vmatpush1.xpose.msra.mxu0 0.0
  %7428 = vmatprep.subr.mxu0 0.0
  %7429 = vmatpush1.xpose.msra.mxu0 0.0
  %7430 = vmatprep.subr.mxu0 0.0
  %7431 = vmatpush1.xpose.msra.mxu0 0.0
  %7432 = vmatprep.subr.mxu0 0.0
  %7433 = vmatpush1.xpose.msra.mxu0 0.0
  %7434 = vmatprep.subr.mxu0 0.0
  %7435 = vmatpush1.xpose.msra.mxu0 0.0
  %7436 = vmatprep.subr.mxu0 0.0
  %7437 = vmatpush1.xpose.msra.mxu0 0.0
  %7438 = vmatprep.subr.mxu0 0.0
  %7439 = vmatpush1.xpose.msra.mxu0 0.0
  %7440 = vmatprep.subr.mxu0 0.0
  %7441 = vmatpush1.xpose.msra.mxu0 0.0
  %7442 = vmatprep.subr.mxu0 0.0
  %7443 = vmatpush1.xpose.msra.mxu0 0.0
  %7444 = vmatprep.subr.mxu0 0.0
  %7445 = vmatpush1.xpose.msra.mxu0 0.0
  %7446 = vmatprep.subr.mxu0 0.0
  %7447 = vmatpush1.xpose.msra.mxu0 0.0
  %7448 = vmatprep.subr.mxu0 0.0
  %7449 = vmatpush1.xpose.msra.mxu0 0.0
  %7450 = vmatprep.subr.mxu0 0.0
  %7451 = vmatpush1.xpose.msra.mxu0 0.0
  %7452 = vmatprep.subr.mxu0 0.0
  %7453 = vmatpush1.xpose.msra.mxu0 0.0
  %7454 = vmatprep.subr.mxu0 0.0
  %7455 = vmatpush1.xpose.msra.mxu0 0.0
  %7456 = vmatprep.subr.mxu0 0.0
  %7457 = vmatpush1.xpose.msra.mxu0 0.0
  %7458 = vmatprep.mubr.f32.mxu0 0.0
  %7459 = vmatmul.mubr.f32.gmra.mrb[0].mxu0 %v7389
  %v7460 = vpop.f32.mrb[0].mxu0
  %v7461 = vadd.f32 0.0, %v7460
  %v7462 = vpop.f32.mrb[0].mxu0
  %7463 = vdwg.mxu0
  %v7465 = vsel %vm179, %v82, 0
  %v7468 = vsel %vm179, %v5107, 0
  %7470 = vmatprep.subr.mxu0 0.0
  %7471 = vmatpush1.xpose.msra.mxu0 %v7468
  %7472 = vmatprep.subr.mxu0 0.0
  %7473 = vmatpush1.xpose.msra.mxu0 0.0
  %7474 = vmatprep.subr.mxu0 0.0
  %7475 = vmatpush1.xpose.msra.mxu0 0.0
  %7476 = vmatprep.subr.mxu0 0.0
  %7477 = vmatpush1.xpose.msra.mxu0 0.0
  %7478 = vmatprep.subr.mxu0 0.0
  %7479 = vmatpush1.xpose.msra.mxu0 0.0
  %7480 = vmatprep.subr.mxu0 0.0
  %7481 = vmatpush1.xpose.msra.mxu0 0.0
  %7482 = vmatprep.subr.mxu0 0.0
  %7483 = vmatpush1.xpose.msra.mxu0 0.0
  %7484 = vmatprep.subr.mxu0 0.0
  %7485 = vmatpush1.xpose.msra.mxu0 0.0
  %7486 = vmatprep.subr.mxu0 0.0
  %7487 = vmatpush1.xpose.msra.mxu0 0.0
  %7488 = vmatprep.subr.mxu0 0.0
  %7489 = vmatpush1.xpose.msra.mxu0 0.0
  %7490 = vmatprep.subr.mxu0 0.0
  %7491 = vmatpush1.xpose.msra.mxu0 0.0
  %7492 = vmatprep.subr.mxu0 0.0
  %7493 = vmatpush1.xpose.msra.mxu0 0.0
  %7494 = vmatprep.subr.mxu0 0.0
  %7495 = vmatpush1.xpose.msra.mxu0 0.0
  %7496 = vmatprep.subr.mxu0 0.0
  %7497 = vmatpush1.xpose.msra.mxu0 0.0
  %7498 = vmatprep.subr.mxu0 0.0
  %7499 = vmatpush1.xpose.msra.mxu0 0.0
  %7500 = vmatprep.subr.mxu0 0.0
  %7501 = vmatpush1.xpose.msra.mxu0 0.0
  %7502 = vmatprep.subr.mxu0 0.0
  %7503 = vmatpush1.xpose.msra.mxu0 0.0
  %7504 = vmatprep.subr.mxu0 0.0
  %7505 = vmatpush1.xpose.msra.mxu0 0.0
  %7506 = vmatprep.subr.mxu0 0.0
  %7507 = vmatpush1.xpose.msra.mxu0 0.0
  %7508 = vmatprep.subr.mxu0 0.0
  %7509 = vmatpush1.xpose.msra.mxu0 0.0
  %7510 = vmatprep.subr.mxu0 0.0
  %7511 = vmatpush1.xpose.msra.mxu0 0.0
  %7512 = vmatprep.subr.mxu0 0.0
  %7513 = vmatpush1.xpose.msra.mxu0 0.0
  %7514 = vmatprep.subr.mxu0 0.0
  %7515 = vmatpush1.xpose.msra.mxu0 0.0
  %7516 = vmatprep.subr.mxu0 0.0
  %7517 = vmatpush1.xpose.msra.mxu0 0.0
  %7518 = vmatprep.subr.mxu0 0.0
  %7519 = vmatpush1.xpose.msra.mxu0 0.0
  %7520 = vmatprep.subr.mxu0 0.0
  %7521 = vmatpush1.xpose.msra.mxu0 0.0
  %7522 = vmatprep.subr.mxu0 0.0
  %7523 = vmatpush1.xpose.msra.mxu0 0.0
  %7524 = vmatprep.subr.mxu0 0.0
  %7525 = vmatpush1.xpose.msra.mxu0 0.0
  %7526 = vmatprep.subr.mxu0 0.0
  %7527 = vmatpush1.xpose.msra.mxu0 0.0
  %7528 = vmatprep.subr.mxu0 0.0
  %7529 = vmatpush1.xpose.msra.mxu0 0.0
  %7530 = vmatprep.subr.mxu0 0.0
  %7531 = vmatpush1.xpose.msra.mxu0 0.0
  %7532 = vmatprep.subr.mxu0 0.0
  %7533 = vmatpush1.xpose.msra.mxu0 0.0
  %7534 = vmatprep.mubr.f32.mxu0 0.0
  %7535 = vmatmul.mubr.f32.gmra.mrb[0].mxu0 %v7465
  %v7536 = vpop.f32.mrb[0].mxu0
  %v7537 = vadd.f32 0.0, %v7536
  %v7538 = vpop.f32.mrb[0].mxu0
  %7539 = vdwg.mxu0
  %v7540 = vsub.f32 %v253, %v5181
  %v7541 = vsub.f32 %v329, %v5257
  %v7542 = vsub.f32 %v405, %v5333
  %v7543 = vsub.f32 %v481, %v5409
  %v7544 = vsub.f32 %v557, %v5485
  %v7545 = vsub.f32 %v633, %v5561
  %v7546 = vsub.f32 %v709, %v5637
  %v7547 = vsub.f32 %v785, %v5713
  %v7548 = vsub.f32 %v861, %v5789
  %v7549 = vsub.f32 %v937, %v5865
  %v7550 = vsub.f32 %v1013, %v5941
  %v7551 = vsub.f32 %v1089, %v6017
  %v7552 = vsub.f32 %v1165, %v6093
  %v7553 = vsub.f32 %v1241, %v6169
  %v7554 = vsub.f32 %v1317, %v6245
  %v7555 = vsub.f32 %v1393, %v6321
  %v7556 = vsub.f32 %v1469, %v6397
  %v7557 = vsub.f32 %v1545, %v6473
  %v7558 = vsub.f32 %v1621, %v6549
  %v7559 = vsub.f32 %v1697, %v6625
  %v7560 = vsub.f32 %v1773, %v6701
  %v7561 = vsub.f32 %v1849, %v6777
  %v7562 = vsub.f32 %v1925, %v6853
  %v7563 = vsub.f32 %v2001, %v6929
  %v7564 = vsub.f32 %v2077, %v7005
  %v7565 = vsub.f32 %v2153, %v7081
  %v7566 = vsub.f32 %v2229, %v7157
  %v7567 = vsub.f32 %v2305, %v7233
  %v7568 = vsub.f32 %v2381, %v7309
  %v7569 = vsub.f32 %v2457, %v7385
  %v7570 = vsub.f32 %v2533, %v7461
  %v7571 = vsub.f32 %v2609, %v7537
  %vm7572 = vcmask 58368
  %7573 = vst.msk [vmem:[%s4] sm:$0x3] %vm7572, %v7540
  %7574 = vst.msk [vmem:[%s4 + $0x2] sm:$0x3] %vm7572, %v7541
  %7575 = vst.msk [vmem:[%s4 + $0x4] sm:$0x3] %vm7572, %v7542
  %7576 = vst.msk [vmem:[%s4 + $0x6] sm:$0x3] %vm7572, %v7543
  %7577 = vst.msk [vmem:[%s4 + $0x8] sm:$0x3] %vm7572, %v7544
  %7578 = vst.msk [vmem:[%s4 + $0xa] sm:$0x3] %vm7572, %v7545
  %7579 = vst.msk [vmem:[%s4 + $0xc] sm:$0x3] %vm7572, %v7546
  %7580 = vst.msk [vmem:[%s4 + $0xe] sm:$0x3] %vm7572, %v7547
  %7581 = vst.msk [vmem:[%s4 + $0x10] sm:$0x3] %vm7572, %v7548
  %7582 = vst.msk [vmem:[%s4 + $0x12] sm:$0x3] %vm7572, %v7549
  %7583 = vst.msk [vmem:[%s4 + $0x14] sm:$0x3] %vm7572, %v7550
  %7584 = vst.msk [vmem:[%s4 + $0x16] sm:$0x3] %vm7572, %v7551
  %7585 = vst.msk [vmem:[%s4 + $0x18] sm:$0x3] %vm7572, %v7552
  %7586 = vst.msk [vmem:[%s4 + $0x1a] sm:$0x3] %vm7572, %v7553
  %7587 = vst.msk [vmem:[%s4 + $0x1c] sm:$0x3] %vm7572, %v7554
  %7588 = vst.msk [vmem:[%s4 + $0x1e] sm:$0x3] %vm7572, %v7555
  %7589 = vst.msk [vmem:[%s4 + $0x20] sm:$0x3] %vm7572, %v7556
  %7590 = vst.msk [vmem:[%s4 + $0x22] sm:$0x3] %vm7572, %v7557
  %7591 = vst.msk [vmem:[%s4 + $0x24] sm:$0x3] %vm7572, %v7558
  %7592 = vst.msk [vmem:[%s4 + $0x26] sm:$0x3] %vm7572, %v7559
  %7593 = vst.msk [vmem:[%s4 + $0x28] sm:$0x3] %vm7572, %v7560
  %7594 = vst.msk [vmem:[%s4 + $0x2a] sm:$0x3] %vm7572, %v7561
  %7595 = vst.msk [vmem:[%s4 + $0x2c] sm:$0x3] %vm7572, %v7562
  %7596 = vst.msk [vmem:[%s4 + $0x2e] sm:$0x3] %vm7572, %v7563
  %7597 = vst.msk [vmem:[%s4 + $0x30] sm:$0x3] %vm7572, %v7564
  %7598 = vst.msk [vmem:[%s4 + $0x32] sm:$0x3] %vm7572, %v7565
  %7599 = vst.msk [vmem:[%s4 + $0x34] sm:$0x3] %vm7572, %v7566
  %7600 = vst.msk [vmem:[%s4 + $0x36] sm:$0x3] %vm7572, %v7567
  %7601 = vst.msk [vmem:[%s4 + $0x38] sm:$0x3] %vm7572, %v7568
  %7602 = vst.msk [vmem:[%s4 + $0x3a] sm:$0x3] %vm7572, %v7569
  %7603 = vst.msk [vmem:[%s4 + $0x3c] sm:$0x3] %vm7572, %v7570
  %7604 = vst.msk [vmem:[%s4 + $0x3e] sm:$0x3] %vm7572, %v7571
  %v7605 = vadd.f32 %v253, %v2717
  %v7606 = vadd.f32 %v329, %v2793
  %v7607 = vadd.f32 %v405, %v2869
  %v7608 = vadd.f32 %v481, %v2945
  %v7609 = vadd.f32 %v557, %v3021
  %v7610 = vadd.f32 %v633, %v3097
  %v7611 = vadd.f32 %v709, %v3173
  %v7612 = vadd.f32 %v785, %v3249
  %v7613 = vadd.f32 %v861, %v3325
  %v7614 = vadd.f32 %v937, %v3401
  %v7615 = vadd.f32 %v1013, %v3477
  %v7616 = vadd.f32 %v1089, %v3553
  %v7617 = vadd.f32 %v1165, %v3629
  %v7618 = vadd.f32 %v1241, %v3705
  %v7619 = vadd.f32 %v1317, %v3781
  %v7620 = vadd.f32 %v1393, %v3857
  %v7621 = vadd.f32 %v1469, %v3933
  %v7622 = vadd.f32 %v1545, %v4009
  %v7623 = vadd.f32 %v1621, %v4085
  %v7624 = vadd.f32 %v1697, %v4161
  %v7625 = vadd.f32 %v1773, %v4237
  %v7626 = vadd.f32 %v1849, %v4313
  %v7627 = vadd.f32 %v1925, %v4389
  %v7628 = vadd.f32 %v2001, %v4465
  %v7629 = vadd.f32 %v2077, %v4541
  %v7630 = vadd.f32 %v2153, %v4617
  %v7631 = vadd.f32 %v2229, %v4693
  %v7632 = vadd.f32 %v2305, %v4769
  %v7633 = vadd.f32 %v2381, %v4845
  %v7634 = vadd.f32 %v2457, %v4921
  %v7635 = vadd.f32 %v2533, %v4997
  %v7636 = vadd.f32 %v2609, %v5073
  %7637 = vst.msk [vmem:[%s5] sm:$0x3] %vm7572, %v7605
  %7638 = vst.msk [vmem:[%s5 + $0x2] sm:$0x3] %vm7572, %v7606
  %7639 = vst.msk [vmem:[%s5 + $0x4] sm:$0x3] %vm7572, %v7607
  %7640 = vst.msk [vmem:[%s5 + $0x6] sm:$0x3] %vm7572, %v7608
  %7641 = vst.msk [vmem:[%s5 + $0x8] sm:$0x3] %vm7572, %v7609
  %7642 = vst.msk [vmem:[%s5 + $0xa] sm:$0x3] %vm7572, %v7610
  %7643 = vst.msk [vmem:[%s5 + $0xc] sm:$0x3] %vm7572, %v7611
  %7644 = vst.msk [vmem:[%s5 + $0xe] sm:$0x3] %vm7572, %v7612
  %7645 = vst.msk [vmem:[%s5 + $0x10] sm:$0x3] %vm7572, %v7613
  %7646 = vst.msk [vmem:[%s5 + $0x12] sm:$0x3] %vm7572, %v7614
  %7647 = vst.msk [vmem:[%s5 + $0x14] sm:$0x3] %vm7572, %v7615
  %7648 = vst.msk [vmem:[%s5 + $0x16] sm:$0x3] %vm7572, %v7616
  %7649 = vst.msk [vmem:[%s5 + $0x18] sm:$0x3] %vm7572, %v7617
  %7650 = vst.msk [vmem:[%s5 + $0x1a] sm:$0x3] %vm7572, %v7618
  %7651 = vst.msk [vmem:[%s5 + $0x1c] sm:$0x3] %vm7572, %v7619
  %7652 = vst.msk [vmem:[%s5 + $0x1e] sm:$0x3] %vm7572, %v7620
  %7653 = vst.msk [vmem:[%s5 + $0x20] sm:$0x3] %vm7572, %v7621
  %7654 = vst.msk [vmem:[%s5 + $0x22] sm:$0x3] %vm7572, %v7622
  %7655 = vst.msk [vmem:[%s5 + $0x24] sm:$0x3] %vm7572, %v7623
  %7656 = vst.msk [vmem:[%s5 + $0x26] sm:$0x3] %vm7572, %v7624
  %7657 = vst.msk [vmem:[%s5 + $0x28] sm:$0x3] %vm7572, %v7625
  %7658 = vst.msk [vmem:[%s5 + $0x2a] sm:$0x3] %vm7572, %v7626
  %7659 = vst.msk [vmem:[%s5 + $0x2c] sm:$0x3] %vm7572, %v7627
  %7660 = vst.msk [vmem:[%s5 + $0x2e] sm:$0x3] %vm7572, %v7628
  %7661 = vst.msk [vmem:[%s5 + $0x30] sm:$0x3] %vm7572, %v7629
  %7662 = vst.msk [vmem:[%s5 + $0x32] sm:$0x3] %vm7572, %v7630
  %7663 = vst.msk [vmem:[%s5 + $0x34] sm:$0x3] %vm7572, %v7631
  %7664 = vst.msk [vmem:[%s5 + $0x36] sm:$0x3] %vm7572, %v7632
  %7665 = vst.msk [vmem:[%s5 + $0x38] sm:$0x3] %vm7572, %v7633
  %7666 = vst.msk [vmem:[%s5 + $0x3a] sm:$0x3] %vm7572, %v7634
  %7667 = vst.msk [vmem:[%s5 + $0x3c] sm:$0x3] %vm7572, %v7635
  %7668 = vst.msk [vmem:[%s5 + $0x3e] sm:$0x3] %vm7572, %v7636
  // Predicated region
  $region18: #{simple_block2d_forward.15} parent=0 // pred_check
    _
  $region19: #{simple_block2d_forward.15} parent=0 // pred_check_branch
    %7670 = sbr.rel (0) target = $region21
  $region20: #{simple_block2d_forward.15} parent=0 // pred_region
    _
  $region21: #{simple_block2d_forward.15} parent=0 // pred_fallthru
    _
  // Predicated region
  $region22: #{simple_block2d_forward.15} parent=0 // pred_check
    _
  $region23: #{simple_block2d_forward.15} parent=0 // pred_check_branch
    %7672 = sbr.rel (0) target = $region25
  $region24: #{simple_block2d_forward.15} parent=0 // pred_region
    _
  $region25: #{simple_block2d_forward.15} parent=0 // pred_fallthru
    _
  // Predicated region
  $region26: #{simple_block2d_forward.15} parent=0 // pred_check
    _
  $region27: #{simple_block2d_forward.15} parent=0 // pred_check_branch
    %7674 = sbr.rel (0) target = $region29
  $region28: #{simple_block2d_forward.15} parent=0 // pred_region
    _
  $region29: #{simple_block2d_forward.15} parent=0 // pred_fallthru
    _
  // Predicated region
  $region30: #{simple_block2d_forward.15} parent=0 // pred_check
    _
  $region31: #{simple_block2d_forward.15} parent=0 // pred_check_branch
    %7676 = sbr.rel (0) target = $region33
  $region32: #{simple_block2d_forward.15} parent=0 // pred_region
    _
  $region33: #{simple_block2d_forward.15} parent=0 // pred_fallthru
    _

// kernel: reverse.8
$region0: #{reverse.8}
  #allocation0 [shape = 's32[1]{0}', space=sflag, size = 0x4, scoped, tag = 'scoped memory for reverse.8']
  %s0 = inlined_call_operand.vmem [shape: f32[8,2,8,8,3], index: 0, kind: input, shape index: {}]
  %s1 = inlined_call_operand.vmem [shape: f32[8,2,8,8,3], index: 1, kind: output, shape index: {}]
  %s2 = scalar_lea.vmem %s0, 16
  %v3 = vld [vmem:[%s2] sm:$0xff]
  %4 = vst [vmem:[%s1] sm:$0xff] %v3
  %s5 = scalar_lea.vmem %s0, 64
  %v6 = vld [vmem:[%s5] sm:$0xff]
  %s7 = scalar_lea.vmem %s1, 48
  %8 = vst [vmem:[%s7] sm:$0xff] %v6
  %s9 = scalar_lea.vmem %s0, 112
  %v10 = vld [vmem:[%s9] sm:$0xff]
  %s11 = scalar_lea.vmem %s1, 96
  %12 = vst [vmem:[%s11] sm:$0xff] %v10
  %s13 = scalar_lea.vmem %s0, 160
  %v14 = vld [vmem:[%s13] sm:$0xff]
  %s15 = scalar_lea.vmem %s1, 144
  %16 = vst [vmem:[%s15] sm:$0xff] %v14
  %s17 = scalar_lea.vmem %s0, 208
  %v18 = vld [vmem:[%s17] sm:$0xff]
  %s19 = scalar_lea.vmem %s1, 192
  %20 = vst [vmem:[%s19] sm:$0xff] %v18
  %s21 = scalar_lea.vmem %s0, 256
  %v22 = vld [vmem:[%s21] sm:$0xff]
  %s23 = scalar_lea.vmem %s1, 240
  %24 = vst [vmem:[%s23] sm:$0xff] %v22
  %s25 = scalar_lea.vmem %s0, 304
  %v26 = vld [vmem:[%s25] sm:$0xff]
  %s27 = scalar_lea.vmem %s1, 288
  %28 = vst [vmem:[%s27] sm:$0xff] %v26
  %s29 = scalar_lea.vmem %s0, 352
  %v30 = vld [vmem:[%s29] sm:$0xff]
  %s31 = scalar_lea.vmem %s1, 336
  %32 = vst [vmem:[%s31] sm:$0xff] %v30
  %s33 = scalar_lea.vmem %s0, 40
  %v34 = vld [vmem:[%s33] sm:$0xff]
  %s35 = scalar_lea.vmem %s1, 24
  %36 = vst [vmem:[%s35] sm:$0xff] %v34
  %s37 = scalar_lea.vmem %s0, 88
  %v38 = vld [vmem:[%s37] sm:$0xff]
  %s39 = scalar_lea.vmem %s1, 72
  %40 = vst [vmem:[%s39] sm:$0xff] %v38
  %s41 = scalar_lea.vmem %s0, 136
  %v42 = vld [vmem:[%s41] sm:$0xff]
  %s43 = scalar_lea.vmem %s1, 120
  %44 = vst [vmem:[%s43] sm:$0xff] %v42
  %s45 = scalar_lea.vmem %s0, 184
  %v46 = vld [vmem:[%s45] sm:$0xff]
  %s47 = scalar_lea.vmem %s1, 168
  %48 = vst [vmem:[%s47] sm:$0xff] %v46
  %s49 = scalar_lea.vmem %s0, 232
  %v50 = vld [vmem:[%s49] sm:$0xff]
  %s51 = scalar_lea.vmem %s1, 216
  %52 = vst [vmem:[%s51] sm:$0xff] %v50
  %s53 = scalar_lea.vmem %s0, 280
  %v54 = vld [vmem:[%s53] sm:$0xff]
  %s55 = scalar_lea.vmem %s1, 264
  %56 = vst [vmem:[%s55] sm:$0xff] %v54
  %s57 = scalar_lea.vmem %s0, 328
  %v58 = vld [vmem:[%s57] sm:$0xff]
  %s59 = scalar_lea.vmem %s1, 312
  %60 = vst [vmem:[%s59] sm:$0xff] %v58
  %s61 = scalar_lea.vmem %s0, 376
  %v62 = vld [vmem:[%s61] sm:$0xff]
  %s63 = scalar_lea.vmem %s1, 360
  %64 = vst [vmem:[%s63] sm:$0xff] %v62
  %s65 = scalar_lea.vmem %s0, 8
  %v66 = vld [vmem:[%s65] sm:$0xff]
  %s67 = scalar_lea.vmem %s1, 8
  %68 = vst [vmem:[%s67] sm:$0xff] %v66
  %s69 = scalar_lea.vmem %s0, 56
  %v70 = vld [vmem:[%s69] sm:$0xff]
  %s71 = scalar_lea.vmem %s1, 56
  %72 = vst [vmem:[%s71] sm:$0xff] %v70
  %s73 = scalar_lea.vmem %s0, 104
  %v74 = vld [vmem:[%s73] sm:$0xff]
  %s75 = scalar_lea.vmem %s1, 104
  %76 = vst [vmem:[%s75] sm:$0xff] %v74
  %s77 = scalar_lea.vmem %s0, 152
  %v78 = vld [vmem:[%s77] sm:$0xff]
  %s79 = scalar_lea.vmem %s1, 152
  %80 = vst [vmem:[%s79] sm:$0xff] %v78
  %s81 = scalar_lea.vmem %s0, 200
  %v82 = vld [vmem:[%s81] sm:$0xff]
  %s83 = scalar_lea.vmem %s1, 200
  %84 = vst [vmem:[%s83] sm:$0xff] %v82
  %s85 = scalar_lea.vmem %s0, 248
  %v86 = vld [vmem:[%s85] sm:$0xff]
  %s87 = scalar_lea.vmem %s1, 248
  %88 = vst [vmem:[%s87] sm:$0xff] %v86
  %s89 = scalar_lea.vmem %s0, 296
  %v90 = vld [vmem:[%s89] sm:$0xff]
  %s91 = scalar_lea.vmem %s1, 296
  %92 = vst [vmem:[%s91] sm:$0xff] %v90
  %s93 = scalar_lea.vmem %s0, 344
  %v94 = vld [vmem:[%s93] sm:$0xff]
  %s95 = scalar_lea.vmem %s1, 344
  %96 = vst [vmem:[%s95] sm:$0xff] %v94
  %s97 = scalar_lea.vmem %s0, 32
  %v98 = vld [vmem:[%s97] sm:$0xff]
  %s99 = scalar_lea.vmem %s1, 32
  %100 = vst [vmem:[%s99] sm:$0xff] %v98
  %s101 = scalar_lea.vmem %s0, 80
  %v102 = vld [vmem:[%s101] sm:$0xff]
  %s103 = scalar_lea.vmem %s1, 80
  %104 = vst [vmem:[%s103] sm:$0xff] %v102
  %s105 = scalar_lea.vmem %s0, 128
  %v106 = vld [vmem:[%s105] sm:$0xff]
  %s107 = scalar_lea.vmem %s1, 128
  %108 = vst [vmem:[%s107] sm:$0xff] %v106
  %s109 = scalar_lea.vmem %s0, 176
  %v110 = vld [vmem:[%s109] sm:$0xff]
  %s111 = scalar_lea.vmem %s1, 176
  %112 = vst [vmem:[%s111] sm:$0xff] %v110
  %s113 = scalar_lea.vmem %s0, 224
  %v114 = vld [vmem:[%s113] sm:$0xff]
  %s115 = scalar_lea.vmem %s1, 224
  %116 = vst [vmem:[%s115] sm:$0xff] %v114
  %s117 = scalar_lea.vmem %s0, 272
  %v118 = vld [vmem:[%s117] sm:$0xff]
  %s119 = scalar_lea.vmem %s1, 272
  %120 = vst [vmem:[%s119] sm:$0xff] %v118
  %s121 = scalar_lea.vmem %s0, 320
  %v122 = vld [vmem:[%s121] sm:$0xff]
  %s123 = scalar_lea.vmem %s1, 320
  %124 = vst [vmem:[%s123] sm:$0xff] %v122
  %s125 = scalar_lea.vmem %s0, 368
  %v126 = vld [vmem:[%s125] sm:$0xff]
  %s127 = scalar_lea.vmem %s1, 368
  %128 = vst [vmem:[%s127] sm:$0xff] %v126
  %v129 = vld [vmem:[%s0] sm:$0xff]
  %s130 = scalar_lea.vmem %s1, 16
  %131 = vst [vmem:[%s130] sm:$0xff] %v129
  %s132 = scalar_lea.vmem %s0, 48
  %v133 = vld [vmem:[%s132] sm:$0xff]
  %s134 = scalar_lea.vmem %s1, 64
  %135 = vst [vmem:[%s134] sm:$0xff] %v133
  %s136 = scalar_lea.vmem %s0, 96
  %v137 = vld [vmem:[%s136] sm:$0xff]
  %s138 = scalar_lea.vmem %s1, 112
  %139 = vst [vmem:[%s138] sm:$0xff] %v137
  %s140 = scalar_lea.vmem %s0, 144
  %v141 = vld [vmem:[%s140] sm:$0xff]
  %s142 = scalar_lea.vmem %s1, 160
  %143 = vst [vmem:[%s142] sm:$0xff] %v141
  %s144 = scalar_lea.vmem %s0, 192
  %v145 = vld [vmem:[%s144] sm:$0xff]
  %s146 = scalar_lea.vmem %s1, 208
  %147 = vst [vmem:[%s146] sm:$0xff] %v145
  %s148 = scalar_lea.vmem %s0, 240
  %v149 = vld [vmem:[%s148] sm:$0xff]
  %s150 = scalar_lea.vmem %s1, 256
  %151 = vst [vmem:[%s150] sm:$0xff] %v149
  %s152 = scalar_lea.vmem %s0, 288
  %v153 = vld [vmem:[%s152] sm:$0xff]
  %s154 = scalar_lea.vmem %s1, 304
  %155 = vst [vmem:[%s154] sm:$0xff] %v153
  %s156 = scalar_lea.vmem %s0, 336
  %v157 = vld [vmem:[%s156] sm:$0xff]
  %s158 = scalar_lea.vmem %s1, 352
  %159 = vst [vmem:[%s158] sm:$0xff] %v157
  %s160 = scalar_lea.vmem %s0, 24
  %v161 = vld [vmem:[%s160] sm:$0xff]
  %s162 = scalar_lea.vmem %s1, 40
  %163 = vst [vmem:[%s162] sm:$0xff] %v161
  %s164 = scalar_lea.vmem %s0, 72
  %v165 = vld [vmem:[%s164] sm:$0xff]
  %s166 = scalar_lea.vmem %s1, 88
  %167 = vst [vmem:[%s166] sm:$0xff] %v165
  %s168 = scalar_lea.vmem %s0, 120
  %v169 = vld [vmem:[%s168] sm:$0xff]
  %s170 = scalar_lea.vmem %s1, 136
  %171 = vst [vmem:[%s170] sm:$0xff] %v169
  %s172 = scalar_lea.vmem %s0, 168
  %v173 = vld [vmem:[%s172] sm:$0xff]
  %s174 = scalar_lea.vmem %s1, 184
  %175 = vst [vmem:[%s174] sm:$0xff] %v173
  %s176 = scalar_lea.vmem %s0, 216
  %v177 = vld [vmem:[%s176] sm:$0xff]
  %s178 = scalar_lea.vmem %s1, 232
  %179 = vst [vmem:[%s178] sm:$0xff] %v177
  %s180 = scalar_lea.vmem %s0, 264
  %v181 = vld [vmem:[%s180] sm:$0xff]
  %s182 = scalar_lea.vmem %s1, 280
  %183 = vst [vmem:[%s182] sm:$0xff] %v181
  %s184 = scalar_lea.vmem %s0, 312
  %v185 = vld [vmem:[%s184] sm:$0xff]
  %s186 = scalar_lea.vmem %s1, 328
  %187 = vst [vmem:[%s186] sm:$0xff] %v185
  %s188 = scalar_lea.vmem %s0, 360
  %v189 = vld [vmem:[%s188] sm:$0xff]
  %s190 = scalar_lea.vmem %s1, 376
  %191 = vst [vmem:[%s190] sm:$0xff] %v189

// kernel: simple_block2d_forward.16
$region0: #{simple_block2d_forward.16}
  #allocation0 [shape = 'u32[]', space=smem, size = 0x4, offset = 0x4, fixed_abs, tag = 'smem constant byte address 0x4 - core index']
  #allocation1 [shape = 'u32[144,128]{1,0:T(1,128)}', space=vmem, size = 0x12000, scoped, tag = 'internal scratch']
  %s0 = inlined_call_operand.vmem [shape: f32[8,1024], index: 0, kind: input, shape index: {}]
  %s1 = inlined_call_operand.vmem [shape: f32[8,1024], index: 1, kind: input, shape index: {}]
  %s2 = inlined_call_operand.vmem [shape: f32[8,8], index: 2, kind: input, shape index: {}]
  %s3 = inlined_call_operand.vmem [shape: f32[8,1], index: 3, kind: input, shape index: {}]
  %s4 = inlined_call_operand.vmem [shape: f32[8,1024], index: 4, kind: output, shape index: {0}]
  %s5 = inlined_call_operand.vmem [shape: f32[1,8,2], index: 5, kind: output, shape index: {1}]
  %6 = xla_tuple %s4, %s5
  %s7 = sld [smem:[#allocation0]]
  $region34: #{simple_block2d_forward.16} parent=0
    _
  %s9 = ssub.s32 1, %s7
  %s10 = scalar_select 0, %s9, %s7
  // Predicated region
  $region2: #{simple_block2d_forward.16} parent=0 // pred_check
    _
  $region3: #{simple_block2d_forward.16} parent=0 // pred_check_branch
    %12 = sbr.rel (0) target = $region5
  $region4: #{simple_block2d_forward.16} parent=0 // pred_region
    _
  $region5: #{simple_block2d_forward.16} parent=0 // pred_fallthru
    _
  // Predicated region
  $region6: #{simple_block2d_forward.16} parent=0 // pred_check
    _
  $region7: #{simple_block2d_forward.16} parent=0 // pred_check_branch
    %14 = sbr.rel (0) target = $region9
  $region8: #{simple_block2d_forward.16} parent=0 // pred_region
    _
  $region9: #{simple_block2d_forward.16} parent=0 // pred_fallthru
    _
  // Predicated region
  $region10: #{simple_block2d_forward.16} parent=0 // pred_check
    _
  $region11: #{simple_block2d_forward.16} parent=0 // pred_check_branch
    %16 = sbr.rel (0) target = $region13
  $region12: #{simple_block2d_forward.16} parent=0 // pred_region
    _
  $region13: #{simple_block2d_forward.16} parent=0 // pred_fallthru
    _
  // Predicated region
  $region14: #{simple_block2d_forward.16} parent=0 // pred_check
    _
  $region15: #{simple_block2d_forward.16} parent=0 // pred_check_branch
    %18 = sbr.rel (0) target = $region17
  $region16: #{simple_block2d_forward.16} parent=0 // pred_region
    _
  $region17: #{simple_block2d_forward.16} parent=0 // pred_fallthru
    _
  %v19 = vld [vmem:[%s2] sm:$0xff]
  %v20 = vld [vmem:[%s1] sm:$0xff]
  %v21 = vld [vmem:[%s1 + $0x8] sm:$0xff]
  %v22 = vld [vmem:[%s1 + $0x10] sm:$0xff]
  %v23 = vld [vmem:[%s1 + $0x18] sm:$0xff]
  %v24 = vld [vmem:[%s1 + $0x20] sm:$0xff]
  %v25 = vld [vmem:[%s1 + $0x28] sm:$0xff]
  %v26 = vld [vmem:[%s1 + $0x30] sm:$0xff]
  %v27 = vld [vmem:[%s1 + $0x38] sm:$0xff]
  %v28 = vld [vmem:[%s3] sm:$0xff]
  %30 = vset.pattern.permute.xlu0 0
  %31 = vperm.xlu0 %30, %v28
  %v32 = vpop.permute.xlu0 %31
  %vm34 = vcmask 64512
  %v36 = vsel %vm34, %v19, 0
  %38 = vmatprep.subr.mxu0 %v21
  %39 = vmatpush1.msra.mxu0 %v20
  %40 = vmatprep.subr.mxu0 0.0
  %41 = vmatpush1.msra.mxu0 0.0
  %42 = vmatprep.subr.mxu0 0.0
  %43 = vmatpush1.msra.mxu0 0.0
  %44 = vmatprep.subr.mxu0 0.0
  %45 = vmatpush1.msra.mxu0 0.0
  %46 = vmatprep.subr.mxu0 0.0
  %47 = vmatpush1.msra.mxu0 0.0
  %48 = vmatprep.subr.mxu0 0.0
  %49 = vmatpush1.msra.mxu0 0.0
  %50 = vmatprep.subr.mxu0 0.0
  %51 = vmatpush1.msra.mxu0 0.0
  %52 = vmatprep.subr.mxu0 0.0
  %53 = vmatpush1.msra.mxu0 0.0
  %54 = vmatprep.subr.mxu0 0.0
  %55 = vmatpush1.msra.mxu0 0.0
  %56 = vmatprep.subr.mxu0 0.0
  %57 = vmatpush1.msra.mxu0 0.0
  %58 = vmatprep.subr.mxu0 0.0
  %59 = vmatpush1.msra.mxu0 0.0
  %60 = vmatprep.subr.mxu0 0.0
  %61 = vmatpush1.msra.mxu0 0.0
  %62 = vmatprep.subr.mxu0 0.0
  %63 = vmatpush1.msra.mxu0 0.0
  %64 = vmatprep.subr.mxu0 0.0
  %65 = vmatpush1.msra.mxu0 0.0
  %66 = vmatprep.subr.mxu0 0.0
  %67 = vmatpush1.msra.mxu0 0.0
  %68 = vmatprep.subr.mxu0 0.0
  %69 = vmatpush1.msra.mxu0 0.0
  %70 = vmatprep.subr.mxu0 0.0
  %71 = vmatpush1.msra.mxu0 0.0
  %72 = vmatprep.subr.mxu0 0.0
  %73 = vmatpush1.msra.mxu0 0.0
  %74 = vmatprep.subr.mxu0 0.0
  %75 = vmatpush1.msra.mxu0 0.0
  %76 = vmatprep.subr.mxu0 0.0
  %77 = vmatpush1.msra.mxu0 0.0
  %78 = vmatprep.subr.mxu0 0.0
  %79 = vmatpush1.msra.mxu0 0.0
  %80 = vmatprep.subr.mxu0 0.0
  %81 = vmatpush1.msra.mxu0 0.0
  %82 = vmatprep.subr.mxu0 0.0
  %83 = vmatpush1.msra.mxu0 0.0
  %84 = vmatprep.subr.mxu0 0.0
  %85 = vmatpush1.msra.mxu0 0.0
  %86 = vmatprep.subr.mxu0 0.0
  %87 = vmatpush1.msra.mxu0 0.0
  %88 = vmatprep.subr.mxu0 0.0
  %89 = vmatpush1.msra.mxu0 0.0
  %90 = vmatprep.subr.mxu0 0.0
  %91 = vmatpush1.msra.mxu0 0.0
  %92 = vmatprep.subr.mxu0 0.0
  %93 = vmatpush1.msra.mxu0 0.0
  %94 = vmatprep.subr.mxu0 0.0
  %95 = vmatpush1.msra.mxu0 0.0
  %96 = vmatprep.subr.mxu0 0.0
  %97 = vmatpush1.msra.mxu0 0.0
  %98 = vmatprep.subr.mxu0 0.0
  %99 = vmatpush1.msra.mxu0 0.0
  %100 = vmatprep.subr.mxu0 0.0
  %101 = vmatpush1.msra.mxu0 0.0
  %102 = vmatprep.mubr.f32.mxu0 0.0
  %103 = vmatmul.mubr.f32.gmra.mrb[0].mxu0 %v36
  %v104 = vpop.f32.mrb[0].mxu0
  %v105 = vadd.f32 %v32, %v104
  %v106 = vpop.f32.mrb[0].mxu0
  %v107 = vadd.f32 %v32, %v106
  %108 = vdwg.mxu0
  %109 = vmatprep.subr.mxu0 %v23
  %110 = vmatpush1.msra.mxu0 %v22
  %111 = vmatprep.subr.mxu0 0.0
  %112 = vmatpush1.msra.mxu0 0.0
  %113 = vmatprep.subr.mxu0 0.0
  %114 = vmatpush1.msra.mxu0 0.0
  %115 = vmatprep.subr.mxu0 0.0
  %116 = vmatpush1.msra.mxu0 0.0
  %117 = vmatprep.subr.mxu0 0.0
  %118 = vmatpush1.msra.mxu0 0.0
  %119 = vmatprep.subr.mxu0 0.0
  %120 = vmatpush1.msra.mxu0 0.0
  %121 = vmatprep.subr.mxu0 0.0
  %122 = vmatpush1.msra.mxu0 0.0
  %123 = vmatprep.subr.mxu0 0.0
  %124 = vmatpush1.msra.mxu0 0.0
  %125 = vmatprep.subr.mxu0 0.0
  %126 = vmatpush1.msra.mxu0 0.0
  %127 = vmatprep.subr.mxu0 0.0
  %128 = vmatpush1.msra.mxu0 0.0
  %129 = vmatprep.subr.mxu0 0.0
  %130 = vmatpush1.msra.mxu0 0.0
  %131 = vmatprep.subr.mxu0 0.0
  %132 = vmatpush1.msra.mxu0 0.0
  %133 = vmatprep.subr.mxu0 0.0
  %134 = vmatpush1.msra.mxu0 0.0
  %135 = vmatprep.subr.mxu0 0.0
  %136 = vmatpush1.msra.mxu0 0.0
  %137 = vmatprep.subr.mxu0 0.0
  %138 = vmatpush1.msra.mxu0 0.0
  %139 = vmatprep.subr.mxu0 0.0
  %140 = vmatpush1.msra.mxu0 0.0
  %141 = vmatprep.subr.mxu0 0.0
  %142 = vmatpush1.msra.mxu0 0.0
  %143 = vmatprep.subr.mxu0 0.0
  %144 = vmatpush1.msra.mxu0 0.0
  %145 = vmatprep.subr.mxu0 0.0
  %146 = vmatpush1.msra.mxu0 0.0
  %147 = vmatprep.subr.mxu0 0.0
  %148 = vmatpush1.msra.mxu0 0.0
  %149 = vmatprep.subr.mxu0 0.0
  %150 = vmatpush1.msra.mxu0 0.0
  %151 = vmatprep.subr.mxu0 0.0
  %152 = vmatpush1.msra.mxu0 0.0
  %153 = vmatprep.subr.mxu0 0.0
  %154 = vmatpush1.msra.mxu0 0.0
  %155 = vmatprep.subr.mxu0 0.0
  %156 = vmatpush1.msra.mxu0 0.0
  %157 = vmatprep.subr.mxu0 0.0
  %158 = vmatpush1.msra.mxu0 0.0
  %159 = vmatprep.subr.mxu0 0.0
  %160 = vmatpush1.msra.mxu0 0.0
  %161 = vmatprep.subr.mxu0 0.0
  %162 = vmatpush1.msra.mxu0 0.0
  %163 = vmatprep.subr.mxu0 0.0
  %164 = vmatpush1.msra.mxu0 0.0
  %165 = vmatprep.subr.mxu0 0.0
  %166 = vmatpush1.msra.mxu0 0.0
  %167 = vmatprep.subr.mxu0 0.0
  %168 = vmatpush1.msra.mxu0 0.0
  %169 = vmatprep.subr.mxu0 0.0
  %170 = vmatpush1.msra.mxu0 0.0
  %171 = vmatprep.subr.mxu0 0.0
  %172 = vmatpush1.msra.mxu0 0.0
  %173 = vmatprep.mubr.f32.mxu0 0.0
  %174 = vmatmul.mubr.f32.gmra.mrb[0].mxu0 %v36
  %v175 = vpop.f32.mrb[0].mxu0
  %v176 = vadd.f32 %v32, %v175
  %v177 = vpop.f32.mrb[0].mxu0
  %v178 = vadd.f32 %v32, %v177
  %179 = vdwg.mxu0
  %180 = vmatprep.subr.mxu0 %v25
  %181 = vmatpush1.msra.mxu0 %v24
  %182 = vmatprep.subr.mxu0 0.0
  %183 = vmatpush1.msra.mxu0 0.0
  %184 = vmatprep.subr.mxu0 0.0
  %185 = vmatpush1.msra.mxu0 0.0
  %186 = vmatprep.subr.mxu0 0.0
  %187 = vmatpush1.msra.mxu0 0.0
  %188 = vmatprep.subr.mxu0 0.0
  %189 = vmatpush1.msra.mxu0 0.0
  %190 = vmatprep.subr.mxu0 0.0
  %191 = vmatpush1.msra.mxu0 0.0
  %192 = vmatprep.subr.mxu0 0.0
  %193 = vmatpush1.msra.mxu0 0.0
  %194 = vmatprep.subr.mxu0 0.0
  %195 = vmatpush1.msra.mxu0 0.0
  %196 = vmatprep.subr.mxu0 0.0
  %197 = vmatpush1.msra.mxu0 0.0
  %198 = vmatprep.subr.mxu0 0.0
  %199 = vmatpush1.msra.mxu0 0.0
  %200 = vmatprep.subr.mxu0 0.0
  %201 = vmatpush1.msra.mxu0 0.0
  %202 = vmatprep.subr.mxu0 0.0
  %203 = vmatpush1.msra.mxu0 0.0
  %204 = vmatprep.subr.mxu0 0.0
  %205 = vmatpush1.msra.mxu0 0.0
  %206 = vmatprep.subr.mxu0 0.0
  %207 = vmatpush1.msra.mxu0 0.0
  %208 = vmatprep.subr.mxu0 0.0
  %209 = vmatpush1.msra.mxu0 0.0
  %210 = vmatprep.subr.mxu0 0.0
  %211 = vmatpush1.msra.mxu0 0.0
  %212 = vmatprep.subr.mxu0 0.0
  %213 = vmatpush1.msra.mxu0 0.0
  %214 = vmatprep.subr.mxu0 0.0
  %215 = vmatpush1.msra.mxu0 0.0
  %216 = vmatprep.subr.mxu0 0.0
  %217 = vmatpush1.msra.mxu0 0.0
  %218 = vmatprep.subr.mxu0 0.0
  %219 = vmatpush1.msra.mxu0 0.0
  %220 = vmatprep.subr.mxu0 0.0
  %221 = vmatpush1.msra.mxu0 0.0
  %222 = vmatprep.subr.mxu0 0.0
  %223 = vmatpush1.msra.mxu0 0.0
  %224 = vmatprep.subr.mxu0 0.0
  %225 = vmatpush1.msra.mxu0 0.0
  %226 = vmatprep.subr.mxu0 0.0
  %227 = vmatpush1.msra.mxu0 0.0
  %228 = vmatprep.subr.mxu0 0.0
  %229 = vmatpush1.msra.mxu0 0.0
  %230 = vmatprep.subr.mxu0 0.0
  %231 = vmatpush1.msra.mxu0 0.0
  %232 = vmatprep.subr.mxu0 0.0
  %233 = vmatpush1.msra.mxu0 0.0
  %234 = vmatprep.subr.mxu0 0.0
  %235 = vmatpush1.msra.mxu0 0.0
  %236 = vmatprep.subr.mxu0 0.0
  %237 = vmatpush1.msra.mxu0 0.0
  %238 = vmatprep.subr.mxu0 0.0
  %239 = vmatpush1.msra.mxu0 0.0
  %240 = vmatprep.subr.mxu0 0.0
  %241 = vmatpush1.msra.mxu0 0.0
  %242 = vmatprep.subr.mxu0 0.0
  %243 = vmatpush1.msra.mxu0 0.0
  %244 = vmatprep.mubr.f32.mxu0 0.0
  %245 = vmatmul.mubr.f32.gmra.mrb[0].mxu0 %v36
  %v246 = vpop.f32.mrb[0].mxu0
  %v247 = vadd.f32 %v32, %v246
  %v248 = vpop.f32.mrb[0].mxu0
  %v249 = vadd.f32 %v32, %v248
  %250 = vdwg.mxu0
  %251 = vmatprep.subr.mxu0 %v27
  %252 = vmatpush1.msra.mxu0 %v26
  %253 = vmatprep.subr.mxu0 0.0
  %254 = vmatpush1.msra.mxu0 0.0
  %255 = vmatprep.subr.mxu0 0.0
  %256 = vmatpush1.msra.mxu0 0.0
  %257 = vmatprep.subr.mxu0 0.0
  %258 = vmatpush1.msra.mxu0 0.0
  %259 = vmatprep.subr.mxu0 0.0
  %260 = vmatpush1.msra.mxu0 0.0
  %261 = vmatprep.subr.mxu0 0.0
  %262 = vmatpush1.msra.mxu0 0.0
  %263 = vmatprep.subr.mxu0 0.0
  %264 = vmatpush1.msra.mxu0 0.0
  %265 = vmatprep.subr.mxu0 0.0
  %266 = vmatpush1.msra.mxu0 0.0
  %267 = vmatprep.subr.mxu0 0.0
  %268 = vmatpush1.msra.mxu0 0.0
  %269 = vmatprep.subr.mxu0 0.0
  %270 = vmatpush1.msra.mxu0 0.0
  %271 = vmatprep.subr.mxu0 0.0
  %272 = vmatpush1.msra.mxu0 0.0
  %273 = vmatprep.subr.mxu0 0.0
  %274 = vmatpush1.msra.mxu0 0.0
  %275 = vmatprep.subr.mxu0 0.0
  %276 = vmatpush1.msra.mxu0 0.0
  %277 = vmatprep.subr.mxu0 0.0
  %278 = vmatpush1.msra.mxu0 0.0
  %279 = vmatprep.subr.mxu0 0.0
  %280 = vmatpush1.msra.mxu0 0.0
  %281 = vmatprep.subr.mxu0 0.0
  %282 = vmatpush1.msra.mxu0 0.0
  %283 = vmatprep.subr.mxu0 0.0
  %284 = vmatpush1.msra.mxu0 0.0
  %285 = vmatprep.subr.mxu0 0.0
  %286 = vmatpush1.msra.mxu0 0.0
  %287 = vmatprep.subr.mxu0 0.0
  %288 = vmatpush1.msra.mxu0 0.0
  %289 = vmatprep.subr.mxu0 0.0
  %290 = vmatpush1.msra.mxu0 0.0
  %291 = vmatprep.subr.mxu0 0.0
  %292 = vmatpush1.msra.mxu0 0.0
  %293 = vmatprep.subr.mxu0 0.0
  %294 = vmatpush1.msra.mxu0 0.0
  %295 = vmatprep.subr.mxu0 0.0
  %296 = vmatpush1.msra.mxu0 0.0
  %297 = vmatprep.subr.mxu0 0.0
  %298 = vmatpush1.msra.mxu0 0.0
  %299 = vmatprep.subr.mxu0 0.0
  %300 = vmatpush1.msra.mxu0 0.0
  %301 = vmatprep.subr.mxu0 0.0
  %302 = vmatpush1.msra.mxu0 0.0
  %303 = vmatprep.subr.mxu0 0.0
  %304 = vmatpush1.msra.mxu0 0.0
  %305 = vmatprep.subr.mxu0 0.0
  %306 = vmatpush1.msra.mxu0 0.0
  %307 = vmatprep.subr.mxu0 0.0
  %308 = vmatpush1.msra.mxu0 0.0
  %309 = vmatprep.subr.mxu0 0.0
  %310 = vmatpush1.msra.mxu0 0.0
  %311 = vmatprep.subr.mxu0 0.0
  %312 = vmatpush1.msra.mxu0 0.0
  %313 = vmatprep.subr.mxu0 0.0
  %314 = vmatpush1.msra.mxu0 0.0
  %315 = vmatprep.mubr.f32.mxu0 0.0
  %316 = vmatmul.mubr.f32.gmra.mrb[0].mxu0 %v36
  %v317 = vpop.f32.mrb[0].mxu0
  %v318 = vadd.f32 %v32, %v317
  %v319 = vpop.f32.mrb[0].mxu0
  %v320 = vadd.f32 %v32, %v319
  %321 = vdwg.mxu0
  %v322 = vld [vmem:[%s0] sm:$0xff]
  %v323 = vld [vmem:[%s0 + $0x8] sm:$0xff]
  %v324 = vld [vmem:[%s0 + $0x10] sm:$0xff]
  %v325 = vld [vmem:[%s0 + $0x18] sm:$0xff]
  %v326 = vld [vmem:[%s0 + $0x20] sm:$0xff]
  %v327 = vld [vmem:[%s0 + $0x28] sm:$0xff]
  %v328 = vld [vmem:[%s0 + $0x30] sm:$0xff]
  %v329 = vld [vmem:[%s0 + $0x38] sm:$0xff]
  %v330 = vadd.f32 %v322, %v105
  %v331 = vadd.f32 %v323, %v107
  %v332 = vadd.f32 %v324, %v176
  %v333 = vadd.f32 %v325, %v178
  %v334 = vadd.f32 %v326, %v247
  %v335 = vadd.f32 %v327, %v249
  %v336 = vadd.f32 %v328, %v318
  %v337 = vadd.f32 %v329, %v320
  %338 = vst [vmem:[%s4] sm:$0xff] %v330
  %339 = vst [vmem:[%s4 + $0x8] sm:$0xff] %v331
  %340 = vst [vmem:[%s4 + $0x10] sm:$0xff] %v332
  %341 = vst [vmem:[%s4 + $0x18] sm:$0xff] %v333
  %342 = vst [vmem:[%s4 + $0x20] sm:$0xff] %v334
  %343 = vst [vmem:[%s4 + $0x28] sm:$0xff] %v335
  %344 = vst [vmem:[%s4 + $0x30] sm:$0xff] %v336
  %345 = vst [vmem:[%s4 + $0x38] sm:$0xff] %v337
  %v346 = vadd.f32 %v330, %v331
  %v347 = vadd.f32 %v346, %v332
  %v348 = vadd.f32 %v347, %v333
  %v349 = vadd.f32 %v348, %v334
  %v350 = vadd.f32 %v349, %v335
  %v351 = vadd.f32 %v350, %v336
  %v352 = vadd.f32 %v351, %v337
  %353 = vadd.xlane.f32.xlu0 %v352
  %v354 = vpop.xlane.xlu0 %353
  %vm355 = vcmask 7168
  %356 = vst.msk [vmem:[%s5] sm:$0xff] %vm355, %v354
  %v357 = vmul.f32 %v330, %v330
  %v358 = vmul.f32 %v331, %v331
  %v359 = vmul.f32 %v332, %v332
  %v360 = vmul.f32 %v333, %v333
  %v361 = vmul.f32 %v334, %v334
  %v362 = vmul.f32 %v335, %v335
  %v363 = vmul.f32 %v336, %v336
  %v364 = vmul.f32 %v337, %v337
  %v365 = vadd.f32 %v357, %v358
  %v366 = vadd.f32 %v365, %v359
  %v367 = vadd.f32 %v366, %v360
  %v368 = vadd.f32 %v367, %v361
  %v369 = vadd.f32 %v368, %v362
  %v370 = vadd.f32 %v369, %v363
  %v371 = vadd.f32 %v370, %v364
  %372 = vadd.xlane.f32.xlu0 %v371
  %v373 = vpop.xlane.xlu0 %372
  %vm374 = vcmask 15368
  %375 = vst.msk [vmem:[%s5] sm:$0xff] %vm374, %v373
  // Predicated region
  $region18: #{simple_block2d_forward.16} parent=0 // pred_check
    _
  $region19: #{simple_block2d_forward.16} parent=0 // pred_check_branch
    %377 = sbr.rel (0) target = $region21
  $region20: #{simple_block2d_forward.16} parent=0 // pred_region
    _
  $region21: #{simple_block2d_forward.16} parent=0 // pred_fallthru
    _
  // Predicated region
  $region22: #{simple_block2d_forward.16} parent=0 // pred_check
    _
  $region23: #{simple_block2d_forward.16} parent=0 // pred_check_branch
    %379 = sbr.rel (0) target = $region25
  $region24: #{simple_block2d_forward.16} parent=0 // pred_region
    _
  $region25: #{simple_block2d_forward.16} parent=0 // pred_fallthru
    _
  // Predicated region
  $region26: #{simple_block2d_forward.16} parent=0 // pred_check
    _
  $region27: #{simple_block2d_forward.16} parent=0 // pred_check_branch
    %381 = sbr.rel (0) target = $region29
  $region28: #{simple_block2d_forward.16} parent=0 // pred_region
    _
  $region29: #{simple_block2d_forward.16} parent=0 // pred_fallthru
    _
  // Predicated region
  $region30: #{simple_block2d_forward.16} parent=0 // pred_check
    _
  $region31: #{simple_block2d_forward.16} parent=0 // pred_check_branch
    %383 = sbr.rel (0) target = $region33
  $region32: #{simple_block2d_forward.16} parent=0 // pred_region
    _
  $region33: #{simple_block2d_forward.16} parent=0 // pred_fallthru
    _

// kernel: simple_block2d_forward.17
$region0: #{simple_block2d_forward.17}
  #allocation0 [shape = 'u32[]', space=smem, size = 0x4, offset = 0x4, fixed_abs, tag = 'smem constant byte address 0x4 - core index']
  #allocation1 [shape = 'u32[144,128]{1,0:T(1,128)}', space=vmem, size = 0x12000, scoped, tag = 'internal scratch']
  %s0 = inlined_call_operand.vmem [shape: f32[8,1024], index: 0, kind: input, shape index: {}]
  %s1 = inlined_call_operand.vmem [shape: f32[8,1], index: 1, kind: input, shape index: {}]
  %s2 = inlined_call_operand.vmem [shape: f32[8,1], index: 2, kind: input, shape index: {}]
  %s3 = inlined_call_operand.vmem [shape: f32[8,1024], index: 3, kind: output, shape index: {}]
  %s4 = sld [smem:[#allocation0]]
  $region22: #{simple_block2d_forward.17} parent=0
    _
  %s6 = ssub.s32 1, %s4
  %s7 = scalar_select 0, %s6, %s4
  // Predicated region
  $region2: #{simple_block2d_forward.17} parent=0 // pred_check
    _
  $region3: #{simple_block2d_forward.17} parent=0 // pred_check_branch
    %9 = sbr.rel (0) target = $region5
  $region4: #{simple_block2d_forward.17} parent=0 // pred_region
    _
  $region5: #{simple_block2d_forward.17} parent=0 // pred_fallthru
    _
  // Predicated region
  $region6: #{simple_block2d_forward.17} parent=0 // pred_check
    _
  $region7: #{simple_block2d_forward.17} parent=0 // pred_check_branch
    %11 = sbr.rel (0) target = $region9
  $region8: #{simple_block2d_forward.17} parent=0 // pred_region
    _
  $region9: #{simple_block2d_forward.17} parent=0 // pred_fallthru
    _
  // Predicated region
  $region10: #{simple_block2d_forward.17} parent=0 // pred_check
    _
  $region11: #{simple_block2d_forward.17} parent=0 // pred_check_branch
    %13 = sbr.rel (0) target = $region13
  $region12: #{simple_block2d_forward.17} parent=0 // pred_region
    _
  $region13: #{simple_block2d_forward.17} parent=0 // pred_fallthru
    _
  %v14 = vld [vmem:[%s0] sm:$0xff]
  %v15 = vld [vmem:[%s0 + $0x8] sm:$0xff]
  %v16 = vld [vmem:[%s0 + $0x10] sm:$0xff]
  %v17 = vld [vmem:[%s0 + $0x18] sm:$0xff]
  %v18 = vld [vmem:[%s0 + $0x20] sm:$0xff]
  %v19 = vld [vmem:[%s0 + $0x28] sm:$0xff]
  %v20 = vld [vmem:[%s0 + $0x30] sm:$0xff]
  %v21 = vld [vmem:[%s0 + $0x38] sm:$0xff]
  %v22 = vld [vmem:[%s1] sm:$0xff]
  %24 = vset.pattern.permute.xlu0 0
  %25 = vperm.xlu0 %24, %v22
  %v26 = vpop.permute.xlu0 %25
  %v28 = vsub.f32 %v14, %v26
  %v29 = vsub.f32 %v15, %v26
  %v30 = vsub.f32 %v16, %v26
  %v31 = vsub.f32 %v17, %v26
  %v32 = vsub.f32 %v18, %v26
  %v33 = vsub.f32 %v19, %v26
  %v34 = vsub.f32 %v20, %v26
  %v35 = vsub.f32 %v21, %v26
  %v36 = vld [vmem:[%s2] sm:$0xff]
  %38 = vset.pattern.permute.xlu0 0
  %39 = vperm.xlu0 %38, %v36
  %v40 = vpop.permute.xlu0 %39
  %v42 = vmul.f32 %v28, %v40
  %v43 = vmul.f32 %v29, %v40
  %v44 = vmul.f32 %v30, %v40
  %v45 = vmul.f32 %v31, %v40
  %v46 = vmul.f32 %v32, %v40
  %v47 = vmul.f32 %v33, %v40
  %v48 = vmul.f32 %v34, %v40
  %v49 = vmul.f32 %v35, %v40
  %v50 = vmax.f32 %v42, 0.0
  %v51 = vmax.f32 %v43, 0.0
  %v52 = vmax.f32 %v44, 0.0
  %v53 = vmax.f32 %v45, 0.0
  %v54 = vmax.f32 %v46, 0.0
  %v55 = vmax.f32 %v47, 0.0
  %v56 = vmax.f32 %v48, 0.0
  %v57 = vmax.f32 %v49, 0.0
  %58 = vst [vmem:[%s3] sm:$0xff] %v50
  %59 = vst [vmem:[%s3 + $0x8] sm:$0xff] %v51
  %60 = vst [vmem:[%s3 + $0x10] sm:$0xff] %v52
  %61 = vst [vmem:[%s3 + $0x18] sm:$0xff] %v53
  %62 = vst [vmem:[%s3 + $0x20] sm:$0xff] %v54
  %63 = vst [vmem:[%s3 + $0x28] sm:$0xff] %v55
  %64 = vst [vmem:[%s3 + $0x30] sm:$0xff] %v56
  %65 = vst [vmem:[%s3 + $0x38] sm:$0xff] %v57
  // Predicated region
  $region14: #{simple_block2d_forward.17} parent=0 // pred_check
    _
  $region15: #{simple_block2d_forward.17} parent=0 // pred_check_branch
    %67 = sbr.rel (0) target = $region17
  $region16: #{simple_block2d_forward.17} parent=0 // pred_region
    _
  $region17: #{simple_block2d_forward.17} parent=0 // pred_fallthru
    _
  // Predicated region
  $region18: #{simple_block2d_forward.17} parent=0 // pred_check
    _
  $region19: #{simple_block2d_forward.17} parent=0 // pred_check_branch
    %69 = sbr.rel (0) target = $region21
  $region20: #{simple_block2d_forward.17} parent=0 // pred_region
    _
  $region21: #{simple_block2d_forward.17} parent=0 // pred_fallthru
    _

// kernel: simple_block2d_forward.26
$region0: #{simple_block2d_forward.26}
  #allocation0 [shape = 'u32[]', space=smem, size = 0x4, offset = 0x4, fixed_abs, tag = 'smem constant byte address 0x4 - core index']
  #allocation1 [shape = 'u32[144,128]{1,0:T(1,128)}', space=vmem, size = 0x12000, scoped, tag = 'internal scratch']
  %s0 = inlined_call_operand.vmem [shape: f32[8,1024], index: 0, kind: input, shape index: {}]
  %s1 = inlined_call_operand.vmem [shape: f32[8,1], index: 1, kind: input, shape index: {}]
  %s2 = inlined_call_operand.vmem [shape: f32[8,1], index: 2, kind: input, shape index: {}]
  %s3 = inlined_call_operand.vmem [shape: f32[8,1024], index: 3, kind: output, shape index: {}]
  %s4 = sld [smem:[#allocation0]]
  $region22: #{simple_block2d_forward.26} parent=0
    _
  %s6 = ssub.s32 1, %s4
  %s7 = scalar_select 0, %s6, %s4
  // Predicated region
  $region2: #{simple_block2d_forward.26} parent=0 // pred_check
    _
  $region3: #{simple_block2d_forward.26} parent=0 // pred_check_branch
    %9 = sbr.rel (0) target = $region5
  $region4: #{simple_block2d_forward.26} parent=0 // pred_region
    _
  $region5: #{simple_block2d_forward.26} parent=0 // pred_fallthru
    _
  // Predicated region
  $region6: #{simple_block2d_forward.26} parent=0 // pred_check
    _
  $region7: #{simple_block2d_forward.26} parent=0 // pred_check_branch
    %11 = sbr.rel (0) target = $region9
  $region8: #{simple_block2d_forward.26} parent=0 // pred_region
    _
  $region9: #{simple_block2d_forward.26} parent=0 // pred_fallthru
    _
  // Predicated region
  $region10: #{simple_block2d_forward.26} parent=0 // pred_check
    _
  $region11: #{simple_block2d_forward.26} parent=0 // pred_check_branch
    %13 = sbr.rel (0) target = $region13
  $region12: #{simple_block2d_forward.26} parent=0 // pred_region
    _
  $region13: #{simple_block2d_forward.26} parent=0 // pred_fallthru
    _
  %v14 = vld [vmem:[%s0] sm:$0xff]
  %v15 = vld [vmem:[%s0 + $0x8] sm:$0xff]
  %v16 = vld [vmem:[%s0 + $0x10] sm:$0xff]
  %v17 = vld [vmem:[%s0 + $0x18] sm:$0xff]
  %v18 = vld [vmem:[%s0 + $0x20] sm:$0xff]
  %v19 = vld [vmem:[%s0 + $0x28] sm:$0xff]
  %v20 = vld [vmem:[%s0 + $0x30] sm:$0xff]
  %v21 = vld [vmem:[%s0 + $0x38] sm:$0xff]
  %v22 = vld [vmem:[%s1] sm:$0xff]
  %24 = vset.pattern.permute.xlu0 0
  %25 = vperm.xlu0 %24, %v22
  %v26 = vpop.permute.xlu0 %25
  %v28 = vsub.f32 %v14, %v26
  %v29 = vsub.f32 %v15, %v26
  %v30 = vsub.f32 %v16, %v26
  %v31 = vsub.f32 %v17, %v26
  %v32 = vsub.f32 %v18, %v26
  %v33 = vsub.f32 %v19, %v26
  %v34 = vsub.f32 %v20, %v26
  %v35 = vsub.f32 %v21, %v26
  %v36 = vld [vmem:[%s2] sm:$0xff]
  %38 = vset.pattern.permute.xlu0 0
  %39 = vperm.xlu0 %38, %v36
  %v40 = vpop.permute.xlu0 %39
  %v42 = vmul.f32 %v28, %v40
  %v43 = vmul.f32 %v29, %v40
  %v44 = vmul.f32 %v30, %v40
  %v45 = vmul.f32 %v31, %v40
  %v46 = vmul.f32 %v32, %v40
  %v47 = vmul.f32 %v33, %v40
  %v48 = vmul.f32 %v34, %v40
  %v49 = vmul.f32 %v35, %v40
  %50 = vst [vmem:[%s3] sm:$0xff] %v42
  %51 = vst [vmem:[%s3 + $0x8] sm:$0xff] %v43
  %52 = vst [vmem:[%s3 + $0x10] sm:$0xff] %v44
  %53 = vst [vmem:[%s3 + $0x18] sm:$0xff] %v45
  %54 = vst [vmem:[%s3 + $0x20] sm:$0xff] %v46
  %55 = vst [vmem:[%s3 + $0x28] sm:$0xff] %v47
  %56 = vst [vmem:[%s3 + $0x30] sm:$0xff] %v48
  %57 = vst [vmem:[%s3 + $0x38] sm:$0xff] %v49
  // Predicated region
  $region14: #{simple_block2d_forward.26} parent=0 // pred_check
    _
  $region15: #{simple_block2d_forward.26} parent=0 // pred_check_branch
    %59 = sbr.rel (0) target = $region17
  $region16: #{simple_block2d_forward.26} parent=0 // pred_region
    _
  $region17: #{simple_block2d_forward.26} parent=0 // pred_fallthru
    _
  // Predicated region
  $region18: #{simple_block2d_forward.26} parent=0 // pred_check
    _
  $region19: #{simple_block2d_forward.26} parent=0 // pred_check_branch
    %61 = sbr.rel (0) target = $region21
  $region20: #{simple_block2d_forward.26} parent=0 // pred_region
    _
  $region21: #{simple_block2d_forward.26} parent=0 // pred_fallthru
    _

// kernel: simple_block2d_forward.27
$region0: #{simple_block2d_forward.27}
  #allocation0 [shape = 'u32[]', space=smem, size = 0x4, offset = 0x4, fixed_abs, tag = 'smem constant byte address 0x4 - core index']
  #allocation1 [shape = 'u32[144,128]{1,0:T(1,128)}', space=vmem, size = 0x12000, scoped, tag = 'internal scratch']
  #allocation2 [shape = 'f32[1,1]{1,0:T(1,128)S(1)}', space=vmem, size = 0x200, scoped, tag = 'scoped memory for simple_block2d_forward.27']
  %s0 = inlined_call_operand.vmem [shape: f32[8,1024], index: 0, kind: input, shape index: {}]
  %s1 = inlined_call_operand.vmem [shape: f32[128,8], index: 1, kind: input, shape index: {}]
  %s2 = inlined_call_operand.vmem [shape: f32[128,1], index: 2, kind: input, shape index: {}]
  %s3 = inlined_call_operand.vmem [shape: f32[1,128], index: 3, kind: input, shape index: {}]
  %s4 = inlined_call_operand.<no memory space> [shape: f32[1,1], index: 4, kind: input, shape index: {}]
  %s5 = inlined_call_operand.vmem [shape: f32[1,1024], index: 5, kind: output, shape index: {}]
  %s6 = sld [smem:[#allocation0]]
  $region30: #{simple_block2d_forward.27} parent=0
    _
  %s8 = ssub.s32 1, %s6
  %s9 = scalar_select 0, %s8, %s6
  %v10 = vstv %s4
  %11 = vst [vmem:[#allocation2] sm:$0x1] %v10
  // Predicated region
  $region2: #{simple_block2d_forward.27} parent=0 // pred_check
    _
  $region3: #{simple_block2d_forward.27} parent=0 // pred_check_branch
    %13 = sbr.rel (0) target = $region5
  $region4: #{simple_block2d_forward.27} parent=0 // pred_region
    _
  $region5: #{simple_block2d_forward.27} parent=0 // pred_fallthru
    _
  // Predicated region
  $region6: #{simple_block2d_forward.27} parent=0 // pred_check
    _
  $region7: #{simple_block2d_forward.27} parent=0 // pred_check_branch
    %15 = sbr.rel (0) target = $region9
  $region8: #{simple_block2d_forward.27} parent=0 // pred_region
    _
  $region9: #{simple_block2d_forward.27} parent=0 // pred_fallthru
    _
  // Predicated region
  $region10: #{simple_block2d_forward.27} parent=0 // pred_check
    _
  $region11: #{simple_block2d_forward.27} parent=0 // pred_check_branch
    %17 = sbr.rel (0) target = $region13
  $region12: #{simple_block2d_forward.27} parent=0 // pred_region
    _
  $region13: #{simple_block2d_forward.27} parent=0 // pred_fallthru
    _
  // Predicated region
  $region14: #{simple_block2d_forward.27} parent=0 // pred_check
    _
  $region15: #{simple_block2d_forward.27} parent=0 // pred_check_branch
    %19 = sbr.rel (0) target = $region17
  $region16: #{simple_block2d_forward.27} parent=0 // pred_region
    _
  $region17: #{simple_block2d_forward.27} parent=0 // pred_fallthru
    _
  // Predicated region
  $region18: #{simple_block2d_forward.27} parent=0 // pred_check
    _
  $region19: #{simple_block2d_forward.27} parent=0 // pred_check_branch
    %21 = sbr.rel (0) target = $region21
  $region20: #{simple_block2d_forward.27} parent=0 // pred_region
    _
  $region21: #{simple_block2d_forward.27} parent=0 // pred_fallthru
    _
  %v22 = vld [vmem:[%s1] sm:$0xff]
  %v23 = vld [vmem:[%s1 + $0x8] sm:$0xff]
  %v24 = vld [vmem:[%s1 + $0x10] sm:$0xff]
  %v25 = vld [vmem:[%s1 + $0x18] sm:$0xff]
  %v26 = vld [vmem:[%s1 + $0x20] sm:$0xff]
  %v27 = vld [vmem:[%s1 + $0x28] sm:$0xff]
  %v28 = vld [vmem:[%s1 + $0x30] sm:$0xff]
  %v29 = vld [vmem:[%s1 + $0x38] sm:$0xff]
  %v30 = vld [vmem:[%s1 + $0x40] sm:$0xff]
  %v31 = vld [vmem:[%s1 + $0x48] sm:$0xff]
  %v32 = vld [vmem:[%s1 + $0x50] sm:$0xff]
  %v33 = vld [vmem:[%s1 + $0x58] sm:$0xff]
  %v34 = vld [vmem:[%s1 + $0x60] sm:$0xff]
  %v35 = vld [vmem:[%s1 + $0x68] sm:$0xff]
  %v36 = vld [vmem:[%s1 + $0x70] sm:$0xff]
  %v37 = vld [vmem:[%s1 + $0x78] sm:$0xff]
  %v38 = vld [vmem:[%s0] sm:$0xff]
  %v39 = vld [vmem:[%s0 + $0x8] sm:$0xff]
  %v40 = vld [vmem:[%s0 + $0x10] sm:$0xff]
  %v41 = vld [vmem:[%s0 + $0x18] sm:$0xff]
  %v42 = vld [vmem:[%s0 + $0x20] sm:$0xff]
  %v43 = vld [vmem:[%s0 + $0x28] sm:$0xff]
  %v44 = vld [vmem:[%s0 + $0x30] sm:$0xff]
  %v45 = vld [vmem:[%s0 + $0x38] sm:$0xff]
  %v46 = vld [vmem:[%s2] sm:$0xff]
  %v47 = vld [vmem:[%s2 + $0x8] sm:$0xff]
  %v48 = vld [vmem:[%s2 + $0x10] sm:$0xff]
  %v49 = vld [vmem:[%s2 + $0x18] sm:$0xff]
  %v50 = vld [vmem:[%s2 + $0x20] sm:$0xff]
  %v51 = vld [vmem:[%s2 + $0x28] sm:$0xff]
  %v52 = vld [vmem:[%s2 + $0x30] sm:$0xff]
  %v53 = vld [vmem:[%s2 + $0x38] sm:$0xff]
  %v54 = vld [vmem:[%s2 + $0x40] sm:$0xff]
  %v55 = vld [vmem:[%s2 + $0x48] sm:$0xff]
  %v56 = vld [vmem:[%s2 + $0x50] sm:$0xff]
  %v57 = vld [vmem:[%s2 + $0x58] sm:$0xff]
  %v58 = vld [vmem:[%s2 + $0x60] sm:$0xff]
  %v59 = vld [vmem:[%s2 + $0x68] sm:$0xff]
  %v60 = vld [vmem:[%s2 + $0x70] sm:$0xff]
  %v61 = vld [vmem:[%s2 + $0x78] sm:$0xff]
  %63 = vset.pattern.permute.xlu0 0
  %64 = vperm.xlu0 %63, %v46
  %v65 = vpop.permute.xlu0 %64
  %68 = vset.pattern.permute.xlu0 0
  %69 = vperm.xlu0 %68, %v47
  %v70 = vpop.permute.xlu0 %69
  %73 = vset.pattern.permute.xlu0 0
  %74 = vperm.xlu0 %73, %v48
  %v75 = vpop.permute.xlu0 %74
  %78 = vset.pattern.permute.xlu0 0
  %79 = vperm.xlu0 %78, %v49
  %v80 = vpop.permute.xlu0 %79
  %83 = vset.pattern.permute.xlu0 0
  %84 = vperm.xlu0 %83, %v50
  %v85 = vpop.permute.xlu0 %84
  %88 = vset.pattern.permute.xlu0 0
  %89 = vperm.xlu0 %88, %v51
  %v90 = vpop.permute.xlu0 %89
  %93 = vset.pattern.permute.xlu0 0
  %94 = vperm.xlu0 %93, %v52
  %v95 = vpop.permute.xlu0 %94
  %98 = vset.pattern.permute.xlu0 0
  %99 = vperm.xlu0 %98, %v53
  %v100 = vpop.permute.xlu0 %99
  %103 = vset.pattern.permute.xlu0 0
  %104 = vperm.xlu0 %103, %v54
  %v105 = vpop.permute.xlu0 %104
  %108 = vset.pattern.permute.xlu0 0
  %109 = vperm.xlu0 %108, %v55
  %v110 = vpop.permute.xlu0 %109
  %113 = vset.pattern.permute.xlu0 0
  %114 = vperm.xlu0 %113, %v56
  %v115 = vpop.permute.xlu0 %114
  %118 = vset.pattern.permute.xlu0 0
  %119 = vperm.xlu0 %118, %v57
  %v120 = vpop.permute.xlu0 %119
  %123 = vset.pattern.permute.xlu0 0
  %124 = vperm.xlu0 %123, %v58
  %v125 = vpop.permute.xlu0 %124
  %128 = vset.pattern.permute.xlu0 0
  %129 = vperm.xlu0 %128, %v59
  %v130 = vpop.permute.xlu0 %129
  %133 = vset.pattern.permute.xlu0 0
  %134 = vperm.xlu0 %133, %v60
  %v135 = vpop.permute.xlu0 %134
  %138 = vset.pattern.permute.xlu0 0
  %139 = vperm.xlu0 %138, %v61
  %v140 = vpop.permute.xlu0 %139
  %vm142 = vcmask 64512
  %v144 = vsel %vm142, %v22, 0
  %v147 = vsel %vm142, %v23, 0
  %v150 = vsel %vm142, %v24, 0
  %v153 = vsel %vm142, %v25, 0
  %v156 = vsel %vm142, %v26, 0
  %v159 = vsel %vm142, %v27, 0
  %v162 = vsel %vm142, %v28, 0
  %v165 = vsel %vm142, %v29, 0
  %v168 = vsel %vm142, %v30, 0
  %v171 = vsel %vm142, %v31, 0
  %v174 = vsel %vm142, %v32, 0
  %v177 = vsel %vm142, %v33, 0
  %v180 = vsel %vm142, %v34, 0
  %v183 = vsel %vm142, %v35, 0
  %v186 = vsel %vm142, %v36, 0
  %v189 = vsel %vm142, %v37, 0
  %191 = vmatprep.subr.mxu0 %v39
  %192 = vmatpush1.msra.mxu0 %v38
  %193 = vmatprep.subr.mxu0 0.0
  %194 = vmatpush1.msra.mxu0 0.0
  %195 = vmatprep.subr.mxu0 0.0
  %196 = vmatpush1.msra.mxu0 0.0
  %197 = vmatprep.subr.mxu0 0.0
  %198 = vmatpush1.msra.mxu0 0.0
  %199 = vmatprep.subr.mxu0 0.0
  %200 = vmatpush1.msra.mxu0 0.0
  %201 = vmatprep.subr.mxu0 0.0
  %202 = vmatpush1.msra.mxu0 0.0
  %203 = vmatprep.subr.mxu0 0.0
  %204 = vmatpush1.msra.mxu0 0.0
  %205 = vmatprep.subr.mxu0 0.0
  %206 = vmatpush1.msra.mxu0 0.0
  %207 = vmatprep.subr.mxu0 0.0
  %208 = vmatpush1.msra.mxu0 0.0
  %209 = vmatprep.subr.mxu0 0.0
  %210 = vmatpush1.msra.mxu0 0.0
  %211 = vmatprep.subr.mxu0 0.0
  %212 = vmatpush1.msra.mxu0 0.0
  %213 = vmatprep.subr.mxu0 0.0
  %214 = vmatpush1.msra.mxu0 0.0
  %215 = vmatprep.subr.mxu0 0.0
  %216 = vmatpush1.msra.mxu0 0.0
  %217 = vmatprep.subr.mxu0 0.0
  %218 = vmatpush1.msra.mxu0 0.0
  %219 = vmatprep.subr.mxu0 0.0
  %220 = vmatpush1.msra.mxu0 0.0
  %221 = vmatprep.subr.mxu0 0.0
  %222 = vmatpush1.msra.mxu0 0.0
  %223 = vmatprep.subr.mxu0 0.0
  %224 = vmatpush1.msra.mxu0 0.0
  %225 = vmatprep.subr.mxu0 0.0
  %226 = vmatpush1.msra.mxu0 0.0
  %227 = vmatprep.subr.mxu0 0.0
  %228 = vmatpush1.msra.mxu0 0.0
  %229 = vmatprep.subr.mxu0 0.0
  %230 = vmatpush1.msra.mxu0 0.0
  %231 = vmatprep.subr.mxu0 0.0
  %232 = vmatpush1.msra.mxu0 0.0
  %233 = vmatprep.subr.mxu0 0.0
  %234 = vmatpush1.msra.mxu0 0.0
  %235 = vmatprep.subr.mxu0 0.0
  %236 = vmatpush1.msra.mxu0 0.0
  %237 = vmatprep.subr.mxu0 0.0
  %238 = vmatpush1.msra.mxu0 0.0
  %239 = vmatprep.subr.mxu0 0.0
  %240 = vmatpush1.msra.mxu0 0.0
  %241 = vmatprep.subr.mxu0 0.0
  %242 = vmatpush1.msra.mxu0 0.0
  %243 = vmatprep.subr.mxu0 0.0
  %244 = vmatpush1.msra.mxu0 0.0
  %245 = vmatprep.subr.mxu0 0.0
  %246 = vmatpush1.msra.mxu0 0.0
  %247 = vmatprep.subr.mxu0 0.0
  %248 = vmatpush1.msra.mxu0 0.0
  %249 = vmatprep.subr.mxu0 0.0
  %250 = vmatpush1.msra.mxu0 0.0
  %251 = vmatprep.subr.mxu0 0.0
  %252 = vmatpush1.msra.mxu0 0.0
  %253 = vmatprep.subr.mxu0 0.0
  %254 = vmatpush1.msra.mxu0 0.0
  %255 = vmatprep.mubr.f32.mxu0 0.0
  %256 = vmatmul.mubr.f32.gmra.mrb[0].mxu0 %v144
  %v257 = vpop.f32.mrb[0].mxu0
  %v258 = vadd.f32 %v65, %v257
  %v259 = vpop.f32.mrb[0].mxu0
  %v260 = vadd.f32 %v65, %v259
  %261 = vmatprep.mubr.f32.mxu0 0.0
  %262 = vmatmul.mubr.f32.gmra.mrb[0].mxu0 %v147
  %v263 = vpop.f32.mrb[0].mxu0
  %v264 = vadd.f32 %v70, %v263
  %v265 = vpop.f32.mrb[0].mxu0
  %v266 = vadd.f32 %v70, %v265
  %267 = vmatprep.mubr.f32.mxu0 0.0
  %268 = vmatmul.mubr.f32.gmra.mrb[0].mxu0 %v150
  %v269 = vpop.f32.mrb[0].mxu0
  %v270 = vadd.f32 %v75, %v269
  %v271 = vpop.f32.mrb[0].mxu0
  %v272 = vadd.f32 %v75, %v271
  %273 = vmatprep.mubr.f32.mxu0 0.0
  %274 = vmatmul.mubr.f32.gmra.mrb[0].mxu0 %v153
  %v275 = vpop.f32.mrb[0].mxu0
  %v276 = vadd.f32 %v80, %v275
  %v277 = vpop.f32.mrb[0].mxu0
  %v278 = vadd.f32 %v80, %v277
  %279 = vmatprep.mubr.f32.mxu0 0.0
  %280 = vmatmul.mubr.f32.gmra.mrb[0].mxu0 %v156
  %v281 = vpop.f32.mrb[0].mxu0
  %v282 = vadd.f32 %v85, %v281
  %v283 = vpop.f32.mrb[0].mxu0
  %v284 = vadd.f32 %v85, %v283
  %285 = vmatprep.mubr.f32.mxu0 0.0
  %286 = vmatmul.mubr.f32.gmra.mrb[0].mxu0 %v159
  %v287 = vpop.f32.mrb[0].mxu0
  %v288 = vadd.f32 %v90, %v287
  %v289 = vpop.f32.mrb[0].mxu0
  %v290 = vadd.f32 %v90, %v289
  %291 = vmatprep.mubr.f32.mxu0 0.0
  %292 = vmatmul.mubr.f32.gmra.mrb[0].mxu0 %v162
  %v293 = vpop.f32.mrb[0].mxu0
  %v294 = vadd.f32 %v95, %v293
  %v295 = vpop.f32.mrb[0].mxu0
  %v296 = vadd.f32 %v95, %v295
  %297 = vmatprep.mubr.f32.mxu0 0.0
  %298 = vmatmul.mubr.f32.gmra.mrb[0].mxu0 %v165
  %v299 = vpop.f32.mrb[0].mxu0
  %v300 = vadd.f32 %v100, %v299
  %v301 = vpop.f32.mrb[0].mxu0
  %v302 = vadd.f32 %v100, %v301
  %303 = vmatprep.mubr.f32.mxu0 0.0
  %304 = vmatmul.mubr.f32.gmra.mrb[0].mxu0 %v168
  %v305 = vpop.f32.mrb[0].mxu0
  %v306 = vadd.f32 %v105, %v305
  %v307 = vpop.f32.mrb[0].mxu0
  %v308 = vadd.f32 %v105, %v307
  %309 = vmatprep.mubr.f32.mxu0 0.0
  %310 = vmatmul.mubr.f32.gmra.mrb[0].mxu0 %v171
  %v311 = vpop.f32.mrb[0].mxu0
  %v312 = vadd.f32 %v110, %v311
  %v313 = vpop.f32.mrb[0].mxu0
  %v314 = vadd.f32 %v110, %v313
  %315 = vmatprep.mubr.f32.mxu0 0.0
  %316 = vmatmul.mubr.f32.gmra.mrb[0].mxu0 %v174
  %v317 = vpop.f32.mrb[0].mxu0
  %v318 = vadd.f32 %v115, %v317
  %v319 = vpop.f32.mrb[0].mxu0
  %v320 = vadd.f32 %v115, %v319
  %321 = vmatprep.mubr.f32.mxu0 0.0
  %322 = vmatmul.mubr.f32.gmra.mrb[0].mxu0 %v177
  %v323 = vpop.f32.mrb[0].mxu0
  %v324 = vadd.f32 %v120, %v323
  %v325 = vpop.f32.mrb[0].mxu0
  %v326 = vadd.f32 %v120, %v325
  %327 = vmatprep.mubr.f32.mxu0 0.0
  %328 = vmatmul.mubr.f32.gmra.mrb[0].mxu0 %v180
  %v329 = vpop.f32.mrb[0].mxu0
  %v330 = vadd.f32 %v125, %v329
  %v331 = vpop.f32.mrb[0].mxu0
  %v332 = vadd.f32 %v125, %v331
  %333 = vmatprep.mubr.f32.mxu0 0.0
  %334 = vmatmul.mubr.f32.gmra.mrb[0].mxu0 %v183
  %v335 = vpop.f32.mrb[0].mxu0
  %v336 = vadd.f32 %v130, %v335
  %v337 = vpop.f32.mrb[0].mxu0
  %v338 = vadd.f32 %v130, %v337
  %339 = vmatprep.mubr.f32.mxu0 0.0
  %340 = vmatmul.mubr.f32.gmra.mrb[0].mxu0 %v186
  %v341 = vpop.f32.mrb[0].mxu0
  %v342 = vadd.f32 %v135, %v341
  %v343 = vpop.f32.mrb[0].mxu0
  %v344 = vadd.f32 %v135, %v343
  %345 = vmatprep.mubr.f32.mxu0 0.0
  %346 = vmatmul.mubr.f32.gmra.mrb[0].mxu0 %v189
  %v347 = vpop.f32.mrb[0].mxu0
  %v348 = vadd.f32 %v140, %v347
  %v349 = vpop.f32.mrb[0].mxu0
  %v350 = vadd.f32 %v140, %v349
  %351 = vdwg.mxu0
  %352 = vmatprep.subr.mxu0 %v41
  %353 = vmatpush1.msra.mxu0 %v40
  %354 = vmatprep.subr.mxu0 0.0
  %355 = vmatpush1.msra.mxu0 0.0
  %356 = vmatprep.subr.mxu0 0.0
  %357 = vmatpush1.msra.mxu0 0.0
  %358 = vmatprep.subr.mxu0 0.0
  %359 = vmatpush1.msra.mxu0 0.0
  %360 = vmatprep.subr.mxu0 0.0
  %361 = vmatpush1.msra.mxu0 0.0
  %362 = vmatprep.subr.mxu0 0.0
  %363 = vmatpush1.msra.mxu0 0.0
  %364 = vmatprep.subr.mxu0 0.0
  %365 = vmatpush1.msra.mxu0 0.0
  %366 = vmatprep.subr.mxu0 0.0
  %367 = vmatpush1.msra.mxu0 0.0
  %368 = vmatprep.subr.mxu0 0.0
  %369 = vmatpush1.msra.mxu0 0.0
  %370 = vmatprep.subr.mxu0 0.0
  %371 = vmatpush1.msra.mxu0 0.0
  %372 = vmatprep.subr.mxu0 0.0
  %373 = vmatpush1.msra.mxu0 0.0
  %374 = vmatprep.subr.mxu0 0.0
  %375 = vmatpush1.msra.mxu0 0.0
  %376 = vmatprep.subr.mxu0 0.0
  %377 = vmatpush1.msra.mxu0 0.0
  %378 = vmatprep.subr.mxu0 0.0
  %379 = vmatpush1.msra.mxu0 0.0
  %380 = vmatprep.subr.mxu0 0.0
  %381 = vmatpush1.msra.mxu0 0.0
  %382 = vmatprep.subr.mxu0 0.0
  %383 = vmatpush1.msra.mxu0 0.0
  %384 = vmatprep.subr.mxu0 0.0
  %385 = vmatpush1.msra.mxu0 0.0
  %386 = vmatprep.subr.mxu0 0.0
  %387 = vmatpush1.msra.mxu0 0.0
  %388 = vmatprep.subr.mxu0 0.0
  %389 = vmatpush1.msra.mxu0 0.0
  %390 = vmatprep.subr.mxu0 0.0
  %391 = vmatpush1.msra.mxu0 0.0
  %392 = vmatprep.subr.mxu0 0.0
  %393 = vmatpush1.msra.mxu0 0.0
  %394 = vmatprep.subr.mxu0 0.0
  %395 = vmatpush1.msra.mxu0 0.0
  %396 = vmatprep.subr.mxu0 0.0
  %397 = vmatpush1.msra.mxu0 0.0
  %398 = vmatprep.subr.mxu0 0.0
  %399 = vmatpush1.msra.mxu0 0.0
  %400 = vmatprep.subr.mxu0 0.0
  %401 = vmatpush1.msra.mxu0 0.0
  %402 = vmatprep.subr.mxu0 0.0
  %403 = vmatpush1.msra.mxu0 0.0
  %404 = vmatprep.subr.mxu0 0.0
  %405 = vmatpush1.msra.mxu0 0.0
  %406 = vmatprep.subr.mxu0 0.0
  %407 = vmatpush1.msra.mxu0 0.0
  %408 = vmatprep.subr.mxu0 0.0
  %409 = vmatpush1.msra.mxu0 0.0
  %410 = vmatprep.subr.mxu0 0.0
  %411 = vmatpush1.msra.mxu0 0.0
  %412 = vmatprep.subr.mxu0 0.0
  %413 = vmatpush1.msra.mxu0 0.0
  %414 = vmatprep.subr.mxu0 0.0
  %415 = vmatpush1.msra.mxu0 0.0
  %416 = vmatprep.mubr.f32.mxu0 0.0
  %417 = vmatmul.mubr.f32.gmra.mrb[0].mxu0 %v144
  %v418 = vpop.f32.mrb[0].mxu0
  %v419 = vadd.f32 %v65, %v418
  %v420 = vpop.f32.mrb[0].mxu0
  %v421 = vadd.f32 %v65, %v420
  %422 = vmatprep.mubr.f32.mxu0 0.0
  %423 = vmatmul.mubr.f32.gmra.mrb[0].mxu0 %v147
  %v424 = vpop.f32.mrb[0].mxu0
  %v425 = vadd.f32 %v70, %v424
  %v426 = vpop.f32.mrb[0].mxu0
  %v427 = vadd.f32 %v70, %v426
  %428 = vmatprep.mubr.f32.mxu0 0.0
  %429 = vmatmul.mubr.f32.gmra.mrb[0].mxu0 %v150
  %v430 = vpop.f32.mrb[0].mxu0
  %v431 = vadd.f32 %v75, %v430
  %v432 = vpop.f32.mrb[0].mxu0
  %v433 = vadd.f32 %v75, %v432
  %434 = vmatprep.mubr.f32.mxu0 0.0
  %435 = vmatmul.mubr.f32.gmra.mrb[0].mxu0 %v153
  %v436 = vpop.f32.mrb[0].mxu0
  %v437 = vadd.f32 %v80, %v436
  %v438 = vpop.f32.mrb[0].mxu0
  %v439 = vadd.f32 %v80, %v438
  %440 = vmatprep.mubr.f32.mxu0 0.0
  %441 = vmatmul.mubr.f32.gmra.mrb[0].mxu0 %v156
  %v442 = vpop.f32.mrb[0].mxu0
  %v443 = vadd.f32 %v85, %v442
  %v444 = vpop.f32.mrb[0].mxu0
  %v445 = vadd.f32 %v85, %v444
  %446 = vmatprep.mubr.f32.mxu0 0.0
  %447 = vmatmul.mubr.f32.gmra.mrb[0].mxu0 %v159
  %v448 = vpop.f32.mrb[0].mxu0
  %v449 = vadd.f32 %v90, %v448
  %v450 = vpop.f32.mrb[0].mxu0
  %v451 = vadd.f32 %v90, %v450
  %452 = vmatprep.mubr.f32.mxu0 0.0
  %453 = vmatmul.mubr.f32.gmra.mrb[0].mxu0 %v162
  %v454 = vpop.f32.mrb[0].mxu0
  %v455 = vadd.f32 %v95, %v454
  %v456 = vpop.f32.mrb[0].mxu0
  %v457 = vadd.f32 %v95, %v456
  %458 = vmatprep.mubr.f32.mxu0 0.0
  %459 = vmatmul.mubr.f32.gmra.mrb[0].mxu0 %v165
  %v460 = vpop.f32.mrb[0].mxu0
  %v461 = vadd.f32 %v100, %v460
  %v462 = vpop.f32.mrb[0].mxu0
  %v463 = vadd.f32 %v100, %v462
  %464 = vmatprep.mubr.f32.mxu0 0.0
  %465 = vmatmul.mubr.f32.gmra.mrb[0].mxu0 %v168
  %v466 = vpop.f32.mrb[0].mxu0
  %v467 = vadd.f32 %v105, %v466
  %v468 = vpop.f32.mrb[0].mxu0
  %v469 = vadd.f32 %v105, %v468
  %470 = vmatprep.mubr.f32.mxu0 0.0
  %471 = vmatmul.mubr.f32.gmra.mrb[0].mxu0 %v171
  %v472 = vpop.f32.mrb[0].mxu0
  %v473 = vadd.f32 %v110, %v472
  %v474 = vpop.f32.mrb[0].mxu0
  %v475 = vadd.f32 %v110, %v474
  %476 = vmatprep.mubr.f32.mxu0 0.0
  %477 = vmatmul.mubr.f32.gmra.mrb[0].mxu0 %v174
  %v478 = vpop.f32.mrb[0].mxu0
  %v479 = vadd.f32 %v115, %v478
  %v480 = vpop.f32.mrb[0].mxu0
  %v481 = vadd.f32 %v115, %v480
  %482 = vmatprep.mubr.f32.mxu0 0.0
  %483 = vmatmul.mubr.f32.gmra.mrb[0].mxu0 %v177
  %v484 = vpop.f32.mrb[0].mxu0
  %v485 = vadd.f32 %v120, %v484
  %v486 = vpop.f32.mrb[0].mxu0
  %v487 = vadd.f32 %v120, %v486
  %488 = vmatprep.mubr.f32.mxu0 0.0
  %489 = vmatmul.mubr.f32.gmra.mrb[0].mxu0 %v180
  %v490 = vpop.f32.mrb[0].mxu0
  %v491 = vadd.f32 %v125, %v490
  %v492 = vpop.f32.mrb[0].mxu0
  %v493 = vadd.f32 %v125, %v492
  %494 = vmatprep.mubr.f32.mxu0 0.0
  %495 = vmatmul.mubr.f32.gmra.mrb[0].mxu0 %v183
  %v496 = vpop.f32.mrb[0].mxu0
  %v497 = vadd.f32 %v130, %v496
  %v498 = vpop.f32.mrb[0].mxu0
  %v499 = vadd.f32 %v130, %v498
  %500 = vmatprep.mubr.f32.mxu0 0.0
  %501 = vmatmul.mubr.f32.gmra.mrb[0].mxu0 %v186
  %v502 = vpop.f32.mrb[0].mxu0
  %v503 = vadd.f32 %v135, %v502
  %v504 = vpop.f32.mrb[0].mxu0
  %v505 = vadd.f32 %v135, %v504
  %506 = vmatprep.mubr.f32.mxu0 0.0
  %507 = vmatmul.mubr.f32.gmra.mrb[0].mxu0 %v189
  %v508 = vpop.f32.mrb[0].mxu0
  %v509 = vadd.f32 %v140, %v508
  %v510 = vpop.f32.mrb[0].mxu0
  %v511 = vadd.f32 %v140, %v510
  %512 = vdwg.mxu0
  %513 = vmatprep.subr.mxu0 %v43
  %514 = vmatpush1.msra.mxu0 %v42
  %515 = vmatprep.subr.mxu0 0.0
  %516 = vmatpush1.msra.mxu0 0.0
  %517 = vmatprep.subr.mxu0 0.0
  %518 = vmatpush1.msra.mxu0 0.0
  %519 = vmatprep.subr.mxu0 0.0
  %520 = vmatpush1.msra.mxu0 0.0
  %521 = vmatprep.subr.mxu0 0.0
  %522 = vmatpush1.msra.mxu0 0.0
  %523 = vmatprep.subr.mxu0 0.0
  %524 = vmatpush1.msra.mxu0 0.0
  %525 = vmatprep.subr.mxu0 0.0
  %526 = vmatpush1.msra.mxu0 0.0
  %527 = vmatprep.subr.mxu0 0.0
  %528 = vmatpush1.msra.mxu0 0.0
  %529 = vmatprep.subr.mxu0 0.0
  %530 = vmatpush1.msra.mxu0 0.0
  %531 = vmatprep.subr.mxu0 0.0
  %532 = vmatpush1.msra.mxu0 0.0
  %533 = vmatprep.subr.mxu0 0.0
  %534 = vmatpush1.msra.mxu0 0.0
  %535 = vmatprep.subr.mxu0 0.0
  %536 = vmatpush1.msra.mxu0 0.0
  %537 = vmatprep.subr.mxu0 0.0
  %538 = vmatpush1.msra.mxu0 0.0
  %539 = vmatprep.subr.mxu0 0.0
  %540 = vmatpush1.msra.mxu0 0.0
  %541 = vmatprep.subr.mxu0 0.0
  %542 = vmatpush1.msra.mxu0 0.0
  %543 = vmatprep.subr.mxu0 0.0
  %544 = vmatpush1.msra.mxu0 0.0
  %545 = vmatprep.subr.mxu0 0.0
  %546 = vmatpush1.msra.mxu0 0.0
  %547 = vmatprep.subr.mxu0 0.0
  %548 = vmatpush1.msra.mxu0 0.0
  %549 = vmatprep.subr.mxu0 0.0
  %550 = vmatpush1.msra.mxu0 0.0
  %551 = vmatprep.subr.mxu0 0.0
  %552 = vmatpush1.msra.mxu0 0.0
  %553 = vmatprep.subr.mxu0 0.0
  %554 = vmatpush1.msra.mxu0 0.0
  %555 = vmatprep.subr.mxu0 0.0
  %556 = vmatpush1.msra.mxu0 0.0
  %557 = vmatprep.subr.mxu0 0.0
  %558 = vmatpush1.msra.mxu0 0.0
  %559 = vmatprep.subr.mxu0 0.0
  %560 = vmatpush1.msra.mxu0 0.0
  %561 = vmatprep.subr.mxu0 0.0
  %562 = vmatpush1.msra.mxu0 0.0
  %563 = vmatprep.subr.mxu0 0.0
  %564 = vmatpush1.msra.mxu0 0.0
  %565 = vmatprep.subr.mxu0 0.0
  %566 = vmatpush1.msra.mxu0 0.0
  %567 = vmatprep.subr.mxu0 0.0
  %568 = vmatpush1.msra.mxu0 0.0
  %569 = vmatprep.subr.mxu0 0.0
  %570 = vmatpush1.msra.mxu0 0.0
  %571 = vmatprep.subr.mxu0 0.0
  %572 = vmatpush1.msra.mxu0 0.0
  %573 = vmatprep.subr.mxu0 0.0
  %574 = vmatpush1.msra.mxu0 0.0
  %575 = vmatprep.subr.mxu0 0.0
  %576 = vmatpush1.msra.mxu0 0.0
  %577 = vmatprep.mubr.f32.mxu0 0.0
  %578 = vmatmul.mubr.f32.gmra.mrb[0].mxu0 %v144
  %v579 = vpop.f32.mrb[0].mxu0
  %v580 = vadd.f32 %v65, %v579
  %v581 = vpop.f32.mrb[0].mxu0
  %v582 = vadd.f32 %v65, %v581
  %583 = vmatprep.mubr.f32.mxu0 0.0
  %584 = vmatmul.mubr.f32.gmra.mrb[0].mxu0 %v147
  %v585 = vpop.f32.mrb[0].mxu0
  %v586 = vadd.f32 %v70, %v585
  %v587 = vpop.f32.mrb[0].mxu0
  %v588 = vadd.f32 %v70, %v587
  %589 = vmatprep.mubr.f32.mxu0 0.0
  %590 = vmatmul.mubr.f32.gmra.mrb[0].mxu0 %v150
  %v591 = vpop.f32.mrb[0].mxu0
  %v592 = vadd.f32 %v75, %v591
  %v593 = vpop.f32.mrb[0].mxu0
  %v594 = vadd.f32 %v75, %v593
  %595 = vmatprep.mubr.f32.mxu0 0.0
  %596 = vmatmul.mubr.f32.gmra.mrb[0].mxu0 %v153
  %v597 = vpop.f32.mrb[0].mxu0
  %v598 = vadd.f32 %v80, %v597
  %v599 = vpop.f32.mrb[0].mxu0
  %v600 = vadd.f32 %v80, %v599
  %601 = vmatprep.mubr.f32.mxu0 0.0
  %602 = vmatmul.mubr.f32.gmra.mrb[0].mxu0 %v156
  %v603 = vpop.f32.mrb[0].mxu0
  %v604 = vadd.f32 %v85, %v603
  %v605 = vpop.f32.mrb[0].mxu0
  %v606 = vadd.f32 %v85, %v605
  %607 = vmatprep.mubr.f32.mxu0 0.0
  %608 = vmatmul.mubr.f32.gmra.mrb[0].mxu0 %v159
  %v609 = vpop.f32.mrb[0].mxu0
  %v610 = vadd.f32 %v90, %v609
  %v611 = vpop.f32.mrb[0].mxu0
  %v612 = vadd.f32 %v90, %v611
  %613 = vmatprep.mubr.f32.mxu0 0.0
  %614 = vmatmul.mubr.f32.gmra.mrb[0].mxu0 %v162
  %v615 = vpop.f32.mrb[0].mxu0
  %v616 = vadd.f32 %v95, %v615
  %v617 = vpop.f32.mrb[0].mxu0
  %v618 = vadd.f32 %v95, %v617
  %619 = vmatprep.mubr.f32.mxu0 0.0
  %620 = vmatmul.mubr.f32.gmra.mrb[0].mxu0 %v165
  %v621 = vpop.f32.mrb[0].mxu0
  %v622 = vadd.f32 %v100, %v621
  %v623 = vpop.f32.mrb[0].mxu0
  %v624 = vadd.f32 %v100, %v623
  %625 = vmatprep.mubr.f32.mxu0 0.0
  %626 = vmatmul.mubr.f32.gmra.mrb[0].mxu0 %v168
  %v627 = vpop.f32.mrb[0].mxu0
  %v628 = vadd.f32 %v105, %v627
  %v629 = vpop.f32.mrb[0].mxu0
  %v630 = vadd.f32 %v105, %v629
  %631 = vmatprep.mubr.f32.mxu0 0.0
  %632 = vmatmul.mubr.f32.gmra.mrb[0].mxu0 %v171
  %v633 = vpop.f32.mrb[0].mxu0
  %v634 = vadd.f32 %v110, %v633
  %v635 = vpop.f32.mrb[0].mxu0
  %v636 = vadd.f32 %v110, %v635
  %637 = vmatprep.mubr.f32.mxu0 0.0
  %638 = vmatmul.mubr.f32.gmra.mrb[0].mxu0 %v174
  %v639 = vpop.f32.mrb[0].mxu0
  %v640 = vadd.f32 %v115, %v639
  %v641 = vpop.f32.mrb[0].mxu0
  %v642 = vadd.f32 %v115, %v641
  %643 = vmatprep.mubr.f32.mxu0 0.0
  %644 = vmatmul.mubr.f32.gmra.mrb[0].mxu0 %v177
  %v645 = vpop.f32.mrb[0].mxu0
  %v646 = vadd.f32 %v120, %v645
  %v647 = vpop.f32.mrb[0].mxu0
  %v648 = vadd.f32 %v120, %v647
  %649 = vmatprep.mubr.f32.mxu0 0.0
  %650 = vmatmul.mubr.f32.gmra.mrb[0].mxu0 %v180
  %v651 = vpop.f32.mrb[0].mxu0
  %v652 = vadd.f32 %v125, %v651
  %v653 = vpop.f32.mrb[0].mxu0
  %v654 = vadd.f32 %v125, %v653
  %655 = vmatprep.mubr.f32.mxu0 0.0
  %656 = vmatmul.mubr.f32.gmra.mrb[0].mxu0 %v183
  %v657 = vpop.f32.mrb[0].mxu0
  %v658 = vadd.f32 %v130, %v657
  %v659 = vpop.f32.mrb[0].mxu0
  %v660 = vadd.f32 %v130, %v659
  %661 = vmatprep.mubr.f32.mxu0 0.0
  %662 = vmatmul.mubr.f32.gmra.mrb[0].mxu0 %v186
  %v663 = vpop.f32.mrb[0].mxu0
  %v664 = vadd.f32 %v135, %v663
  %v665 = vpop.f32.mrb[0].mxu0
  %v666 = vadd.f32 %v135, %v665
  %667 = vmatprep.mubr.f32.mxu0 0.0
  %668 = vmatmul.mubr.f32.gmra.mrb[0].mxu0 %v189
  %v669 = vpop.f32.mrb[0].mxu0
  %v670 = vadd.f32 %v140, %v669
  %v671 = vpop.f32.mrb[0].mxu0
  %v672 = vadd.f32 %v140, %v671
  %673 = vdwg.mxu0
  %674 = vmatprep.subr.mxu0 %v45
  %675 = vmatpush1.msra.mxu0 %v44
  %676 = vmatprep.subr.mxu0 0.0
  %677 = vmatpush1.msra.mxu0 0.0
  %678 = vmatprep.subr.mxu0 0.0
  %679 = vmatpush1.msra.mxu0 0.0
  %680 = vmatprep.subr.mxu0 0.0
  %681 = vmatpush1.msra.mxu0 0.0
  %682 = vmatprep.subr.mxu0 0.0
  %683 = vmatpush1.msra.mxu0 0.0
  %684 = vmatprep.subr.mxu0 0.0
  %685 = vmatpush1.msra.mxu0 0.0
  %686 = vmatprep.subr.mxu0 0.0
  %687 = vmatpush1.msra.mxu0 0.0
  %688 = vmatprep.subr.mxu0 0.0
  %689 = vmatpush1.msra.mxu0 0.0
  %690 = vmatprep.subr.mxu0 0.0
  %691 = vmatpush1.msra.mxu0 0.0
  %692 = vmatprep.subr.mxu0 0.0
  %693 = vmatpush1.msra.mxu0 0.0
  %694 = vmatprep.subr.mxu0 0.0
  %695 = vmatpush1.msra.mxu0 0.0
  %696 = vmatprep.subr.mxu0 0.0
  %697 = vmatpush1.msra.mxu0 0.0
  %698 = vmatprep.subr.mxu0 0.0
  %699 = vmatpush1.msra.mxu0 0.0
  %700 = vmatprep.subr.mxu0 0.0
  %701 = vmatpush1.msra.mxu0 0.0
  %702 = vmatprep.subr.mxu0 0.0
  %703 = vmatpush1.msra.mxu0 0.0
  %704 = vmatprep.subr.mxu0 0.0
  %705 = vmatpush1.msra.mxu0 0.0
  %706 = vmatprep.subr.mxu0 0.0
  %707 = vmatpush1.msra.mxu0 0.0
  %708 = vmatprep.subr.mxu0 0.0
  %709 = vmatpush1.msra.mxu0 0.0
  %710 = vmatprep.subr.mxu0 0.0
  %711 = vmatpush1.msra.mxu0 0.0
  %712 = vmatprep.subr.mxu0 0.0
  %713 = vmatpush1.msra.mxu0 0.0
  %714 = vmatprep.subr.mxu0 0.0
  %715 = vmatpush1.msra.mxu0 0.0
  %716 = vmatprep.subr.mxu0 0.0
  %717 = vmatpush1.msra.mxu0 0.0
  %718 = vmatprep.subr.mxu0 0.0
  %719 = vmatpush1.msra.mxu0 0.0
  %720 = vmatprep.subr.mxu0 0.0
  %721 = vmatpush1.msra.mxu0 0.0
  %722 = vmatprep.subr.mxu0 0.0
  %723 = vmatpush1.msra.mxu0 0.0
  %724 = vmatprep.subr.mxu0 0.0
  %725 = vmatpush1.msra.mxu0 0.0
  %726 = vmatprep.subr.mxu0 0.0
  %727 = vmatpush1.msra.mxu0 0.0
  %728 = vmatprep.subr.mxu0 0.0
  %729 = vmatpush1.msra.mxu0 0.0
  %730 = vmatprep.subr.mxu0 0.0
  %731 = vmatpush1.msra.mxu0 0.0
  %732 = vmatprep.subr.mxu0 0.0
  %733 = vmatpush1.msra.mxu0 0.0
  %734 = vmatprep.subr.mxu0 0.0
  %735 = vmatpush1.msra.mxu0 0.0
  %736 = vmatprep.subr.mxu0 0.0
  %737 = vmatpush1.msra.mxu0 0.0
  %738 = vmatprep.mubr.f32.mxu0 0.0
  %739 = vmatmul.mubr.f32.gmra.mrb[0].mxu0 %v144
  %v740 = vpop.f32.mrb[0].mxu0
  %v741 = vadd.f32 %v65, %v740
  %v742 = vpop.f32.mrb[0].mxu0
  %v743 = vadd.f32 %v65, %v742
  %744 = vmatprep.mubr.f32.mxu0 0.0
  %745 = vmatmul.mubr.f32.gmra.mrb[0].mxu0 %v147
  %v746 = vpop.f32.mrb[0].mxu0
  %v747 = vadd.f32 %v70, %v746
  %v748 = vpop.f32.mrb[0].mxu0
  %v749 = vadd.f32 %v70, %v748
  %750 = vmatprep.mubr.f32.mxu0 0.0
  %751 = vmatmul.mubr.f32.gmra.mrb[0].mxu0 %v150
  %v752 = vpop.f32.mrb[0].mxu0
  %v753 = vadd.f32 %v75, %v752
  %v754 = vpop.f32.mrb[0].mxu0
  %v755 = vadd.f32 %v75, %v754
  %756 = vmatprep.mubr.f32.mxu0 0.0
  %757 = vmatmul.mubr.f32.gmra.mrb[0].mxu0 %v153
  %v758 = vpop.f32.mrb[0].mxu0
  %v759 = vadd.f32 %v80, %v758
  %v760 = vpop.f32.mrb[0].mxu0
  %v761 = vadd.f32 %v80, %v760
  %762 = vmatprep.mubr.f32.mxu0 0.0
  %763 = vmatmul.mubr.f32.gmra.mrb[0].mxu0 %v156
  %v764 = vpop.f32.mrb[0].mxu0
  %v765 = vadd.f32 %v85, %v764
  %v766 = vpop.f32.mrb[0].mxu0
  %v767 = vadd.f32 %v85, %v766
  %768 = vmatprep.mubr.f32.mxu0 0.0
  %769 = vmatmul.mubr.f32.gmra.mrb[0].mxu0 %v159
  %v770 = vpop.f32.mrb[0].mxu0
  %v771 = vadd.f32 %v90, %v770
  %v772 = vpop.f32.mrb[0].mxu0
  %v773 = vadd.f32 %v90, %v772
  %774 = vmatprep.mubr.f32.mxu0 0.0
  %775 = vmatmul.mubr.f32.gmra.mrb[0].mxu0 %v162
  %v776 = vpop.f32.mrb[0].mxu0
  %v777 = vadd.f32 %v95, %v776
  %v778 = vpop.f32.mrb[0].mxu0
  %v779 = vadd.f32 %v95, %v778
  %780 = vmatprep.mubr.f32.mxu0 0.0
  %781 = vmatmul.mubr.f32.gmra.mrb[0].mxu0 %v165
  %v782 = vpop.f32.mrb[0].mxu0
  %v783 = vadd.f32 %v100, %v782
  %v784 = vpop.f32.mrb[0].mxu0
  %v785 = vadd.f32 %v100, %v784
  %786 = vmatprep.mubr.f32.mxu0 0.0
  %787 = vmatmul.mubr.f32.gmra.mrb[0].mxu0 %v168
  %v788 = vpop.f32.mrb[0].mxu0
  %v789 = vadd.f32 %v105, %v788
  %v790 = vpop.f32.mrb[0].mxu0
  %v791 = vadd.f32 %v105, %v790
  %792 = vmatprep.mubr.f32.mxu0 0.0
  %793 = vmatmul.mubr.f32.gmra.mrb[0].mxu0 %v171
  %v794 = vpop.f32.mrb[0].mxu0
  %v795 = vadd.f32 %v110, %v794
  %v796 = vpop.f32.mrb[0].mxu0
  %v797 = vadd.f32 %v110, %v796
  %798 = vmatprep.mubr.f32.mxu0 0.0
  %799 = vmatmul.mubr.f32.gmra.mrb[0].mxu0 %v174
  %v800 = vpop.f32.mrb[0].mxu0
  %v801 = vadd.f32 %v115, %v800
  %v802 = vpop.f32.mrb[0].mxu0
  %v803 = vadd.f32 %v115, %v802
  %804 = vmatprep.mubr.f32.mxu0 0.0
  %805 = vmatmul.mubr.f32.gmra.mrb[0].mxu0 %v177
  %v806 = vpop.f32.mrb[0].mxu0
  %v807 = vadd.f32 %v120, %v806
  %v808 = vpop.f32.mrb[0].mxu0
  %v809 = vadd.f32 %v120, %v808
  %810 = vmatprep.mubr.f32.mxu0 0.0
  %811 = vmatmul.mubr.f32.gmra.mrb[0].mxu0 %v180
  %v812 = vpop.f32.mrb[0].mxu0
  %v813 = vadd.f32 %v125, %v812
  %v814 = vpop.f32.mrb[0].mxu0
  %v815 = vadd.f32 %v125, %v814
  %816 = vmatprep.mubr.f32.mxu0 0.0
  %817 = vmatmul.mubr.f32.gmra.mrb[0].mxu0 %v183
  %v818 = vpop.f32.mrb[0].mxu0
  %v819 = vadd.f32 %v130, %v818
  %v820 = vpop.f32.mrb[0].mxu0
  %v821 = vadd.f32 %v130, %v820
  %822 = vmatprep.mubr.f32.mxu0 0.0
  %823 = vmatmul.mubr.f32.gmra.mrb[0].mxu0 %v186
  %v824 = vpop.f32.mrb[0].mxu0
  %v825 = vadd.f32 %v135, %v824
  %v826 = vpop.f32.mrb[0].mxu0
  %v827 = vadd.f32 %v135, %v826
  %828 = vmatprep.mubr.f32.mxu0 0.0
  %829 = vmatmul.mubr.f32.gmra.mrb[0].mxu0 %v189
  %v830 = vpop.f32.mrb[0].mxu0
  %v831 = vadd.f32 %v140, %v830
  %v832 = vpop.f32.mrb[0].mxu0
  %v833 = vadd.f32 %v140, %v832
  %834 = vdwg.mxu0
  %v835 = vmax.f32 %v258, 0.0
  %v836 = vmax.f32 %v260, 0.0
  %v837 = vmax.f32 %v419, 0.0
  %v838 = vmax.f32 %v421, 0.0
  %v839 = vmax.f32 %v580, 0.0
  %v840 = vmax.f32 %v582, 0.0
  %v841 = vmax.f32 %v741, 0.0
  %v842 = vmax.f32 %v743, 0.0
  %v843 = vmax.f32 %v264, 0.0
  %v844 = vmax.f32 %v266, 0.0
  %v845 = vmax.f32 %v425, 0.0
  %v846 = vmax.f32 %v427, 0.0
  %v847 = vmax.f32 %v586, 0.0
  %v848 = vmax.f32 %v588, 0.0
  %v849 = vmax.f32 %v747, 0.0
  %v850 = vmax.f32 %v749, 0.0
  %v851 = vmax.f32 %v270, 0.0
  %v852 = vmax.f32 %v272, 0.0
  %v853 = vmax.f32 %v431, 0.0
  %v854 = vmax.f32 %v433, 0.0
  %v855 = vmax.f32 %v592, 0.0
  %v856 = vmax.f32 %v594, 0.0
  %v857 = vmax.f32 %v753, 0.0
  %v858 = vmax.f32 %v755, 0.0
  %v859 = vmax.f32 %v276, 0.0
  %v860 = vmax.f32 %v278, 0.0
  %v861 = vmax.f32 %v437, 0.0
  %v862 = vmax.f32 %v439, 0.0
  %v863 = vmax.f32 %v598, 0.0
  %v864 = vmax.f32 %v600, 0.0
  %v865 = vmax.f32 %v759, 0.0
  %v866 = vmax.f32 %v761, 0.0
  %v867 = vmax.f32 %v282, 0.0
  %v868 = vmax.f32 %v284, 0.0
  %v869 = vmax.f32 %v443, 0.0
  %v870 = vmax.f32 %v445, 0.0
  %v871 = vmax.f32 %v604, 0.0
  %v872 = vmax.f32 %v606, 0.0
  %v873 = vmax.f32 %v765, 0.0
  %v874 = vmax.f32 %v767, 0.0
  %v875 = vmax.f32 %v288, 0.0
  %v876 = vmax.f32 %v290, 0.0
  %v877 = vmax.f32 %v449, 0.0
  %v878 = vmax.f32 %v451, 0.0
  %v879 = vmax.f32 %v610, 0.0
  %v880 = vmax.f32 %v612, 0.0
  %v881 = vmax.f32 %v771, 0.0
  %v882 = vmax.f32 %v773, 0.0
  %v883 = vmax.f32 %v294, 0.0
  %v884 = vmax.f32 %v296, 0.0
  %v885 = vmax.f32 %v455, 0.0
  %v886 = vmax.f32 %v457, 0.0
  %v887 = vmax.f32 %v616, 0.0
  %v888 = vmax.f32 %v618, 0.0
  %v889 = vmax.f32 %v777, 0.0
  %v890 = vmax.f32 %v779, 0.0
  %v891 = vmax.f32 %v300, 0.0
  %v892 = vmax.f32 %v302, 0.0
  %v893 = vmax.f32 %v461, 0.0
  %v894 = vmax.f32 %v463, 0.0
  %v895 = vmax.f32 %v622, 0.0
  %v896 = vmax.f32 %v624, 0.0
  %v897 = vmax.f32 %v783, 0.0
  %v898 = vmax.f32 %v785, 0.0
  %v899 = vmax.f32 %v306, 0.0
  %v900 = vmax.f32 %v308, 0.0
  %v901 = vmax.f32 %v467, 0.0
  %v902 = vmax.f32 %v469, 0.0
  %v903 = vmax.f32 %v628, 0.0
  %v904 = vmax.f32 %v630, 0.0
  %v905 = vmax.f32 %v789, 0.0
  %v906 = vmax.f32 %v791, 0.0
  %v907 = vmax.f32 %v312, 0.0
  %v908 = vmax.f32 %v314, 0.0
  %v909 = vmax.f32 %v473, 0.0
  %v910 = vmax.f32 %v475, 0.0
  %v911 = vmax.f32 %v634, 0.0
  %v912 = vmax.f32 %v636, 0.0
  %v913 = vmax.f32 %v795, 0.0
  %v914 = vmax.f32 %v797, 0.0
  %v915 = vmax.f32 %v318, 0.0
  %v916 = vmax.f32 %v320, 0.0
  %v917 = vmax.f32 %v479, 0.0
  %v918 = vmax.f32 %v481, 0.0
  %v919 = vmax.f32 %v640, 0.0
  %v920 = vmax.f32 %v642, 0.0
  %v921 = vmax.f32 %v801, 0.0
  %v922 = vmax.f32 %v803, 0.0
  %v923 = vmax.f32 %v324, 0.0
  %v924 = vmax.f32 %v326, 0.0
  %v925 = vmax.f32 %v485, 0.0
  %v926 = vmax.f32 %v487, 0.0
  %v927 = vmax.f32 %v646, 0.0
  %v928 = vmax.f32 %v648, 0.0
  %v929 = vmax.f32 %v807, 0.0
  %v930 = vmax.f32 %v809, 0.0
  %v931 = vmax.f32 %v330, 0.0
  %v932 = vmax.f32 %v332, 0.0
  %v933 = vmax.f32 %v491, 0.0
  %v934 = vmax.f32 %v493, 0.0
  %v935 = vmax.f32 %v652, 0.0
  %v936 = vmax.f32 %v654, 0.0
  %v937 = vmax.f32 %v813, 0.0
  %v938 = vmax.f32 %v815, 0.0
  %v939 = vmax.f32 %v336, 0.0
  %v940 = vmax.f32 %v338, 0.0
  %v941 = vmax.f32 %v497, 0.0
  %v942 = vmax.f32 %v499, 0.0
  %v943 = vmax.f32 %v658, 0.0
  %v944 = vmax.f32 %v660, 0.0
  %v945 = vmax.f32 %v819, 0.0
  %v946 = vmax.f32 %v821, 0.0
  %v947 = vmax.f32 %v342, 0.0
  %v948 = vmax.f32 %v344, 0.0
  %v949 = vmax.f32 %v503, 0.0
  %v950 = vmax.f32 %v505, 0.0
  %v951 = vmax.f32 %v664, 0.0
  %v952 = vmax.f32 %v666, 0.0
  %v953 = vmax.f32 %v825, 0.0
  %v954 = vmax.f32 %v827, 0.0
  %v955 = vmax.f32 %v348, 0.0
  %v956 = vmax.f32 %v350, 0.0
  %v957 = vmax.f32 %v509, 0.0
  %v958 = vmax.f32 %v511, 0.0
  %v959 = vmax.f32 %v670, 0.0
  %v960 = vmax.f32 %v672, 0.0
  %v961 = vmax.f32 %v831, 0.0
  %v962 = vmax.f32 %v833, 0.0
  %v963 = vld [vmem:[%s3] sm:$0x1]
  %v964 = vld [vmem:[#allocation2] sm:$0x1]
  %966 = vset.pattern.permute.xlu0 0
  %967 = vperm.xlu0 %966, %v964
  %v968 = vpop.permute.xlu0 %967
  %v970 = vlaneseq
  %v971 = vshrl.u32 %v970, 7
  %v972 = vsub.s32 0, %v971
  %v973 = vrot.slane %v968, %v972
  %974 = vmatprep.subr.mxu0 %v836
  %975 = vmatpush1.msra.mxu0 %v835
  %976 = vmatprep.subr.mxu0 %v844
  %977 = vmatpush1.msra.mxu0 %v843
  %978 = vmatprep.subr.mxu0 %v852
  %979 = vmatpush1.msra.mxu0 %v851
  %980 = vmatprep.subr.mxu0 %v860
  %981 = vmatpush1.msra.mxu0 %v859
  %982 = vmatprep.subr.mxu0 %v868
  %983 = vmatpush1.msra.mxu0 %v867
  %984 = vmatprep.subr.mxu0 %v876
  %985 = vmatpush1.msra.mxu0 %v875
  %986 = vmatprep.subr.mxu0 %v884
  %987 = vmatpush1.msra.mxu0 %v883
  %988 = vmatprep.subr.mxu0 %v892
  %989 = vmatpush1.msra.mxu0 %v891
  %990 = vmatprep.subr.mxu0 %v900
  %991 = vmatpush1.msra.mxu0 %v899
  %992 = vmatprep.subr.mxu0 %v908
  %993 = vmatpush1.msra.mxu0 %v907
  %994 = vmatprep.subr.mxu0 %v916
  %995 = vmatpush1.msra.mxu0 %v915
  %996 = vmatprep.subr.mxu0 %v924
  %997 = vmatpush1.msra.mxu0 %v923
  %998 = vmatprep.subr.mxu0 %v932
  %999 = vmatpush1.msra.mxu0 %v931
  %1000 = vmatprep.subr.mxu0 %v940
  %1001 = vmatpush1.msra.mxu0 %v939
  %1002 = vmatprep.subr.mxu0 %v948
  %1003 = vmatpush1.msra.mxu0 %v947
  %1004 = vmatprep.subr.mxu0 %v956
  %1005 = vmatpush1.msra.mxu0 %v955
  %1006 = vmatprep.subr.mxu0 0.0
  %1007 = vmatpush1.msra.mxu0 0.0
  %1008 = vmatprep.subr.mxu0 0.0
  %1009 = vmatpush1.msra.mxu0 0.0
  %1010 = vmatprep.subr.mxu0 0.0
  %1011 = vmatpush1.msra.mxu0 0.0
  %1012 = vmatprep.subr.mxu0 0.0
  %1013 = vmatpush1.msra.mxu0 0.0
  %1014 = vmatprep.subr.mxu0 0.0
  %1015 = vmatpush1.msra.mxu0 0.0
  %1016 = vmatprep.subr.mxu0 0.0
  %1017 = vmatpush1.msra.mxu0 0.0
  %1018 = vmatprep.subr.mxu0 0.0
  %1019 = vmatpush1.msra.mxu0 0.0
  %1020 = vmatprep.subr.mxu0 0.0
  %1021 = vmatpush1.msra.mxu0 0.0
  %1022 = vmatprep.subr.mxu0 0.0
  %1023 = vmatpush1.msra.mxu0 0.0
  %1024 = vmatprep.subr.mxu0 0.0
  %1025 = vmatpush1.msra.mxu0 0.0
  %1026 = vmatprep.subr.mxu0 0.0
  %1027 = vmatpush1.msra.mxu0 0.0
  %1028 = vmatprep.subr.mxu0 0.0
  %1029 = vmatpush1.msra.mxu0 0.0
  %1030 = vmatprep.subr.mxu0 0.0
  %1031 = vmatpush1.msra.mxu0 0.0
  %1032 = vmatprep.subr.mxu0 0.0
  %1033 = vmatpush1.msra.mxu0 0.0
  %1034 = vmatprep.subr.mxu0 0.0
  %1035 = vmatpush1.msra.mxu0 0.0
  %1036 = vmatprep.subr.mxu0 0.0
  %1037 = vmatpush1.msra.mxu0 0.0
  %1038 = vmatprep.mubr.f32.mxu0 0.0
  %1039 = vmatmul.mubr.f32.gmra.mrb[0].mxu0 %v963
  %v1040 = vpop.f32.mrb[0].mxu0
  %v1041 = vadd.f32 %v973, %v1040
  %v1042 = vpop.f32.mrb[0].mxu0
  %v1043 = vadd.f32 %v973, %v1042
  %1044 = vdwg.mxu0
  %1045 = vmatprep.subr.mxu0 %v838
  %1046 = vmatpush1.msra.mxu0 %v837
  %1047 = vmatprep.subr.mxu0 %v846
  %1048 = vmatpush1.msra.mxu0 %v845
  %1049 = vmatprep.subr.mxu0 %v854
  %1050 = vmatpush1.msra.mxu0 %v853
  %1051 = vmatprep.subr.mxu0 %v862
  %1052 = vmatpush1.msra.mxu0 %v861
  %1053 = vmatprep.subr.mxu0 %v870
  %1054 = vmatpush1.msra.mxu0 %v869
  %1055 = vmatprep.subr.mxu0 %v878
  %1056 = vmatpush1.msra.mxu0 %v877
  %1057 = vmatprep.subr.mxu0 %v886
  %1058 = vmatpush1.msra.mxu0 %v885
  %1059 = vmatprep.subr.mxu0 %v894
  %1060 = vmatpush1.msra.mxu0 %v893
  %1061 = vmatprep.subr.mxu0 %v902
  %1062 = vmatpush1.msra.mxu0 %v901
  %1063 = vmatprep.subr.mxu0 %v910
  %1064 = vmatpush1.msra.mxu0 %v909
  %1065 = vmatprep.subr.mxu0 %v918
  %1066 = vmatpush1.msra.mxu0 %v917
  %1067 = vmatprep.subr.mxu0 %v926
  %1068 = vmatpush1.msra.mxu0 %v925
  %1069 = vmatprep.subr.mxu0 %v934
  %1070 = vmatpush1.msra.mxu0 %v933
  %1071 = vmatprep.subr.mxu0 %v942
  %1072 = vmatpush1.msra.mxu0 %v941
  %1073 = vmatprep.subr.mxu0 %v950
  %1074 = vmatpush1.msra.mxu0 %v949
  %1075 = vmatprep.subr.mxu0 %v958
  %1076 = vmatpush1.msra.mxu0 %v957
  %1077 = vmatprep.subr.mxu0 0.0
  %1078 = vmatpush1.msra.mxu0 0.0
  %1079 = vmatprep.subr.mxu0 0.0
  %1080 = vmatpush1.msra.mxu0 0.0
  %1081 = vmatprep.subr.mxu0 0.0
  %1082 = vmatpush1.msra.mxu0 0.0
  %1083 = vmatprep.subr.mxu0 0.0
  %1084 = vmatpush1.msra.mxu0 0.0
  %1085 = vmatprep.subr.mxu0 0.0
  %1086 = vmatpush1.msra.mxu0 0.0
  %1087 = vmatprep.subr.mxu0 0.0
  %1088 = vmatpush1.msra.mxu0 0.0
  %1089 = vmatprep.subr.mxu0 0.0
  %1090 = vmatpush1.msra.mxu0 0.0
  %1091 = vmatprep.subr.mxu0 0.0
  %1092 = vmatpush1.msra.mxu0 0.0
  %1093 = vmatprep.subr.mxu0 0.0
  %1094 = vmatpush1.msra.mxu0 0.0
  %1095 = vmatprep.subr.mxu0 0.0
  %1096 = vmatpush1.msra.mxu0 0.0
  %1097 = vmatprep.subr.mxu0 0.0
  %1098 = vmatpush1.msra.mxu0 0.0
  %1099 = vmatprep.subr.mxu0 0.0
  %1100 = vmatpush1.msra.mxu0 0.0
  %1101 = vmatprep.subr.mxu0 0.0
  %1102 = vmatpush1.msra.mxu0 0.0
  %1103 = vmatprep.subr.mxu0 0.0
  %1104 = vmatpush1.msra.mxu0 0.0
  %1105 = vmatprep.subr.mxu0 0.0
  %1106 = vmatpush1.msra.mxu0 0.0
  %1107 = vmatprep.subr.mxu0 0.0
  %1108 = vmatpush1.msra.mxu0 0.0
  %1109 = vmatprep.mubr.f32.mxu0 0.0
  %1110 = vmatmul.mubr.f32.gmra.mrb[0].mxu0 %v963
  %v1111 = vpop.f32.mrb[0].mxu0
  %v1112 = vadd.f32 %v973, %v1111
  %v1113 = vpop.f32.mrb[0].mxu0
  %v1114 = vadd.f32 %v973, %v1113
  %1115 = vdwg.mxu0
  %1116 = vmatprep.subr.mxu0 %v840
  %1117 = vmatpush1.msra.mxu0 %v839
  %1118 = vmatprep.subr.mxu0 %v848
  %1119 = vmatpush1.msra.mxu0 %v847
  %1120 = vmatprep.subr.mxu0 %v856
  %1121 = vmatpush1.msra.mxu0 %v855
  %1122 = vmatprep.subr.mxu0 %v864
  %1123 = vmatpush1.msra.mxu0 %v863
  %1124 = vmatprep.subr.mxu0 %v872
  %1125 = vmatpush1.msra.mxu0 %v871
  %1126 = vmatprep.subr.mxu0 %v880
  %1127 = vmatpush1.msra.mxu0 %v879
  %1128 = vmatprep.subr.mxu0 %v888
  %1129 = vmatpush1.msra.mxu0 %v887
  %1130 = vmatprep.subr.mxu0 %v896
  %1131 = vmatpush1.msra.mxu0 %v895
  %1132 = vmatprep.subr.mxu0 %v904
  %1133 = vmatpush1.msra.mxu0 %v903
  %1134 = vmatprep.subr.mxu0 %v912
  %1135 = vmatpush1.msra.mxu0 %v911
  %1136 = vmatprep.subr.mxu0 %v920
  %1137 = vmatpush1.msra.mxu0 %v919
  %1138 = vmatprep.subr.mxu0 %v928
  %1139 = vmatpush1.msra.mxu0 %v927
  %1140 = vmatprep.subr.mxu0 %v936
  %1141 = vmatpush1.msra.mxu0 %v935
  %1142 = vmatprep.subr.mxu0 %v944
  %1143 = vmatpush1.msra.mxu0 %v943
  %1144 = vmatprep.subr.mxu0 %v952
  %1145 = vmatpush1.msra.mxu0 %v951
  %1146 = vmatprep.subr.mxu0 %v960
  %1147 = vmatpush1.msra.mxu0 %v959
  %1148 = vmatprep.subr.mxu0 0.0
  %1149 = vmatpush1.msra.mxu0 0.0
  %1150 = vmatprep.subr.mxu0 0.0
  %1151 = vmatpush1.msra.mxu0 0.0
  %1152 = vmatprep.subr.mxu0 0.0
  %1153 = vmatpush1.msra.mxu0 0.0
  %1154 = vmatprep.subr.mxu0 0.0
  %1155 = vmatpush1.msra.mxu0 0.0
  %1156 = vmatprep.subr.mxu0 0.0
  %1157 = vmatpush1.msra.mxu0 0.0
  %1158 = vmatprep.subr.mxu0 0.0
  %1159 = vmatpush1.msra.mxu0 0.0
  %1160 = vmatprep.subr.mxu0 0.0
  %1161 = vmatpush1.msra.mxu0 0.0
  %1162 = vmatprep.subr.mxu0 0.0
  %1163 = vmatpush1.msra.mxu0 0.0
  %1164 = vmatprep.subr.mxu0 0.0
  %1165 = vmatpush1.msra.mxu0 0.0
  %1166 = vmatprep.subr.mxu0 0.0
  %1167 = vmatpush1.msra.mxu0 0.0
  %1168 = vmatprep.subr.mxu0 0.0
  %1169 = vmatpush1.msra.mxu0 0.0
  %1170 = vmatprep.subr.mxu0 0.0
  %1171 = vmatpush1.msra.mxu0 0.0
  %1172 = vmatprep.subr.mxu0 0.0
  %1173 = vmatpush1.msra.mxu0 0.0
  %1174 = vmatprep.subr.mxu0 0.0
  %1175 = vmatpush1.msra.mxu0 0.0
  %1176 = vmatprep.subr.mxu0 0.0
  %1177 = vmatpush1.msra.mxu0 0.0
  %1178 = vmatprep.subr.mxu0 0.0
  %1179 = vmatpush1.msra.mxu0 0.0
  %1180 = vmatprep.mubr.f32.mxu0 0.0
  %1181 = vmatmul.mubr.f32.gmra.mrb[0].mxu0 %v963
  %v1182 = vpop.f32.mrb[0].mxu0
  %v1183 = vadd.f32 %v973, %v1182
  %v1184 = vpop.f32.mrb[0].mxu0
  %v1185 = vadd.f32 %v973, %v1184
  %1186 = vdwg.mxu0
  %1187 = vmatprep.subr.mxu0 %v842
  %1188 = vmatpush1.msra.mxu0 %v841
  %1189 = vmatprep.subr.mxu0 %v850
  %1190 = vmatpush1.msra.mxu0 %v849
  %1191 = vmatprep.subr.mxu0 %v858
  %1192 = vmatpush1.msra.mxu0 %v857
  %1193 = vmatprep.subr.mxu0 %v866
  %1194 = vmatpush1.msra.mxu0 %v865
  %1195 = vmatprep.subr.mxu0 %v874
  %1196 = vmatpush1.msra.mxu0 %v873
  %1197 = vmatprep.subr.mxu0 %v882
  %1198 = vmatpush1.msra.mxu0 %v881
  %1199 = vmatprep.subr.mxu0 %v890
  %1200 = vmatpush1.msra.mxu0 %v889
  %1201 = vmatprep.subr.mxu0 %v898
  %1202 = vmatpush1.msra.mxu0 %v897
  %1203 = vmatprep.subr.mxu0 %v906
  %1204 = vmatpush1.msra.mxu0 %v905
  %1205 = vmatprep.subr.mxu0 %v914
  %1206 = vmatpush1.msra.mxu0 %v913
  %1207 = vmatprep.subr.mxu0 %v922
  %1208 = vmatpush1.msra.mxu0 %v921
  %1209 = vmatprep.subr.mxu0 %v930
  %1210 = vmatpush1.msra.mxu0 %v929
  %1211 = vmatprep.subr.mxu0 %v938
  %1212 = vmatpush1.msra.mxu0 %v937
  %1213 = vmatprep.subr.mxu0 %v946
  %1214 = vmatpush1.msra.mxu0 %v945
  %1215 = vmatprep.subr.mxu0 %v954
  %1216 = vmatpush1.msra.mxu0 %v953
  %1217 = vmatprep.subr.mxu0 %v962
  %1218 = vmatpush1.msra.mxu0 %v961
  %1219 = vmatprep.subr.mxu0 0.0
  %1220 = vmatpush1.msra.mxu0 0.0
  %1221 = vmatprep.subr.mxu0 0.0
  %1222 = vmatpush1.msra.mxu0 0.0
  %1223 = vmatprep.subr.mxu0 0.0
  %1224 = vmatpush1.msra.mxu0 0.0
  %1225 = vmatprep.subr.mxu0 0.0
  %1226 = vmatpush1.msra.mxu0 0.0
  %1227 = vmatprep.subr.mxu0 0.0
  %1228 = vmatpush1.msra.mxu0 0.0
  %1229 = vmatprep.subr.mxu0 0.0
  %1230 = vmatpush1.msra.mxu0 0.0
  %1231 = vmatprep.subr.mxu0 0.0
  %1232 = vmatpush1.msra.mxu0 0.0
  %1233 = vmatprep.subr.mxu0 0.0
  %1234 = vmatpush1.msra.mxu0 0.0
  %1235 = vmatprep.subr.mxu0 0.0
  %1236 = vmatpush1.msra.mxu0 0.0
  %1237 = vmatprep.subr.mxu0 0.0
  %1238 = vmatpush1.msra.mxu0 0.0
  %1239 = vmatprep.subr.mxu0 0.0
  %1240 = vmatpush1.msra.mxu0 0.0
  %1241 = vmatprep.subr.mxu0 0.0
  %1242 = vmatpush1.msra.mxu0 0.0
  %1243 = vmatprep.subr.mxu0 0.0
  %1244 = vmatpush1.msra.mxu0 0.0
  %1245 = vmatprep.subr.mxu0 0.0
  %1246 = vmatpush1.msra.mxu0 0.0
  %1247 = vmatprep.subr.mxu0 0.0
  %1248 = vmatpush1.msra.mxu0 0.0
  %1249 = vmatprep.subr.mxu0 0.0
  %1250 = vmatpush1.msra.mxu0 0.0
  %1251 = vmatprep.mubr.f32.mxu0 0.0
  %1252 = vmatmul.mubr.f32.gmra.mrb[0].mxu0 %v963
  %v1253 = vpop.f32.mrb[0].mxu0
  %v1254 = vadd.f32 %v973, %v1253
  %v1255 = vpop.f32.mrb[0].mxu0
  %v1256 = vadd.f32 %v973, %v1255
  %1257 = vdwg.mxu0
  %v1266 = vcombine.low %v1041, %v1043
  %v1267 = vcombine.low %v1112, %v1114
  %v1268 = vcombine.low %v1183, %v1185
  %v1269 = vcombine.low %v1254, %v1256
  %v1271 = vunpack.c.l.s4 1966171168
  %v1272 = vunpack.c.0.s8 %v1271
  %v1273 = vlaneseq
  %v1274 = vshrl.u32 %v1273, 7
  %v1275 = vsub.s32 %v1272, %v1274
  %v1276 = vrot.slane %v1266, %v1275
  %v1278 = vunpack.c.l.s4 1966171168
  %v1279 = vunpack.c.0.s8 %v1278
  %v1280 = vlaneseq
  %v1281 = vshrl.u32 %v1280, 7
  %v1282 = vsub.s32 %v1279, %v1281
  %v1283 = vrot.slane %v1267, %v1282
  %v1285 = vunpack.c.l.s4 1966171168
  %v1286 = vunpack.c.0.s8 %v1285
  %v1287 = vlaneseq
  %v1288 = vshrl.u32 %v1287, 7
  %v1289 = vsub.s32 %v1286, %v1288
  %v1290 = vrot.slane %v1268, %v1289
  %v1292 = vunpack.c.l.s4 1966171168
  %v1293 = vunpack.c.0.s8 %v1292
  %v1294 = vlaneseq
  %v1295 = vshrl.u32 %v1294, 7
  %v1296 = vsub.s32 %v1293, %v1295
  %v1297 = vrot.slane %v1269, %v1296
  %v1298 = vcombine.low %v1276, %v1283
  %v1299 = vcombine.low %v1290, %v1297
  %v1301 = vunpack.c.l.s4 1966171168
  %v1302 = vunpack.c.0.s8 %v1301
  %v1303 = vlaneseq
  %v1304 = vshrl.u32 %v1303, 7
  %v1305 = vsub.s32 %v1302, %v1304
  %v1306 = vrot.slane %v1298, %v1305
  %v1308 = vunpack.c.l.s4 1966171168
  %v1309 = vunpack.c.0.s8 %v1308
  %v1310 = vlaneseq
  %v1311 = vshrl.u32 %v1310, 7
  %v1312 = vsub.s32 %v1309, %v1311
  %v1313 = vrot.slane %v1299, %v1312
  %v1314 = vcombine.low %v1306, %v1313
  %1316 = vst [vmem:[%s5] sm:$0xff] %v1314
  // Predicated region
  $region22: #{simple_block2d_forward.27} parent=0 // pred_check
    _
  $region23: #{simple_block2d_forward.27} parent=0 // pred_check_branch
    %1318 = sbr.rel (0) target = $region25
  $region24: #{simple_block2d_forward.27} parent=0 // pred_region
    _
  $region25: #{simple_block2d_forward.27} parent=0 // pred_fallthru
    _
  // Predicated region
  $region26: #{simple_block2d_forward.27} parent=0 // pred_check
    _
  $region27: #{simple_block2d_forward.27} parent=0 // pred_check_branch
    %1320 = sbr.rel (0) target = $region29
  $region28: #{simple_block2d_forward.27} parent=0 // pred_region
    _
  $region29: #{simple_block2d_forward.27} parent=0 // pred_fallthru
    _

</llo_original>
